<compile_context>
chip_gen: v6e
topology: v6e:2x2x1
jax: 0.10.0
libtpu: 0.0.40
codegen_flags: <defaults>
</compile_context>

<pallas_src>
import functools

import numpy as np
import jax
import jax.numpy as jnp
from jax.experimental import pallas as pl
from jax.experimental.pallas import tpu as pltpu


LANE = 128


def _round_up(x, m):
    return ((x + m - 1) // m) * m


# ----------------------------------------------------------------------------
# Specialised fast path: n_input == 1, n_output == 1 (the module's defaults).
# ----------------------------------------------------------------------------
def _fourier_dense_kernel(n_hidden, p_ref, t_ref, o_ref):
    """p_ref: (5, H) SMEM rows = [w_sin, w_cos, w_out_sin, w_out_cos, bias]
       t_ref: (TS, 128) dense batch tile
       o_ref: (TS, 128) dense output tile
    """
    t = t_ref[...]
    # Bias splat from an SMEM scalar (sreg -> vreg), no cross-lane broadcast.
    acc = jnp.full(t.shape, p_ref[4, 0], dtype=jnp.float32)
    for h in range(n_hidden):
        acc = acc + p_ref[2, h] * jnp.sin(p_ref[0, h] * t)
        acc = acc + p_ref[3, h] * jnp.cos(p_ref[1, h] * t)
    o_ref[...] = acc


def _forward_i1_o1(t, w_sin, w_cos, w_out, b_out, *, block_rows=64):
    """t: (B, 1). Returns (B, 1)."""
    B = t.shape[0]
    H = w_sin.shape[0]

    rows = pl.cdiv(B, LANE)
    if rows < 8:
        ts = rows                                    # single full-array block
    else:
        ts = min(block_rows, _round_up(rows, 8))     # multiple of 8 sublanes
    rows_pad = _round_up(rows, ts)                   # grid divides evenly
    b_pad = rows_pad * LANE
    grid = (rows_pad // ts,)

    # Lane+sublane dense batch layout: (B, 1) -> (rows_pad, 128).
    # (Pad only when B is not already tile-aligned.)
    t_flat = t.astype(jnp.float32).reshape(B)
    if b_pad != B:
        t_flat = jnp.pad(t_flat, (0, b_pad - B))
    t2d = t_flat.reshape(rows_pad, LANE)

    # Per-feature scalars packed into one small SMEM-resident table.
    params = jnp.stack([
        w_sin.reshape(H),
        w_cos.reshape(H),
        w_out[0, :H],
        w_out[0, H:],
        jnp.full((H,), b_out[0]),
    ]).astype(jnp.float32)                           # (5, H)

    out2d = pl.pallas_call(
        functools.partial(_fourier_dense_kernel, H),
        out_shape=jax.ShapeDtypeStruct((rows_pad, LANE), jnp.float32),
        grid=grid,
        in_specs=[
            pl.BlockSpec(memory_space=pltpu.MemorySpace.SMEM),   # params in SMEM
            pl.BlockSpec((ts, LANE), lambda i: (i, 0)),          # batch tile
        ],
        out_specs=pl.BlockSpec((ts, LANE), lambda i: (i, 0)),
        compiler_params=pltpu.CompilerParams(
            dimension_semantics=("parallel",)),
    )(params, t2d)

    out_flat = out2d.reshape(b_pad)
    if b_pad != B:
        out_flat = out_flat[:B]
    return out_flat.reshape(B, 1)


# ----------------------------------------------------------------------------
# General fallback: n_input > 1 or n_output > 1 -> batch-tiled MXU kernel.
# ----------------------------------------------------------------------------
def _fourier_general_kernel(n_hidden, t_ref, w12_ref, wout_ref, b_ref, o_ref):
    """t_ref: (TB, I); w12_ref: (I, 2H) = [Wsin.T | Wcos.T];
       wout_ref: (2H, O); b_ref: (1, O); o_ref: (TB, O)."""
    z = jnp.dot(t_ref[...], w12_ref[...], preferred_element_type=jnp.float32)
    lane = jax.lax.broadcasted_iota(jnp.int32, z.shape, 1)
    trig = jnp.where(lane < n_hidden, jnp.sin(z), jnp.cos(z))   # no lane slicing
    out = jnp.dot(trig, wout_ref[...], preferred_element_type=jnp.float32)
    o_ref[...] = out + b_ref[...]


def _forward_general(t, w_sin, w_cos, w_out, b_out, *, batch_block=512):
    t = t.astype(jnp.float32)
    B, I = t.shape
    H = w_sin.shape[0]
    O = w_out.shape[0]

    w12 = jnp.concatenate([w_sin.T, w_cos.T], axis=1).astype(jnp.float32)  # (I, 2H)
    wout_t = w_out.T.astype(jnp.float32)                                   # (2H, O)
    bias = b_out.reshape(1, O).astype(jnp.float32)

    if B <= 8:
        tb = B
    else:
        tb = min(batch_block, (B // 8) * 8)
    grid = (pl.cdiv(B, tb),)

    return pl.pallas_call(
        functools.partial(_fourier_general_kernel, H),
        out_shape=jax.ShapeDtypeStruct((B, O), jnp.float32),
        grid=grid,
        in_specs=[
            pl.BlockSpec((tb, I), lambda i: (i, 0)),        # batch tile (pipelined)
            pl.BlockSpec((I, 2 * H), lambda i: (0, 0)),     # resident weights
            pl.BlockSpec((2 * H, O), lambda i: (0, 0)),
            pl.BlockSpec((1, O), lambda i: (0, 0)),
        ],
        out_specs=pl.BlockSpec((tb, O), lambda i: (i, 0)),
        compiler_params=pltpu.CompilerParams(
            dimension_semantics=("parallel",)),
    )(t, w12, wout_t, bias)


def nn_fourier_forward(t, w_sin, w_cos, w_out, b_out):
    """t: (B, I); w_sin/w_cos: (H, I); w_out: (O, 2H); b_out: (O,). Returns (B, O)."""
    _, I = t.shape
    O = w_out.shape[0]
    if I == 1 and O == 1:
        return _forward_i1_o1(t, w_sin, w_cos, w_out, b_out)
    return _forward_general(t, w_sin, w_cos, w_out, b_out)


# ----------------------------------------------------------------------------
# Parameter init (mirrors the PyTorch __init__ semantics) and a pure-JAX ref.
# ----------------------------------------------------------------------------
def init_params(key, n_input=1, n_output=1, n_hidden=32):
    k1, k2, k3, k4 = jax.random.split(key, 4)

    # nn.Linear default init: U(-1/sqrt(fan_in), 1/sqrt(fan_in))
    bound_in = 1.0 / np.sqrt(n_input)
    w_sin = jax.random.uniform(k1, (n_hidden, n_input), jnp.float32,
                               -bound_in, bound_in)
    w_cos = jax.random.uniform(k2, (n_hidden, n_input), jnp.float32,
                               -bound_in, bound_in)

    # K = 2*pi*k/20 added (column-broadcast) onto both weight matrices.
    K = jnp.array([2.0 * np.pi * k / 20.0 for k in range(n_hidden)],
                  dtype=jnp.float32)[:, None]
    w_sin = w_sin + K
    w_cos = w_cos + K

    bound_out = 1.0 / np.sqrt(2 * n_hidden)
    w_out = jax.random.uniform(k3, (n_output, 2 * n_hidden), jnp.float32,
                               -bound_out, bound_out)
    b_out = jax.random.uniform(k4, (n_output,), jnp.float32,
                               -bound_out, bound_out)
    return w_sin, w_cos, w_out, b_out


def reference_forward(t, w_sin, w_cos, w_out, b_out):
    sin = jnp.sin(t @ w_sin.T)
    cos = jnp.cos(t @ w_cos.T)
    combined = jnp.concatenate([sin, cos], axis=1)
    return combined @ w_out.T + b_out


if __name__ == "__main__":
    key = jax.random.PRNGKey(0)
    kp, kt = jax.random.split(key)

    # Default module configuration: n_input=1, n_output=1, n_hidden=32.
    n_hidden = 32
    w_sin, w_cos, w_out, b_out = init_params(kp, 1, 1, n_hidden)

    # 1) Small batch (module-default shapes), exercises pad -> single tiny block.
    t_small = jax.random.uniform(kt, (8, 1), jnp.float32, 0.0, 10.0)
    out_small = jax.block_until_ready(
        nn_fourier_forward(t_small, w_sin, w_cos, w_out, b_out))
    ref_small = reference_forward(t_small, w_sin, w_cos, w_out, b_out)
    np.testing.assert_allclose(np.asarray(out_small), np.asarray(ref_small),
                               rtol=1e-5, atol=1e-5)

    # 2) Larger batch: exercises the multi-step (grid > 1) pipelined fast path.
    kt2 = jax.random.fold_in(kt, 1)
    t_big = jax.random.uniform(kt2, (16384, 1), jnp.float32, 0.0, 1.0)
    out_big = jax.block_until_ready(
        nn_fourier_forward(t_big, w_sin, w_cos, w_out, b_out))
    ref_big = reference_forward(t_big, w_sin, w_cos, w_out, b_out)
    np.testing.assert_allclose(np.asarray(out_big), np.asarray(ref_big),
                               rtol=1e-4, atol=1e-4)

    # 3) General (n_input>1 / n_output>1) batch-tiled MXU fallback.
    kp2 = jax.random.fold_in(kp, 1)
    kt3 = jax.random.fold_in(kt, 2)
    w_sin2, w_cos2, w_out2, b_out2 = init_params(kp2, 2, 3, n_hidden)
    t2 = jax.random.uniform(kt3, (8, 2), jnp.float32, 0.0, 10.0)
    out2 = jax.block_until_ready(
        nn_fourier_forward(t2, w_sin2, w_cos2, w_out2, b_out2))
    ref2 = reference_forward(t2, w_sin2, w_cos2, w_out2, b_out2)
    np.testing.assert_allclose(np.asarray(out2), np.asarray(ref2),
                               rtol=1e-5, atol=1e-5)

    print("KERNEL_OK")
</pallas_src>

<mosaic_0001>
module attributes {stable_mosaic.version = 11 : i64} {
  func.func @_fourier_dense_kernel(%arg0: i32, %arg1: memref<5x32xf32, #tpu.memory_space<smem>>, %arg2: memref<1x128xf32, #tpu.memory_space<vmem>>, %arg3: memref<1x128xf32, #tpu.memory_space<vmem>>) attributes {dimension_semantics = [#tpu.dimension_semantics<parallel>], iteration_bounds = array<i64: 1>, scalar_prefetch = 0 : i64, scratch_operands = 0 : i64, tpu.core_type = #tpu.core_type<tc>, window_params = [{transform_indices = @transform_0, window_bounds = array<i64: 5, 32>}, {transform_indices = @transform_1, window_bounds = array<i64: 1, 128>}, {transform_indices = @transform_2, window_bounds = array<i64: 1, 128>}]} {
    %c0 = arith.constant 0 : index
    %c0_0 = arith.constant 0 : index
    %0 = vector.load %arg2[%c0, %c0_0] : memref<1x128xf32, #tpu.memory_space<vmem>>, vector<1x128xf32>
    %c4 = arith.constant 4 : index
    %c0_1 = arith.constant 0 : index
    %1 = memref.load %arg1[%c4, %c0_1] : memref<5x32xf32, #tpu.memory_space<smem>>
    %2 = vector.broadcast %1 : f32 to vector<1x128xf32>
    %c2 = arith.constant 2 : index
    %c0_2 = arith.constant 0 : index
    %3 = memref.load %arg1[%c2, %c0_2] : memref<5x32xf32, #tpu.memory_space<smem>>
    %c0_3 = arith.constant 0 : index
    %c0_4 = arith.constant 0 : index
    %4 = memref.load %arg1[%c0_3, %c0_4] : memref<5x32xf32, #tpu.memory_space<smem>>
    %5 = vector.broadcast %4 : f32 to vector<1x128xf32>
    %6 = arith.mulf %5, %0 : vector<1x128xf32>
    %7 = math.sin %6 : vector<1x128xf32>
    %8 = vector.broadcast %3 : f32 to vector<1x128xf32>
    %9 = arith.mulf %8, %7 : vector<1x128xf32>
    %10 = arith.addf %2, %9 : vector<1x128xf32>
    %c3 = arith.constant 3 : index
    %c0_5 = arith.constant 0 : index
    %11 = memref.load %arg1[%c3, %c0_5] : memref<5x32xf32, #tpu.memory_space<smem>>
    %c1 = arith.constant 1 : index
    %c0_6 = arith.constant 0 : index
    %12 = memref.load %arg1[%c1, %c0_6] : memref<5x32xf32, #tpu.memory_space<smem>>
    %13 = vector.broadcast %12 : f32 to vector<1x128xf32>
    %14 = arith.mulf %13, %0 : vector<1x128xf32>
    %15 = math.cos %14 : vector<1x128xf32>
    %16 = vector.broadcast %11 : f32 to vector<1x128xf32>
    %17 = arith.mulf %16, %15 : vector<1x128xf32>
    %18 = arith.addf %10, %17 : vector<1x128xf32>
    %c2_7 = arith.constant 2 : index
    %c1_8 = arith.constant 1 : index
    %19 = memref.load %arg1[%c2_7, %c1_8] : memref<5x32xf32, #tpu.memory_space<smem>>
    %c0_9 = arith.constant 0 : index
    %c1_10 = arith.constant 1 : index
    %20 = memref.load %arg1[%c0_9, %c1_10] : memref<5x32xf32, #tpu.memory_space<smem>>
    %21 = vector.broadcast %20 : f32 to vector<1x128xf32>
    %22 = arith.mulf %21, %0 : vector<1x128xf32>
    %23 = math.sin %22 : vector<1x128xf32>
    %24 = vector.broadcast %19 : f32 to vector<1x128xf32>
    %25 = arith.mulf %24, %23 : vector<1x128xf32>
    %26 = arith.addf %18, %25 : vector<1x128xf32>
    %c3_11 = arith.constant 3 : index
    %c1_12 = arith.constant 1 : index
    %27 = memref.load %arg1[%c3_11, %c1_12] : memref<5x32xf32, #tpu.memory_space<smem>>
    %c1_13 = arith.constant 1 : index
    %c1_14 = arith.constant 1 : index
    %28 = memref.load %arg1[%c1_13, %c1_14] : memref<5x32xf32, #tpu.memory_space<smem>>
    %29 = vector.broadcast %28 : f32 to vector<1x128xf32>
    %30 = arith.mulf %29, %0 : vector<1x128xf32>
    %31 = math.cos %30 : vector<1x128xf32>
    %32 = vector.broadcast %27 : f32 to vector<1x128xf32>
    %33 = arith.mulf %32, %31 : vector<1x128xf32>
    %34 = arith.addf %26, %33 : vector<1x128xf32>
    %c2_15 = arith.constant 2 : index
    %c2_16 = arith.constant 2 : index
    %35 = memref.load %arg1[%c2_15, %c2_16] : memref<5x32xf32, #tpu.memory_space<smem>>
    %c0_17 = arith.constant 0 : index
    %c2_18 = arith.constant 2 : index
    %36 = memref.load %arg1[%c0_17, %c2_18] : memref<5x32xf32, #tpu.memory_space<smem>>
    %37 = vector.broadcast %36 : f32 to vector<1x128xf32>
    %38 = arith.mulf %37, %0 : vector<1x128xf32>
    %39 = math.sin %38 : vector<1x128xf32>
    %40 = vector.broadcast %35 : f32 to vector<1x128xf32>
    %41 = arith.mulf %40, %39 : vector<1x128xf32>
    %42 = arith.addf %34, %41 : vector<1x128xf32>
    %c3_19 = arith.constant 3 : index
    %c2_20 = arith.constant 2 : index
    %43 = memref.load %arg1[%c3_19, %c2_20] : memref<5x32xf32, #tpu.memory_space<smem>>
    %c1_21 = arith.constant 1 : index
    %c2_22 = arith.constant 2 : index
    %44 = memref.load %arg1[%c1_21, %c2_22] : memref<5x32xf32, #tpu.memory_space<smem>>
    %45 = vector.broadcast %44 : f32 to vector<1x128xf32>
    %46 = arith.mulf %45, %0 : vector<1x128xf32>
    %47 = math.cos %46 : vector<1x128xf32>
    %48 = vector.broadcast %43 : f32 to vector<1x128xf32>
    %49 = arith.mulf %48, %47 : vector<1x128xf32>
    %50 = arith.addf %42, %49 : vector<1x128xf32>
    %c2_23 = arith.constant 2 : index
    %c3_24 = arith.constant 3 : index
    %51 = memref.load %arg1[%c2_23, %c3_24] : memref<5x32xf32, #tpu.memory_space<smem>>
    %c0_25 = arith.constant 0 : index
    %c3_26 = arith.constant 3 : index
    %52 = memref.load %arg1[%c0_25, %c3_26] : memref<5x32xf32, #tpu.memory_space<smem>>
    %53 = vector.broadcast %52 : f32 to vector<1x128xf32>
    %54 = arith.mulf %53, %0 : vector<1x128xf32>
    %55 = math.sin %54 : vector<1x128xf32>
    %56 = vector.broadcast %51 : f32 to vector<1x128xf32>
    %57 = arith.mulf %56, %55 : vector<1x128xf32>
    %58 = arith.addf %50, %57 : vector<1x128xf32>
    %c3_27 = arith.constant 3 : index
    %c3_28 = arith.constant 3 : index
    %59 = memref.load %arg1[%c3_27, %c3_28] : memref<5x32xf32, #tpu.memory_space<smem>>
    %c1_29 = arith.constant 1 : index
    %c3_30 = arith.constant 3 : index
    %60 = memref.load %arg1[%c1_29, %c3_30] : memref<5x32xf32, #tpu.memory_space<smem>>
    %61 = vector.broadcast %60 : f32 to vector<1x128xf32>
    %62 = arith.mulf %61, %0 : vector<1x128xf32>
    %63 = math.cos %62 : vector<1x128xf32>
    %64 = vector.broadcast %59 : f32 to vector<1x128xf32>
    %65 = arith.mulf %64, %63 : vector<1x128xf32>
    %66 = arith.addf %58, %65 : vector<1x128xf32>
    %c2_31 = arith.constant 2 : index
    %c4_32 = arith.constant 4 : index
    %67 = memref.load %arg1[%c2_31, %c4_32] : memref<5x32xf32, #tpu.memory_space<smem>>
    %c0_33 = arith.constant 0 : index
    %c4_34 = arith.constant 4 : index
    %68 = memref.load %arg1[%c0_33, %c4_34] : memref<5x32xf32, #tpu.memory_space<smem>>
    %69 = vector.broadcast %68 : f32 to vector<1x128xf32>
    %70 = arith.mulf %69, %0 : vector<1x128xf32>
    %71 = math.sin %70 : vector<1x128xf32>
    %72 = vector.broadcast %67 : f32 to vector<1x128xf32>
    %73 = arith.mulf %72, %71 : vector<1x128xf32>
    %74 = arith.addf %66, %73 : vector<1x128xf32>
    %c3_35 = arith.constant 3 : index
    %c4_36 = arith.constant 4 : index
    %75 = memref.load %arg1[%c3_35, %c4_36] : memref<5x32xf32, #tpu.memory_space<smem>>
    %c1_37 = arith.constant 1 : index
    %c4_38 = arith.constant 4 : index
    %76 = memref.load %arg1[%c1_37, %c4_38] : memref<5x32xf32, #tpu.memory_space<smem>>
    %77 = vector.broadcast %76 : f32 to vector<1x128xf32>
    %78 = arith.mulf %77, %0 : vector<1x128xf32>
    %79 = math.cos %78 : vector<1x128xf32>
    %80 = vector.broadcast %75 : f32 to vector<1x128xf32>
    %81 = arith.mulf %80, %79 : vector<1x128xf32>
    %82 = arith.addf %74, %81 : vector<1x128xf32>
    %c2_39 = arith.constant 2 : index
    %c5 = arith.constant 5 : index
    %83 = memref.load %arg1[%c2_39, %c5] : memref<5x32xf32, #tpu.memory_space<smem>>
    %c0_40 = arith.constant 0 : index
    %c5_41 = arith.constant 5 : index
    %84 = memref.load %arg1[%c0_40, %c5_41] : memref<5x32xf32, #tpu.memory_space<smem>>
    %85 = vector.broadcast %84 : f32 to vector<1x128xf32>
    %86 = arith.mulf %85, %0 : vector<1x128xf32>
    %87 = math.sin %86 : vector<1x128xf32>
    %88 = vector.broadcast %83 : f32 to vector<1x128xf32>
    %89 = arith.mulf %88, %87 : vector<1x128xf32>
    %90 = arith.addf %82, %89 : vector<1x128xf32>
    %c3_42 = arith.constant 3 : index
    %c5_43 = arith.constant 5 : index
    %91 = memref.load %arg1[%c3_42, %c5_43] : memref<5x32xf32, #tpu.memory_space<smem>>
    %c1_44 = arith.constant 1 : index
    %c5_45 = arith.constant 5 : index
    %92 = memref.load %arg1[%c1_44, %c5_45] : memref<5x32xf32, #tpu.memory_space<smem>>
    %93 = vector.broadcast %92 : f32 to vector<1x128xf32>
    %94 = arith.mulf %93, %0 : vector<1x128xf32>
    %95 = math.cos %94 : vector<1x128xf32>
    %96 = vector.broadcast %91 : f32 to vector<1x128xf32>
    %97 = arith.mulf %96, %95 : vector<1x128xf32>
    %98 = arith.addf %90, %97 : vector<1x128xf32>
    %c2_46 = arith.constant 2 : index
    %c6 = arith.constant 6 : index
    %99 = memref.load %arg1[%c2_46, %c6] : memref<5x32xf32, #tpu.memory_space<smem>>
    %c0_47 = arith.constant 0 : index
    %c6_48 = arith.constant 6 : index
    %100 = memref.load %arg1[%c0_47, %c6_48] : memref<5x32xf32, #tpu.memory_space<smem>>
    %101 = vector.broadcast %100 : f32 to vector<1x128xf32>
    %102 = arith.mulf %101, %0 : vector<1x128xf32>
    %103 = math.sin %102 : vector<1x128xf32>
    %104 = vector.broadcast %99 : f32 to vector<1x128xf32>
    %105 = arith.mulf %104, %103 : vector<1x128xf32>
    %106 = arith.addf %98, %105 : vector<1x128xf32>
    %c3_49 = arith.constant 3 : index
    %c6_50 = arith.constant 6 : index
    %107 = memref.load %arg1[%c3_49, %c6_50] : memref<5x32xf32, #tpu.memory_space<smem>>
    %c1_51 = arith.constant 1 : index
    %c6_52 = arith.constant 6 : index
    %108 = memref.load %arg1[%c1_51, %c6_52] : memref<5x32xf32, #tpu.memory_space<smem>>
    %109 = vector.broadcast %108 : f32 to vector<1x128xf32>
    %110 = arith.mulf %109, %0 : vector<1x128xf32>
    %111 = math.cos %110 : vector<1x128xf32>
    %112 = vector.broadcast %107 : f32 to vector<1x128xf32>
    %113 = arith.mulf %112, %111 : vector<1x128xf32>
    %114 = arith.addf %106, %113 : vector<1x128xf32>
    %c2_53 = arith.constant 2 : index
    %c7 = arith.constant 7 : index
    %115 = memref.load %arg1[%c2_53, %c7] : memref<5x32xf32, #tpu.memory_space<smem>>
    %c0_54 = arith.constant 0 : index
    %c7_55 = arith.constant 7 : index
    %116 = memref.load %arg1[%c0_54, %c7_55] : memref<5x32xf32, #tpu.memory_space<smem>>
    %117 = vector.broadcast %116 : f32 to vector<1x128xf32>
    %118 = arith.mulf %117, %0 : vector<1x128xf32>
    %119 = math.sin %118 : vector<1x128xf32>
    %120 = vector.broadcast %115 : f32 to vector<1x128xf32>
    %121 = arith.mulf %120, %119 : vector<1x128xf32>
    %122 = arith.addf %114, %121 : vector<1x128xf32>
    %c3_56 = arith.constant 3 : index
    %c7_57 = arith.constant 7 : index
    %123 = memref.load %arg1[%c3_56, %c7_57] : memref<5x32xf32, #tpu.memory_space<smem>>
    %c1_58 = arith.constant 1 : index
    %c7_59 = arith.constant 7 : index
    %124 = memref.load %arg1[%c1_58, %c7_59] : memref<5x32xf32, #tpu.memory_space<smem>>
    %125 = vector.broadcast %124 : f32 to vector<1x128xf32>
    %126 = arith.mulf %125, %0 : vector<1x128xf32>
    %127 = math.cos %126 : vector<1x128xf32>
    %128 = vector.broadcast %123 : f32 to vector<1x128xf32>
    %129 = arith.mulf %128, %127 : vector<1x128xf32>
    %130 = arith.addf %122, %129 : vector<1x128xf32>
    %c2_60 = arith.constant 2 : index
    %c8 = arith.constant 8 : index
    %131 = memref.load %arg1[%c2_60, %c8] : memref<5x32xf32, #tpu.memory_space<smem>>
    %c0_61 = arith.constant 0 : index
    %c8_62 = arith.constant 8 : index
    %132 = memref.load %arg1[%c0_61, %c8_62] : memref<5x32xf32, #tpu.memory_space<smem>>
    %133 = vector.broadcast %132 : f32 to vector<1x128xf32>
    %134 = arith.mulf %133, %0 : vector<1x128xf32>
    %135 = math.sin %134 : vector<1x128xf32>
    %136 = vector.broadcast %131 : f32 to vector<1x128xf32>
    %137 = arith.mulf %136, %135 : vector<1x128xf32>
    %138 = arith.addf %130, %137 : vector<1x128xf32>
    %c3_63 = arith.constant 3 : index
    %c8_64 = arith.constant 8 : index
    %139 = memref.load %arg1[%c3_63, %c8_64] : memref<5x32xf32, #tpu.memory_space<smem>>
    %c1_65 = arith.constant 1 : index
    %c8_66 = arith.constant 8 : index
    %140 = memref.load %arg1[%c1_65, %c8_66] : memref<5x32xf32, #tpu.memory_space<smem>>
    %141 = vector.broadcast %140 : f32 to vector<1x128xf32>
    %142 = arith.mulf %141, %0 : vector<1x128xf32>
    %143 = math.cos %142 : vector<1x128xf32>
    %144 = vector.broadcast %139 : f32 to vector<1x128xf32>
    %145 = arith.mulf %144, %143 : vector<1x128xf32>
    %146 = arith.addf %138, %145 : vector<1x128xf32>
    %c2_67 = arith.constant 2 : index
    %c9 = arith.constant 9 : index
    %147 = memref.load %arg1[%c2_67, %c9] : memref<5x32xf32, #tpu.memory_space<smem>>
    %c0_68 = arith.constant 0 : index
    %c9_69 = arith.constant 9 : index
    %148 = memref.load %arg1[%c0_68, %c9_69] : memref<5x32xf32, #tpu.memory_space<smem>>
    %149 = vector.broadcast %148 : f32 to vector<1x128xf32>
    %150 = arith.mulf %149, %0 : vector<1x128xf32>
    %151 = math.sin %150 : vector<1x128xf32>
    %152 = vector.broadcast %147 : f32 to vector<1x128xf32>
    %153 = arith.mulf %152, %151 : vector<1x128xf32>
    %154 = arith.addf %146, %153 : vector<1x128xf32>
    %c3_70 = arith.constant 3 : index
    %c9_71 = arith.constant 9 : index
    %155 = memref.load %arg1[%c3_70, %c9_71] : memref<5x32xf32, #tpu.memory_space<smem>>
    %c1_72 = arith.constant 1 : index
    %c9_73 = arith.constant 9 : index
    %156 = memref.load %arg1[%c1_72, %c9_73] : memref<5x32xf32, #tpu.memory_space<smem>>
    %157 = vector.broadcast %156 : f32 to vector<1x128xf32>
    %158 = arith.mulf %157, %0 : vector<1x128xf32>
    %159 = math.cos %158 : vector<1x128xf32>
    %160 = vector.broadcast %155 : f32 to vector<1x128xf32>
    %161 = arith.mulf %160, %159 : vector<1x128xf32>
    %162 = arith.addf %154, %161 : vector<1x128xf32>
    %c2_74 = arith.constant 2 : index
    %c10 = arith.constant 10 : index
    %163 = memref.load %arg1[%c2_74, %c10] : memref<5x32xf32, #tpu.memory_space<smem>>
    %c0_75 = arith.constant 0 : index
    %c10_76 = arith.constant 10 : index
    %164 = memref.load %arg1[%c0_75, %c10_76] : memref<5x32xf32, #tpu.memory_space<smem>>
    %165 = vector.broadcast %164 : f32 to vector<1x128xf32>
    %166 = arith.mulf %165, %0 : vector<1x128xf32>
    %167 = math.sin %166 : vector<1x128xf32>
    %168 = vector.broadcast %163 : f32 to vector<1x128xf32>
    %169 = arith.mulf %168, %167 : vector<1x128xf32>
    %170 = arith.addf %162, %169 : vector<1x128xf32>
    %c3_77 = arith.constant 3 : index
    %c10_78 = arith.constant 10 : index
    %171 = memref.load %arg1[%c3_77, %c10_78] : memref<5x32xf32, #tpu.memory_space<smem>>
    %c1_79 = arith.constant 1 : index
    %c10_80 = arith.constant 10 : index
    %172 = memref.load %arg1[%c1_79, %c10_80] : memref<5x32xf32, #tpu.memory_space<smem>>
    %173 = vector.broadcast %172 : f32 to vector<1x128xf32>
    %174 = arith.mulf %173, %0 : vector<1x128xf32>
    %175 = math.cos %174 : vector<1x128xf32>
    %176 = vector.broadcast %171 : f32 to vector<1x128xf32>
    %177 = arith.mulf %176, %175 : vector<1x128xf32>
    %178 = arith.addf %170, %177 : vector<1x128xf32>
    %c2_81 = arith.constant 2 : index
    %c11 = arith.constant 11 : index
    %179 = memref.load %arg1[%c2_81, %c11] : memref<5x32xf32, #tpu.memory_space<smem>>
    %c0_82 = arith.constant 0 : index
    %c11_83 = arith.constant 11 : index
    %180 = memref.load %arg1[%c0_82, %c11_83] : memref<5x32xf32, #tpu.memory_space<smem>>
    %181 = vector.broadcast %180 : f32 to vector<1x128xf32>
    %182 = arith.mulf %181, %0 : vector<1x128xf32>
    %183 = math.sin %182 : vector<1x128xf32>
    %184 = vector.broadcast %179 : f32 to vector<1x128xf32>
    %185 = arith.mulf %184, %183 : vector<1x128xf32>
    %186 = arith.addf %178, %185 : vector<1x128xf32>
    %c3_84 = arith.constant 3 : index
    %c11_85 = arith.constant 11 : index
    %187 = memref.load %arg1[%c3_84, %c11_85] : memref<5x32xf32, #tpu.memory_space<smem>>
    %c1_86 = arith.constant 1 : index
    %c11_87 = arith.constant 11 : index
    %188 = memref.load %arg1[%c1_86, %c11_87] : memref<5x32xf32, #tpu.memory_space<smem>>
    %189 = vector.broadcast %188 : f32 to vector<1x128xf32>
    %190 = arith.mulf %189, %0 : vector<1x128xf32>
    %191 = math.cos %190 : vector<1x128xf32>
    %192 = vector.broadcast %187 : f32 to vector<1x128xf32>
    %193 = arith.mulf %192, %191 : vector<1x128xf32>
    %194 = arith.addf %186, %193 : vector<1x128xf32>
    %c2_88 = arith.constant 2 : index
    %c12 = arith.constant 12 : index
    %195 = memref.load %arg1[%c2_88, %c12] : memref<5x32xf32, #tpu.memory_space<smem>>
    %c0_89 = arith.constant 0 : index
    %c12_90 = arith.constant 12 : index
    %196 = memref.load %arg1[%c0_89, %c12_90] : memref<5x32xf32, #tpu.memory_space<smem>>
    %197 = vector.broadcast %196 : f32 to vector<1x128xf32>
    %198 = arith.mulf %197, %0 : vector<1x128xf32>
    %199 = math.sin %198 : vector<1x128xf32>
    %200 = vector.broadcast %195 : f32 to vector<1x128xf32>
    %201 = arith.mulf %200, %199 : vector<1x128xf32>
    %202 = arith.addf %194, %201 : vector<1x128xf32>
    %c3_91 = arith.constant 3 : index
    %c12_92 = arith.constant 12 : index
    %203 = memref.load %arg1[%c3_91, %c12_92] : memref<5x32xf32, #tpu.memory_space<smem>>
    %c1_93 = arith.constant 1 : index
    %c12_94 = arith.constant 12 : index
    %204 = memref.load %arg1[%c1_93, %c12_94] : memref<5x32xf32, #tpu.memory_space<smem>>
    %205 = vector.broadcast %204 : f32 to vector<1x128xf32>
    %206 = arith.mulf %205, %0 : vector<1x128xf32>
    %207 = math.cos %206 : vector<1x128xf32>
    %208 = vector.broadcast %203 : f32 to vector<1x128xf32>
    %209 = arith.mulf %208, %207 : vector<1x128xf32>
    %210 = arith.addf %202, %209 : vector<1x128xf32>
    %c2_95 = arith.constant 2 : index
    %c13 = arith.constant 13 : index
    %211 = memref.load %arg1[%c2_95, %c13] : memref<5x32xf32, #tpu.memory_space<smem>>
    %c0_96 = arith.constant 0 : index
    %c13_97 = arith.constant 13 : index
    %212 = memref.load %arg1[%c0_96, %c13_97] : memref<5x32xf32, #tpu.memory_space<smem>>
    %213 = vector.broadcast %212 : f32 to vector<1x128xf32>
    %214 = arith.mulf %213, %0 : vector<1x128xf32>
    %215 = math.sin %214 : vector<1x128xf32>
    %216 = vector.broadcast %211 : f32 to vector<1x128xf32>
    %217 = arith.mulf %216, %215 : vector<1x128xf32>
    %218 = arith.addf %210, %217 : vector<1x128xf32>
    %c3_98 = arith.constant 3 : index
    %c13_99 = arith.constant 13 : index
    %219 = memref.load %arg1[%c3_98, %c13_99] : memref<5x32xf32, #tpu.memory_space<smem>>
    %c1_100 = arith.constant 1 : index
    %c13_101 = arith.constant 13 : index
    %220 = memref.load %arg1[%c1_100, %c13_101] : memref<5x32xf32, #tpu.memory_space<smem>>
    %221 = vector.broadcast %220 : f32 to vector<1x128xf32>
    %222 = arith.mulf %221, %0 : vector<1x128xf32>
    %223 = math.cos %222 : vector<1x128xf32>
    %224 = vector.broadcast %219 : f32 to vector<1x128xf32>
    %225 = arith.mulf %224, %223 : vector<1x128xf32>
    %226 = arith.addf %218, %225 : vector<1x128xf32>
    %c2_102 = arith.constant 2 : index
    %c14 = arith.constant 14 : index
    %227 = memref.load %arg1[%c2_102, %c14] : memref<5x32xf32, #tpu.memory_space<smem>>
    %c0_103 = arith.constant 0 : index
    %c14_104 = arith.constant 14 : index
    %228 = memref.load %arg1[%c0_103, %c14_104] : memref<5x32xf32, #tpu.memory_space<smem>>
    %229 = vector.broadcast %228 : f32 to vector<1x128xf32>
    %230 = arith.mulf %229, %0 : vector<1x128xf32>
    %231 = math.sin %230 : vector<1x128xf32>
    %232 = vector.broadcast %227 : f32 to vector<1x128xf32>
    %233 = arith.mulf %232, %231 : vector<1x128xf32>
    %234 = arith.addf %226, %233 : vector<1x128xf32>
    %c3_105 = arith.constant 3 : index
    %c14_106 = arith.constant 14 : index
    %235 = memref.load %arg1[%c3_105, %c14_106] : memref<5x32xf32, #tpu.memory_space<smem>>
    %c1_107 = arith.constant 1 : index
    %c14_108 = arith.constant 14 : index
    %236 = memref.load %arg1[%c1_107, %c14_108] : memref<5x32xf32, #tpu.memory_space<smem>>
    %237 = vector.broadcast %236 : f32 to vector<1x128xf32>
    %238 = arith.mulf %237, %0 : vector<1x128xf32>
    %239 = math.cos %238 : vector<1x128xf32>
    %240 = vector.broadcast %235 : f32 to vector<1x128xf32>
    %241 = arith.mulf %240, %239 : vector<1x128xf32>
    %242 = arith.addf %234, %241 : vector<1x128xf32>
    %c2_109 = arith.constant 2 : index
    %c15 = arith.constant 15 : index
    %243 = memref.load %arg1[%c2_109, %c15] : memref<5x32xf32, #tpu.memory_space<smem>>
    %c0_110 = arith.constant 0 : index
    %c15_111 = arith.constant 15 : index
    %244 = memref.load %arg1[%c0_110, %c15_111] : memref<5x32xf32, #tpu.memory_space<smem>>
    %245 = vector.broadcast %244 : f32 to vector<1x128xf32>
    %246 = arith.mulf %245, %0 : vector<1x128xf32>
    %247 = math.sin %246 : vector<1x128xf32>
    %248 = vector.broadcast %243 : f32 to vector<1x128xf32>
    %249 = arith.mulf %248, %247 : vector<1x128xf32>
    %250 = arith.addf %242, %249 : vector<1x128xf32>
    %c3_112 = arith.constant 3 : index
    %c15_113 = arith.constant 15 : index
    %251 = memref.load %arg1[%c3_112, %c15_113] : memref<5x32xf32, #tpu.memory_space<smem>>
    %c1_114 = arith.constant 1 : index
    %c15_115 = arith.constant 15 : index
    %252 = memref.load %arg1[%c1_114, %c15_115] : memref<5x32xf32, #tpu.memory_space<smem>>
    %253 = vector.broadcast %252 : f32 to vector<1x128xf32>
    %254 = arith.mulf %253, %0 : vector<1x128xf32>
    %255 = math.cos %254 : vector<1x128xf32>
    %256 = vector.broadcast %251 : f32 to vector<1x128xf32>
    %257 = arith.mulf %256, %255 : vector<1x128xf32>
    %258 = arith.addf %250, %257 : vector<1x128xf32>
    %c2_116 = arith.constant 2 : index
    %c16 = arith.constant 16 : index
    %259 = memref.load %arg1[%c2_116, %c16] : memref<5x32xf32, #tpu.memory_space<smem>>
    %c0_117 = arith.constant 0 : index
    %c16_118 = arith.constant 16 : index
    %260 = memref.load %arg1[%c0_117, %c16_118] : memref<5x32xf32, #tpu.memory_space<smem>>
    %261 = vector.broadcast %260 : f32 to vector<1x128xf32>
    %262 = arith.mulf %261, %0 : vector<1x128xf32>
    %263 = math.sin %262 : vector<1x128xf32>
    %264 = vector.broadcast %259 : f32 to vector<1x128xf32>
    %265 = arith.mulf %264, %263 : vector<1x128xf32>
    %266 = arith.addf %258, %265 : vector<1x128xf32>
    %c3_119 = arith.constant 3 : index
    %c16_120 = arith.constant 16 : index
    %267 = memref.load %arg1[%c3_119, %c16_120] : memref<5x32xf32, #tpu.memory_space<smem>>
    %c1_121 = arith.constant 1 : index
    %c16_122 = arith.constant 16 : index
    %268 = memref.load %arg1[%c1_121, %c16_122] : memref<5x32xf32, #tpu.memory_space<smem>>
    %269 = vector.broadcast %268 : f32 to vector<1x128xf32>
    %270 = arith.mulf %269, %0 : vector<1x128xf32>
    %271 = math.cos %270 : vector<1x128xf32>
    %272 = vector.broadcast %267 : f32 to vector<1x128xf32>
    %273 = arith.mulf %272, %271 : vector<1x128xf32>
    %274 = arith.addf %266, %273 : vector<1x128xf32>
    %c2_123 = arith.constant 2 : index
    %c17 = arith.constant 17 : index
    %275 = memref.load %arg1[%c2_123, %c17] : memref<5x32xf32, #tpu.memory_space<smem>>
    %c0_124 = arith.constant 0 : index
    %c17_125 = arith.constant 17 : index
    %276 = memref.load %arg1[%c0_124, %c17_125] : memref<5x32xf32, #tpu.memory_space<smem>>
    %277 = vector.broadcast %276 : f32 to vector<1x128xf32>
    %278 = arith.mulf %277, %0 : vector<1x128xf32>
    %279 = math.sin %278 : vector<1x128xf32>
    %280 = vector.broadcast %275 : f32 to vector<1x128xf32>
    %281 = arith.mulf %280, %279 : vector<1x128xf32>
    %282 = arith.addf %274, %281 : vector<1x128xf32>
    %c3_126 = arith.constant 3 : index
    %c17_127 = arith.constant 17 : index
    %283 = memref.load %arg1[%c3_126, %c17_127] : memref<5x32xf32, #tpu.memory_space<smem>>
    %c1_128 = arith.constant 1 : index
    %c17_129 = arith.constant 17 : index
    %284 = memref.load %arg1[%c1_128, %c17_129] : memref<5x32xf32, #tpu.memory_space<smem>>
    %285 = vector.broadcast %284 : f32 to vector<1x128xf32>
    %286 = arith.mulf %285, %0 : vector<1x128xf32>
    %287 = math.cos %286 : vector<1x128xf32>
    %288 = vector.broadcast %283 : f32 to vector<1x128xf32>
    %289 = arith.mulf %288, %287 : vector<1x128xf32>
    %290 = arith.addf %282, %289 : vector<1x128xf32>
    %c2_130 = arith.constant 2 : index
    %c18 = arith.constant 18 : index
    %291 = memref.load %arg1[%c2_130, %c18] : memref<5x32xf32, #tpu.memory_space<smem>>
    %c0_131 = arith.constant 0 : index
    %c18_132 = arith.constant 18 : index
    %292 = memref.load %arg1[%c0_131, %c18_132] : memref<5x32xf32, #tpu.memory_space<smem>>
    %293 = vector.broadcast %292 : f32 to vector<1x128xf32>
    %294 = arith.mulf %293, %0 : vector<1x128xf32>
    %295 = math.sin %294 : vector<1x128xf32>
    %296 = vector.broadcast %291 : f32 to vector<1x128xf32>
    %297 = arith.mulf %296, %295 : vector<1x128xf32>
    %298 = arith.addf %290, %297 : vector<1x128xf32>
    %c3_133 = arith.constant 3 : index
    %c18_134 = arith.constant 18 : index
    %299 = memref.load %arg1[%c3_133, %c18_134] : memref<5x32xf32, #tpu.memory_space<smem>>
    %c1_135 = arith.constant 1 : index
    %c18_136 = arith.constant 18 : index
    %300 = memref.load %arg1[%c1_135, %c18_136] : memref<5x32xf32, #tpu.memory_space<smem>>
    %301 = vector.broadcast %300 : f32 to vector<1x128xf32>
    %302 = arith.mulf %301, %0 : vector<1x128xf32>
    %303 = math.cos %302 : vector<1x128xf32>
    %304 = vector.broadcast %299 : f32 to vector<1x128xf32>
    %305 = arith.mulf %304, %303 : vector<1x128xf32>
    %306 = arith.addf %298, %305 : vector<1x128xf32>
    %c2_137 = arith.constant 2 : index
    %c19 = arith.constant 19 : index
    %307 = memref.load %arg1[%c2_137, %c19] : memref<5x32xf32, #tpu.memory_space<smem>>
    %c0_138 = arith.constant 0 : index
    %c19_139 = arith.constant 19 : index
    %308 = memref.load %arg1[%c0_138, %c19_139] : memref<5x32xf32, #tpu.memory_space<smem>>
    %309 = vector.broadcast %308 : f32 to vector<1x128xf32>
    %310 = arith.mulf %309, %0 : vector<1x128xf32>
    %311 = math.sin %310 : vector<1x128xf32>
    %312 = vector.broadcast %307 : f32 to vector<1x128xf32>
    %313 = arith.mulf %312, %311 : vector<1x128xf32>
    %314 = arith.addf %306, %313 : vector<1x128xf32>
    %c3_140 = arith.constant 3 : index
    %c19_141 = arith.constant 19 : index
    %315 = memref.load %arg1[%c3_140, %c19_141] : memref<5x32xf32, #tpu.memory_space<smem>>
    %c1_142 = arith.constant 1 : index
    %c19_143 = arith.constant 19 : index
    %316 = memref.load %arg1[%c1_142, %c19_143] : memref<5x32xf32, #tpu.memory_space<smem>>
    %317 = vector.broadcast %316 : f32 to vector<1x128xf32>
    %318 = arith.mulf %317, %0 : vector<1x128xf32>
    %319 = math.cos %318 : vector<1x128xf32>
    %320 = vector.broadcast %315 : f32 to vector<1x128xf32>
    %321 = arith.mulf %320, %319 : vector<1x128xf32>
    %322 = arith.addf %314, %321 : vector<1x128xf32>
    %c2_144 = arith.constant 2 : index
    %c20 = arith.constant 20 : index
    %323 = memref.load %arg1[%c2_144, %c20] : memref<5x32xf32, #tpu.memory_space<smem>>
    %c0_145 = arith.constant 0 : index
    %c20_146 = arith.constant 20 : index
    %324 = memref.load %arg1[%c0_145, %c20_146] : memref<5x32xf32, #tpu.memory_space<smem>>
    %325 = vector.broadcast %324 : f32 to vector<1x128xf32>
    %326 = arith.mulf %325, %0 : vector<1x128xf32>
    %327 = math.sin %326 : vector<1x128xf32>
    %328 = vector.broadcast %323 : f32 to vector<1x128xf32>
    %329 = arith.mulf %328, %327 : vector<1x128xf32>
    %330 = arith.addf %322, %329 : vector<1x128xf32>
    %c3_147 = arith.constant 3 : index
    %c20_148 = arith.constant 20 : index
    %331 = memref.load %arg1[%c3_147, %c20_148] : memref<5x32xf32, #tpu.memory_space<smem>>
    %c1_149 = arith.constant 1 : index
    %c20_150 = arith.constant 20 : index
    %332 = memref.load %arg1[%c1_149, %c20_150] : memref<5x32xf32, #tpu.memory_space<smem>>
    %333 = vector.broadcast %332 : f32 to vector<1x128xf32>
    %334 = arith.mulf %333, %0 : vector<1x128xf32>
    %335 = math.cos %334 : vector<1x128xf32>
    %336 = vector.broadcast %331 : f32 to vector<1x128xf32>
    %337 = arith.mulf %336, %335 : vector<1x128xf32>
    %338 = arith.addf %330, %337 : vector<1x128xf32>
    %c2_151 = arith.constant 2 : index
    %c21 = arith.constant 21 : index
    %339 = memref.load %arg1[%c2_151, %c21] : memref<5x32xf32, #tpu.memory_space<smem>>
    %c0_152 = arith.constant 0 : index
    %c21_153 = arith.constant 21 : index
    %340 = memref.load %arg1[%c0_152, %c21_153] : memref<5x32xf32, #tpu.memory_space<smem>>
    %341 = vector.broadcast %340 : f32 to vector<1x128xf32>
    %342 = arith.mulf %341, %0 : vector<1x128xf32>
    %343 = math.sin %342 : vector<1x128xf32>
    %344 = vector.broadcast %339 : f32 to vector<1x128xf32>
    %345 = arith.mulf %344, %343 : vector<1x128xf32>
    %346 = arith.addf %338, %345 : vector<1x128xf32>
    %c3_154 = arith.constant 3 : index
    %c21_155 = arith.constant 21 : index
    %347 = memref.load %arg1[%c3_154, %c21_155] : memref<5x32xf32, #tpu.memory_space<smem>>
    %c1_156 = arith.constant 1 : index
    %c21_157 = arith.constant 21 : index
    %348 = memref.load %arg1[%c1_156, %c21_157] : memref<5x32xf32, #tpu.memory_space<smem>>
    %349 = vector.broadcast %348 : f32 to vector<1x128xf32>
    %350 = arith.mulf %349, %0 : vector<1x128xf32>
    %351 = math.cos %350 : vector<1x128xf32>
    %352 = vector.broadcast %347 : f32 to vector<1x128xf32>
    %353 = arith.mulf %352, %351 : vector<1x128xf32>
    %354 = arith.addf %346, %353 : vector<1x128xf32>
    %c2_158 = arith.constant 2 : index
    %c22 = arith.constant 22 : index
    %355 = memref.load %arg1[%c2_158, %c22] : memref<5x32xf32, #tpu.memory_space<smem>>
    %c0_159 = arith.constant 0 : index
    %c22_160 = arith.constant 22 : index
    %356 = memref.load %arg1[%c0_159, %c22_160] : memref<5x32xf32, #tpu.memory_space<smem>>
    %357 = vector.broadcast %356 : f32 to vector<1x128xf32>
    %358 = arith.mulf %357, %0 : vector<1x128xf32>
    %359 = math.sin %358 : vector<1x128xf32>
    %360 = vector.broadcast %355 : f32 to vector<1x128xf32>
    %361 = arith.mulf %360, %359 : vector<1x128xf32>
    %362 = arith.addf %354, %361 : vector<1x128xf32>
    %c3_161 = arith.constant 3 : index
    %c22_162 = arith.constant 22 : index
    %363 = memref.load %arg1[%c3_161, %c22_162] : memref<5x32xf32, #tpu.memory_space<smem>>
    %c1_163 = arith.constant 1 : index
    %c22_164 = arith.constant 22 : index
    %364 = memref.load %arg1[%c1_163, %c22_164] : memref<5x32xf32, #tpu.memory_space<smem>>
    %365 = vector.broadcast %364 : f32 to vector<1x128xf32>
    %366 = arith.mulf %365, %0 : vector<1x128xf32>
    %367 = math.cos %366 : vector<1x128xf32>
    %368 = vector.broadcast %363 : f32 to vector<1x128xf32>
    %369 = arith.mulf %368, %367 : vector<1x128xf32>
    %370 = arith.addf %362, %369 : vector<1x128xf32>
    %c2_165 = arith.constant 2 : index
    %c23 = arith.constant 23 : index
    %371 = memref.load %arg1[%c2_165, %c23] : memref<5x32xf32, #tpu.memory_space<smem>>
    %c0_166 = arith.constant 0 : index
    %c23_167 = arith.constant 23 : index
    %372 = memref.load %arg1[%c0_166, %c23_167] : memref<5x32xf32, #tpu.memory_space<smem>>
    %373 = vector.broadcast %372 : f32 to vector<1x128xf32>
    %374 = arith.mulf %373, %0 : vector<1x128xf32>
    %375 = math.sin %374 : vector<1x128xf32>
    %376 = vector.broadcast %371 : f32 to vector<1x128xf32>
    %377 = arith.mulf %376, %375 : vector<1x128xf32>
    %378 = arith.addf %370, %377 : vector<1x128xf32>
    %c3_168 = arith.constant 3 : index
    %c23_169 = arith.constant 23 : index
    %379 = memref.load %arg1[%c3_168, %c23_169] : memref<5x32xf32, #tpu.memory_space<smem>>
    %c1_170 = arith.constant 1 : index
    %c23_171 = arith.constant 23 : index
    %380 = memref.load %arg1[%c1_170, %c23_171] : memref<5x32xf32, #tpu.memory_space<smem>>
    %381 = vector.broadcast %380 : f32 to vector<1x128xf32>
    %382 = arith.mulf %381, %0 : vector<1x128xf32>
    %383 = math.cos %382 : vector<1x128xf32>
    %384 = vector.broadcast %379 : f32 to vector<1x128xf32>
    %385 = arith.mulf %384, %383 : vector<1x128xf32>
    %386 = arith.addf %378, %385 : vector<1x128xf32>
    %c2_172 = arith.constant 2 : index
    %c24 = arith.constant 24 : index
    %387 = memref.load %arg1[%c2_172, %c24] : memref<5x32xf32, #tpu.memory_space<smem>>
    %c0_173 = arith.constant 0 : index
    %c24_174 = arith.constant 24 : index
    %388 = memref.load %arg1[%c0_173, %c24_174] : memref<5x32xf32, #tpu.memory_space<smem>>
    %389 = vector.broadcast %388 : f32 to vector<1x128xf32>
    %390 = arith.mulf %389, %0 : vector<1x128xf32>
    %391 = math.sin %390 : vector<1x128xf32>
    %392 = vector.broadcast %387 : f32 to vector<1x128xf32>
    %393 = arith.mulf %392, %391 : vector<1x128xf32>
    %394 = arith.addf %386, %393 : vector<1x128xf32>
    %c3_175 = arith.constant 3 : index
    %c24_176 = arith.constant 24 : index
    %395 = memref.load %arg1[%c3_175, %c24_176] : memref<5x32xf32, #tpu.memory_space<smem>>
    %c1_177 = arith.constant 1 : index
    %c24_178 = arith.constant 24 : index
    %396 = memref.load %arg1[%c1_177, %c24_178] : memref<5x32xf32, #tpu.memory_space<smem>>
    %397 = vector.broadcast %396 : f32 to vector<1x128xf32>
    %398 = arith.mulf %397, %0 : vector<1x128xf32>
    %399 = math.cos %398 : vector<1x128xf32>
    %400 = vector.broadcast %395 : f32 to vector<1x128xf32>
    %401 = arith.mulf %400, %399 : vector<1x128xf32>
    %402 = arith.addf %394, %401 : vector<1x128xf32>
    %c2_179 = arith.constant 2 : index
    %c25 = arith.constant 25 : index
    %403 = memref.load %arg1[%c2_179, %c25] : memref<5x32xf32, #tpu.memory_space<smem>>
    %c0_180 = arith.constant 0 : index
    %c25_181 = arith.constant 25 : index
    %404 = memref.load %arg1[%c0_180, %c25_181] : memref<5x32xf32, #tpu.memory_space<smem>>
    %405 = vector.broadcast %404 : f32 to vector<1x128xf32>
    %406 = arith.mulf %405, %0 : vector<1x128xf32>
    %407 = math.sin %406 : vector<1x128xf32>
    %408 = vector.broadcast %403 : f32 to vector<1x128xf32>
    %409 = arith.mulf %408, %407 : vector<1x128xf32>
    %410 = arith.addf %402, %409 : vector<1x128xf32>
    %c3_182 = arith.constant 3 : index
    %c25_183 = arith.constant 25 : index
    %411 = memref.load %arg1[%c3_182, %c25_183] : memref<5x32xf32, #tpu.memory_space<smem>>
    %c1_184 = arith.constant 1 : index
    %c25_185 = arith.constant 25 : index
    %412 = memref.load %arg1[%c1_184, %c25_185] : memref<5x32xf32, #tpu.memory_space<smem>>
    %413 = vector.broadcast %412 : f32 to vector<1x128xf32>
    %414 = arith.mulf %413, %0 : vector<1x128xf32>
    %415 = math.cos %414 : vector<1x128xf32>
    %416 = vector.broadcast %411 : f32 to vector<1x128xf32>
    %417 = arith.mulf %416, %415 : vector<1x128xf32>
    %418 = arith.addf %410, %417 : vector<1x128xf32>
    %c2_186 = arith.constant 2 : index
    %c26 = arith.constant 26 : index
    %419 = memref.load %arg1[%c2_186, %c26] : memref<5x32xf32, #tpu.memory_space<smem>>
    %c0_187 = arith.constant 0 : index
    %c26_188 = arith.constant 26 : index
    %420 = memref.load %arg1[%c0_187, %c26_188] : memref<5x32xf32, #tpu.memory_space<smem>>
    %421 = vector.broadcast %420 : f32 to vector<1x128xf32>
    %422 = arith.mulf %421, %0 : vector<1x128xf32>
    %423 = math.sin %422 : vector<1x128xf32>
    %424 = vector.broadcast %419 : f32 to vector<1x128xf32>
    %425 = arith.mulf %424, %423 : vector<1x128xf32>
    %426 = arith.addf %418, %425 : vector<1x128xf32>
    %c3_189 = arith.constant 3 : index
    %c26_190 = arith.constant 26 : index
    %427 = memref.load %arg1[%c3_189, %c26_190] : memref<5x32xf32, #tpu.memory_space<smem>>
    %c1_191 = arith.constant 1 : index
    %c26_192 = arith.constant 26 : index
    %428 = memref.load %arg1[%c1_191, %c26_192] : memref<5x32xf32, #tpu.memory_space<smem>>
    %429 = vector.broadcast %428 : f32 to vector<1x128xf32>
    %430 = arith.mulf %429, %0 : vector<1x128xf32>
    %431 = math.cos %430 : vector<1x128xf32>
    %432 = vector.broadcast %427 : f32 to vector<1x128xf32>
    %433 = arith.mulf %432, %431 : vector<1x128xf32>
    %434 = arith.addf %426, %433 : vector<1x128xf32>
    %c2_193 = arith.constant 2 : index
    %c27 = arith.constant 27 : index
    %435 = memref.load %arg1[%c2_193, %c27] : memref<5x32xf32, #tpu.memory_space<smem>>
    %c0_194 = arith.constant 0 : index
    %c27_195 = arith.constant 27 : index
    %436 = memref.load %arg1[%c0_194, %c27_195] : memref<5x32xf32, #tpu.memory_space<smem>>
    %437 = vector.broadcast %436 : f32 to vector<1x128xf32>
    %438 = arith.mulf %437, %0 : vector<1x128xf32>
    %439 = math.sin %438 : vector<1x128xf32>
    %440 = vector.broadcast %435 : f32 to vector<1x128xf32>
    %441 = arith.mulf %440, %439 : vector<1x128xf32>
    %442 = arith.addf %434, %441 : vector<1x128xf32>
    %c3_196 = arith.constant 3 : index
    %c27_197 = arith.constant 27 : index
    %443 = memref.load %arg1[%c3_196, %c27_197] : memref<5x32xf32, #tpu.memory_space<smem>>
    %c1_198 = arith.constant 1 : index
    %c27_199 = arith.constant 27 : index
    %444 = memref.load %arg1[%c1_198, %c27_199] : memref<5x32xf32, #tpu.memory_space<smem>>
    %445 = vector.broadcast %444 : f32 to vector<1x128xf32>
    %446 = arith.mulf %445, %0 : vector<1x128xf32>
    %447 = math.cos %446 : vector<1x128xf32>
    %448 = vector.broadcast %443 : f32 to vector<1x128xf32>
    %449 = arith.mulf %448, %447 : vector<1x128xf32>
    %450 = arith.addf %442, %449 : vector<1x128xf32>
    %c2_200 = arith.constant 2 : index
    %c28 = arith.constant 28 : index
    %451 = memref.load %arg1[%c2_200, %c28] : memref<5x32xf32, #tpu.memory_space<smem>>
    %c0_201 = arith.constant 0 : index
    %c28_202 = arith.constant 28 : index
    %452 = memref.load %arg1[%c0_201, %c28_202] : memref<5x32xf32, #tpu.memory_space<smem>>
    %453 = vector.broadcast %452 : f32 to vector<1x128xf32>
    %454 = arith.mulf %453, %0 : vector<1x128xf32>
    %455 = math.sin %454 : vector<1x128xf32>
    %456 = vector.broadcast %451 : f32 to vector<1x128xf32>
    %457 = arith.mulf %456, %455 : vector<1x128xf32>
    %458 = arith.addf %450, %457 : vector<1x128xf32>
    %c3_203 = arith.constant 3 : index
    %c28_204 = arith.constant 28 : index
    %459 = memref.load %arg1[%c3_203, %c28_204] : memref<5x32xf32, #tpu.memory_space<smem>>
    %c1_205 = arith.constant 1 : index
    %c28_206 = arith.constant 28 : index
    %460 = memref.load %arg1[%c1_205, %c28_206] : memref<5x32xf32, #tpu.memory_space<smem>>
    %461 = vector.broadcast %460 : f32 to vector<1x128xf32>
    %462 = arith.mulf %461, %0 : vector<1x128xf32>
    %463 = math.cos %462 : vector<1x128xf32>
    %464 = vector.broadcast %459 : f32 to vector<1x128xf32>
    %465 = arith.mulf %464, %463 : vector<1x128xf32>
    %466 = arith.addf %458, %465 : vector<1x128xf32>
    %c2_207 = arith.constant 2 : index
    %c29 = arith.constant 29 : index
    %467 = memref.load %arg1[%c2_207, %c29] : memref<5x32xf32, #tpu.memory_space<smem>>
    %c0_208 = arith.constant 0 : index
    %c29_209 = arith.constant 29 : index
    %468 = memref.load %arg1[%c0_208, %c29_209] : memref<5x32xf32, #tpu.memory_space<smem>>
    %469 = vector.broadcast %468 : f32 to vector<1x128xf32>
    %470 = arith.mulf %469, %0 : vector<1x128xf32>
    %471 = math.sin %470 : vector<1x128xf32>
    %472 = vector.broadcast %467 : f32 to vector<1x128xf32>
    %473 = arith.mulf %472, %471 : vector<1x128xf32>
    %474 = arith.addf %466, %473 : vector<1x128xf32>
    %c3_210 = arith.constant 3 : index
    %c29_211 = arith.constant 29 : index
    %475 = memref.load %arg1[%c3_210, %c29_211] : memref<5x32xf32, #tpu.memory_space<smem>>
    %c1_212 = arith.constant 1 : index
    %c29_213 = arith.constant 29 : index
    %476 = memref.load %arg1[%c1_212, %c29_213] : memref<5x32xf32, #tpu.memory_space<smem>>
    %477 = vector.broadcast %476 : f32 to vector<1x128xf32>
    %478 = arith.mulf %477, %0 : vector<1x128xf32>
    %479 = math.cos %478 : vector<1x128xf32>
    %480 = vector.broadcast %475 : f32 to vector<1x128xf32>
    %481 = arith.mulf %480, %479 : vector<1x128xf32>
    %482 = arith.addf %474, %481 : vector<1x128xf32>
    %c2_214 = arith.constant 2 : index
    %c30 = arith.constant 30 : index
    %483 = memref.load %arg1[%c2_214, %c30] : memref<5x32xf32, #tpu.memory_space<smem>>
    %c0_215 = arith.constant 0 : index
    %c30_216 = arith.constant 30 : index
    %484 = memref.load %arg1[%c0_215, %c30_216] : memref<5x32xf32, #tpu.memory_space<smem>>
    %485 = vector.broadcast %484 : f32 to vector<1x128xf32>
    %486 = arith.mulf %485, %0 : vector<1x128xf32>
    %487 = math.sin %486 : vector<1x128xf32>
    %488 = vector.broadcast %483 : f32 to vector<1x128xf32>
    %489 = arith.mulf %488, %487 : vector<1x128xf32>
    %490 = arith.addf %482, %489 : vector<1x128xf32>
    %c3_217 = arith.constant 3 : index
    %c30_218 = arith.constant 30 : index
    %491 = memref.load %arg1[%c3_217, %c30_218] : memref<5x32xf32, #tpu.memory_space<smem>>
    %c1_219 = arith.constant 1 : index
    %c30_220 = arith.constant 30 : index
    %492 = memref.load %arg1[%c1_219, %c30_220] : memref<5x32xf32, #tpu.memory_space<smem>>
    %493 = vector.broadcast %492 : f32 to vector<1x128xf32>
    %494 = arith.mulf %493, %0 : vector<1x128xf32>
    %495 = math.cos %494 : vector<1x128xf32>
    %496 = vector.broadcast %491 : f32 to vector<1x128xf32>
    %497 = arith.mulf %496, %495 : vector<1x128xf32>
    %498 = arith.addf %490, %497 : vector<1x128xf32>
    %c2_221 = arith.constant 2 : index
    %c31 = arith.constant 31 : index
    %499 = memref.load %arg1[%c2_221, %c31] : memref<5x32xf32, #tpu.memory_space<smem>>
    %c0_222 = arith.constant 0 : index
    %c31_223 = arith.constant 31 : index
    %500 = memref.load %arg1[%c0_222, %c31_223] : memref<5x32xf32, #tpu.memory_space<smem>>
    %501 = vector.broadcast %500 : f32 to vector<1x128xf32>
    %502 = arith.mulf %501, %0 : vector<1x128xf32>
    %503 = math.sin %502 : vector<1x128xf32>
    %504 = vector.broadcast %499 : f32 to vector<1x128xf32>
    %505 = arith.mulf %504, %503 : vector<1x128xf32>
    %506 = arith.addf %498, %505 : vector<1x128xf32>
    %c3_224 = arith.constant 3 : index
    %c31_225 = arith.constant 31 : index
    %507 = memref.load %arg1[%c3_224, %c31_225] : memref<5x32xf32, #tpu.memory_space<smem>>
    %c1_226 = arith.constant 1 : index
    %c31_227 = arith.constant 31 : index
    %508 = memref.load %arg1[%c1_226, %c31_227] : memref<5x32xf32, #tpu.memory_space<smem>>
    %509 = vector.broadcast %508 : f32 to vector<1x128xf32>
    %510 = arith.mulf %509, %0 : vector<1x128xf32>
    %511 = math.cos %510 : vector<1x128xf32>
    %512 = vector.broadcast %507 : f32 to vector<1x128xf32>
    %513 = arith.mulf %512, %511 : vector<1x128xf32>
    %514 = arith.addf %506, %513 : vector<1x128xf32>
    %c0_228 = arith.constant 0 : index
    %c0_229 = arith.constant 0 : index
    %515 = vector.load %arg3[%c0_228, %c0_229] : memref<1x128xf32, #tpu.memory_space<vmem>>, vector<1x128xf32>
    tpu.vector_store %arg3[%c0_228, %c0_229], %514 {strides = array<i32>} : memref<1x128xf32, #tpu.memory_space<vmem>>, vector<1x128xf32>,
    return
  }
  func.func @transform_0(%arg0: i32) -> (i32, i32) {
    %c0_i32 = arith.constant 0 : i32
    %c0_i32_0 = arith.constant 0 : i32
    %c0_i32_1 = arith.constant 0 : i32
    return %c0_i32, %c0_i32_0 : i32, i32
  }
  func.func @transform_1(%arg0: i32) -> (i32, i32) {
    %c0_i32 = arith.constant 0 : i32
    %c0_i32_0 = arith.constant 0 : i32
    return %arg0, %c0_i32 : i32, i32
  }
  func.func @transform_2(%arg0: i32) -> (i32, i32) {
    %c0_i32 = arith.constant 0 : i32
    %c0_i32_0 = arith.constant 0 : i32
    return %arg0, %c0_i32 : i32, i32
  }
}

</mosaic_0001>

<llo_original>
// kernel: tpu_custom_call.1
$region0: #{tpu_custom_call.1}
  #allocation0 [shape = 'u32[]', space=smem, size = 0x4, offset = 0x4, fixed_abs, tag = 'smem constant byte address 0x4 - core index']
  #allocation1 [shape = 'u32[144,128]{1,0:T(1,128)}', space=vmem, size = 0x12000, scoped, tag = 'internal scratch']
  %s0 = inlined_call_operand.hbm [shape: f32[5,32], index: 0, kind: input, shape index: {}]
  %s1 = inlined_call_operand.vmem [shape: f32[1,128], index: 1, kind: input, shape index: {}]
  %s2 = inlined_call_operand.hbm [shape: f32[1,128], index: 2, kind: output, shape index: {}]
  %s3 = sld [smem:[#allocation0]]
  $region22: #{tpu_custom_call.1} parent=0
    _
  %s5 = ssub.s32 1, %s3
  %s6 = scalar_select 0, %s5, %s3
  $region1: #{tpu_custom_call.1} parent=0
    #allocation2 [shape = 'u8[4096]{0}', space=smem, size = 0x1000, scoped, tag = 'input window, operand 0, single buffered']
    #allocation3 [shape = 's32[1]{0}', space=sflag, size = 0x4, scoped, tag = 'scoped memory for tpu_custom_call.1']
    #allocation4 [shape = 's32[1]{0}', space=sflag, size = 0x4, scoped, tag = 'scoped memory for tpu_custom_call.1']
    #allocation5 [shape = 'u8[512]{0}', space=vmem, size = 0x400, scoped, tag = 'output window, operand 0, single buffered']
    %7 = vsyncpa [#allocation4], 0
    %8 = vsyncpa [#allocation3], 0
    // Predicated region
    $region2: #{tpu_custom_call.1} parent=1 // pred_check
      _
    $region3: #{tpu_custom_call.1} parent=1 // pred_check_branch
      %10 = sbr.rel (0) target = $region5
    $region4: #{tpu_custom_call.1} parent=1 // pred_region
      %s12 = ssub.s32 128, 128
      %13 = vsyncadd [#allocation4], %s12
      %16 = dma.hbm_to_smem %s0, 128, [#allocation2], [#allocation4]
    $region5: #{tpu_custom_call.1} parent=1 // pred_fallthru
      _
    // Predicated region
    $region6: #{tpu_custom_call.1} parent=1 // pred_check
      _
    $region7: #{tpu_custom_call.1} parent=1 // pred_check_branch
      %18 = sbr.rel (0) target = $region9
    $region8: #{tpu_custom_call.1} parent=1 // pred_region
      _
    $region9: #{tpu_custom_call.1} parent=1 // pred_fallthru
      _
    // Predicated region
    $region10: #{tpu_custom_call.1} parent=1 // pred_check
      _
    $region11: #{tpu_custom_call.1} parent=1 // pred_check_branch
      %20 = sbr.rel (0) target = $region13
    $region12: #{tpu_custom_call.1} parent=1 // pred_region
      %21 = dma.done [#allocation4], 128
    $region13: #{tpu_custom_call.1} parent=1 // pred_fallthru
      _
    %22 = sfence
    %v23 = vld [vmem:[%s1] sm:$0x1]
    %s24 = sld [smem:[#allocation2 + $0x200]]
    %v25 = vstv %s24
    %s26 = sld [smem:[#allocation2 + $0x100]]
    %s27 = sld [smem:[#allocation2]]
    %v28 = vstv %s27
    %v29 = vmul.f32 %v28, %v23
    %v30 = vand.u32 2147483647, %v29
    %vm31 = vcmp.le.f32.partialorder %v30, 0.7853982
    %vm32 = vcmp.lt.s32.totalorder %v29, 0
    %v33 = vand.u32 %v29, 2139095040
    %v34 = vshrl.u32 %v33, 23
    %v35 = vsub.s32 %v34, 127
    %v36 = vand.u32 2147483647, %v29
    %v37 = vand.u32 %v36, 8388607
    %v38 = vor.u32 %v37, 8388608
    %v39 = vsub.s32 0, %v38
    %v40 = vadd.s32 %v35, 1
    %vm41 = vcmp.gt.s32.totalorder %v40, 0
    %v42 = vsel %vm41, %v40, 0
    %v43 = vshrl.u32 %v42, 5
    %v44 = vand.u32 %v42, 31
    %v45 = vsub.s32 32, %v44
    %v46 = vshrl.u32 683565275, %v45
    %v47 = vshll.u32 683565275, %v44
    %v48 = vshrl.u32 2475754826, %v45
    %v49 = vor.u32 %v47, %v48
    %v50 = vshll.u32 2475754826, %v44
    %v51 = vshrl.u32 2131351028, %v45
    %v52 = vor.u32 %v50, %v51
    %v53 = vshll.u32 2131351028, %v44
    %v54 = vshrl.u32 2102212464, %v45
    %v55 = vor.u32 %v53, %v54
    %v56 = vshll.u32 2102212464, %v44
    %v57 = vshrl.u32 920167782, %v45
    %v58 = vor.u32 %v56, %v57
    %v59 = vshll.u32 920167782, %v44
    %v60 = vshrl.u32 1326507024, %v45
    %v61 = vor.u32 %v59, %v60
    %vm62 = vcmp.lt.s32.totalorder %v43, 1
    %vm63 = vcmp.lt.s32.totalorder %v43, 2
    %vm64 = vcmp.lt.s32.totalorder %v43, 3
    %vm65 = vcmp.lt.s32.totalorder %v43, 4
    %v66 = vsel %vm62, %v46, %v49
    %v67 = vsel %vm65, %v55, 2102212464
    %v68 = vsel %vm64, %v52, %v67
    %v69 = vsel %vm63, %v66, %v68
    %v70 = vsel %vm62, %v49, %v52
    %v71 = vsel %vm65, %v58, 920167782
    %v72 = vsel %vm64, %v55, %v71
    %v73 = vsel %vm63, %v70, %v72
    %v74 = vsel %vm62, %v52, %v55
    %v75 = vsel %vm65, %v61, 1326507024
    %v76 = vsel %vm64, %v58, %v75
    %v77 = vsel %vm63, %v74, %v76
    %v78 = vshll.u32 %v38, 8
    %v79 = vmul.u32.u64.compose %v78, %v77
    %v80 = vextract.low.u32 %v79
    %v81 = vextract.high.u32 %v79
    %v82 = vmul.u32.u64.compose %v78, %v73
    %v83 = vextract.low.u32 %v82
    %v84 = vextract.high.u32 %v82
    %v85 = vmul.u32 %v78, %v69
    %v86 = vadd.s32 %v81, %v83
    %vm87 = vc.u32 %v81, %v83
    %v88 = vadd.s32 %v84, 1
    %v89 = vsel %vm87, %v88, %v84
    %v90 = vadd.s32 %v85, %v89
    %v91 = vadd.s32 %v90, 536870912
    %v92 = vshrl.u32 %v91, 30
    %v93 = vshll.u32 %v92, 30
    %v94 = vsub.s32 %v90, %v93
    %vm95 = vcmp.lt.s32.totalorder %v94, 0
    %v96 = vsub.s32 0, %v94
    %v97 = vsel %vm95, %v96, %v94
    %v98 = vclz %v97
    %v99 = vsub.s32 %v98, 2
    %vm100 = vcmp.gt.s32.totalorder 0, %v99
    %v101 = vsel %vm100, 0, %v99
    %v102 = vsub.s32 32, %v101
    %v103 = vshll.u32 %v94, %v101
    %v104 = vshrl.u32 %v86, %v102
    %v105 = vor.u32 %v103, %v104
    %v106 = vsub.s32 4294967266, %v101
    %v107 = vadd.s32 %v106, 127
    %v108 = vshll.u32 %v107, 23
    %v109 = vor.u32 4788187, %v108
    %v110 = vand.u32 2147483647, %v109
    %v112 = vcvt.s32.f32 %v105
    %v113 = vmul.f32 %v112, %v110
    %v114 = vxor.u32 %v113, 2147483648
    %v115 = vsel %vm32, %v114, %v113
    %v116 = vsub.s32 4, %v92
    %v117 = vsel %vm32, %v116, %v92
    %v118 = vsel %vm31, %v29, %v115
    %v119 = vsel %vm31, 0, %v117
    %v120 = vcosq.f32.pop %v118
    %v121 = vsinq.f32.pop %v118
    %vm122 = vweird.f32 %v29
    %v123 = vadd.s32 %v119, 3
    %v124 = vand.u32 %v123, 3
    %vm125 = vcmp.lt.s32.totalorder %v124, 2
    %vm126 = vcmp.eq.s32.totalorder %v124, 0
    %v127 = vxor.u32 %v121, 2147483648
    %v128 = vsel %vm126, %v120, %v127
    %vm129 = vcmp.eq.s32.totalorder %v124, 2
    %v130 = vxor.u32 %v120, 2147483648
    %v131 = vsel %vm129, %v130, %v121
    %v132 = vsel %vm125, %v128, %v131
    %v133 = vsel %vm122, nan, %v132
    %v134 = vstv %s26
    %v135 = vmul.f32 %v134, %v133
    %v136 = vadd.f32 %v25, %v135
    %s137 = sld [smem:[#allocation2 + $0x180]]
    %s138 = sld [smem:[#allocation2 + $0x80]]
    %v139 = vstv %s138
    %v140 = vmul.f32 %v139, %v23
    %v141 = vand.u32 2147483647, %v140
    %vm142 = vcmp.le.f32.partialorder %v141, 0.7853982
    %vm143 = vcmp.lt.s32.totalorder %v140, 0
    %v144 = vand.u32 %v140, 2139095040
    %v145 = vshrl.u32 %v144, 23
    %v146 = vsub.s32 %v145, 127
    %v147 = vand.u32 2147483647, %v140
    %v148 = vand.u32 %v147, 8388607
    %v149 = vor.u32 %v148, 8388608
    %v150 = vsub.s32 0, %v149
    %v151 = vadd.s32 %v146, 1
    %vm152 = vcmp.gt.s32.totalorder %v151, 0
    %v153 = vsel %vm152, %v151, 0
    %v154 = vshrl.u32 %v153, 5
    %v155 = vand.u32 %v153, 31
    %v156 = vsub.s32 32, %v155
    %v157 = vshrl.u32 683565275, %v156
    %v158 = vshll.u32 683565275, %v155
    %v159 = vshrl.u32 2475754826, %v156
    %v160 = vor.u32 %v158, %v159
    %v161 = vshll.u32 2475754826, %v155
    %v162 = vshrl.u32 2131351028, %v156
    %v163 = vor.u32 %v161, %v162
    %v164 = vshll.u32 2131351028, %v155
    %v165 = vshrl.u32 2102212464, %v156
    %v166 = vor.u32 %v164, %v165
    %v167 = vshll.u32 2102212464, %v155
    %v168 = vshrl.u32 920167782, %v156
    %v169 = vor.u32 %v167, %v168
    %v170 = vshll.u32 920167782, %v155
    %v171 = vshrl.u32 1326507024, %v156
    %v172 = vor.u32 %v170, %v171
    %vm173 = vcmp.lt.s32.totalorder %v154, 1
    %vm174 = vcmp.lt.s32.totalorder %v154, 2
    %vm175 = vcmp.lt.s32.totalorder %v154, 3
    %vm176 = vcmp.lt.s32.totalorder %v154, 4
    %v177 = vsel %vm173, %v157, %v160
    %v178 = vsel %vm176, %v166, 2102212464
    %v179 = vsel %vm175, %v163, %v178
    %v180 = vsel %vm174, %v177, %v179
    %v181 = vsel %vm173, %v160, %v163
    %v182 = vsel %vm176, %v169, 920167782
    %v183 = vsel %vm175, %v166, %v182
    %v184 = vsel %vm174, %v181, %v183
    %v185 = vsel %vm173, %v163, %v166
    %v186 = vsel %vm176, %v172, 1326507024
    %v187 = vsel %vm175, %v169, %v186
    %v188 = vsel %vm174, %v185, %v187
    %v189 = vshll.u32 %v149, 8
    %v190 = vmul.u32.u64.compose %v189, %v188
    %v191 = vextract.low.u32 %v190
    %v192 = vextract.high.u32 %v190
    %v193 = vmul.u32.u64.compose %v189, %v184
    %v194 = vextract.low.u32 %v193
    %v195 = vextract.high.u32 %v193
    %v196 = vmul.u32 %v189, %v180
    %v197 = vadd.s32 %v192, %v194
    %vm198 = vc.u32 %v192, %v194
    %v199 = vadd.s32 %v195, 1
    %v200 = vsel %vm198, %v199, %v195
    %v201 = vadd.s32 %v196, %v200
    %v202 = vadd.s32 %v201, 536870912
    %v203 = vshrl.u32 %v202, 30
    %v204 = vshll.u32 %v203, 30
    %v205 = vsub.s32 %v201, %v204
    %vm206 = vcmp.lt.s32.totalorder %v205, 0
    %v207 = vsub.s32 0, %v205
    %v208 = vsel %vm206, %v207, %v205
    %v209 = vclz %v208
    %v210 = vsub.s32 %v209, 2
    %vm211 = vcmp.gt.s32.totalorder 0, %v210
    %v212 = vsel %vm211, 0, %v210
    %v213 = vsub.s32 32, %v212
    %v214 = vshll.u32 %v205, %v212
    %v215 = vshrl.u32 %v197, %v213
    %v216 = vor.u32 %v214, %v215
    %v217 = vsub.s32 4294967266, %v212
    %v218 = vadd.s32 %v217, 127
    %v219 = vshll.u32 %v218, 23
    %v220 = vor.u32 4788187, %v219
    %v221 = vand.u32 2147483647, %v220
    %v223 = vcvt.s32.f32 %v216
    %v224 = vmul.f32 %v223, %v221
    %v225 = vxor.u32 %v224, 2147483648
    %v226 = vsel %vm143, %v225, %v224
    %v227 = vsub.s32 4, %v203
    %v228 = vsel %vm143, %v227, %v203
    %v229 = vsel %vm142, %v140, %v226
    %v230 = vsel %vm142, 0, %v228
    %v231 = vcosq.f32.pop %v229
    %v232 = vsinq.f32.pop %v229
    %vm233 = vweird.f32 %v140
    %v234 = vand.u32 %v230, 3
    %vm235 = vcmp.lt.s32.totalorder %v234, 2
    %vm236 = vcmp.eq.s32.totalorder %v234, 0
    %v237 = vxor.u32 %v232, 2147483648
    %v238 = vsel %vm236, %v231, %v237
    %vm239 = vcmp.eq.s32.totalorder %v234, 2
    %v240 = vxor.u32 %v231, 2147483648
    %v241 = vsel %vm239, %v240, %v232
    %v242 = vsel %vm235, %v238, %v241
    %v243 = vsel %vm233, nan, %v242
    %v244 = vstv %s137
    %v245 = vmul.f32 %v244, %v243
    %v246 = vadd.f32 %v136, %v245
    %s247 = sld [smem:[#allocation2 + $0x101]]
    %s248 = sld [smem:[#allocation2 + $0x1]]
    %v249 = vstv %s248
    %v250 = vmul.f32 %v249, %v23
    %v251 = vand.u32 2147483647, %v250
    %vm252 = vcmp.le.f32.partialorder %v251, 0.7853982
    %vm253 = vcmp.lt.s32.totalorder %v250, 0
    %v254 = vand.u32 %v250, 2139095040
    %v255 = vshrl.u32 %v254, 23
    %v256 = vsub.s32 %v255, 127
    %v257 = vand.u32 2147483647, %v250
    %v258 = vand.u32 %v257, 8388607
    %v259 = vor.u32 %v258, 8388608
    %v260 = vsub.s32 0, %v259
    %v261 = vadd.s32 %v256, 1
    %vm262 = vcmp.gt.s32.totalorder %v261, 0
    %v263 = vsel %vm262, %v261, 0
    %v264 = vshrl.u32 %v263, 5
    %v265 = vand.u32 %v263, 31
    %v266 = vsub.s32 32, %v265
    %v267 = vshrl.u32 683565275, %v266
    %v268 = vshll.u32 683565275, %v265
    %v269 = vshrl.u32 2475754826, %v266
    %v270 = vor.u32 %v268, %v269
    %v271 = vshll.u32 2475754826, %v265
    %v272 = vshrl.u32 2131351028, %v266
    %v273 = vor.u32 %v271, %v272
    %v274 = vshll.u32 2131351028, %v265
    %v275 = vshrl.u32 2102212464, %v266
    %v276 = vor.u32 %v274, %v275
    %v277 = vshll.u32 2102212464, %v265
    %v278 = vshrl.u32 920167782, %v266
    %v279 = vor.u32 %v277, %v278
    %v280 = vshll.u32 920167782, %v265
    %v281 = vshrl.u32 1326507024, %v266
    %v282 = vor.u32 %v280, %v281
    %vm283 = vcmp.lt.s32.totalorder %v264, 1
    %vm284 = vcmp.lt.s32.totalorder %v264, 2
    %vm285 = vcmp.lt.s32.totalorder %v264, 3
    %vm286 = vcmp.lt.s32.totalorder %v264, 4
    %v287 = vsel %vm283, %v267, %v270
    %v288 = vsel %vm286, %v276, 2102212464
    %v289 = vsel %vm285, %v273, %v288
    %v290 = vsel %vm284, %v287, %v289
    %v291 = vsel %vm283, %v270, %v273
    %v292 = vsel %vm286, %v279, 920167782
    %v293 = vsel %vm285, %v276, %v292
    %v294 = vsel %vm284, %v291, %v293
    %v295 = vsel %vm283, %v273, %v276
    %v296 = vsel %vm286, %v282, 1326507024
    %v297 = vsel %vm285, %v279, %v296
    %v298 = vsel %vm284, %v295, %v297
    %v299 = vshll.u32 %v259, 8
    %v300 = vmul.u32.u64.compose %v299, %v298
    %v301 = vextract.low.u32 %v300
    %v302 = vextract.high.u32 %v300
    %v303 = vmul.u32.u64.compose %v299, %v294
    %v304 = vextract.low.u32 %v303
    %v305 = vextract.high.u32 %v303
    %v306 = vmul.u32 %v299, %v290
    %v307 = vadd.s32 %v302, %v304
    %vm308 = vc.u32 %v302, %v304
    %v309 = vadd.s32 %v305, 1
    %v310 = vsel %vm308, %v309, %v305
    %v311 = vadd.s32 %v306, %v310
    %v312 = vadd.s32 %v311, 536870912
    %v313 = vshrl.u32 %v312, 30
    %v314 = vshll.u32 %v313, 30
    %v315 = vsub.s32 %v311, %v314
    %vm316 = vcmp.lt.s32.totalorder %v315, 0
    %v317 = vsub.s32 0, %v315
    %v318 = vsel %vm316, %v317, %v315
    %v319 = vclz %v318
    %v320 = vsub.s32 %v319, 2
    %vm321 = vcmp.gt.s32.totalorder 0, %v320
    %v322 = vsel %vm321, 0, %v320
    %v323 = vsub.s32 32, %v322
    %v324 = vshll.u32 %v315, %v322
    %v325 = vshrl.u32 %v307, %v323
    %v326 = vor.u32 %v324, %v325
    %v327 = vsub.s32 4294967266, %v322
    %v328 = vadd.s32 %v327, 127
    %v329 = vshll.u32 %v328, 23
    %v330 = vor.u32 4788187, %v329
    %v331 = vand.u32 2147483647, %v330
    %v333 = vcvt.s32.f32 %v326
    %v334 = vmul.f32 %v333, %v331
    %v335 = vxor.u32 %v334, 2147483648
    %v336 = vsel %vm253, %v335, %v334
    %v337 = vsub.s32 4, %v313
    %v338 = vsel %vm253, %v337, %v313
    %v339 = vsel %vm252, %v250, %v336
    %v340 = vsel %vm252, 0, %v338
    %v341 = vcosq.f32.pop %v339
    %v342 = vsinq.f32.pop %v339
    %vm343 = vweird.f32 %v250
    %v344 = vadd.s32 %v340, 3
    %v345 = vand.u32 %v344, 3
    %vm346 = vcmp.lt.s32.totalorder %v345, 2
    %vm347 = vcmp.eq.s32.totalorder %v345, 0
    %v348 = vxor.u32 %v342, 2147483648
    %v349 = vsel %vm347, %v341, %v348
    %vm350 = vcmp.eq.s32.totalorder %v345, 2
    %v351 = vxor.u32 %v341, 2147483648
    %v352 = vsel %vm350, %v351, %v342
    %v353 = vsel %vm346, %v349, %v352
    %v354 = vsel %vm343, nan, %v353
    %v355 = vstv %s247
    %v356 = vmul.f32 %v355, %v354
    %v357 = vadd.f32 %v246, %v356
    %s358 = sld [smem:[#allocation2 + $0x181]]
    %s359 = sld [smem:[#allocation2 + $0x81]]
    %v360 = vstv %s359
    %v361 = vmul.f32 %v360, %v23
    %v362 = vand.u32 2147483647, %v361
    %vm363 = vcmp.le.f32.partialorder %v362, 0.7853982
    %vm364 = vcmp.lt.s32.totalorder %v361, 0
    %v365 = vand.u32 %v361, 2139095040
    %v366 = vshrl.u32 %v365, 23
    %v367 = vsub.s32 %v366, 127
    %v368 = vand.u32 2147483647, %v361
    %v369 = vand.u32 %v368, 8388607
    %v370 = vor.u32 %v369, 8388608
    %v371 = vsub.s32 0, %v370
    %v372 = vadd.s32 %v367, 1
    %vm373 = vcmp.gt.s32.totalorder %v372, 0
    %v374 = vsel %vm373, %v372, 0
    %v375 = vshrl.u32 %v374, 5
    %v376 = vand.u32 %v374, 31
    %v377 = vsub.s32 32, %v376
    %v378 = vshrl.u32 683565275, %v377
    %v379 = vshll.u32 683565275, %v376
    %v380 = vshrl.u32 2475754826, %v377
    %v381 = vor.u32 %v379, %v380
    %v382 = vshll.u32 2475754826, %v376
    %v383 = vshrl.u32 2131351028, %v377
    %v384 = vor.u32 %v382, %v383
    %v385 = vshll.u32 2131351028, %v376
    %v386 = vshrl.u32 2102212464, %v377
    %v387 = vor.u32 %v385, %v386
    %v388 = vshll.u32 2102212464, %v376
    %v389 = vshrl.u32 920167782, %v377
    %v390 = vor.u32 %v388, %v389
    %v391 = vshll.u32 920167782, %v376
    %v392 = vshrl.u32 1326507024, %v377
    %v393 = vor.u32 %v391, %v392
    %vm394 = vcmp.lt.s32.totalorder %v375, 1
    %vm395 = vcmp.lt.s32.totalorder %v375, 2
    %vm396 = vcmp.lt.s32.totalorder %v375, 3
    %vm397 = vcmp.lt.s32.totalorder %v375, 4
    %v398 = vsel %vm394, %v378, %v381
    %v399 = vsel %vm397, %v387, 2102212464
    %v400 = vsel %vm396, %v384, %v399
    %v401 = vsel %vm395, %v398, %v400
    %v402 = vsel %vm394, %v381, %v384
    %v403 = vsel %vm397, %v390, 920167782
    %v404 = vsel %vm396, %v387, %v403
    %v405 = vsel %vm395, %v402, %v404
    %v406 = vsel %vm394, %v384, %v387
    %v407 = vsel %vm397, %v393, 1326507024
    %v408 = vsel %vm396, %v390, %v407
    %v409 = vsel %vm395, %v406, %v408
    %v410 = vshll.u32 %v370, 8
    %v411 = vmul.u32.u64.compose %v410, %v409
    %v412 = vextract.low.u32 %v411
    %v413 = vextract.high.u32 %v411
    %v414 = vmul.u32.u64.compose %v410, %v405
    %v415 = vextract.low.u32 %v414
    %v416 = vextract.high.u32 %v414
    %v417 = vmul.u32 %v410, %v401
    %v418 = vadd.s32 %v413, %v415
    %vm419 = vc.u32 %v413, %v415
    %v420 = vadd.s32 %v416, 1
    %v421 = vsel %vm419, %v420, %v416
    %v422 = vadd.s32 %v417, %v421
    %v423 = vadd.s32 %v422, 536870912
    %v424 = vshrl.u32 %v423, 30
    %v425 = vshll.u32 %v424, 30
    %v426 = vsub.s32 %v422, %v425
    %vm427 = vcmp.lt.s32.totalorder %v426, 0
    %v428 = vsub.s32 0, %v426
    %v429 = vsel %vm427, %v428, %v426
    %v430 = vclz %v429
    %v431 = vsub.s32 %v430, 2
    %vm432 = vcmp.gt.s32.totalorder 0, %v431
    %v433 = vsel %vm432, 0, %v431
    %v434 = vsub.s32 32, %v433
    %v435 = vshll.u32 %v426, %v433
    %v436 = vshrl.u32 %v418, %v434
    %v437 = vor.u32 %v435, %v436
    %v438 = vsub.s32 4294967266, %v433
    %v439 = vadd.s32 %v438, 127
    %v440 = vshll.u32 %v439, 23
    %v441 = vor.u32 4788187, %v440
    %v442 = vand.u32 2147483647, %v441
    %v444 = vcvt.s32.f32 %v437
    %v445 = vmul.f32 %v444, %v442
    %v446 = vxor.u32 %v445, 2147483648
    %v447 = vsel %vm364, %v446, %v445
    %v448 = vsub.s32 4, %v424
    %v449 = vsel %vm364, %v448, %v424
    %v450 = vsel %vm363, %v361, %v447
    %v451 = vsel %vm363, 0, %v449
    %v452 = vcosq.f32.pop %v450
    %v453 = vsinq.f32.pop %v450
    %vm454 = vweird.f32 %v361
    %v455 = vand.u32 %v451, 3
    %vm456 = vcmp.lt.s32.totalorder %v455, 2
    %vm457 = vcmp.eq.s32.totalorder %v455, 0
    %v458 = vxor.u32 %v453, 2147483648
    %v459 = vsel %vm457, %v452, %v458
    %vm460 = vcmp.eq.s32.totalorder %v455, 2
    %v461 = vxor.u32 %v452, 2147483648
    %v462 = vsel %vm460, %v461, %v453
    %v463 = vsel %vm456, %v459, %v462
    %v464 = vsel %vm454, nan, %v463
    %v465 = vstv %s358
    %v466 = vmul.f32 %v465, %v464
    %v467 = vadd.f32 %v357, %v466
    %s468 = sld [smem:[#allocation2 + $0x102]]
    %s469 = sld [smem:[#allocation2 + $0x2]]
    %v470 = vstv %s469
    %v471 = vmul.f32 %v470, %v23
    %v472 = vand.u32 2147483647, %v471
    %vm473 = vcmp.le.f32.partialorder %v472, 0.7853982
    %vm474 = vcmp.lt.s32.totalorder %v471, 0
    %v475 = vand.u32 %v471, 2139095040
    %v476 = vshrl.u32 %v475, 23
    %v477 = vsub.s32 %v476, 127
    %v478 = vand.u32 2147483647, %v471
    %v479 = vand.u32 %v478, 8388607
    %v480 = vor.u32 %v479, 8388608
    %v481 = vsub.s32 0, %v480
    %v482 = vadd.s32 %v477, 1
    %vm483 = vcmp.gt.s32.totalorder %v482, 0
    %v484 = vsel %vm483, %v482, 0
    %v485 = vshrl.u32 %v484, 5
    %v486 = vand.u32 %v484, 31
    %v487 = vsub.s32 32, %v486
    %v488 = vshrl.u32 683565275, %v487
    %v489 = vshll.u32 683565275, %v486
    %v490 = vshrl.u32 2475754826, %v487
    %v491 = vor.u32 %v489, %v490
    %v492 = vshll.u32 2475754826, %v486
    %v493 = vshrl.u32 2131351028, %v487
    %v494 = vor.u32 %v492, %v493
    %v495 = vshll.u32 2131351028, %v486
    %v496 = vshrl.u32 2102212464, %v487
    %v497 = vor.u32 %v495, %v496
    %v498 = vshll.u32 2102212464, %v486
    %v499 = vshrl.u32 920167782, %v487
    %v500 = vor.u32 %v498, %v499
    %v501 = vshll.u32 920167782, %v486
    %v502 = vshrl.u32 1326507024, %v487
    %v503 = vor.u32 %v501, %v502
    %vm504 = vcmp.lt.s32.totalorder %v485, 1
    %vm505 = vcmp.lt.s32.totalorder %v485, 2
    %vm506 = vcmp.lt.s32.totalorder %v485, 3
    %vm507 = vcmp.lt.s32.totalorder %v485, 4
    %v508 = vsel %vm504, %v488, %v491
    %v509 = vsel %vm507, %v497, 2102212464
    %v510 = vsel %vm506, %v494, %v509
    %v511 = vsel %vm505, %v508, %v510
    %v512 = vsel %vm504, %v491, %v494
    %v513 = vsel %vm507, %v500, 920167782
    %v514 = vsel %vm506, %v497, %v513
    %v515 = vsel %vm505, %v512, %v514
    %v516 = vsel %vm504, %v494, %v497
    %v517 = vsel %vm507, %v503, 1326507024
    %v518 = vsel %vm506, %v500, %v517
    %v519 = vsel %vm505, %v516, %v518
    %v520 = vshll.u32 %v480, 8
    %v521 = vmul.u32.u64.compose %v520, %v519
    %v522 = vextract.low.u32 %v521
    %v523 = vextract.high.u32 %v521
    %v524 = vmul.u32.u64.compose %v520, %v515
    %v525 = vextract.low.u32 %v524
    %v526 = vextract.high.u32 %v524
    %v527 = vmul.u32 %v520, %v511
    %v528 = vadd.s32 %v523, %v525
    %vm529 = vc.u32 %v523, %v525
    %v530 = vadd.s32 %v526, 1
    %v531 = vsel %vm529, %v530, %v526
    %v532 = vadd.s32 %v527, %v531
    %v533 = vadd.s32 %v532, 536870912
    %v534 = vshrl.u32 %v533, 30
    %v535 = vshll.u32 %v534, 30
    %v536 = vsub.s32 %v532, %v535
    %vm537 = vcmp.lt.s32.totalorder %v536, 0
    %v538 = vsub.s32 0, %v536
    %v539 = vsel %vm537, %v538, %v536
    %v540 = vclz %v539
    %v541 = vsub.s32 %v540, 2
    %vm542 = vcmp.gt.s32.totalorder 0, %v541
    %v543 = vsel %vm542, 0, %v541
    %v544 = vsub.s32 32, %v543
    %v545 = vshll.u32 %v536, %v543
    %v546 = vshrl.u32 %v528, %v544
    %v547 = vor.u32 %v545, %v546
    %v548 = vsub.s32 4294967266, %v543
    %v549 = vadd.s32 %v548, 127
    %v550 = vshll.u32 %v549, 23
    %v551 = vor.u32 4788187, %v550
    %v552 = vand.u32 2147483647, %v551
    %v554 = vcvt.s32.f32 %v547
    %v555 = vmul.f32 %v554, %v552
    %v556 = vxor.u32 %v555, 2147483648
    %v557 = vsel %vm474, %v556, %v555
    %v558 = vsub.s32 4, %v534
    %v559 = vsel %vm474, %v558, %v534
    %v560 = vsel %vm473, %v471, %v557
    %v561 = vsel %vm473, 0, %v559
    %v562 = vcosq.f32.pop %v560
    %v563 = vsinq.f32.pop %v560
    %vm564 = vweird.f32 %v471
    %v565 = vadd.s32 %v561, 3
    %v566 = vand.u32 %v565, 3
    %vm567 = vcmp.lt.s32.totalorder %v566, 2
    %vm568 = vcmp.eq.s32.totalorder %v566, 0
    %v569 = vxor.u32 %v563, 2147483648
    %v570 = vsel %vm568, %v562, %v569
    %vm571 = vcmp.eq.s32.totalorder %v566, 2
    %v572 = vxor.u32 %v562, 2147483648
    %v573 = vsel %vm571, %v572, %v563
    %v574 = vsel %vm567, %v570, %v573
    %v575 = vsel %vm564, nan, %v574
    %v576 = vstv %s468
    %v577 = vmul.f32 %v576, %v575
    %v578 = vadd.f32 %v467, %v577
    %s579 = sld [smem:[#allocation2 + $0x182]]
    %s580 = sld [smem:[#allocation2 + $0x82]]
    %v581 = vstv %s580
    %v582 = vmul.f32 %v581, %v23
    %v583 = vand.u32 2147483647, %v582
    %vm584 = vcmp.le.f32.partialorder %v583, 0.7853982
    %vm585 = vcmp.lt.s32.totalorder %v582, 0
    %v586 = vand.u32 %v582, 2139095040
    %v587 = vshrl.u32 %v586, 23
    %v588 = vsub.s32 %v587, 127
    %v589 = vand.u32 2147483647, %v582
    %v590 = vand.u32 %v589, 8388607
    %v591 = vor.u32 %v590, 8388608
    %v592 = vsub.s32 0, %v591
    %v593 = vadd.s32 %v588, 1
    %vm594 = vcmp.gt.s32.totalorder %v593, 0
    %v595 = vsel %vm594, %v593, 0
    %v596 = vshrl.u32 %v595, 5
    %v597 = vand.u32 %v595, 31
    %v598 = vsub.s32 32, %v597
    %v599 = vshrl.u32 683565275, %v598
    %v600 = vshll.u32 683565275, %v597
    %v601 = vshrl.u32 2475754826, %v598
    %v602 = vor.u32 %v600, %v601
    %v603 = vshll.u32 2475754826, %v597
    %v604 = vshrl.u32 2131351028, %v598
    %v605 = vor.u32 %v603, %v604
    %v606 = vshll.u32 2131351028, %v597
    %v607 = vshrl.u32 2102212464, %v598
    %v608 = vor.u32 %v606, %v607
    %v609 = vshll.u32 2102212464, %v597
    %v610 = vshrl.u32 920167782, %v598
    %v611 = vor.u32 %v609, %v610
    %v612 = vshll.u32 920167782, %v597
    %v613 = vshrl.u32 1326507024, %v598
    %v614 = vor.u32 %v612, %v613
    %vm615 = vcmp.lt.s32.totalorder %v596, 1
    %vm616 = vcmp.lt.s32.totalorder %v596, 2
    %vm617 = vcmp.lt.s32.totalorder %v596, 3
    %vm618 = vcmp.lt.s32.totalorder %v596, 4
    %v619 = vsel %vm615, %v599, %v602
    %v620 = vsel %vm618, %v608, 2102212464
    %v621 = vsel %vm617, %v605, %v620
    %v622 = vsel %vm616, %v619, %v621
    %v623 = vsel %vm615, %v602, %v605
    %v624 = vsel %vm618, %v611, 920167782
    %v625 = vsel %vm617, %v608, %v624
    %v626 = vsel %vm616, %v623, %v625
    %v627 = vsel %vm615, %v605, %v608
    %v628 = vsel %vm618, %v614, 1326507024
    %v629 = vsel %vm617, %v611, %v628
    %v630 = vsel %vm616, %v627, %v629
    %v631 = vshll.u32 %v591, 8
    %v632 = vmul.u32.u64.compose %v631, %v630
    %v633 = vextract.low.u32 %v632
    %v634 = vextract.high.u32 %v632
    %v635 = vmul.u32.u64.compose %v631, %v626
    %v636 = vextract.low.u32 %v635
    %v637 = vextract.high.u32 %v635
    %v638 = vmul.u32 %v631, %v622
    %v639 = vadd.s32 %v634, %v636
    %vm640 = vc.u32 %v634, %v636
    %v641 = vadd.s32 %v637, 1
    %v642 = vsel %vm640, %v641, %v637
    %v643 = vadd.s32 %v638, %v642
    %v644 = vadd.s32 %v643, 536870912
    %v645 = vshrl.u32 %v644, 30
    %v646 = vshll.u32 %v645, 30
    %v647 = vsub.s32 %v643, %v646
    %vm648 = vcmp.lt.s32.totalorder %v647, 0
    %v649 = vsub.s32 0, %v647
    %v650 = vsel %vm648, %v649, %v647
    %v651 = vclz %v650
    %v652 = vsub.s32 %v651, 2
    %vm653 = vcmp.gt.s32.totalorder 0, %v652
    %v654 = vsel %vm653, 0, %v652
    %v655 = vsub.s32 32, %v654
    %v656 = vshll.u32 %v647, %v654
    %v657 = vshrl.u32 %v639, %v655
    %v658 = vor.u32 %v656, %v657
    %v659 = vsub.s32 4294967266, %v654
    %v660 = vadd.s32 %v659, 127
    %v661 = vshll.u32 %v660, 23
    %v662 = vor.u32 4788187, %v661
    %v663 = vand.u32 2147483647, %v662
    %v665 = vcvt.s32.f32 %v658
    %v666 = vmul.f32 %v665, %v663
    %v667 = vxor.u32 %v666, 2147483648
    %v668 = vsel %vm585, %v667, %v666
    %v669 = vsub.s32 4, %v645
    %v670 = vsel %vm585, %v669, %v645
    %v671 = vsel %vm584, %v582, %v668
    %v672 = vsel %vm584, 0, %v670
    %v673 = vcosq.f32.pop %v671
    %v674 = vsinq.f32.pop %v671
    %vm675 = vweird.f32 %v582
    %v676 = vand.u32 %v672, 3
    %vm677 = vcmp.lt.s32.totalorder %v676, 2
    %vm678 = vcmp.eq.s32.totalorder %v676, 0
    %v679 = vxor.u32 %v674, 2147483648
    %v680 = vsel %vm678, %v673, %v679
    %vm681 = vcmp.eq.s32.totalorder %v676, 2
    %v682 = vxor.u32 %v673, 2147483648
    %v683 = vsel %vm681, %v682, %v674
    %v684 = vsel %vm677, %v680, %v683
    %v685 = vsel %vm675, nan, %v684
    %v686 = vstv %s579
    %v687 = vmul.f32 %v686, %v685
    %v688 = vadd.f32 %v578, %v687
    %s689 = sld [smem:[#allocation2 + $0x103]]
    %s690 = sld [smem:[#allocation2 + $0x3]]
    %v691 = vstv %s690
    %v692 = vmul.f32 %v691, %v23
    %v693 = vand.u32 2147483647, %v692
    %vm694 = vcmp.le.f32.partialorder %v693, 0.7853982
    %vm695 = vcmp.lt.s32.totalorder %v692, 0
    %v696 = vand.u32 %v692, 2139095040
    %v697 = vshrl.u32 %v696, 23
    %v698 = vsub.s32 %v697, 127
    %v699 = vand.u32 2147483647, %v692
    %v700 = vand.u32 %v699, 8388607
    %v701 = vor.u32 %v700, 8388608
    %v702 = vsub.s32 0, %v701
    %v703 = vadd.s32 %v698, 1
    %vm704 = vcmp.gt.s32.totalorder %v703, 0
    %v705 = vsel %vm704, %v703, 0
    %v706 = vshrl.u32 %v705, 5
    %v707 = vand.u32 %v705, 31
    %v708 = vsub.s32 32, %v707
    %v709 = vshrl.u32 683565275, %v708
    %v710 = vshll.u32 683565275, %v707
    %v711 = vshrl.u32 2475754826, %v708
    %v712 = vor.u32 %v710, %v711
    %v713 = vshll.u32 2475754826, %v707
    %v714 = vshrl.u32 2131351028, %v708
    %v715 = vor.u32 %v713, %v714
    %v716 = vshll.u32 2131351028, %v707
    %v717 = vshrl.u32 2102212464, %v708
    %v718 = vor.u32 %v716, %v717
    %v719 = vshll.u32 2102212464, %v707
    %v720 = vshrl.u32 920167782, %v708
    %v721 = vor.u32 %v719, %v720
    %v722 = vshll.u32 920167782, %v707
    %v723 = vshrl.u32 1326507024, %v708
    %v724 = vor.u32 %v722, %v723
    %vm725 = vcmp.lt.s32.totalorder %v706, 1
    %vm726 = vcmp.lt.s32.totalorder %v706, 2
    %vm727 = vcmp.lt.s32.totalorder %v706, 3
    %vm728 = vcmp.lt.s32.totalorder %v706, 4
    %v729 = vsel %vm725, %v709, %v712
    %v730 = vsel %vm728, %v718, 2102212464
    %v731 = vsel %vm727, %v715, %v730
    %v732 = vsel %vm726, %v729, %v731
    %v733 = vsel %vm725, %v712, %v715
    %v734 = vsel %vm728, %v721, 920167782
    %v735 = vsel %vm727, %v718, %v734
    %v736 = vsel %vm726, %v733, %v735
    %v737 = vsel %vm725, %v715, %v718
    %v738 = vsel %vm728, %v724, 1326507024
    %v739 = vsel %vm727, %v721, %v738
    %v740 = vsel %vm726, %v737, %v739
    %v741 = vshll.u32 %v701, 8
    %v742 = vmul.u32.u64.compose %v741, %v740
    %v743 = vextract.low.u32 %v742
    %v744 = vextract.high.u32 %v742
    %v745 = vmul.u32.u64.compose %v741, %v736
    %v746 = vextract.low.u32 %v745
    %v747 = vextract.high.u32 %v745
    %v748 = vmul.u32 %v741, %v732
    %v749 = vadd.s32 %v744, %v746
    %vm750 = vc.u32 %v744, %v746
    %v751 = vadd.s32 %v747, 1
    %v752 = vsel %vm750, %v751, %v747
    %v753 = vadd.s32 %v748, %v752
    %v754 = vadd.s32 %v753, 536870912
    %v755 = vshrl.u32 %v754, 30
    %v756 = vshll.u32 %v755, 30
    %v757 = vsub.s32 %v753, %v756
    %vm758 = vcmp.lt.s32.totalorder %v757, 0
    %v759 = vsub.s32 0, %v757
    %v760 = vsel %vm758, %v759, %v757
    %v761 = vclz %v760
    %v762 = vsub.s32 %v761, 2
    %vm763 = vcmp.gt.s32.totalorder 0, %v762
    %v764 = vsel %vm763, 0, %v762
    %v765 = vsub.s32 32, %v764
    %v766 = vshll.u32 %v757, %v764
    %v767 = vshrl.u32 %v749, %v765
    %v768 = vor.u32 %v766, %v767
    %v769 = vsub.s32 4294967266, %v764
    %v770 = vadd.s32 %v769, 127
    %v771 = vshll.u32 %v770, 23
    %v772 = vor.u32 4788187, %v771
    %v773 = vand.u32 2147483647, %v772
    %v775 = vcvt.s32.f32 %v768
    %v776 = vmul.f32 %v775, %v773
    %v777 = vxor.u32 %v776, 2147483648
    %v778 = vsel %vm695, %v777, %v776
    %v779 = vsub.s32 4, %v755
    %v780 = vsel %vm695, %v779, %v755
    %v781 = vsel %vm694, %v692, %v778
    %v782 = vsel %vm694, 0, %v780
    %v783 = vcosq.f32.pop %v781
    %v784 = vsinq.f32.pop %v781
    %vm785 = vweird.f32 %v692
    %v786 = vadd.s32 %v782, 3
    %v787 = vand.u32 %v786, 3
    %vm788 = vcmp.lt.s32.totalorder %v787, 2
    %vm789 = vcmp.eq.s32.totalorder %v787, 0
    %v790 = vxor.u32 %v784, 2147483648
    %v791 = vsel %vm789, %v783, %v790
    %vm792 = vcmp.eq.s32.totalorder %v787, 2
    %v793 = vxor.u32 %v783, 2147483648
    %v794 = vsel %vm792, %v793, %v784
    %v795 = vsel %vm788, %v791, %v794
    %v796 = vsel %vm785, nan, %v795
    %v797 = vstv %s689
    %v798 = vmul.f32 %v797, %v796
    %v799 = vadd.f32 %v688, %v798
    %s800 = sld [smem:[#allocation2 + $0x183]]
    %s801 = sld [smem:[#allocation2 + $0x83]]
    %v802 = vstv %s801
    %v803 = vmul.f32 %v802, %v23
    %v804 = vand.u32 2147483647, %v803
    %vm805 = vcmp.le.f32.partialorder %v804, 0.7853982
    %vm806 = vcmp.lt.s32.totalorder %v803, 0
    %v807 = vand.u32 %v803, 2139095040
    %v808 = vshrl.u32 %v807, 23
    %v809 = vsub.s32 %v808, 127
    %v810 = vand.u32 2147483647, %v803
    %v811 = vand.u32 %v810, 8388607
    %v812 = vor.u32 %v811, 8388608
    %v813 = vsub.s32 0, %v812
    %v814 = vadd.s32 %v809, 1
    %vm815 = vcmp.gt.s32.totalorder %v814, 0
    %v816 = vsel %vm815, %v814, 0
    %v817 = vshrl.u32 %v816, 5
    %v818 = vand.u32 %v816, 31
    %v819 = vsub.s32 32, %v818
    %v820 = vshrl.u32 683565275, %v819
    %v821 = vshll.u32 683565275, %v818
    %v822 = vshrl.u32 2475754826, %v819
    %v823 = vor.u32 %v821, %v822
    %v824 = vshll.u32 2475754826, %v818
    %v825 = vshrl.u32 2131351028, %v819
    %v826 = vor.u32 %v824, %v825
    %v827 = vshll.u32 2131351028, %v818
    %v828 = vshrl.u32 2102212464, %v819
    %v829 = vor.u32 %v827, %v828
    %v830 = vshll.u32 2102212464, %v818
    %v831 = vshrl.u32 920167782, %v819
    %v832 = vor.u32 %v830, %v831
    %v833 = vshll.u32 920167782, %v818
    %v834 = vshrl.u32 1326507024, %v819
    %v835 = vor.u32 %v833, %v834
    %vm836 = vcmp.lt.s32.totalorder %v817, 1
    %vm837 = vcmp.lt.s32.totalorder %v817, 2
    %vm838 = vcmp.lt.s32.totalorder %v817, 3
    %vm839 = vcmp.lt.s32.totalorder %v817, 4
    %v840 = vsel %vm836, %v820, %v823
    %v841 = vsel %vm839, %v829, 2102212464
    %v842 = vsel %vm838, %v826, %v841
    %v843 = vsel %vm837, %v840, %v842
    %v844 = vsel %vm836, %v823, %v826
    %v845 = vsel %vm839, %v832, 920167782
    %v846 = vsel %vm838, %v829, %v845
    %v847 = vsel %vm837, %v844, %v846
    %v848 = vsel %vm836, %v826, %v829
    %v849 = vsel %vm839, %v835, 1326507024
    %v850 = vsel %vm838, %v832, %v849
    %v851 = vsel %vm837, %v848, %v850
    %v852 = vshll.u32 %v812, 8
    %v853 = vmul.u32.u64.compose %v852, %v851
    %v854 = vextract.low.u32 %v853
    %v855 = vextract.high.u32 %v853
    %v856 = vmul.u32.u64.compose %v852, %v847
    %v857 = vextract.low.u32 %v856
    %v858 = vextract.high.u32 %v856
    %v859 = vmul.u32 %v852, %v843
    %v860 = vadd.s32 %v855, %v857
    %vm861 = vc.u32 %v855, %v857
    %v862 = vadd.s32 %v858, 1
    %v863 = vsel %vm861, %v862, %v858
    %v864 = vadd.s32 %v859, %v863
    %v865 = vadd.s32 %v864, 536870912
    %v866 = vshrl.u32 %v865, 30
    %v867 = vshll.u32 %v866, 30
    %v868 = vsub.s32 %v864, %v867
    %vm869 = vcmp.lt.s32.totalorder %v868, 0
    %v870 = vsub.s32 0, %v868
    %v871 = vsel %vm869, %v870, %v868
    %v872 = vclz %v871
    %v873 = vsub.s32 %v872, 2
    %vm874 = vcmp.gt.s32.totalorder 0, %v873
    %v875 = vsel %vm874, 0, %v873
    %v876 = vsub.s32 32, %v875
    %v877 = vshll.u32 %v868, %v875
    %v878 = vshrl.u32 %v860, %v876
    %v879 = vor.u32 %v877, %v878
    %v880 = vsub.s32 4294967266, %v875
    %v881 = vadd.s32 %v880, 127
    %v882 = vshll.u32 %v881, 23
    %v883 = vor.u32 4788187, %v882
    %v884 = vand.u32 2147483647, %v883
    %v886 = vcvt.s32.f32 %v879
    %v887 = vmul.f32 %v886, %v884
    %v888 = vxor.u32 %v887, 2147483648
    %v889 = vsel %vm806, %v888, %v887
    %v890 = vsub.s32 4, %v866
    %v891 = vsel %vm806, %v890, %v866
    %v892 = vsel %vm805, %v803, %v889
    %v893 = vsel %vm805, 0, %v891
    %v894 = vcosq.f32.pop %v892
    %v895 = vsinq.f32.pop %v892
    %vm896 = vweird.f32 %v803
    %v897 = vand.u32 %v893, 3
    %vm898 = vcmp.lt.s32.totalorder %v897, 2
    %vm899 = vcmp.eq.s32.totalorder %v897, 0
    %v900 = vxor.u32 %v895, 2147483648
    %v901 = vsel %vm899, %v894, %v900
    %vm902 = vcmp.eq.s32.totalorder %v897, 2
    %v903 = vxor.u32 %v894, 2147483648
    %v904 = vsel %vm902, %v903, %v895
    %v905 = vsel %vm898, %v901, %v904
    %v906 = vsel %vm896, nan, %v905
    %v907 = vstv %s800
    %v908 = vmul.f32 %v907, %v906
    %v909 = vadd.f32 %v799, %v908
    %s910 = sld [smem:[#allocation2 + $0x104]]
    %s911 = sld [smem:[#allocation2 + $0x4]]
    %v912 = vstv %s911
    %v913 = vmul.f32 %v912, %v23
    %v914 = vand.u32 2147483647, %v913
    %vm915 = vcmp.le.f32.partialorder %v914, 0.7853982
    %vm916 = vcmp.lt.s32.totalorder %v913, 0
    %v917 = vand.u32 %v913, 2139095040
    %v918 = vshrl.u32 %v917, 23
    %v919 = vsub.s32 %v918, 127
    %v920 = vand.u32 2147483647, %v913
    %v921 = vand.u32 %v920, 8388607
    %v922 = vor.u32 %v921, 8388608
    %v923 = vsub.s32 0, %v922
    %v924 = vadd.s32 %v919, 1
    %vm925 = vcmp.gt.s32.totalorder %v924, 0
    %v926 = vsel %vm925, %v924, 0
    %v927 = vshrl.u32 %v926, 5
    %v928 = vand.u32 %v926, 31
    %v929 = vsub.s32 32, %v928
    %v930 = vshrl.u32 683565275, %v929
    %v931 = vshll.u32 683565275, %v928
    %v932 = vshrl.u32 2475754826, %v929
    %v933 = vor.u32 %v931, %v932
    %v934 = vshll.u32 2475754826, %v928
    %v935 = vshrl.u32 2131351028, %v929
    %v936 = vor.u32 %v934, %v935
    %v937 = vshll.u32 2131351028, %v928
    %v938 = vshrl.u32 2102212464, %v929
    %v939 = vor.u32 %v937, %v938
    %v940 = vshll.u32 2102212464, %v928
    %v941 = vshrl.u32 920167782, %v929
    %v942 = vor.u32 %v940, %v941
    %v943 = vshll.u32 920167782, %v928
    %v944 = vshrl.u32 1326507024, %v929
    %v945 = vor.u32 %v943, %v944
    %vm946 = vcmp.lt.s32.totalorder %v927, 1
    %vm947 = vcmp.lt.s32.totalorder %v927, 2
    %vm948 = vcmp.lt.s32.totalorder %v927, 3
    %vm949 = vcmp.lt.s32.totalorder %v927, 4
    %v950 = vsel %vm946, %v930, %v933
    %v951 = vsel %vm949, %v939, 2102212464
    %v952 = vsel %vm948, %v936, %v951
    %v953 = vsel %vm947, %v950, %v952
    %v954 = vsel %vm946, %v933, %v936
    %v955 = vsel %vm949, %v942, 920167782
    %v956 = vsel %vm948, %v939, %v955
    %v957 = vsel %vm947, %v954, %v956
    %v958 = vsel %vm946, %v936, %v939
    %v959 = vsel %vm949, %v945, 1326507024
    %v960 = vsel %vm948, %v942, %v959
    %v961 = vsel %vm947, %v958, %v960
    %v962 = vshll.u32 %v922, 8
    %v963 = vmul.u32.u64.compose %v962, %v961
    %v964 = vextract.low.u32 %v963
    %v965 = vextract.high.u32 %v963
    %v966 = vmul.u32.u64.compose %v962, %v957
    %v967 = vextract.low.u32 %v966
    %v968 = vextract.high.u32 %v966
    %v969 = vmul.u32 %v962, %v953
    %v970 = vadd.s32 %v965, %v967
    %vm971 = vc.u32 %v965, %v967
    %v972 = vadd.s32 %v968, 1
    %v973 = vsel %vm971, %v972, %v968
    %v974 = vadd.s32 %v969, %v973
    %v975 = vadd.s32 %v974, 536870912
    %v976 = vshrl.u32 %v975, 30
    %v977 = vshll.u32 %v976, 30
    %v978 = vsub.s32 %v974, %v977
    %vm979 = vcmp.lt.s32.totalorder %v978, 0
    %v980 = vsub.s32 0, %v978
    %v981 = vsel %vm979, %v980, %v978
    %v982 = vclz %v981
    %v983 = vsub.s32 %v982, 2
    %vm984 = vcmp.gt.s32.totalorder 0, %v983
    %v985 = vsel %vm984, 0, %v983
    %v986 = vsub.s32 32, %v985
    %v987 = vshll.u32 %v978, %v985
    %v988 = vshrl.u32 %v970, %v986
    %v989 = vor.u32 %v987, %v988
    %v990 = vsub.s32 4294967266, %v985
    %v991 = vadd.s32 %v990, 127
    %v992 = vshll.u32 %v991, 23
    %v993 = vor.u32 4788187, %v992
    %v994 = vand.u32 2147483647, %v993
    %v996 = vcvt.s32.f32 %v989
    %v997 = vmul.f32 %v996, %v994
    %v998 = vxor.u32 %v997, 2147483648
    %v999 = vsel %vm916, %v998, %v997
    %v1000 = vsub.s32 4, %v976
    %v1001 = vsel %vm916, %v1000, %v976
    %v1002 = vsel %vm915, %v913, %v999
    %v1003 = vsel %vm915, 0, %v1001
    %v1004 = vcosq.f32.pop %v1002
    %v1005 = vsinq.f32.pop %v1002
    %vm1006 = vweird.f32 %v913
    %v1007 = vadd.s32 %v1003, 3
    %v1008 = vand.u32 %v1007, 3
    %vm1009 = vcmp.lt.s32.totalorder %v1008, 2
    %vm1010 = vcmp.eq.s32.totalorder %v1008, 0
    %v1011 = vxor.u32 %v1005, 2147483648
    %v1012 = vsel %vm1010, %v1004, %v1011
    %vm1013 = vcmp.eq.s32.totalorder %v1008, 2
    %v1014 = vxor.u32 %v1004, 2147483648
    %v1015 = vsel %vm1013, %v1014, %v1005
    %v1016 = vsel %vm1009, %v1012, %v1015
    %v1017 = vsel %vm1006, nan, %v1016
    %v1018 = vstv %s910
    %v1019 = vmul.f32 %v1018, %v1017
    %v1020 = vadd.f32 %v909, %v1019
    %s1021 = sld [smem:[#allocation2 + $0x184]]
    %s1022 = sld [smem:[#allocation2 + $0x84]]
    %v1023 = vstv %s1022
    %v1024 = vmul.f32 %v1023, %v23
    %v1025 = vand.u32 2147483647, %v1024
    %vm1026 = vcmp.le.f32.partialorder %v1025, 0.7853982
    %vm1027 = vcmp.lt.s32.totalorder %v1024, 0
    %v1028 = vand.u32 %v1024, 2139095040
    %v1029 = vshrl.u32 %v1028, 23
    %v1030 = vsub.s32 %v1029, 127
    %v1031 = vand.u32 2147483647, %v1024
    %v1032 = vand.u32 %v1031, 8388607
    %v1033 = vor.u32 %v1032, 8388608
    %v1034 = vsub.s32 0, %v1033
    %v1035 = vadd.s32 %v1030, 1
    %vm1036 = vcmp.gt.s32.totalorder %v1035, 0
    %v1037 = vsel %vm1036, %v1035, 0
    %v1038 = vshrl.u32 %v1037, 5
    %v1039 = vand.u32 %v1037, 31
    %v1040 = vsub.s32 32, %v1039
    %v1041 = vshrl.u32 683565275, %v1040
    %v1042 = vshll.u32 683565275, %v1039
    %v1043 = vshrl.u32 2475754826, %v1040
    %v1044 = vor.u32 %v1042, %v1043
    %v1045 = vshll.u32 2475754826, %v1039
    %v1046 = vshrl.u32 2131351028, %v1040
    %v1047 = vor.u32 %v1045, %v1046
    %v1048 = vshll.u32 2131351028, %v1039
    %v1049 = vshrl.u32 2102212464, %v1040
    %v1050 = vor.u32 %v1048, %v1049
    %v1051 = vshll.u32 2102212464, %v1039
    %v1052 = vshrl.u32 920167782, %v1040
    %v1053 = vor.u32 %v1051, %v1052
    %v1054 = vshll.u32 920167782, %v1039
    %v1055 = vshrl.u32 1326507024, %v1040
    %v1056 = vor.u32 %v1054, %v1055
    %vm1057 = vcmp.lt.s32.totalorder %v1038, 1
    %vm1058 = vcmp.lt.s32.totalorder %v1038, 2
    %vm1059 = vcmp.lt.s32.totalorder %v1038, 3
    %vm1060 = vcmp.lt.s32.totalorder %v1038, 4
    %v1061 = vsel %vm1057, %v1041, %v1044
    %v1062 = vsel %vm1060, %v1050, 2102212464
    %v1063 = vsel %vm1059, %v1047, %v1062
    %v1064 = vsel %vm1058, %v1061, %v1063
    %v1065 = vsel %vm1057, %v1044, %v1047
    %v1066 = vsel %vm1060, %v1053, 920167782
    %v1067 = vsel %vm1059, %v1050, %v1066
    %v1068 = vsel %vm1058, %v1065, %v1067
    %v1069 = vsel %vm1057, %v1047, %v1050
    %v1070 = vsel %vm1060, %v1056, 1326507024
    %v1071 = vsel %vm1059, %v1053, %v1070
    %v1072 = vsel %vm1058, %v1069, %v1071
    %v1073 = vshll.u32 %v1033, 8
    %v1074 = vmul.u32.u64.compose %v1073, %v1072
    %v1075 = vextract.low.u32 %v1074
    %v1076 = vextract.high.u32 %v1074
    %v1077 = vmul.u32.u64.compose %v1073, %v1068
    %v1078 = vextract.low.u32 %v1077
    %v1079 = vextract.high.u32 %v1077
    %v1080 = vmul.u32 %v1073, %v1064
    %v1081 = vadd.s32 %v1076, %v1078
    %vm1082 = vc.u32 %v1076, %v1078
    %v1083 = vadd.s32 %v1079, 1
    %v1084 = vsel %vm1082, %v1083, %v1079
    %v1085 = vadd.s32 %v1080, %v1084
    %v1086 = vadd.s32 %v1085, 536870912
    %v1087 = vshrl.u32 %v1086, 30
    %v1088 = vshll.u32 %v1087, 30
    %v1089 = vsub.s32 %v1085, %v1088
    %vm1090 = vcmp.lt.s32.totalorder %v1089, 0
    %v1091 = vsub.s32 0, %v1089
    %v1092 = vsel %vm1090, %v1091, %v1089
    %v1093 = vclz %v1092
    %v1094 = vsub.s32 %v1093, 2
    %vm1095 = vcmp.gt.s32.totalorder 0, %v1094
    %v1096 = vsel %vm1095, 0, %v1094
    %v1097 = vsub.s32 32, %v1096
    %v1098 = vshll.u32 %v1089, %v1096
    %v1099 = vshrl.u32 %v1081, %v1097
    %v1100 = vor.u32 %v1098, %v1099
    %v1101 = vsub.s32 4294967266, %v1096
    %v1102 = vadd.s32 %v1101, 127
    %v1103 = vshll.u32 %v1102, 23
    %v1104 = vor.u32 4788187, %v1103
    %v1105 = vand.u32 2147483647, %v1104
    %v1107 = vcvt.s32.f32 %v1100
    %v1108 = vmul.f32 %v1107, %v1105
    %v1109 = vxor.u32 %v1108, 2147483648
    %v1110 = vsel %vm1027, %v1109, %v1108
    %v1111 = vsub.s32 4, %v1087
    %v1112 = vsel %vm1027, %v1111, %v1087
    %v1113 = vsel %vm1026, %v1024, %v1110
    %v1114 = vsel %vm1026, 0, %v1112
    %v1115 = vcosq.f32.pop %v1113
    %v1116 = vsinq.f32.pop %v1113
    %vm1117 = vweird.f32 %v1024
    %v1118 = vand.u32 %v1114, 3
    %vm1119 = vcmp.lt.s32.totalorder %v1118, 2
    %vm1120 = vcmp.eq.s32.totalorder %v1118, 0
    %v1121 = vxor.u32 %v1116, 2147483648
    %v1122 = vsel %vm1120, %v1115, %v1121
    %vm1123 = vcmp.eq.s32.totalorder %v1118, 2
    %v1124 = vxor.u32 %v1115, 2147483648
    %v1125 = vsel %vm1123, %v1124, %v1116
    %v1126 = vsel %vm1119, %v1122, %v1125
    %v1127 = vsel %vm1117, nan, %v1126
    %v1128 = vstv %s1021
    %v1129 = vmul.f32 %v1128, %v1127
    %v1130 = vadd.f32 %v1020, %v1129
    %s1131 = sld [smem:[#allocation2 + $0x105]]
    %s1132 = sld [smem:[#allocation2 + $0x5]]
    %v1133 = vstv %s1132
    %v1134 = vmul.f32 %v1133, %v23
    %v1135 = vand.u32 2147483647, %v1134
    %vm1136 = vcmp.le.f32.partialorder %v1135, 0.7853982
    %vm1137 = vcmp.lt.s32.totalorder %v1134, 0
    %v1138 = vand.u32 %v1134, 2139095040
    %v1139 = vshrl.u32 %v1138, 23
    %v1140 = vsub.s32 %v1139, 127
    %v1141 = vand.u32 2147483647, %v1134
    %v1142 = vand.u32 %v1141, 8388607
    %v1143 = vor.u32 %v1142, 8388608
    %v1144 = vsub.s32 0, %v1143
    %v1145 = vadd.s32 %v1140, 1
    %vm1146 = vcmp.gt.s32.totalorder %v1145, 0
    %v1147 = vsel %vm1146, %v1145, 0
    %v1148 = vshrl.u32 %v1147, 5
    %v1149 = vand.u32 %v1147, 31
    %v1150 = vsub.s32 32, %v1149
    %v1151 = vshrl.u32 683565275, %v1150
    %v1152 = vshll.u32 683565275, %v1149
    %v1153 = vshrl.u32 2475754826, %v1150
    %v1154 = vor.u32 %v1152, %v1153
    %v1155 = vshll.u32 2475754826, %v1149
    %v1156 = vshrl.u32 2131351028, %v1150
    %v1157 = vor.u32 %v1155, %v1156
    %v1158 = vshll.u32 2131351028, %v1149
    %v1159 = vshrl.u32 2102212464, %v1150
    %v1160 = vor.u32 %v1158, %v1159
    %v1161 = vshll.u32 2102212464, %v1149
    %v1162 = vshrl.u32 920167782, %v1150
    %v1163 = vor.u32 %v1161, %v1162
    %v1164 = vshll.u32 920167782, %v1149
    %v1165 = vshrl.u32 1326507024, %v1150
    %v1166 = vor.u32 %v1164, %v1165
    %vm1167 = vcmp.lt.s32.totalorder %v1148, 1
    %vm1168 = vcmp.lt.s32.totalorder %v1148, 2
    %vm1169 = vcmp.lt.s32.totalorder %v1148, 3
    %vm1170 = vcmp.lt.s32.totalorder %v1148, 4
    %v1171 = vsel %vm1167, %v1151, %v1154
    %v1172 = vsel %vm1170, %v1160, 2102212464
    %v1173 = vsel %vm1169, %v1157, %v1172
    %v1174 = vsel %vm1168, %v1171, %v1173
    %v1175 = vsel %vm1167, %v1154, %v1157
    %v1176 = vsel %vm1170, %v1163, 920167782
    %v1177 = vsel %vm1169, %v1160, %v1176
    %v1178 = vsel %vm1168, %v1175, %v1177
    %v1179 = vsel %vm1167, %v1157, %v1160
    %v1180 = vsel %vm1170, %v1166, 1326507024
    %v1181 = vsel %vm1169, %v1163, %v1180
    %v1182 = vsel %vm1168, %v1179, %v1181
    %v1183 = vshll.u32 %v1143, 8
    %v1184 = vmul.u32.u64.compose %v1183, %v1182
    %v1185 = vextract.low.u32 %v1184
    %v1186 = vextract.high.u32 %v1184
    %v1187 = vmul.u32.u64.compose %v1183, %v1178
    %v1188 = vextract.low.u32 %v1187
    %v1189 = vextract.high.u32 %v1187
    %v1190 = vmul.u32 %v1183, %v1174
    %v1191 = vadd.s32 %v1186, %v1188
    %vm1192 = vc.u32 %v1186, %v1188
    %v1193 = vadd.s32 %v1189, 1
    %v1194 = vsel %vm1192, %v1193, %v1189
    %v1195 = vadd.s32 %v1190, %v1194
    %v1196 = vadd.s32 %v1195, 536870912
    %v1197 = vshrl.u32 %v1196, 30
    %v1198 = vshll.u32 %v1197, 30
    %v1199 = vsub.s32 %v1195, %v1198
    %vm1200 = vcmp.lt.s32.totalorder %v1199, 0
    %v1201 = vsub.s32 0, %v1199
    %v1202 = vsel %vm1200, %v1201, %v1199
    %v1203 = vclz %v1202
    %v1204 = vsub.s32 %v1203, 2
    %vm1205 = vcmp.gt.s32.totalorder 0, %v1204
    %v1206 = vsel %vm1205, 0, %v1204
    %v1207 = vsub.s32 32, %v1206
    %v1208 = vshll.u32 %v1199, %v1206
    %v1209 = vshrl.u32 %v1191, %v1207
    %v1210 = vor.u32 %v1208, %v1209
    %v1211 = vsub.s32 4294967266, %v1206
    %v1212 = vadd.s32 %v1211, 127
    %v1213 = vshll.u32 %v1212, 23
    %v1214 = vor.u32 4788187, %v1213
    %v1215 = vand.u32 2147483647, %v1214
    %v1217 = vcvt.s32.f32 %v1210
    %v1218 = vmul.f32 %v1217, %v1215
    %v1219 = vxor.u32 %v1218, 2147483648
    %v1220 = vsel %vm1137, %v1219, %v1218
    %v1221 = vsub.s32 4, %v1197
    %v1222 = vsel %vm1137, %v1221, %v1197
    %v1223 = vsel %vm1136, %v1134, %v1220
    %v1224 = vsel %vm1136, 0, %v1222
    %v1225 = vcosq.f32.pop %v1223
    %v1226 = vsinq.f32.pop %v1223
    %vm1227 = vweird.f32 %v1134
    %v1228 = vadd.s32 %v1224, 3
    %v1229 = vand.u32 %v1228, 3
    %vm1230 = vcmp.lt.s32.totalorder %v1229, 2
    %vm1231 = vcmp.eq.s32.totalorder %v1229, 0
    %v1232 = vxor.u32 %v1226, 2147483648
    %v1233 = vsel %vm1231, %v1225, %v1232
    %vm1234 = vcmp.eq.s32.totalorder %v1229, 2
    %v1235 = vxor.u32 %v1225, 2147483648
    %v1236 = vsel %vm1234, %v1235, %v1226
    %v1237 = vsel %vm1230, %v1233, %v1236
    %v1238 = vsel %vm1227, nan, %v1237
    %v1239 = vstv %s1131
    %v1240 = vmul.f32 %v1239, %v1238
    %v1241 = vadd.f32 %v1130, %v1240
    %s1242 = sld [smem:[#allocation2 + $0x185]]
    %s1243 = sld [smem:[#allocation2 + $0x85]]
    %v1244 = vstv %s1243
    %v1245 = vmul.f32 %v1244, %v23
    %v1246 = vand.u32 2147483647, %v1245
    %vm1247 = vcmp.le.f32.partialorder %v1246, 0.7853982
    %vm1248 = vcmp.lt.s32.totalorder %v1245, 0
    %v1249 = vand.u32 %v1245, 2139095040
    %v1250 = vshrl.u32 %v1249, 23
    %v1251 = vsub.s32 %v1250, 127
    %v1252 = vand.u32 2147483647, %v1245
    %v1253 = vand.u32 %v1252, 8388607
    %v1254 = vor.u32 %v1253, 8388608
    %v1255 = vsub.s32 0, %v1254
    %v1256 = vadd.s32 %v1251, 1
    %vm1257 = vcmp.gt.s32.totalorder %v1256, 0
    %v1258 = vsel %vm1257, %v1256, 0
    %v1259 = vshrl.u32 %v1258, 5
    %v1260 = vand.u32 %v1258, 31
    %v1261 = vsub.s32 32, %v1260
    %v1262 = vshrl.u32 683565275, %v1261
    %v1263 = vshll.u32 683565275, %v1260
    %v1264 = vshrl.u32 2475754826, %v1261
    %v1265 = vor.u32 %v1263, %v1264
    %v1266 = vshll.u32 2475754826, %v1260
    %v1267 = vshrl.u32 2131351028, %v1261
    %v1268 = vor.u32 %v1266, %v1267
    %v1269 = vshll.u32 2131351028, %v1260
    %v1270 = vshrl.u32 2102212464, %v1261
    %v1271 = vor.u32 %v1269, %v1270
    %v1272 = vshll.u32 2102212464, %v1260
    %v1273 = vshrl.u32 920167782, %v1261
    %v1274 = vor.u32 %v1272, %v1273
    %v1275 = vshll.u32 920167782, %v1260
    %v1276 = vshrl.u32 1326507024, %v1261
    %v1277 = vor.u32 %v1275, %v1276
    %vm1278 = vcmp.lt.s32.totalorder %v1259, 1
    %vm1279 = vcmp.lt.s32.totalorder %v1259, 2
    %vm1280 = vcmp.lt.s32.totalorder %v1259, 3
    %vm1281 = vcmp.lt.s32.totalorder %v1259, 4
    %v1282 = vsel %vm1278, %v1262, %v1265
    %v1283 = vsel %vm1281, %v1271, 2102212464
    %v1284 = vsel %vm1280, %v1268, %v1283
    %v1285 = vsel %vm1279, %v1282, %v1284
    %v1286 = vsel %vm1278, %v1265, %v1268
    %v1287 = vsel %vm1281, %v1274, 920167782
    %v1288 = vsel %vm1280, %v1271, %v1287
    %v1289 = vsel %vm1279, %v1286, %v1288
    %v1290 = vsel %vm1278, %v1268, %v1271
    %v1291 = vsel %vm1281, %v1277, 1326507024
    %v1292 = vsel %vm1280, %v1274, %v1291
    %v1293 = vsel %vm1279, %v1290, %v1292
    %v1294 = vshll.u32 %v1254, 8
    %v1295 = vmul.u32.u64.compose %v1294, %v1293
    %v1296 = vextract.low.u32 %v1295
    %v1297 = vextract.high.u32 %v1295
    %v1298 = vmul.u32.u64.compose %v1294, %v1289
    %v1299 = vextract.low.u32 %v1298
    %v1300 = vextract.high.u32 %v1298
    %v1301 = vmul.u32 %v1294, %v1285
    %v1302 = vadd.s32 %v1297, %v1299
    %vm1303 = vc.u32 %v1297, %v1299
    %v1304 = vadd.s32 %v1300, 1
    %v1305 = vsel %vm1303, %v1304, %v1300
    %v1306 = vadd.s32 %v1301, %v1305
    %v1307 = vadd.s32 %v1306, 536870912
    %v1308 = vshrl.u32 %v1307, 30
    %v1309 = vshll.u32 %v1308, 30
    %v1310 = vsub.s32 %v1306, %v1309
    %vm1311 = vcmp.lt.s32.totalorder %v1310, 0
    %v1312 = vsub.s32 0, %v1310
    %v1313 = vsel %vm1311, %v1312, %v1310
    %v1314 = vclz %v1313
    %v1315 = vsub.s32 %v1314, 2
    %vm1316 = vcmp.gt.s32.totalorder 0, %v1315
    %v1317 = vsel %vm1316, 0, %v1315
    %v1318 = vsub.s32 32, %v1317
    %v1319 = vshll.u32 %v1310, %v1317
    %v1320 = vshrl.u32 %v1302, %v1318
    %v1321 = vor.u32 %v1319, %v1320
    %v1322 = vsub.s32 4294967266, %v1317
    %v1323 = vadd.s32 %v1322, 127
    %v1324 = vshll.u32 %v1323, 23
    %v1325 = vor.u32 4788187, %v1324
    %v1326 = vand.u32 2147483647, %v1325
    %v1328 = vcvt.s32.f32 %v1321
    %v1329 = vmul.f32 %v1328, %v1326
    %v1330 = vxor.u32 %v1329, 2147483648
    %v1331 = vsel %vm1248, %v1330, %v1329
    %v1332 = vsub.s32 4, %v1308
    %v1333 = vsel %vm1248, %v1332, %v1308
    %v1334 = vsel %vm1247, %v1245, %v1331
    %v1335 = vsel %vm1247, 0, %v1333
    %v1336 = vcosq.f32.pop %v1334
    %v1337 = vsinq.f32.pop %v1334
    %vm1338 = vweird.f32 %v1245
    %v1339 = vand.u32 %v1335, 3
    %vm1340 = vcmp.lt.s32.totalorder %v1339, 2
    %vm1341 = vcmp.eq.s32.totalorder %v1339, 0
    %v1342 = vxor.u32 %v1337, 2147483648
    %v1343 = vsel %vm1341, %v1336, %v1342
    %vm1344 = vcmp.eq.s32.totalorder %v1339, 2
    %v1345 = vxor.u32 %v1336, 2147483648
    %v1346 = vsel %vm1344, %v1345, %v1337
    %v1347 = vsel %vm1340, %v1343, %v1346
    %v1348 = vsel %vm1338, nan, %v1347
    %v1349 = vstv %s1242
    %v1350 = vmul.f32 %v1349, %v1348
    %v1351 = vadd.f32 %v1241, %v1350
    %s1352 = sld [smem:[#allocation2 + $0x106]]
    %s1353 = sld [smem:[#allocation2 + $0x6]]
    %v1354 = vstv %s1353
    %v1355 = vmul.f32 %v1354, %v23
    %v1356 = vand.u32 2147483647, %v1355
    %vm1357 = vcmp.le.f32.partialorder %v1356, 0.7853982
    %vm1358 = vcmp.lt.s32.totalorder %v1355, 0
    %v1359 = vand.u32 %v1355, 2139095040
    %v1360 = vshrl.u32 %v1359, 23
    %v1361 = vsub.s32 %v1360, 127
    %v1362 = vand.u32 2147483647, %v1355
    %v1363 = vand.u32 %v1362, 8388607
    %v1364 = vor.u32 %v1363, 8388608
    %v1365 = vsub.s32 0, %v1364
    %v1366 = vadd.s32 %v1361, 1
    %vm1367 = vcmp.gt.s32.totalorder %v1366, 0
    %v1368 = vsel %vm1367, %v1366, 0
    %v1369 = vshrl.u32 %v1368, 5
    %v1370 = vand.u32 %v1368, 31
    %v1371 = vsub.s32 32, %v1370
    %v1372 = vshrl.u32 683565275, %v1371
    %v1373 = vshll.u32 683565275, %v1370
    %v1374 = vshrl.u32 2475754826, %v1371
    %v1375 = vor.u32 %v1373, %v1374
    %v1376 = vshll.u32 2475754826, %v1370
    %v1377 = vshrl.u32 2131351028, %v1371
    %v1378 = vor.u32 %v1376, %v1377
    %v1379 = vshll.u32 2131351028, %v1370
    %v1380 = vshrl.u32 2102212464, %v1371
    %v1381 = vor.u32 %v1379, %v1380
    %v1382 = vshll.u32 2102212464, %v1370
    %v1383 = vshrl.u32 920167782, %v1371
    %v1384 = vor.u32 %v1382, %v1383
    %v1385 = vshll.u32 920167782, %v1370
    %v1386 = vshrl.u32 1326507024, %v1371
    %v1387 = vor.u32 %v1385, %v1386
    %vm1388 = vcmp.lt.s32.totalorder %v1369, 1
    %vm1389 = vcmp.lt.s32.totalorder %v1369, 2
    %vm1390 = vcmp.lt.s32.totalorder %v1369, 3
    %vm1391 = vcmp.lt.s32.totalorder %v1369, 4
    %v1392 = vsel %vm1388, %v1372, %v1375
    %v1393 = vsel %vm1391, %v1381, 2102212464
    %v1394 = vsel %vm1390, %v1378, %v1393
    %v1395 = vsel %vm1389, %v1392, %v1394
    %v1396 = vsel %vm1388, %v1375, %v1378
    %v1397 = vsel %vm1391, %v1384, 920167782
    %v1398 = vsel %vm1390, %v1381, %v1397
    %v1399 = vsel %vm1389, %v1396, %v1398
    %v1400 = vsel %vm1388, %v1378, %v1381
    %v1401 = vsel %vm1391, %v1387, 1326507024
    %v1402 = vsel %vm1390, %v1384, %v1401
    %v1403 = vsel %vm1389, %v1400, %v1402
    %v1404 = vshll.u32 %v1364, 8
    %v1405 = vmul.u32.u64.compose %v1404, %v1403
    %v1406 = vextract.low.u32 %v1405
    %v1407 = vextract.high.u32 %v1405
    %v1408 = vmul.u32.u64.compose %v1404, %v1399
    %v1409 = vextract.low.u32 %v1408
    %v1410 = vextract.high.u32 %v1408
    %v1411 = vmul.u32 %v1404, %v1395
    %v1412 = vadd.s32 %v1407, %v1409
    %vm1413 = vc.u32 %v1407, %v1409
    %v1414 = vadd.s32 %v1410, 1
    %v1415 = vsel %vm1413, %v1414, %v1410
    %v1416 = vadd.s32 %v1411, %v1415
    %v1417 = vadd.s32 %v1416, 536870912
    %v1418 = vshrl.u32 %v1417, 30
    %v1419 = vshll.u32 %v1418, 30
    %v1420 = vsub.s32 %v1416, %v1419
    %vm1421 = vcmp.lt.s32.totalorder %v1420, 0
    %v1422 = vsub.s32 0, %v1420
    %v1423 = vsel %vm1421, %v1422, %v1420
    %v1424 = vclz %v1423
    %v1425 = vsub.s32 %v1424, 2
    %vm1426 = vcmp.gt.s32.totalorder 0, %v1425
    %v1427 = vsel %vm1426, 0, %v1425
    %v1428 = vsub.s32 32, %v1427
    %v1429 = vshll.u32 %v1420, %v1427
    %v1430 = vshrl.u32 %v1412, %v1428
    %v1431 = vor.u32 %v1429, %v1430
    %v1432 = vsub.s32 4294967266, %v1427
    %v1433 = vadd.s32 %v1432, 127
    %v1434 = vshll.u32 %v1433, 23
    %v1435 = vor.u32 4788187, %v1434
    %v1436 = vand.u32 2147483647, %v1435
    %v1438 = vcvt.s32.f32 %v1431
    %v1439 = vmul.f32 %v1438, %v1436
    %v1440 = vxor.u32 %v1439, 2147483648
    %v1441 = vsel %vm1358, %v1440, %v1439
    %v1442 = vsub.s32 4, %v1418
    %v1443 = vsel %vm1358, %v1442, %v1418
    %v1444 = vsel %vm1357, %v1355, %v1441
    %v1445 = vsel %vm1357, 0, %v1443
    %v1446 = vcosq.f32.pop %v1444
    %v1447 = vsinq.f32.pop %v1444
    %vm1448 = vweird.f32 %v1355
    %v1449 = vadd.s32 %v1445, 3
    %v1450 = vand.u32 %v1449, 3
    %vm1451 = vcmp.lt.s32.totalorder %v1450, 2
    %vm1452 = vcmp.eq.s32.totalorder %v1450, 0
    %v1453 = vxor.u32 %v1447, 2147483648
    %v1454 = vsel %vm1452, %v1446, %v1453
    %vm1455 = vcmp.eq.s32.totalorder %v1450, 2
    %v1456 = vxor.u32 %v1446, 2147483648
    %v1457 = vsel %vm1455, %v1456, %v1447
    %v1458 = vsel %vm1451, %v1454, %v1457
    %v1459 = vsel %vm1448, nan, %v1458
    %v1460 = vstv %s1352
    %v1461 = vmul.f32 %v1460, %v1459
    %v1462 = vadd.f32 %v1351, %v1461
    %s1463 = sld [smem:[#allocation2 + $0x186]]
    %s1464 = sld [smem:[#allocation2 + $0x86]]
    %v1465 = vstv %s1464
    %v1466 = vmul.f32 %v1465, %v23
    %v1467 = vand.u32 2147483647, %v1466
    %vm1468 = vcmp.le.f32.partialorder %v1467, 0.7853982
    %vm1469 = vcmp.lt.s32.totalorder %v1466, 0
    %v1470 = vand.u32 %v1466, 2139095040
    %v1471 = vshrl.u32 %v1470, 23
    %v1472 = vsub.s32 %v1471, 127
    %v1473 = vand.u32 2147483647, %v1466
    %v1474 = vand.u32 %v1473, 8388607
    %v1475 = vor.u32 %v1474, 8388608
    %v1476 = vsub.s32 0, %v1475
    %v1477 = vadd.s32 %v1472, 1
    %vm1478 = vcmp.gt.s32.totalorder %v1477, 0
    %v1479 = vsel %vm1478, %v1477, 0
    %v1480 = vshrl.u32 %v1479, 5
    %v1481 = vand.u32 %v1479, 31
    %v1482 = vsub.s32 32, %v1481
    %v1483 = vshrl.u32 683565275, %v1482
    %v1484 = vshll.u32 683565275, %v1481
    %v1485 = vshrl.u32 2475754826, %v1482
    %v1486 = vor.u32 %v1484, %v1485
    %v1487 = vshll.u32 2475754826, %v1481
    %v1488 = vshrl.u32 2131351028, %v1482
    %v1489 = vor.u32 %v1487, %v1488
    %v1490 = vshll.u32 2131351028, %v1481
    %v1491 = vshrl.u32 2102212464, %v1482
    %v1492 = vor.u32 %v1490, %v1491
    %v1493 = vshll.u32 2102212464, %v1481
    %v1494 = vshrl.u32 920167782, %v1482
    %v1495 = vor.u32 %v1493, %v1494
    %v1496 = vshll.u32 920167782, %v1481
    %v1497 = vshrl.u32 1326507024, %v1482
    %v1498 = vor.u32 %v1496, %v1497
    %vm1499 = vcmp.lt.s32.totalorder %v1480, 1
    %vm1500 = vcmp.lt.s32.totalorder %v1480, 2
    %vm1501 = vcmp.lt.s32.totalorder %v1480, 3
    %vm1502 = vcmp.lt.s32.totalorder %v1480, 4
    %v1503 = vsel %vm1499, %v1483, %v1486
    %v1504 = vsel %vm1502, %v1492, 2102212464
    %v1505 = vsel %vm1501, %v1489, %v1504
    %v1506 = vsel %vm1500, %v1503, %v1505
    %v1507 = vsel %vm1499, %v1486, %v1489
    %v1508 = vsel %vm1502, %v1495, 920167782
    %v1509 = vsel %vm1501, %v1492, %v1508
    %v1510 = vsel %vm1500, %v1507, %v1509
    %v1511 = vsel %vm1499, %v1489, %v1492
    %v1512 = vsel %vm1502, %v1498, 1326507024
    %v1513 = vsel %vm1501, %v1495, %v1512
    %v1514 = vsel %vm1500, %v1511, %v1513
    %v1515 = vshll.u32 %v1475, 8
    %v1516 = vmul.u32.u64.compose %v1515, %v1514
    %v1517 = vextract.low.u32 %v1516
    %v1518 = vextract.high.u32 %v1516
    %v1519 = vmul.u32.u64.compose %v1515, %v1510
    %v1520 = vextract.low.u32 %v1519
    %v1521 = vextract.high.u32 %v1519
    %v1522 = vmul.u32 %v1515, %v1506
    %v1523 = vadd.s32 %v1518, %v1520
    %vm1524 = vc.u32 %v1518, %v1520
    %v1525 = vadd.s32 %v1521, 1
    %v1526 = vsel %vm1524, %v1525, %v1521
    %v1527 = vadd.s32 %v1522, %v1526
    %v1528 = vadd.s32 %v1527, 536870912
    %v1529 = vshrl.u32 %v1528, 30
    %v1530 = vshll.u32 %v1529, 30
    %v1531 = vsub.s32 %v1527, %v1530
    %vm1532 = vcmp.lt.s32.totalorder %v1531, 0
    %v1533 = vsub.s32 0, %v1531
    %v1534 = vsel %vm1532, %v1533, %v1531
    %v1535 = vclz %v1534
    %v1536 = vsub.s32 %v1535, 2
    %vm1537 = vcmp.gt.s32.totalorder 0, %v1536
    %v1538 = vsel %vm1537, 0, %v1536
    %v1539 = vsub.s32 32, %v1538
    %v1540 = vshll.u32 %v1531, %v1538
    %v1541 = vshrl.u32 %v1523, %v1539
    %v1542 = vor.u32 %v1540, %v1541
    %v1543 = vsub.s32 4294967266, %v1538
    %v1544 = vadd.s32 %v1543, 127
    %v1545 = vshll.u32 %v1544, 23
    %v1546 = vor.u32 4788187, %v1545
    %v1547 = vand.u32 2147483647, %v1546
    %v1549 = vcvt.s32.f32 %v1542
    %v1550 = vmul.f32 %v1549, %v1547
    %v1551 = vxor.u32 %v1550, 2147483648
    %v1552 = vsel %vm1469, %v1551, %v1550
    %v1553 = vsub.s32 4, %v1529
    %v1554 = vsel %vm1469, %v1553, %v1529
    %v1555 = vsel %vm1468, %v1466, %v1552
    %v1556 = vsel %vm1468, 0, %v1554
    %v1557 = vcosq.f32.pop %v1555
    %v1558 = vsinq.f32.pop %v1555
    %vm1559 = vweird.f32 %v1466
    %v1560 = vand.u32 %v1556, 3
    %vm1561 = vcmp.lt.s32.totalorder %v1560, 2
    %vm1562 = vcmp.eq.s32.totalorder %v1560, 0
    %v1563 = vxor.u32 %v1558, 2147483648
    %v1564 = vsel %vm1562, %v1557, %v1563
    %vm1565 = vcmp.eq.s32.totalorder %v1560, 2
    %v1566 = vxor.u32 %v1557, 2147483648
    %v1567 = vsel %vm1565, %v1566, %v1558
    %v1568 = vsel %vm1561, %v1564, %v1567
    %v1569 = vsel %vm1559, nan, %v1568
    %v1570 = vstv %s1463
    %v1571 = vmul.f32 %v1570, %v1569
    %v1572 = vadd.f32 %v1462, %v1571
    %s1573 = sld [smem:[#allocation2 + $0x107]]
    %s1574 = sld [smem:[#allocation2 + $0x7]]
    %v1575 = vstv %s1574
    %v1576 = vmul.f32 %v1575, %v23
    %v1577 = vand.u32 2147483647, %v1576
    %vm1578 = vcmp.le.f32.partialorder %v1577, 0.7853982
    %vm1579 = vcmp.lt.s32.totalorder %v1576, 0
    %v1580 = vand.u32 %v1576, 2139095040
    %v1581 = vshrl.u32 %v1580, 23
    %v1582 = vsub.s32 %v1581, 127
    %v1583 = vand.u32 2147483647, %v1576
    %v1584 = vand.u32 %v1583, 8388607
    %v1585 = vor.u32 %v1584, 8388608
    %v1586 = vsub.s32 0, %v1585
    %v1587 = vadd.s32 %v1582, 1
    %vm1588 = vcmp.gt.s32.totalorder %v1587, 0
    %v1589 = vsel %vm1588, %v1587, 0
    %v1590 = vshrl.u32 %v1589, 5
    %v1591 = vand.u32 %v1589, 31
    %v1592 = vsub.s32 32, %v1591
    %v1593 = vshrl.u32 683565275, %v1592
    %v1594 = vshll.u32 683565275, %v1591
    %v1595 = vshrl.u32 2475754826, %v1592
    %v1596 = vor.u32 %v1594, %v1595
    %v1597 = vshll.u32 2475754826, %v1591
    %v1598 = vshrl.u32 2131351028, %v1592
    %v1599 = vor.u32 %v1597, %v1598
    %v1600 = vshll.u32 2131351028, %v1591
    %v1601 = vshrl.u32 2102212464, %v1592
    %v1602 = vor.u32 %v1600, %v1601
    %v1603 = vshll.u32 2102212464, %v1591
    %v1604 = vshrl.u32 920167782, %v1592
    %v1605 = vor.u32 %v1603, %v1604
    %v1606 = vshll.u32 920167782, %v1591
    %v1607 = vshrl.u32 1326507024, %v1592
    %v1608 = vor.u32 %v1606, %v1607
    %vm1609 = vcmp.lt.s32.totalorder %v1590, 1
    %vm1610 = vcmp.lt.s32.totalorder %v1590, 2
    %vm1611 = vcmp.lt.s32.totalorder %v1590, 3
    %vm1612 = vcmp.lt.s32.totalorder %v1590, 4
    %v1613 = vsel %vm1609, %v1593, %v1596
    %v1614 = vsel %vm1612, %v1602, 2102212464
    %v1615 = vsel %vm1611, %v1599, %v1614
    %v1616 = vsel %vm1610, %v1613, %v1615
    %v1617 = vsel %vm1609, %v1596, %v1599
    %v1618 = vsel %vm1612, %v1605, 920167782
    %v1619 = vsel %vm1611, %v1602, %v1618
    %v1620 = vsel %vm1610, %v1617, %v1619
    %v1621 = vsel %vm1609, %v1599, %v1602
    %v1622 = vsel %vm1612, %v1608, 1326507024
    %v1623 = vsel %vm1611, %v1605, %v1622
    %v1624 = vsel %vm1610, %v1621, %v1623
    %v1625 = vshll.u32 %v1585, 8
    %v1626 = vmul.u32.u64.compose %v1625, %v1624
    %v1627 = vextract.low.u32 %v1626
    %v1628 = vextract.high.u32 %v1626
    %v1629 = vmul.u32.u64.compose %v1625, %v1620
    %v1630 = vextract.low.u32 %v1629
    %v1631 = vextract.high.u32 %v1629
    %v1632 = vmul.u32 %v1625, %v1616
    %v1633 = vadd.s32 %v1628, %v1630
    %vm1634 = vc.u32 %v1628, %v1630
    %v1635 = vadd.s32 %v1631, 1
    %v1636 = vsel %vm1634, %v1635, %v1631
    %v1637 = vadd.s32 %v1632, %v1636
    %v1638 = vadd.s32 %v1637, 536870912
    %v1639 = vshrl.u32 %v1638, 30
    %v1640 = vshll.u32 %v1639, 30
    %v1641 = vsub.s32 %v1637, %v1640
    %vm1642 = vcmp.lt.s32.totalorder %v1641, 0
    %v1643 = vsub.s32 0, %v1641
    %v1644 = vsel %vm1642, %v1643, %v1641
    %v1645 = vclz %v1644
    %v1646 = vsub.s32 %v1645, 2
    %vm1647 = vcmp.gt.s32.totalorder 0, %v1646
    %v1648 = vsel %vm1647, 0, %v1646
    %v1649 = vsub.s32 32, %v1648
    %v1650 = vshll.u32 %v1641, %v1648
    %v1651 = vshrl.u32 %v1633, %v1649
    %v1652 = vor.u32 %v1650, %v1651
    %v1653 = vsub.s32 4294967266, %v1648
    %v1654 = vadd.s32 %v1653, 127
    %v1655 = vshll.u32 %v1654, 23
    %v1656 = vor.u32 4788187, %v1655
    %v1657 = vand.u32 2147483647, %v1656
    %v1659 = vcvt.s32.f32 %v1652
    %v1660 = vmul.f32 %v1659, %v1657
    %v1661 = vxor.u32 %v1660, 2147483648
    %v1662 = vsel %vm1579, %v1661, %v1660
    %v1663 = vsub.s32 4, %v1639
    %v1664 = vsel %vm1579, %v1663, %v1639
    %v1665 = vsel %vm1578, %v1576, %v1662
    %v1666 = vsel %vm1578, 0, %v1664
    %v1667 = vcosq.f32.pop %v1665
    %v1668 = vsinq.f32.pop %v1665
    %vm1669 = vweird.f32 %v1576
    %v1670 = vadd.s32 %v1666, 3
    %v1671 = vand.u32 %v1670, 3
    %vm1672 = vcmp.lt.s32.totalorder %v1671, 2
    %vm1673 = vcmp.eq.s32.totalorder %v1671, 0
    %v1674 = vxor.u32 %v1668, 2147483648
    %v1675 = vsel %vm1673, %v1667, %v1674
    %vm1676 = vcmp.eq.s32.totalorder %v1671, 2
    %v1677 = vxor.u32 %v1667, 2147483648
    %v1678 = vsel %vm1676, %v1677, %v1668
    %v1679 = vsel %vm1672, %v1675, %v1678
    %v1680 = vsel %vm1669, nan, %v1679
    %v1681 = vstv %s1573
    %v1682 = vmul.f32 %v1681, %v1680
    %v1683 = vadd.f32 %v1572, %v1682
    %s1684 = sld [smem:[#allocation2 + $0x187]]
    %s1685 = sld [smem:[#allocation2 + $0x87]]
    %v1686 = vstv %s1685
    %v1687 = vmul.f32 %v1686, %v23
    %v1688 = vand.u32 2147483647, %v1687
    %vm1689 = vcmp.le.f32.partialorder %v1688, 0.7853982
    %vm1690 = vcmp.lt.s32.totalorder %v1687, 0
    %v1691 = vand.u32 %v1687, 2139095040
    %v1692 = vshrl.u32 %v1691, 23
    %v1693 = vsub.s32 %v1692, 127
    %v1694 = vand.u32 2147483647, %v1687
    %v1695 = vand.u32 %v1694, 8388607
    %v1696 = vor.u32 %v1695, 8388608
    %v1697 = vsub.s32 0, %v1696
    %v1698 = vadd.s32 %v1693, 1
    %vm1699 = vcmp.gt.s32.totalorder %v1698, 0
    %v1700 = vsel %vm1699, %v1698, 0
    %v1701 = vshrl.u32 %v1700, 5
    %v1702 = vand.u32 %v1700, 31
    %v1703 = vsub.s32 32, %v1702
    %v1704 = vshrl.u32 683565275, %v1703
    %v1705 = vshll.u32 683565275, %v1702
    %v1706 = vshrl.u32 2475754826, %v1703
    %v1707 = vor.u32 %v1705, %v1706
    %v1708 = vshll.u32 2475754826, %v1702
    %v1709 = vshrl.u32 2131351028, %v1703
    %v1710 = vor.u32 %v1708, %v1709
    %v1711 = vshll.u32 2131351028, %v1702
    %v1712 = vshrl.u32 2102212464, %v1703
    %v1713 = vor.u32 %v1711, %v1712
    %v1714 = vshll.u32 2102212464, %v1702
    %v1715 = vshrl.u32 920167782, %v1703
    %v1716 = vor.u32 %v1714, %v1715
    %v1717 = vshll.u32 920167782, %v1702
    %v1718 = vshrl.u32 1326507024, %v1703
    %v1719 = vor.u32 %v1717, %v1718
    %vm1720 = vcmp.lt.s32.totalorder %v1701, 1
    %vm1721 = vcmp.lt.s32.totalorder %v1701, 2
    %vm1722 = vcmp.lt.s32.totalorder %v1701, 3
    %vm1723 = vcmp.lt.s32.totalorder %v1701, 4
    %v1724 = vsel %vm1720, %v1704, %v1707
    %v1725 = vsel %vm1723, %v1713, 2102212464
    %v1726 = vsel %vm1722, %v1710, %v1725
    %v1727 = vsel %vm1721, %v1724, %v1726
    %v1728 = vsel %vm1720, %v1707, %v1710
    %v1729 = vsel %vm1723, %v1716, 920167782
    %v1730 = vsel %vm1722, %v1713, %v1729
    %v1731 = vsel %vm1721, %v1728, %v1730
    %v1732 = vsel %vm1720, %v1710, %v1713
    %v1733 = vsel %vm1723, %v1719, 1326507024
    %v1734 = vsel %vm1722, %v1716, %v1733
    %v1735 = vsel %vm1721, %v1732, %v1734
    %v1736 = vshll.u32 %v1696, 8
    %v1737 = vmul.u32.u64.compose %v1736, %v1735
    %v1738 = vextract.low.u32 %v1737
    %v1739 = vextract.high.u32 %v1737
    %v1740 = vmul.u32.u64.compose %v1736, %v1731
    %v1741 = vextract.low.u32 %v1740
    %v1742 = vextract.high.u32 %v1740
    %v1743 = vmul.u32 %v1736, %v1727
    %v1744 = vadd.s32 %v1739, %v1741
    %vm1745 = vc.u32 %v1739, %v1741
    %v1746 = vadd.s32 %v1742, 1
    %v1747 = vsel %vm1745, %v1746, %v1742
    %v1748 = vadd.s32 %v1743, %v1747
    %v1749 = vadd.s32 %v1748, 536870912
    %v1750 = vshrl.u32 %v1749, 30
    %v1751 = vshll.u32 %v1750, 30
    %v1752 = vsub.s32 %v1748, %v1751
    %vm1753 = vcmp.lt.s32.totalorder %v1752, 0
    %v1754 = vsub.s32 0, %v1752
    %v1755 = vsel %vm1753, %v1754, %v1752
    %v1756 = vclz %v1755
    %v1757 = vsub.s32 %v1756, 2
    %vm1758 = vcmp.gt.s32.totalorder 0, %v1757
    %v1759 = vsel %vm1758, 0, %v1757
    %v1760 = vsub.s32 32, %v1759
    %v1761 = vshll.u32 %v1752, %v1759
    %v1762 = vshrl.u32 %v1744, %v1760
    %v1763 = vor.u32 %v1761, %v1762
    %v1764 = vsub.s32 4294967266, %v1759
    %v1765 = vadd.s32 %v1764, 127
    %v1766 = vshll.u32 %v1765, 23
    %v1767 = vor.u32 4788187, %v1766
    %v1768 = vand.u32 2147483647, %v1767
    %v1770 = vcvt.s32.f32 %v1763
    %v1771 = vmul.f32 %v1770, %v1768
    %v1772 = vxor.u32 %v1771, 2147483648
    %v1773 = vsel %vm1690, %v1772, %v1771
    %v1774 = vsub.s32 4, %v1750
    %v1775 = vsel %vm1690, %v1774, %v1750
    %v1776 = vsel %vm1689, %v1687, %v1773
    %v1777 = vsel %vm1689, 0, %v1775
    %v1778 = vcosq.f32.pop %v1776
    %v1779 = vsinq.f32.pop %v1776
    %vm1780 = vweird.f32 %v1687
    %v1781 = vand.u32 %v1777, 3
    %vm1782 = vcmp.lt.s32.totalorder %v1781, 2
    %vm1783 = vcmp.eq.s32.totalorder %v1781, 0
    %v1784 = vxor.u32 %v1779, 2147483648
    %v1785 = vsel %vm1783, %v1778, %v1784
    %vm1786 = vcmp.eq.s32.totalorder %v1781, 2
    %v1787 = vxor.u32 %v1778, 2147483648
    %v1788 = vsel %vm1786, %v1787, %v1779
    %v1789 = vsel %vm1782, %v1785, %v1788
    %v1790 = vsel %vm1780, nan, %v1789
    %v1791 = vstv %s1684
    %v1792 = vmul.f32 %v1791, %v1790
    %v1793 = vadd.f32 %v1683, %v1792
    %s1794 = sld [smem:[#allocation2 + $0x108]]
    %s1795 = sld [smem:[#allocation2 + $0x8]]
    %v1796 = vstv %s1795
    %v1797 = vmul.f32 %v1796, %v23
    %v1798 = vand.u32 2147483647, %v1797
    %vm1799 = vcmp.le.f32.partialorder %v1798, 0.7853982
    %vm1800 = vcmp.lt.s32.totalorder %v1797, 0
    %v1801 = vand.u32 %v1797, 2139095040
    %v1802 = vshrl.u32 %v1801, 23
    %v1803 = vsub.s32 %v1802, 127
    %v1804 = vand.u32 2147483647, %v1797
    %v1805 = vand.u32 %v1804, 8388607
    %v1806 = vor.u32 %v1805, 8388608
    %v1807 = vsub.s32 0, %v1806
    %v1808 = vadd.s32 %v1803, 1
    %vm1809 = vcmp.gt.s32.totalorder %v1808, 0
    %v1810 = vsel %vm1809, %v1808, 0
    %v1811 = vshrl.u32 %v1810, 5
    %v1812 = vand.u32 %v1810, 31
    %v1813 = vsub.s32 32, %v1812
    %v1814 = vshrl.u32 683565275, %v1813
    %v1815 = vshll.u32 683565275, %v1812
    %v1816 = vshrl.u32 2475754826, %v1813
    %v1817 = vor.u32 %v1815, %v1816
    %v1818 = vshll.u32 2475754826, %v1812
    %v1819 = vshrl.u32 2131351028, %v1813
    %v1820 = vor.u32 %v1818, %v1819
    %v1821 = vshll.u32 2131351028, %v1812
    %v1822 = vshrl.u32 2102212464, %v1813
    %v1823 = vor.u32 %v1821, %v1822
    %v1824 = vshll.u32 2102212464, %v1812
    %v1825 = vshrl.u32 920167782, %v1813
    %v1826 = vor.u32 %v1824, %v1825
    %v1827 = vshll.u32 920167782, %v1812
    %v1828 = vshrl.u32 1326507024, %v1813
    %v1829 = vor.u32 %v1827, %v1828
    %vm1830 = vcmp.lt.s32.totalorder %v1811, 1
    %vm1831 = vcmp.lt.s32.totalorder %v1811, 2
    %vm1832 = vcmp.lt.s32.totalorder %v1811, 3
    %vm1833 = vcmp.lt.s32.totalorder %v1811, 4
    %v1834 = vsel %vm1830, %v1814, %v1817
    %v1835 = vsel %vm1833, %v1823, 2102212464
    %v1836 = vsel %vm1832, %v1820, %v1835
    %v1837 = vsel %vm1831, %v1834, %v1836
    %v1838 = vsel %vm1830, %v1817, %v1820
    %v1839 = vsel %vm1833, %v1826, 920167782
    %v1840 = vsel %vm1832, %v1823, %v1839
    %v1841 = vsel %vm1831, %v1838, %v1840
    %v1842 = vsel %vm1830, %v1820, %v1823
    %v1843 = vsel %vm1833, %v1829, 1326507024
    %v1844 = vsel %vm1832, %v1826, %v1843
    %v1845 = vsel %vm1831, %v1842, %v1844
    %v1846 = vshll.u32 %v1806, 8
    %v1847 = vmul.u32.u64.compose %v1846, %v1845
    %v1848 = vextract.low.u32 %v1847
    %v1849 = vextract.high.u32 %v1847
    %v1850 = vmul.u32.u64.compose %v1846, %v1841
    %v1851 = vextract.low.u32 %v1850
    %v1852 = vextract.high.u32 %v1850
    %v1853 = vmul.u32 %v1846, %v1837
    %v1854 = vadd.s32 %v1849, %v1851
    %vm1855 = vc.u32 %v1849, %v1851
    %v1856 = vadd.s32 %v1852, 1
    %v1857 = vsel %vm1855, %v1856, %v1852
    %v1858 = vadd.s32 %v1853, %v1857
    %v1859 = vadd.s32 %v1858, 536870912
    %v1860 = vshrl.u32 %v1859, 30
    %v1861 = vshll.u32 %v1860, 30
    %v1862 = vsub.s32 %v1858, %v1861
    %vm1863 = vcmp.lt.s32.totalorder %v1862, 0
    %v1864 = vsub.s32 0, %v1862
    %v1865 = vsel %vm1863, %v1864, %v1862
    %v1866 = vclz %v1865
    %v1867 = vsub.s32 %v1866, 2
    %vm1868 = vcmp.gt.s32.totalorder 0, %v1867
    %v1869 = vsel %vm1868, 0, %v1867
    %v1870 = vsub.s32 32, %v1869
    %v1871 = vshll.u32 %v1862, %v1869
    %v1872 = vshrl.u32 %v1854, %v1870
    %v1873 = vor.u32 %v1871, %v1872
    %v1874 = vsub.s32 4294967266, %v1869
    %v1875 = vadd.s32 %v1874, 127
    %v1876 = vshll.u32 %v1875, 23
    %v1877 = vor.u32 4788187, %v1876
    %v1878 = vand.u32 2147483647, %v1877
    %v1880 = vcvt.s32.f32 %v1873
    %v1881 = vmul.f32 %v1880, %v1878
    %v1882 = vxor.u32 %v1881, 2147483648
    %v1883 = vsel %vm1800, %v1882, %v1881
    %v1884 = vsub.s32 4, %v1860
    %v1885 = vsel %vm1800, %v1884, %v1860
    %v1886 = vsel %vm1799, %v1797, %v1883
    %v1887 = vsel %vm1799, 0, %v1885
    %v1888 = vcosq.f32.pop %v1886
    %v1889 = vsinq.f32.pop %v1886
    %vm1890 = vweird.f32 %v1797
    %v1891 = vadd.s32 %v1887, 3
    %v1892 = vand.u32 %v1891, 3
    %vm1893 = vcmp.lt.s32.totalorder %v1892, 2
    %vm1894 = vcmp.eq.s32.totalorder %v1892, 0
    %v1895 = vxor.u32 %v1889, 2147483648
    %v1896 = vsel %vm1894, %v1888, %v1895
    %vm1897 = vcmp.eq.s32.totalorder %v1892, 2
    %v1898 = vxor.u32 %v1888, 2147483648
    %v1899 = vsel %vm1897, %v1898, %v1889
    %v1900 = vsel %vm1893, %v1896, %v1899
    %v1901 = vsel %vm1890, nan, %v1900
    %v1902 = vstv %s1794
    %v1903 = vmul.f32 %v1902, %v1901
    %v1904 = vadd.f32 %v1793, %v1903
    %s1905 = sld [smem:[#allocation2 + $0x188]]
    %s1906 = sld [smem:[#allocation2 + $0x88]]
    %v1907 = vstv %s1906
    %v1908 = vmul.f32 %v1907, %v23
    %v1909 = vand.u32 2147483647, %v1908
    %vm1910 = vcmp.le.f32.partialorder %v1909, 0.7853982
    %vm1911 = vcmp.lt.s32.totalorder %v1908, 0
    %v1912 = vand.u32 %v1908, 2139095040
    %v1913 = vshrl.u32 %v1912, 23
    %v1914 = vsub.s32 %v1913, 127
    %v1915 = vand.u32 2147483647, %v1908
    %v1916 = vand.u32 %v1915, 8388607
    %v1917 = vor.u32 %v1916, 8388608
    %v1918 = vsub.s32 0, %v1917
    %v1919 = vadd.s32 %v1914, 1
    %vm1920 = vcmp.gt.s32.totalorder %v1919, 0
    %v1921 = vsel %vm1920, %v1919, 0
    %v1922 = vshrl.u32 %v1921, 5
    %v1923 = vand.u32 %v1921, 31
    %v1924 = vsub.s32 32, %v1923
    %v1925 = vshrl.u32 683565275, %v1924
    %v1926 = vshll.u32 683565275, %v1923
    %v1927 = vshrl.u32 2475754826, %v1924
    %v1928 = vor.u32 %v1926, %v1927
    %v1929 = vshll.u32 2475754826, %v1923
    %v1930 = vshrl.u32 2131351028, %v1924
    %v1931 = vor.u32 %v1929, %v1930
    %v1932 = vshll.u32 2131351028, %v1923
    %v1933 = vshrl.u32 2102212464, %v1924
    %v1934 = vor.u32 %v1932, %v1933
    %v1935 = vshll.u32 2102212464, %v1923
    %v1936 = vshrl.u32 920167782, %v1924
    %v1937 = vor.u32 %v1935, %v1936
    %v1938 = vshll.u32 920167782, %v1923
    %v1939 = vshrl.u32 1326507024, %v1924
    %v1940 = vor.u32 %v1938, %v1939
    %vm1941 = vcmp.lt.s32.totalorder %v1922, 1
    %vm1942 = vcmp.lt.s32.totalorder %v1922, 2
    %vm1943 = vcmp.lt.s32.totalorder %v1922, 3
    %vm1944 = vcmp.lt.s32.totalorder %v1922, 4
    %v1945 = vsel %vm1941, %v1925, %v1928
    %v1946 = vsel %vm1944, %v1934, 2102212464
    %v1947 = vsel %vm1943, %v1931, %v1946
    %v1948 = vsel %vm1942, %v1945, %v1947
    %v1949 = vsel %vm1941, %v1928, %v1931
    %v1950 = vsel %vm1944, %v1937, 920167782
    %v1951 = vsel %vm1943, %v1934, %v1950
    %v1952 = vsel %vm1942, %v1949, %v1951
    %v1953 = vsel %vm1941, %v1931, %v1934
    %v1954 = vsel %vm1944, %v1940, 1326507024
    %v1955 = vsel %vm1943, %v1937, %v1954
    %v1956 = vsel %vm1942, %v1953, %v1955
    %v1957 = vshll.u32 %v1917, 8
    %v1958 = vmul.u32.u64.compose %v1957, %v1956
    %v1959 = vextract.low.u32 %v1958
    %v1960 = vextract.high.u32 %v1958
    %v1961 = vmul.u32.u64.compose %v1957, %v1952
    %v1962 = vextract.low.u32 %v1961
    %v1963 = vextract.high.u32 %v1961
    %v1964 = vmul.u32 %v1957, %v1948
    %v1965 = vadd.s32 %v1960, %v1962
    %vm1966 = vc.u32 %v1960, %v1962
    %v1967 = vadd.s32 %v1963, 1
    %v1968 = vsel %vm1966, %v1967, %v1963
    %v1969 = vadd.s32 %v1964, %v1968
    %v1970 = vadd.s32 %v1969, 536870912
    %v1971 = vshrl.u32 %v1970, 30
    %v1972 = vshll.u32 %v1971, 30
    %v1973 = vsub.s32 %v1969, %v1972
    %vm1974 = vcmp.lt.s32.totalorder %v1973, 0
    %v1975 = vsub.s32 0, %v1973
    %v1976 = vsel %vm1974, %v1975, %v1973
    %v1977 = vclz %v1976
    %v1978 = vsub.s32 %v1977, 2
    %vm1979 = vcmp.gt.s32.totalorder 0, %v1978
    %v1980 = vsel %vm1979, 0, %v1978
    %v1981 = vsub.s32 32, %v1980
    %v1982 = vshll.u32 %v1973, %v1980
    %v1983 = vshrl.u32 %v1965, %v1981
    %v1984 = vor.u32 %v1982, %v1983
    %v1985 = vsub.s32 4294967266, %v1980
    %v1986 = vadd.s32 %v1985, 127
    %v1987 = vshll.u32 %v1986, 23
    %v1988 = vor.u32 4788187, %v1987
    %v1989 = vand.u32 2147483647, %v1988
    %v1991 = vcvt.s32.f32 %v1984
    %v1992 = vmul.f32 %v1991, %v1989
    %v1993 = vxor.u32 %v1992, 2147483648
    %v1994 = vsel %vm1911, %v1993, %v1992
    %v1995 = vsub.s32 4, %v1971
    %v1996 = vsel %vm1911, %v1995, %v1971
    %v1997 = vsel %vm1910, %v1908, %v1994
    %v1998 = vsel %vm1910, 0, %v1996
    %v1999 = vcosq.f32.pop %v1997
    %v2000 = vsinq.f32.pop %v1997
    %vm2001 = vweird.f32 %v1908
    %v2002 = vand.u32 %v1998, 3
    %vm2003 = vcmp.lt.s32.totalorder %v2002, 2
    %vm2004 = vcmp.eq.s32.totalorder %v2002, 0
    %v2005 = vxor.u32 %v2000, 2147483648
    %v2006 = vsel %vm2004, %v1999, %v2005
    %vm2007 = vcmp.eq.s32.totalorder %v2002, 2
    %v2008 = vxor.u32 %v1999, 2147483648
    %v2009 = vsel %vm2007, %v2008, %v2000
    %v2010 = vsel %vm2003, %v2006, %v2009
    %v2011 = vsel %vm2001, nan, %v2010
    %v2012 = vstv %s1905
    %v2013 = vmul.f32 %v2012, %v2011
    %v2014 = vadd.f32 %v1904, %v2013
    %s2015 = sld [smem:[#allocation2 + $0x109]]
    %s2016 = sld [smem:[#allocation2 + $0x9]]
    %v2017 = vstv %s2016
    %v2018 = vmul.f32 %v2017, %v23
    %v2019 = vand.u32 2147483647, %v2018
    %vm2020 = vcmp.le.f32.partialorder %v2019, 0.7853982
    %vm2021 = vcmp.lt.s32.totalorder %v2018, 0
    %v2022 = vand.u32 %v2018, 2139095040
    %v2023 = vshrl.u32 %v2022, 23
    %v2024 = vsub.s32 %v2023, 127
    %v2025 = vand.u32 2147483647, %v2018
    %v2026 = vand.u32 %v2025, 8388607
    %v2027 = vor.u32 %v2026, 8388608
    %v2028 = vsub.s32 0, %v2027
    %v2029 = vadd.s32 %v2024, 1
    %vm2030 = vcmp.gt.s32.totalorder %v2029, 0
    %v2031 = vsel %vm2030, %v2029, 0
    %v2032 = vshrl.u32 %v2031, 5
    %v2033 = vand.u32 %v2031, 31
    %v2034 = vsub.s32 32, %v2033
    %v2035 = vshrl.u32 683565275, %v2034
    %v2036 = vshll.u32 683565275, %v2033
    %v2037 = vshrl.u32 2475754826, %v2034
    %v2038 = vor.u32 %v2036, %v2037
    %v2039 = vshll.u32 2475754826, %v2033
    %v2040 = vshrl.u32 2131351028, %v2034
    %v2041 = vor.u32 %v2039, %v2040
    %v2042 = vshll.u32 2131351028, %v2033
    %v2043 = vshrl.u32 2102212464, %v2034
    %v2044 = vor.u32 %v2042, %v2043
    %v2045 = vshll.u32 2102212464, %v2033
    %v2046 = vshrl.u32 920167782, %v2034
    %v2047 = vor.u32 %v2045, %v2046
    %v2048 = vshll.u32 920167782, %v2033
    %v2049 = vshrl.u32 1326507024, %v2034
    %v2050 = vor.u32 %v2048, %v2049
    %vm2051 = vcmp.lt.s32.totalorder %v2032, 1
    %vm2052 = vcmp.lt.s32.totalorder %v2032, 2
    %vm2053 = vcmp.lt.s32.totalorder %v2032, 3
    %vm2054 = vcmp.lt.s32.totalorder %v2032, 4
    %v2055 = vsel %vm2051, %v2035, %v2038
    %v2056 = vsel %vm2054, %v2044, 2102212464
    %v2057 = vsel %vm2053, %v2041, %v2056
    %v2058 = vsel %vm2052, %v2055, %v2057
    %v2059 = vsel %vm2051, %v2038, %v2041
    %v2060 = vsel %vm2054, %v2047, 920167782
    %v2061 = vsel %vm2053, %v2044, %v2060
    %v2062 = vsel %vm2052, %v2059, %v2061
    %v2063 = vsel %vm2051, %v2041, %v2044
    %v2064 = vsel %vm2054, %v2050, 1326507024
    %v2065 = vsel %vm2053, %v2047, %v2064
    %v2066 = vsel %vm2052, %v2063, %v2065
    %v2067 = vshll.u32 %v2027, 8
    %v2068 = vmul.u32.u64.compose %v2067, %v2066
    %v2069 = vextract.low.u32 %v2068
    %v2070 = vextract.high.u32 %v2068
    %v2071 = vmul.u32.u64.compose %v2067, %v2062
    %v2072 = vextract.low.u32 %v2071
    %v2073 = vextract.high.u32 %v2071
    %v2074 = vmul.u32 %v2067, %v2058
    %v2075 = vadd.s32 %v2070, %v2072
    %vm2076 = vc.u32 %v2070, %v2072
    %v2077 = vadd.s32 %v2073, 1
    %v2078 = vsel %vm2076, %v2077, %v2073
    %v2079 = vadd.s32 %v2074, %v2078
    %v2080 = vadd.s32 %v2079, 536870912
    %v2081 = vshrl.u32 %v2080, 30
    %v2082 = vshll.u32 %v2081, 30
    %v2083 = vsub.s32 %v2079, %v2082
    %vm2084 = vcmp.lt.s32.totalorder %v2083, 0
    %v2085 = vsub.s32 0, %v2083
    %v2086 = vsel %vm2084, %v2085, %v2083
    %v2087 = vclz %v2086
    %v2088 = vsub.s32 %v2087, 2
    %vm2089 = vcmp.gt.s32.totalorder 0, %v2088
    %v2090 = vsel %vm2089, 0, %v2088
    %v2091 = vsub.s32 32, %v2090
    %v2092 = vshll.u32 %v2083, %v2090
    %v2093 = vshrl.u32 %v2075, %v2091
    %v2094 = vor.u32 %v2092, %v2093
    %v2095 = vsub.s32 4294967266, %v2090
    %v2096 = vadd.s32 %v2095, 127
    %v2097 = vshll.u32 %v2096, 23
    %v2098 = vor.u32 4788187, %v2097
    %v2099 = vand.u32 2147483647, %v2098
    %v2101 = vcvt.s32.f32 %v2094
    %v2102 = vmul.f32 %v2101, %v2099
    %v2103 = vxor.u32 %v2102, 2147483648
    %v2104 = vsel %vm2021, %v2103, %v2102
    %v2105 = vsub.s32 4, %v2081
    %v2106 = vsel %vm2021, %v2105, %v2081
    %v2107 = vsel %vm2020, %v2018, %v2104
    %v2108 = vsel %vm2020, 0, %v2106
    %v2109 = vcosq.f32.pop %v2107
    %v2110 = vsinq.f32.pop %v2107
    %vm2111 = vweird.f32 %v2018
    %v2112 = vadd.s32 %v2108, 3
    %v2113 = vand.u32 %v2112, 3
    %vm2114 = vcmp.lt.s32.totalorder %v2113, 2
    %vm2115 = vcmp.eq.s32.totalorder %v2113, 0
    %v2116 = vxor.u32 %v2110, 2147483648
    %v2117 = vsel %vm2115, %v2109, %v2116
    %vm2118 = vcmp.eq.s32.totalorder %v2113, 2
    %v2119 = vxor.u32 %v2109, 2147483648
    %v2120 = vsel %vm2118, %v2119, %v2110
    %v2121 = vsel %vm2114, %v2117, %v2120
    %v2122 = vsel %vm2111, nan, %v2121
    %v2123 = vstv %s2015
    %v2124 = vmul.f32 %v2123, %v2122
    %v2125 = vadd.f32 %v2014, %v2124
    %s2126 = sld [smem:[#allocation2 + $0x189]]
    %s2127 = sld [smem:[#allocation2 + $0x89]]
    %v2128 = vstv %s2127
    %v2129 = vmul.f32 %v2128, %v23
    %v2130 = vand.u32 2147483647, %v2129
    %vm2131 = vcmp.le.f32.partialorder %v2130, 0.7853982
    %vm2132 = vcmp.lt.s32.totalorder %v2129, 0
    %v2133 = vand.u32 %v2129, 2139095040
    %v2134 = vshrl.u32 %v2133, 23
    %v2135 = vsub.s32 %v2134, 127
    %v2136 = vand.u32 2147483647, %v2129
    %v2137 = vand.u32 %v2136, 8388607
    %v2138 = vor.u32 %v2137, 8388608
    %v2139 = vsub.s32 0, %v2138
    %v2140 = vadd.s32 %v2135, 1
    %vm2141 = vcmp.gt.s32.totalorder %v2140, 0
    %v2142 = vsel %vm2141, %v2140, 0
    %v2143 = vshrl.u32 %v2142, 5
    %v2144 = vand.u32 %v2142, 31
    %v2145 = vsub.s32 32, %v2144
    %v2146 = vshrl.u32 683565275, %v2145
    %v2147 = vshll.u32 683565275, %v2144
    %v2148 = vshrl.u32 2475754826, %v2145
    %v2149 = vor.u32 %v2147, %v2148
    %v2150 = vshll.u32 2475754826, %v2144
    %v2151 = vshrl.u32 2131351028, %v2145
    %v2152 = vor.u32 %v2150, %v2151
    %v2153 = vshll.u32 2131351028, %v2144
    %v2154 = vshrl.u32 2102212464, %v2145
    %v2155 = vor.u32 %v2153, %v2154
    %v2156 = vshll.u32 2102212464, %v2144
    %v2157 = vshrl.u32 920167782, %v2145
    %v2158 = vor.u32 %v2156, %v2157
    %v2159 = vshll.u32 920167782, %v2144
    %v2160 = vshrl.u32 1326507024, %v2145
    %v2161 = vor.u32 %v2159, %v2160
    %vm2162 = vcmp.lt.s32.totalorder %v2143, 1
    %vm2163 = vcmp.lt.s32.totalorder %v2143, 2
    %vm2164 = vcmp.lt.s32.totalorder %v2143, 3
    %vm2165 = vcmp.lt.s32.totalorder %v2143, 4
    %v2166 = vsel %vm2162, %v2146, %v2149
    %v2167 = vsel %vm2165, %v2155, 2102212464
    %v2168 = vsel %vm2164, %v2152, %v2167
    %v2169 = vsel %vm2163, %v2166, %v2168
    %v2170 = vsel %vm2162, %v2149, %v2152
    %v2171 = vsel %vm2165, %v2158, 920167782
    %v2172 = vsel %vm2164, %v2155, %v2171
    %v2173 = vsel %vm2163, %v2170, %v2172
    %v2174 = vsel %vm2162, %v2152, %v2155
    %v2175 = vsel %vm2165, %v2161, 1326507024
    %v2176 = vsel %vm2164, %v2158, %v2175
    %v2177 = vsel %vm2163, %v2174, %v2176
    %v2178 = vshll.u32 %v2138, 8
    %v2179 = vmul.u32.u64.compose %v2178, %v2177
    %v2180 = vextract.low.u32 %v2179
    %v2181 = vextract.high.u32 %v2179
    %v2182 = vmul.u32.u64.compose %v2178, %v2173
    %v2183 = vextract.low.u32 %v2182
    %v2184 = vextract.high.u32 %v2182
    %v2185 = vmul.u32 %v2178, %v2169
    %v2186 = vadd.s32 %v2181, %v2183
    %vm2187 = vc.u32 %v2181, %v2183
    %v2188 = vadd.s32 %v2184, 1
    %v2189 = vsel %vm2187, %v2188, %v2184
    %v2190 = vadd.s32 %v2185, %v2189
    %v2191 = vadd.s32 %v2190, 536870912
    %v2192 = vshrl.u32 %v2191, 30
    %v2193 = vshll.u32 %v2192, 30
    %v2194 = vsub.s32 %v2190, %v2193
    %vm2195 = vcmp.lt.s32.totalorder %v2194, 0
    %v2196 = vsub.s32 0, %v2194
    %v2197 = vsel %vm2195, %v2196, %v2194
    %v2198 = vclz %v2197
    %v2199 = vsub.s32 %v2198, 2
    %vm2200 = vcmp.gt.s32.totalorder 0, %v2199
    %v2201 = vsel %vm2200, 0, %v2199
    %v2202 = vsub.s32 32, %v2201
    %v2203 = vshll.u32 %v2194, %v2201
    %v2204 = vshrl.u32 %v2186, %v2202
    %v2205 = vor.u32 %v2203, %v2204
    %v2206 = vsub.s32 4294967266, %v2201
    %v2207 = vadd.s32 %v2206, 127
    %v2208 = vshll.u32 %v2207, 23
    %v2209 = vor.u32 4788187, %v2208
    %v2210 = vand.u32 2147483647, %v2209
    %v2212 = vcvt.s32.f32 %v2205
    %v2213 = vmul.f32 %v2212, %v2210
    %v2214 = vxor.u32 %v2213, 2147483648
    %v2215 = vsel %vm2132, %v2214, %v2213
    %v2216 = vsub.s32 4, %v2192
    %v2217 = vsel %vm2132, %v2216, %v2192
    %v2218 = vsel %vm2131, %v2129, %v2215
    %v2219 = vsel %vm2131, 0, %v2217
    %v2220 = vcosq.f32.pop %v2218
    %v2221 = vsinq.f32.pop %v2218
    %vm2222 = vweird.f32 %v2129
    %v2223 = vand.u32 %v2219, 3
    %vm2224 = vcmp.lt.s32.totalorder %v2223, 2
    %vm2225 = vcmp.eq.s32.totalorder %v2223, 0
    %v2226 = vxor.u32 %v2221, 2147483648
    %v2227 = vsel %vm2225, %v2220, %v2226
    %vm2228 = vcmp.eq.s32.totalorder %v2223, 2
    %v2229 = vxor.u32 %v2220, 2147483648
    %v2230 = vsel %vm2228, %v2229, %v2221
    %v2231 = vsel %vm2224, %v2227, %v2230
    %v2232 = vsel %vm2222, nan, %v2231
    %v2233 = vstv %s2126
    %v2234 = vmul.f32 %v2233, %v2232
    %v2235 = vadd.f32 %v2125, %v2234
    %s2236 = sld [smem:[#allocation2 + $0x10a]]
    %s2237 = sld [smem:[#allocation2 + $0xa]]
    %v2238 = vstv %s2237
    %v2239 = vmul.f32 %v2238, %v23
    %v2240 = vand.u32 2147483647, %v2239
    %vm2241 = vcmp.le.f32.partialorder %v2240, 0.7853982
    %vm2242 = vcmp.lt.s32.totalorder %v2239, 0
    %v2243 = vand.u32 %v2239, 2139095040
    %v2244 = vshrl.u32 %v2243, 23
    %v2245 = vsub.s32 %v2244, 127
    %v2246 = vand.u32 2147483647, %v2239
    %v2247 = vand.u32 %v2246, 8388607
    %v2248 = vor.u32 %v2247, 8388608
    %v2249 = vsub.s32 0, %v2248
    %v2250 = vadd.s32 %v2245, 1
    %vm2251 = vcmp.gt.s32.totalorder %v2250, 0
    %v2252 = vsel %vm2251, %v2250, 0
    %v2253 = vshrl.u32 %v2252, 5
    %v2254 = vand.u32 %v2252, 31
    %v2255 = vsub.s32 32, %v2254
    %v2256 = vshrl.u32 683565275, %v2255
    %v2257 = vshll.u32 683565275, %v2254
    %v2258 = vshrl.u32 2475754826, %v2255
    %v2259 = vor.u32 %v2257, %v2258
    %v2260 = vshll.u32 2475754826, %v2254
    %v2261 = vshrl.u32 2131351028, %v2255
    %v2262 = vor.u32 %v2260, %v2261
    %v2263 = vshll.u32 2131351028, %v2254
    %v2264 = vshrl.u32 2102212464, %v2255
    %v2265 = vor.u32 %v2263, %v2264
    %v2266 = vshll.u32 2102212464, %v2254
    %v2267 = vshrl.u32 920167782, %v2255
    %v2268 = vor.u32 %v2266, %v2267
    %v2269 = vshll.u32 920167782, %v2254
    %v2270 = vshrl.u32 1326507024, %v2255
    %v2271 = vor.u32 %v2269, %v2270
    %vm2272 = vcmp.lt.s32.totalorder %v2253, 1
    %vm2273 = vcmp.lt.s32.totalorder %v2253, 2
    %vm2274 = vcmp.lt.s32.totalorder %v2253, 3
    %vm2275 = vcmp.lt.s32.totalorder %v2253, 4
    %v2276 = vsel %vm2272, %v2256, %v2259
    %v2277 = vsel %vm2275, %v2265, 2102212464
    %v2278 = vsel %vm2274, %v2262, %v2277
    %v2279 = vsel %vm2273, %v2276, %v2278
    %v2280 = vsel %vm2272, %v2259, %v2262
    %v2281 = vsel %vm2275, %v2268, 920167782
    %v2282 = vsel %vm2274, %v2265, %v2281
    %v2283 = vsel %vm2273, %v2280, %v2282
    %v2284 = vsel %vm2272, %v2262, %v2265
    %v2285 = vsel %vm2275, %v2271, 1326507024
    %v2286 = vsel %vm2274, %v2268, %v2285
    %v2287 = vsel %vm2273, %v2284, %v2286
    %v2288 = vshll.u32 %v2248, 8
    %v2289 = vmul.u32.u64.compose %v2288, %v2287
    %v2290 = vextract.low.u32 %v2289
    %v2291 = vextract.high.u32 %v2289
    %v2292 = vmul.u32.u64.compose %v2288, %v2283
    %v2293 = vextract.low.u32 %v2292
    %v2294 = vextract.high.u32 %v2292
    %v2295 = vmul.u32 %v2288, %v2279
    %v2296 = vadd.s32 %v2291, %v2293
    %vm2297 = vc.u32 %v2291, %v2293
    %v2298 = vadd.s32 %v2294, 1
    %v2299 = vsel %vm2297, %v2298, %v2294
    %v2300 = vadd.s32 %v2295, %v2299
    %v2301 = vadd.s32 %v2300, 536870912
    %v2302 = vshrl.u32 %v2301, 30
    %v2303 = vshll.u32 %v2302, 30
    %v2304 = vsub.s32 %v2300, %v2303
    %vm2305 = vcmp.lt.s32.totalorder %v2304, 0
    %v2306 = vsub.s32 0, %v2304
    %v2307 = vsel %vm2305, %v2306, %v2304
    %v2308 = vclz %v2307
    %v2309 = vsub.s32 %v2308, 2
    %vm2310 = vcmp.gt.s32.totalorder 0, %v2309
    %v2311 = vsel %vm2310, 0, %v2309
    %v2312 = vsub.s32 32, %v2311
    %v2313 = vshll.u32 %v2304, %v2311
    %v2314 = vshrl.u32 %v2296, %v2312
    %v2315 = vor.u32 %v2313, %v2314
    %v2316 = vsub.s32 4294967266, %v2311
    %v2317 = vadd.s32 %v2316, 127
    %v2318 = vshll.u32 %v2317, 23
    %v2319 = vor.u32 4788187, %v2318
    %v2320 = vand.u32 2147483647, %v2319
    %v2322 = vcvt.s32.f32 %v2315
    %v2323 = vmul.f32 %v2322, %v2320
    %v2324 = vxor.u32 %v2323, 2147483648
    %v2325 = vsel %vm2242, %v2324, %v2323
    %v2326 = vsub.s32 4, %v2302
    %v2327 = vsel %vm2242, %v2326, %v2302
    %v2328 = vsel %vm2241, %v2239, %v2325
    %v2329 = vsel %vm2241, 0, %v2327
    %v2330 = vcosq.f32.pop %v2328
    %v2331 = vsinq.f32.pop %v2328
    %vm2332 = vweird.f32 %v2239
    %v2333 = vadd.s32 %v2329, 3
    %v2334 = vand.u32 %v2333, 3
    %vm2335 = vcmp.lt.s32.totalorder %v2334, 2
    %vm2336 = vcmp.eq.s32.totalorder %v2334, 0
    %v2337 = vxor.u32 %v2331, 2147483648
    %v2338 = vsel %vm2336, %v2330, %v2337
    %vm2339 = vcmp.eq.s32.totalorder %v2334, 2
    %v2340 = vxor.u32 %v2330, 2147483648
    %v2341 = vsel %vm2339, %v2340, %v2331
    %v2342 = vsel %vm2335, %v2338, %v2341
    %v2343 = vsel %vm2332, nan, %v2342
    %v2344 = vstv %s2236
    %v2345 = vmul.f32 %v2344, %v2343
    %v2346 = vadd.f32 %v2235, %v2345
    %s2347 = sld [smem:[#allocation2 + $0x18a]]
    %s2348 = sld [smem:[#allocation2 + $0x8a]]
    %v2349 = vstv %s2348
    %v2350 = vmul.f32 %v2349, %v23
    %v2351 = vand.u32 2147483647, %v2350
    %vm2352 = vcmp.le.f32.partialorder %v2351, 0.7853982
    %vm2353 = vcmp.lt.s32.totalorder %v2350, 0
    %v2354 = vand.u32 %v2350, 2139095040
    %v2355 = vshrl.u32 %v2354, 23
    %v2356 = vsub.s32 %v2355, 127
    %v2357 = vand.u32 2147483647, %v2350
    %v2358 = vand.u32 %v2357, 8388607
    %v2359 = vor.u32 %v2358, 8388608
    %v2360 = vsub.s32 0, %v2359
    %v2361 = vadd.s32 %v2356, 1
    %vm2362 = vcmp.gt.s32.totalorder %v2361, 0
    %v2363 = vsel %vm2362, %v2361, 0
    %v2364 = vshrl.u32 %v2363, 5
    %v2365 = vand.u32 %v2363, 31
    %v2366 = vsub.s32 32, %v2365
    %v2367 = vshrl.u32 683565275, %v2366
    %v2368 = vshll.u32 683565275, %v2365
    %v2369 = vshrl.u32 2475754826, %v2366
    %v2370 = vor.u32 %v2368, %v2369
    %v2371 = vshll.u32 2475754826, %v2365
    %v2372 = vshrl.u32 2131351028, %v2366
    %v2373 = vor.u32 %v2371, %v2372
    %v2374 = vshll.u32 2131351028, %v2365
    %v2375 = vshrl.u32 2102212464, %v2366
    %v2376 = vor.u32 %v2374, %v2375
    %v2377 = vshll.u32 2102212464, %v2365
    %v2378 = vshrl.u32 920167782, %v2366
    %v2379 = vor.u32 %v2377, %v2378
    %v2380 = vshll.u32 920167782, %v2365
    %v2381 = vshrl.u32 1326507024, %v2366
    %v2382 = vor.u32 %v2380, %v2381
    %vm2383 = vcmp.lt.s32.totalorder %v2364, 1
    %vm2384 = vcmp.lt.s32.totalorder %v2364, 2
    %vm2385 = vcmp.lt.s32.totalorder %v2364, 3
    %vm2386 = vcmp.lt.s32.totalorder %v2364, 4
    %v2387 = vsel %vm2383, %v2367, %v2370
    %v2388 = vsel %vm2386, %v2376, 2102212464
    %v2389 = vsel %vm2385, %v2373, %v2388
    %v2390 = vsel %vm2384, %v2387, %v2389
    %v2391 = vsel %vm2383, %v2370, %v2373
    %v2392 = vsel %vm2386, %v2379, 920167782
    %v2393 = vsel %vm2385, %v2376, %v2392
    %v2394 = vsel %vm2384, %v2391, %v2393
    %v2395 = vsel %vm2383, %v2373, %v2376
    %v2396 = vsel %vm2386, %v2382, 1326507024
    %v2397 = vsel %vm2385, %v2379, %v2396
    %v2398 = vsel %vm2384, %v2395, %v2397
    %v2399 = vshll.u32 %v2359, 8
    %v2400 = vmul.u32.u64.compose %v2399, %v2398
    %v2401 = vextract.low.u32 %v2400
    %v2402 = vextract.high.u32 %v2400
    %v2403 = vmul.u32.u64.compose %v2399, %v2394
    %v2404 = vextract.low.u32 %v2403
    %v2405 = vextract.high.u32 %v2403
    %v2406 = vmul.u32 %v2399, %v2390
    %v2407 = vadd.s32 %v2402, %v2404
    %vm2408 = vc.u32 %v2402, %v2404
    %v2409 = vadd.s32 %v2405, 1
    %v2410 = vsel %vm2408, %v2409, %v2405
    %v2411 = vadd.s32 %v2406, %v2410
    %v2412 = vadd.s32 %v2411, 536870912
    %v2413 = vshrl.u32 %v2412, 30
    %v2414 = vshll.u32 %v2413, 30
    %v2415 = vsub.s32 %v2411, %v2414
    %vm2416 = vcmp.lt.s32.totalorder %v2415, 0
    %v2417 = vsub.s32 0, %v2415
    %v2418 = vsel %vm2416, %v2417, %v2415
    %v2419 = vclz %v2418
    %v2420 = vsub.s32 %v2419, 2
    %vm2421 = vcmp.gt.s32.totalorder 0, %v2420
    %v2422 = vsel %vm2421, 0, %v2420
    %v2423 = vsub.s32 32, %v2422
    %v2424 = vshll.u32 %v2415, %v2422
    %v2425 = vshrl.u32 %v2407, %v2423
    %v2426 = vor.u32 %v2424, %v2425
    %v2427 = vsub.s32 4294967266, %v2422
    %v2428 = vadd.s32 %v2427, 127
    %v2429 = vshll.u32 %v2428, 23
    %v2430 = vor.u32 4788187, %v2429
    %v2431 = vand.u32 2147483647, %v2430
    %v2433 = vcvt.s32.f32 %v2426
    %v2434 = vmul.f32 %v2433, %v2431
    %v2435 = vxor.u32 %v2434, 2147483648
    %v2436 = vsel %vm2353, %v2435, %v2434
    %v2437 = vsub.s32 4, %v2413
    %v2438 = vsel %vm2353, %v2437, %v2413
    %v2439 = vsel %vm2352, %v2350, %v2436
    %v2440 = vsel %vm2352, 0, %v2438
    %v2441 = vcosq.f32.pop %v2439
    %v2442 = vsinq.f32.pop %v2439
    %vm2443 = vweird.f32 %v2350
    %v2444 = vand.u32 %v2440, 3
    %vm2445 = vcmp.lt.s32.totalorder %v2444, 2
    %vm2446 = vcmp.eq.s32.totalorder %v2444, 0
    %v2447 = vxor.u32 %v2442, 2147483648
    %v2448 = vsel %vm2446, %v2441, %v2447
    %vm2449 = vcmp.eq.s32.totalorder %v2444, 2
    %v2450 = vxor.u32 %v2441, 2147483648
    %v2451 = vsel %vm2449, %v2450, %v2442
    %v2452 = vsel %vm2445, %v2448, %v2451
    %v2453 = vsel %vm2443, nan, %v2452
    %v2454 = vstv %s2347
    %v2455 = vmul.f32 %v2454, %v2453
    %v2456 = vadd.f32 %v2346, %v2455
    %s2457 = sld [smem:[#allocation2 + $0x10b]]
    %s2458 = sld [smem:[#allocation2 + $0xb]]
    %v2459 = vstv %s2458
    %v2460 = vmul.f32 %v2459, %v23
    %v2461 = vand.u32 2147483647, %v2460
    %vm2462 = vcmp.le.f32.partialorder %v2461, 0.7853982
    %vm2463 = vcmp.lt.s32.totalorder %v2460, 0
    %v2464 = vand.u32 %v2460, 2139095040
    %v2465 = vshrl.u32 %v2464, 23
    %v2466 = vsub.s32 %v2465, 127
    %v2467 = vand.u32 2147483647, %v2460
    %v2468 = vand.u32 %v2467, 8388607
    %v2469 = vor.u32 %v2468, 8388608
    %v2470 = vsub.s32 0, %v2469
    %v2471 = vadd.s32 %v2466, 1
    %vm2472 = vcmp.gt.s32.totalorder %v2471, 0
    %v2473 = vsel %vm2472, %v2471, 0
    %v2474 = vshrl.u32 %v2473, 5
    %v2475 = vand.u32 %v2473, 31
    %v2476 = vsub.s32 32, %v2475
    %v2477 = vshrl.u32 683565275, %v2476
    %v2478 = vshll.u32 683565275, %v2475
    %v2479 = vshrl.u32 2475754826, %v2476
    %v2480 = vor.u32 %v2478, %v2479
    %v2481 = vshll.u32 2475754826, %v2475
    %v2482 = vshrl.u32 2131351028, %v2476
    %v2483 = vor.u32 %v2481, %v2482
    %v2484 = vshll.u32 2131351028, %v2475
    %v2485 = vshrl.u32 2102212464, %v2476
    %v2486 = vor.u32 %v2484, %v2485
    %v2487 = vshll.u32 2102212464, %v2475
    %v2488 = vshrl.u32 920167782, %v2476
    %v2489 = vor.u32 %v2487, %v2488
    %v2490 = vshll.u32 920167782, %v2475
    %v2491 = vshrl.u32 1326507024, %v2476
    %v2492 = vor.u32 %v2490, %v2491
    %vm2493 = vcmp.lt.s32.totalorder %v2474, 1
    %vm2494 = vcmp.lt.s32.totalorder %v2474, 2
    %vm2495 = vcmp.lt.s32.totalorder %v2474, 3
    %vm2496 = vcmp.lt.s32.totalorder %v2474, 4
    %v2497 = vsel %vm2493, %v2477, %v2480
    %v2498 = vsel %vm2496, %v2486, 2102212464
    %v2499 = vsel %vm2495, %v2483, %v2498
    %v2500 = vsel %vm2494, %v2497, %v2499
    %v2501 = vsel %vm2493, %v2480, %v2483
    %v2502 = vsel %vm2496, %v2489, 920167782
    %v2503 = vsel %vm2495, %v2486, %v2502
    %v2504 = vsel %vm2494, %v2501, %v2503
    %v2505 = vsel %vm2493, %v2483, %v2486
    %v2506 = vsel %vm2496, %v2492, 1326507024
    %v2507 = vsel %vm2495, %v2489, %v2506
    %v2508 = vsel %vm2494, %v2505, %v2507
    %v2509 = vshll.u32 %v2469, 8
    %v2510 = vmul.u32.u64.compose %v2509, %v2508
    %v2511 = vextract.low.u32 %v2510
    %v2512 = vextract.high.u32 %v2510
    %v2513 = vmul.u32.u64.compose %v2509, %v2504
    %v2514 = vextract.low.u32 %v2513
    %v2515 = vextract.high.u32 %v2513
    %v2516 = vmul.u32 %v2509, %v2500
    %v2517 = vadd.s32 %v2512, %v2514
    %vm2518 = vc.u32 %v2512, %v2514
    %v2519 = vadd.s32 %v2515, 1
    %v2520 = vsel %vm2518, %v2519, %v2515
    %v2521 = vadd.s32 %v2516, %v2520
    %v2522 = vadd.s32 %v2521, 536870912
    %v2523 = vshrl.u32 %v2522, 30
    %v2524 = vshll.u32 %v2523, 30
    %v2525 = vsub.s32 %v2521, %v2524
    %vm2526 = vcmp.lt.s32.totalorder %v2525, 0
    %v2527 = vsub.s32 0, %v2525
    %v2528 = vsel %vm2526, %v2527, %v2525
    %v2529 = vclz %v2528
    %v2530 = vsub.s32 %v2529, 2
    %vm2531 = vcmp.gt.s32.totalorder 0, %v2530
    %v2532 = vsel %vm2531, 0, %v2530
    %v2533 = vsub.s32 32, %v2532
    %v2534 = vshll.u32 %v2525, %v2532
    %v2535 = vshrl.u32 %v2517, %v2533
    %v2536 = vor.u32 %v2534, %v2535
    %v2537 = vsub.s32 4294967266, %v2532
    %v2538 = vadd.s32 %v2537, 127
    %v2539 = vshll.u32 %v2538, 23
    %v2540 = vor.u32 4788187, %v2539
    %v2541 = vand.u32 2147483647, %v2540
    %v2543 = vcvt.s32.f32 %v2536
    %v2544 = vmul.f32 %v2543, %v2541
    %v2545 = vxor.u32 %v2544, 2147483648
    %v2546 = vsel %vm2463, %v2545, %v2544
    %v2547 = vsub.s32 4, %v2523
    %v2548 = vsel %vm2463, %v2547, %v2523
    %v2549 = vsel %vm2462, %v2460, %v2546
    %v2550 = vsel %vm2462, 0, %v2548
    %v2551 = vcosq.f32.pop %v2549
    %v2552 = vsinq.f32.pop %v2549
    %vm2553 = vweird.f32 %v2460
    %v2554 = vadd.s32 %v2550, 3
    %v2555 = vand.u32 %v2554, 3
    %vm2556 = vcmp.lt.s32.totalorder %v2555, 2
    %vm2557 = vcmp.eq.s32.totalorder %v2555, 0
    %v2558 = vxor.u32 %v2552, 2147483648
    %v2559 = vsel %vm2557, %v2551, %v2558
    %vm2560 = vcmp.eq.s32.totalorder %v2555, 2
    %v2561 = vxor.u32 %v2551, 2147483648
    %v2562 = vsel %vm2560, %v2561, %v2552
    %v2563 = vsel %vm2556, %v2559, %v2562
    %v2564 = vsel %vm2553, nan, %v2563
    %v2565 = vstv %s2457
    %v2566 = vmul.f32 %v2565, %v2564
    %v2567 = vadd.f32 %v2456, %v2566
    %s2568 = sld [smem:[#allocation2 + $0x18b]]
    %s2569 = sld [smem:[#allocation2 + $0x8b]]
    %v2570 = vstv %s2569
    %v2571 = vmul.f32 %v2570, %v23
    %v2572 = vand.u32 2147483647, %v2571
    %vm2573 = vcmp.le.f32.partialorder %v2572, 0.7853982
    %vm2574 = vcmp.lt.s32.totalorder %v2571, 0
    %v2575 = vand.u32 %v2571, 2139095040
    %v2576 = vshrl.u32 %v2575, 23
    %v2577 = vsub.s32 %v2576, 127
    %v2578 = vand.u32 2147483647, %v2571
    %v2579 = vand.u32 %v2578, 8388607
    %v2580 = vor.u32 %v2579, 8388608
    %v2581 = vsub.s32 0, %v2580
    %v2582 = vadd.s32 %v2577, 1
    %vm2583 = vcmp.gt.s32.totalorder %v2582, 0
    %v2584 = vsel %vm2583, %v2582, 0
    %v2585 = vshrl.u32 %v2584, 5
    %v2586 = vand.u32 %v2584, 31
    %v2587 = vsub.s32 32, %v2586
    %v2588 = vshrl.u32 683565275, %v2587
    %v2589 = vshll.u32 683565275, %v2586
    %v2590 = vshrl.u32 2475754826, %v2587
    %v2591 = vor.u32 %v2589, %v2590
    %v2592 = vshll.u32 2475754826, %v2586
    %v2593 = vshrl.u32 2131351028, %v2587
    %v2594 = vor.u32 %v2592, %v2593
    %v2595 = vshll.u32 2131351028, %v2586
    %v2596 = vshrl.u32 2102212464, %v2587
    %v2597 = vor.u32 %v2595, %v2596
    %v2598 = vshll.u32 2102212464, %v2586
    %v2599 = vshrl.u32 920167782, %v2587
    %v2600 = vor.u32 %v2598, %v2599
    %v2601 = vshll.u32 920167782, %v2586
    %v2602 = vshrl.u32 1326507024, %v2587
    %v2603 = vor.u32 %v2601, %v2602
    %vm2604 = vcmp.lt.s32.totalorder %v2585, 1
    %vm2605 = vcmp.lt.s32.totalorder %v2585, 2
    %vm2606 = vcmp.lt.s32.totalorder %v2585, 3
    %vm2607 = vcmp.lt.s32.totalorder %v2585, 4
    %v2608 = vsel %vm2604, %v2588, %v2591
    %v2609 = vsel %vm2607, %v2597, 2102212464
    %v2610 = vsel %vm2606, %v2594, %v2609
    %v2611 = vsel %vm2605, %v2608, %v2610
    %v2612 = vsel %vm2604, %v2591, %v2594
    %v2613 = vsel %vm2607, %v2600, 920167782
    %v2614 = vsel %vm2606, %v2597, %v2613
    %v2615 = vsel %vm2605, %v2612, %v2614
    %v2616 = vsel %vm2604, %v2594, %v2597
    %v2617 = vsel %vm2607, %v2603, 1326507024
    %v2618 = vsel %vm2606, %v2600, %v2617
    %v2619 = vsel %vm2605, %v2616, %v2618
    %v2620 = vshll.u32 %v2580, 8
    %v2621 = vmul.u32.u64.compose %v2620, %v2619
    %v2622 = vextract.low.u32 %v2621
    %v2623 = vextract.high.u32 %v2621
    %v2624 = vmul.u32.u64.compose %v2620, %v2615
    %v2625 = vextract.low.u32 %v2624
    %v2626 = vextract.high.u32 %v2624
    %v2627 = vmul.u32 %v2620, %v2611
    %v2628 = vadd.s32 %v2623, %v2625
    %vm2629 = vc.u32 %v2623, %v2625
    %v2630 = vadd.s32 %v2626, 1
    %v2631 = vsel %vm2629, %v2630, %v2626
    %v2632 = vadd.s32 %v2627, %v2631
    %v2633 = vadd.s32 %v2632, 536870912
    %v2634 = vshrl.u32 %v2633, 30
    %v2635 = vshll.u32 %v2634, 30
    %v2636 = vsub.s32 %v2632, %v2635
    %vm2637 = vcmp.lt.s32.totalorder %v2636, 0
    %v2638 = vsub.s32 0, %v2636
    %v2639 = vsel %vm2637, %v2638, %v2636
    %v2640 = vclz %v2639
    %v2641 = vsub.s32 %v2640, 2
    %vm2642 = vcmp.gt.s32.totalorder 0, %v2641
    %v2643 = vsel %vm2642, 0, %v2641
    %v2644 = vsub.s32 32, %v2643
    %v2645 = vshll.u32 %v2636, %v2643
    %v2646 = vshrl.u32 %v2628, %v2644
    %v2647 = vor.u32 %v2645, %v2646
    %v2648 = vsub.s32 4294967266, %v2643
    %v2649 = vadd.s32 %v2648, 127
    %v2650 = vshll.u32 %v2649, 23
    %v2651 = vor.u32 4788187, %v2650
    %v2652 = vand.u32 2147483647, %v2651
    %v2654 = vcvt.s32.f32 %v2647
    %v2655 = vmul.f32 %v2654, %v2652
    %v2656 = vxor.u32 %v2655, 2147483648
    %v2657 = vsel %vm2574, %v2656, %v2655
    %v2658 = vsub.s32 4, %v2634
    %v2659 = vsel %vm2574, %v2658, %v2634
    %v2660 = vsel %vm2573, %v2571, %v2657
    %v2661 = vsel %vm2573, 0, %v2659
    %v2662 = vcosq.f32.pop %v2660
    %v2663 = vsinq.f32.pop %v2660
    %vm2664 = vweird.f32 %v2571
    %v2665 = vand.u32 %v2661, 3
    %vm2666 = vcmp.lt.s32.totalorder %v2665, 2
    %vm2667 = vcmp.eq.s32.totalorder %v2665, 0
    %v2668 = vxor.u32 %v2663, 2147483648
    %v2669 = vsel %vm2667, %v2662, %v2668
    %vm2670 = vcmp.eq.s32.totalorder %v2665, 2
    %v2671 = vxor.u32 %v2662, 2147483648
    %v2672 = vsel %vm2670, %v2671, %v2663
    %v2673 = vsel %vm2666, %v2669, %v2672
    %v2674 = vsel %vm2664, nan, %v2673
    %v2675 = vstv %s2568
    %v2676 = vmul.f32 %v2675, %v2674
    %v2677 = vadd.f32 %v2567, %v2676
    %s2678 = sld [smem:[#allocation2 + $0x10c]]
    %s2679 = sld [smem:[#allocation2 + $0xc]]
    %v2680 = vstv %s2679
    %v2681 = vmul.f32 %v2680, %v23
    %v2682 = vand.u32 2147483647, %v2681
    %vm2683 = vcmp.le.f32.partialorder %v2682, 0.7853982
    %vm2684 = vcmp.lt.s32.totalorder %v2681, 0
    %v2685 = vand.u32 %v2681, 2139095040
    %v2686 = vshrl.u32 %v2685, 23
    %v2687 = vsub.s32 %v2686, 127
    %v2688 = vand.u32 2147483647, %v2681
    %v2689 = vand.u32 %v2688, 8388607
    %v2690 = vor.u32 %v2689, 8388608
    %v2691 = vsub.s32 0, %v2690
    %v2692 = vadd.s32 %v2687, 1
    %vm2693 = vcmp.gt.s32.totalorder %v2692, 0
    %v2694 = vsel %vm2693, %v2692, 0
    %v2695 = vshrl.u32 %v2694, 5
    %v2696 = vand.u32 %v2694, 31
    %v2697 = vsub.s32 32, %v2696
    %v2698 = vshrl.u32 683565275, %v2697
    %v2699 = vshll.u32 683565275, %v2696
    %v2700 = vshrl.u32 2475754826, %v2697
    %v2701 = vor.u32 %v2699, %v2700
    %v2702 = vshll.u32 2475754826, %v2696
    %v2703 = vshrl.u32 2131351028, %v2697
    %v2704 = vor.u32 %v2702, %v2703
    %v2705 = vshll.u32 2131351028, %v2696
    %v2706 = vshrl.u32 2102212464, %v2697
    %v2707 = vor.u32 %v2705, %v2706
    %v2708 = vshll.u32 2102212464, %v2696
    %v2709 = vshrl.u32 920167782, %v2697
    %v2710 = vor.u32 %v2708, %v2709
    %v2711 = vshll.u32 920167782, %v2696
    %v2712 = vshrl.u32 1326507024, %v2697
    %v2713 = vor.u32 %v2711, %v2712
    %vm2714 = vcmp.lt.s32.totalorder %v2695, 1
    %vm2715 = vcmp.lt.s32.totalorder %v2695, 2
    %vm2716 = vcmp.lt.s32.totalorder %v2695, 3
    %vm2717 = vcmp.lt.s32.totalorder %v2695, 4
    %v2718 = vsel %vm2714, %v2698, %v2701
    %v2719 = vsel %vm2717, %v2707, 2102212464
    %v2720 = vsel %vm2716, %v2704, %v2719
    %v2721 = vsel %vm2715, %v2718, %v2720
    %v2722 = vsel %vm2714, %v2701, %v2704
    %v2723 = vsel %vm2717, %v2710, 920167782
    %v2724 = vsel %vm2716, %v2707, %v2723
    %v2725 = vsel %vm2715, %v2722, %v2724
    %v2726 = vsel %vm2714, %v2704, %v2707
    %v2727 = vsel %vm2717, %v2713, 1326507024
    %v2728 = vsel %vm2716, %v2710, %v2727
    %v2729 = vsel %vm2715, %v2726, %v2728
    %v2730 = vshll.u32 %v2690, 8
    %v2731 = vmul.u32.u64.compose %v2730, %v2729
    %v2732 = vextract.low.u32 %v2731
    %v2733 = vextract.high.u32 %v2731
    %v2734 = vmul.u32.u64.compose %v2730, %v2725
    %v2735 = vextract.low.u32 %v2734
    %v2736 = vextract.high.u32 %v2734
    %v2737 = vmul.u32 %v2730, %v2721
    %v2738 = vadd.s32 %v2733, %v2735
    %vm2739 = vc.u32 %v2733, %v2735
    %v2740 = vadd.s32 %v2736, 1
    %v2741 = vsel %vm2739, %v2740, %v2736
    %v2742 = vadd.s32 %v2737, %v2741
    %v2743 = vadd.s32 %v2742, 536870912
    %v2744 = vshrl.u32 %v2743, 30
    %v2745 = vshll.u32 %v2744, 30
    %v2746 = vsub.s32 %v2742, %v2745
    %vm2747 = vcmp.lt.s32.totalorder %v2746, 0
    %v2748 = vsub.s32 0, %v2746
    %v2749 = vsel %vm2747, %v2748, %v2746
    %v2750 = vclz %v2749
    %v2751 = vsub.s32 %v2750, 2
    %vm2752 = vcmp.gt.s32.totalorder 0, %v2751
    %v2753 = vsel %vm2752, 0, %v2751
    %v2754 = vsub.s32 32, %v2753
    %v2755 = vshll.u32 %v2746, %v2753
    %v2756 = vshrl.u32 %v2738, %v2754
    %v2757 = vor.u32 %v2755, %v2756
    %v2758 = vsub.s32 4294967266, %v2753
    %v2759 = vadd.s32 %v2758, 127
    %v2760 = vshll.u32 %v2759, 23
    %v2761 = vor.u32 4788187, %v2760
    %v2762 = vand.u32 2147483647, %v2761
    %v2764 = vcvt.s32.f32 %v2757
    %v2765 = vmul.f32 %v2764, %v2762
    %v2766 = vxor.u32 %v2765, 2147483648
    %v2767 = vsel %vm2684, %v2766, %v2765
    %v2768 = vsub.s32 4, %v2744
    %v2769 = vsel %vm2684, %v2768, %v2744
    %v2770 = vsel %vm2683, %v2681, %v2767
    %v2771 = vsel %vm2683, 0, %v2769
    %v2772 = vcosq.f32.pop %v2770
    %v2773 = vsinq.f32.pop %v2770
    %vm2774 = vweird.f32 %v2681
    %v2775 = vadd.s32 %v2771, 3
    %v2776 = vand.u32 %v2775, 3
    %vm2777 = vcmp.lt.s32.totalorder %v2776, 2
    %vm2778 = vcmp.eq.s32.totalorder %v2776, 0
    %v2779 = vxor.u32 %v2773, 2147483648
    %v2780 = vsel %vm2778, %v2772, %v2779
    %vm2781 = vcmp.eq.s32.totalorder %v2776, 2
    %v2782 = vxor.u32 %v2772, 2147483648
    %v2783 = vsel %vm2781, %v2782, %v2773
    %v2784 = vsel %vm2777, %v2780, %v2783
    %v2785 = vsel %vm2774, nan, %v2784
    %v2786 = vstv %s2678
    %v2787 = vmul.f32 %v2786, %v2785
    %v2788 = vadd.f32 %v2677, %v2787
    %s2789 = sld [smem:[#allocation2 + $0x18c]]
    %s2790 = sld [smem:[#allocation2 + $0x8c]]
    %v2791 = vstv %s2790
    %v2792 = vmul.f32 %v2791, %v23
    %v2793 = vand.u32 2147483647, %v2792
    %vm2794 = vcmp.le.f32.partialorder %v2793, 0.7853982
    %vm2795 = vcmp.lt.s32.totalorder %v2792, 0
    %v2796 = vand.u32 %v2792, 2139095040
    %v2797 = vshrl.u32 %v2796, 23
    %v2798 = vsub.s32 %v2797, 127
    %v2799 = vand.u32 2147483647, %v2792
    %v2800 = vand.u32 %v2799, 8388607
    %v2801 = vor.u32 %v2800, 8388608
    %v2802 = vsub.s32 0, %v2801
    %v2803 = vadd.s32 %v2798, 1
    %vm2804 = vcmp.gt.s32.totalorder %v2803, 0
    %v2805 = vsel %vm2804, %v2803, 0
    %v2806 = vshrl.u32 %v2805, 5
    %v2807 = vand.u32 %v2805, 31
    %v2808 = vsub.s32 32, %v2807
    %v2809 = vshrl.u32 683565275, %v2808
    %v2810 = vshll.u32 683565275, %v2807
    %v2811 = vshrl.u32 2475754826, %v2808
    %v2812 = vor.u32 %v2810, %v2811
    %v2813 = vshll.u32 2475754826, %v2807
    %v2814 = vshrl.u32 2131351028, %v2808
    %v2815 = vor.u32 %v2813, %v2814
    %v2816 = vshll.u32 2131351028, %v2807
    %v2817 = vshrl.u32 2102212464, %v2808
    %v2818 = vor.u32 %v2816, %v2817
    %v2819 = vshll.u32 2102212464, %v2807
    %v2820 = vshrl.u32 920167782, %v2808
    %v2821 = vor.u32 %v2819, %v2820
    %v2822 = vshll.u32 920167782, %v2807
    %v2823 = vshrl.u32 1326507024, %v2808
    %v2824 = vor.u32 %v2822, %v2823
    %vm2825 = vcmp.lt.s32.totalorder %v2806, 1
    %vm2826 = vcmp.lt.s32.totalorder %v2806, 2
    %vm2827 = vcmp.lt.s32.totalorder %v2806, 3
    %vm2828 = vcmp.lt.s32.totalorder %v2806, 4
    %v2829 = vsel %vm2825, %v2809, %v2812
    %v2830 = vsel %vm2828, %v2818, 2102212464
    %v2831 = vsel %vm2827, %v2815, %v2830
    %v2832 = vsel %vm2826, %v2829, %v2831
    %v2833 = vsel %vm2825, %v2812, %v2815
    %v2834 = vsel %vm2828, %v2821, 920167782
    %v2835 = vsel %vm2827, %v2818, %v2834
    %v2836 = vsel %vm2826, %v2833, %v2835
    %v2837 = vsel %vm2825, %v2815, %v2818
    %v2838 = vsel %vm2828, %v2824, 1326507024
    %v2839 = vsel %vm2827, %v2821, %v2838
    %v2840 = vsel %vm2826, %v2837, %v2839
    %v2841 = vshll.u32 %v2801, 8
    %v2842 = vmul.u32.u64.compose %v2841, %v2840
    %v2843 = vextract.low.u32 %v2842
    %v2844 = vextract.high.u32 %v2842
    %v2845 = vmul.u32.u64.compose %v2841, %v2836
    %v2846 = vextract.low.u32 %v2845
    %v2847 = vextract.high.u32 %v2845
    %v2848 = vmul.u32 %v2841, %v2832
    %v2849 = vadd.s32 %v2844, %v2846
    %vm2850 = vc.u32 %v2844, %v2846
    %v2851 = vadd.s32 %v2847, 1
    %v2852 = vsel %vm2850, %v2851, %v2847
    %v2853 = vadd.s32 %v2848, %v2852
    %v2854 = vadd.s32 %v2853, 536870912
    %v2855 = vshrl.u32 %v2854, 30
    %v2856 = vshll.u32 %v2855, 30
    %v2857 = vsub.s32 %v2853, %v2856
    %vm2858 = vcmp.lt.s32.totalorder %v2857, 0
    %v2859 = vsub.s32 0, %v2857
    %v2860 = vsel %vm2858, %v2859, %v2857
    %v2861 = vclz %v2860
    %v2862 = vsub.s32 %v2861, 2
    %vm2863 = vcmp.gt.s32.totalorder 0, %v2862
    %v2864 = vsel %vm2863, 0, %v2862
    %v2865 = vsub.s32 32, %v2864
    %v2866 = vshll.u32 %v2857, %v2864
    %v2867 = vshrl.u32 %v2849, %v2865
    %v2868 = vor.u32 %v2866, %v2867
    %v2869 = vsub.s32 4294967266, %v2864
    %v2870 = vadd.s32 %v2869, 127
    %v2871 = vshll.u32 %v2870, 23
    %v2872 = vor.u32 4788187, %v2871
    %v2873 = vand.u32 2147483647, %v2872
    %v2875 = vcvt.s32.f32 %v2868
    %v2876 = vmul.f32 %v2875, %v2873
    %v2877 = vxor.u32 %v2876, 2147483648
    %v2878 = vsel %vm2795, %v2877, %v2876
    %v2879 = vsub.s32 4, %v2855
    %v2880 = vsel %vm2795, %v2879, %v2855
    %v2881 = vsel %vm2794, %v2792, %v2878
    %v2882 = vsel %vm2794, 0, %v2880
    %v2883 = vcosq.f32.pop %v2881
    %v2884 = vsinq.f32.pop %v2881
    %vm2885 = vweird.f32 %v2792
    %v2886 = vand.u32 %v2882, 3
    %vm2887 = vcmp.lt.s32.totalorder %v2886, 2
    %vm2888 = vcmp.eq.s32.totalorder %v2886, 0
    %v2889 = vxor.u32 %v2884, 2147483648
    %v2890 = vsel %vm2888, %v2883, %v2889
    %vm2891 = vcmp.eq.s32.totalorder %v2886, 2
    %v2892 = vxor.u32 %v2883, 2147483648
    %v2893 = vsel %vm2891, %v2892, %v2884
    %v2894 = vsel %vm2887, %v2890, %v2893
    %v2895 = vsel %vm2885, nan, %v2894
    %v2896 = vstv %s2789
    %v2897 = vmul.f32 %v2896, %v2895
    %v2898 = vadd.f32 %v2788, %v2897
    %s2899 = sld [smem:[#allocation2 + $0x10d]]
    %s2900 = sld [smem:[#allocation2 + $0xd]]
    %v2901 = vstv %s2900
    %v2902 = vmul.f32 %v2901, %v23
    %v2903 = vand.u32 2147483647, %v2902
    %vm2904 = vcmp.le.f32.partialorder %v2903, 0.7853982
    %vm2905 = vcmp.lt.s32.totalorder %v2902, 0
    %v2906 = vand.u32 %v2902, 2139095040
    %v2907 = vshrl.u32 %v2906, 23
    %v2908 = vsub.s32 %v2907, 127
    %v2909 = vand.u32 2147483647, %v2902
    %v2910 = vand.u32 %v2909, 8388607
    %v2911 = vor.u32 %v2910, 8388608
    %v2912 = vsub.s32 0, %v2911
    %v2913 = vadd.s32 %v2908, 1
    %vm2914 = vcmp.gt.s32.totalorder %v2913, 0
    %v2915 = vsel %vm2914, %v2913, 0
    %v2916 = vshrl.u32 %v2915, 5
    %v2917 = vand.u32 %v2915, 31
    %v2918 = vsub.s32 32, %v2917
    %v2919 = vshrl.u32 683565275, %v2918
    %v2920 = vshll.u32 683565275, %v2917
    %v2921 = vshrl.u32 2475754826, %v2918
    %v2922 = vor.u32 %v2920, %v2921
    %v2923 = vshll.u32 2475754826, %v2917
    %v2924 = vshrl.u32 2131351028, %v2918
    %v2925 = vor.u32 %v2923, %v2924
    %v2926 = vshll.u32 2131351028, %v2917
    %v2927 = vshrl.u32 2102212464, %v2918
    %v2928 = vor.u32 %v2926, %v2927
    %v2929 = vshll.u32 2102212464, %v2917
    %v2930 = vshrl.u32 920167782, %v2918
    %v2931 = vor.u32 %v2929, %v2930
    %v2932 = vshll.u32 920167782, %v2917
    %v2933 = vshrl.u32 1326507024, %v2918
    %v2934 = vor.u32 %v2932, %v2933
    %vm2935 = vcmp.lt.s32.totalorder %v2916, 1
    %vm2936 = vcmp.lt.s32.totalorder %v2916, 2
    %vm2937 = vcmp.lt.s32.totalorder %v2916, 3
    %vm2938 = vcmp.lt.s32.totalorder %v2916, 4
    %v2939 = vsel %vm2935, %v2919, %v2922
    %v2940 = vsel %vm2938, %v2928, 2102212464
    %v2941 = vsel %vm2937, %v2925, %v2940
    %v2942 = vsel %vm2936, %v2939, %v2941
    %v2943 = vsel %vm2935, %v2922, %v2925
    %v2944 = vsel %vm2938, %v2931, 920167782
    %v2945 = vsel %vm2937, %v2928, %v2944
    %v2946 = vsel %vm2936, %v2943, %v2945
    %v2947 = vsel %vm2935, %v2925, %v2928
    %v2948 = vsel %vm2938, %v2934, 1326507024
    %v2949 = vsel %vm2937, %v2931, %v2948
    %v2950 = vsel %vm2936, %v2947, %v2949
    %v2951 = vshll.u32 %v2911, 8
    %v2952 = vmul.u32.u64.compose %v2951, %v2950
    %v2953 = vextract.low.u32 %v2952
    %v2954 = vextract.high.u32 %v2952
    %v2955 = vmul.u32.u64.compose %v2951, %v2946
    %v2956 = vextract.low.u32 %v2955
    %v2957 = vextract.high.u32 %v2955
    %v2958 = vmul.u32 %v2951, %v2942
    %v2959 = vadd.s32 %v2954, %v2956
    %vm2960 = vc.u32 %v2954, %v2956
    %v2961 = vadd.s32 %v2957, 1
    %v2962 = vsel %vm2960, %v2961, %v2957
    %v2963 = vadd.s32 %v2958, %v2962
    %v2964 = vadd.s32 %v2963, 536870912
    %v2965 = vshrl.u32 %v2964, 30
    %v2966 = vshll.u32 %v2965, 30
    %v2967 = vsub.s32 %v2963, %v2966
    %vm2968 = vcmp.lt.s32.totalorder %v2967, 0
    %v2969 = vsub.s32 0, %v2967
    %v2970 = vsel %vm2968, %v2969, %v2967
    %v2971 = vclz %v2970
    %v2972 = vsub.s32 %v2971, 2
    %vm2973 = vcmp.gt.s32.totalorder 0, %v2972
    %v2974 = vsel %vm2973, 0, %v2972
    %v2975 = vsub.s32 32, %v2974
    %v2976 = vshll.u32 %v2967, %v2974
    %v2977 = vshrl.u32 %v2959, %v2975
    %v2978 = vor.u32 %v2976, %v2977
    %v2979 = vsub.s32 4294967266, %v2974
    %v2980 = vadd.s32 %v2979, 127
    %v2981 = vshll.u32 %v2980, 23
    %v2982 = vor.u32 4788187, %v2981
    %v2983 = vand.u32 2147483647, %v2982
    %v2985 = vcvt.s32.f32 %v2978
    %v2986 = vmul.f32 %v2985, %v2983
    %v2987 = vxor.u32 %v2986, 2147483648
    %v2988 = vsel %vm2905, %v2987, %v2986
    %v2989 = vsub.s32 4, %v2965
    %v2990 = vsel %vm2905, %v2989, %v2965
    %v2991 = vsel %vm2904, %v2902, %v2988
    %v2992 = vsel %vm2904, 0, %v2990
    %v2993 = vcosq.f32.pop %v2991
    %v2994 = vsinq.f32.pop %v2991
    %vm2995 = vweird.f32 %v2902
    %v2996 = vadd.s32 %v2992, 3
    %v2997 = vand.u32 %v2996, 3
    %vm2998 = vcmp.lt.s32.totalorder %v2997, 2
    %vm2999 = vcmp.eq.s32.totalorder %v2997, 0
    %v3000 = vxor.u32 %v2994, 2147483648
    %v3001 = vsel %vm2999, %v2993, %v3000
    %vm3002 = vcmp.eq.s32.totalorder %v2997, 2
    %v3003 = vxor.u32 %v2993, 2147483648
    %v3004 = vsel %vm3002, %v3003, %v2994
    %v3005 = vsel %vm2998, %v3001, %v3004
    %v3006 = vsel %vm2995, nan, %v3005
    %v3007 = vstv %s2899
    %v3008 = vmul.f32 %v3007, %v3006
    %v3009 = vadd.f32 %v2898, %v3008
    %s3010 = sld [smem:[#allocation2 + $0x18d]]
    %s3011 = sld [smem:[#allocation2 + $0x8d]]
    %v3012 = vstv %s3011
    %v3013 = vmul.f32 %v3012, %v23
    %v3014 = vand.u32 2147483647, %v3013
    %vm3015 = vcmp.le.f32.partialorder %v3014, 0.7853982
    %vm3016 = vcmp.lt.s32.totalorder %v3013, 0
    %v3017 = vand.u32 %v3013, 2139095040
    %v3018 = vshrl.u32 %v3017, 23
    %v3019 = vsub.s32 %v3018, 127
    %v3020 = vand.u32 2147483647, %v3013
    %v3021 = vand.u32 %v3020, 8388607
    %v3022 = vor.u32 %v3021, 8388608
    %v3023 = vsub.s32 0, %v3022
    %v3024 = vadd.s32 %v3019, 1
    %vm3025 = vcmp.gt.s32.totalorder %v3024, 0
    %v3026 = vsel %vm3025, %v3024, 0
    %v3027 = vshrl.u32 %v3026, 5
    %v3028 = vand.u32 %v3026, 31
    %v3029 = vsub.s32 32, %v3028
    %v3030 = vshrl.u32 683565275, %v3029
    %v3031 = vshll.u32 683565275, %v3028
    %v3032 = vshrl.u32 2475754826, %v3029
    %v3033 = vor.u32 %v3031, %v3032
    %v3034 = vshll.u32 2475754826, %v3028
    %v3035 = vshrl.u32 2131351028, %v3029
    %v3036 = vor.u32 %v3034, %v3035
    %v3037 = vshll.u32 2131351028, %v3028
    %v3038 = vshrl.u32 2102212464, %v3029
    %v3039 = vor.u32 %v3037, %v3038
    %v3040 = vshll.u32 2102212464, %v3028
    %v3041 = vshrl.u32 920167782, %v3029
    %v3042 = vor.u32 %v3040, %v3041
    %v3043 = vshll.u32 920167782, %v3028
    %v3044 = vshrl.u32 1326507024, %v3029
    %v3045 = vor.u32 %v3043, %v3044
    %vm3046 = vcmp.lt.s32.totalorder %v3027, 1
    %vm3047 = vcmp.lt.s32.totalorder %v3027, 2
    %vm3048 = vcmp.lt.s32.totalorder %v3027, 3
    %vm3049 = vcmp.lt.s32.totalorder %v3027, 4
    %v3050 = vsel %vm3046, %v3030, %v3033
    %v3051 = vsel %vm3049, %v3039, 2102212464
    %v3052 = vsel %vm3048, %v3036, %v3051
    %v3053 = vsel %vm3047, %v3050, %v3052
    %v3054 = vsel %vm3046, %v3033, %v3036
    %v3055 = vsel %vm3049, %v3042, 920167782
    %v3056 = vsel %vm3048, %v3039, %v3055
    %v3057 = vsel %vm3047, %v3054, %v3056
    %v3058 = vsel %vm3046, %v3036, %v3039
    %v3059 = vsel %vm3049, %v3045, 1326507024
    %v3060 = vsel %vm3048, %v3042, %v3059
    %v3061 = vsel %vm3047, %v3058, %v3060
    %v3062 = vshll.u32 %v3022, 8
    %v3063 = vmul.u32.u64.compose %v3062, %v3061
    %v3064 = vextract.low.u32 %v3063
    %v3065 = vextract.high.u32 %v3063
    %v3066 = vmul.u32.u64.compose %v3062, %v3057
    %v3067 = vextract.low.u32 %v3066
    %v3068 = vextract.high.u32 %v3066
    %v3069 = vmul.u32 %v3062, %v3053
    %v3070 = vadd.s32 %v3065, %v3067
    %vm3071 = vc.u32 %v3065, %v3067
    %v3072 = vadd.s32 %v3068, 1
    %v3073 = vsel %vm3071, %v3072, %v3068
    %v3074 = vadd.s32 %v3069, %v3073
    %v3075 = vadd.s32 %v3074, 536870912
    %v3076 = vshrl.u32 %v3075, 30
    %v3077 = vshll.u32 %v3076, 30
    %v3078 = vsub.s32 %v3074, %v3077
    %vm3079 = vcmp.lt.s32.totalorder %v3078, 0
    %v3080 = vsub.s32 0, %v3078
    %v3081 = vsel %vm3079, %v3080, %v3078
    %v3082 = vclz %v3081
    %v3083 = vsub.s32 %v3082, 2
    %vm3084 = vcmp.gt.s32.totalorder 0, %v3083
    %v3085 = vsel %vm3084, 0, %v3083
    %v3086 = vsub.s32 32, %v3085
    %v3087 = vshll.u32 %v3078, %v3085
    %v3088 = vshrl.u32 %v3070, %v3086
    %v3089 = vor.u32 %v3087, %v3088
    %v3090 = vsub.s32 4294967266, %v3085
    %v3091 = vadd.s32 %v3090, 127
    %v3092 = vshll.u32 %v3091, 23
    %v3093 = vor.u32 4788187, %v3092
    %v3094 = vand.u32 2147483647, %v3093
    %v3096 = vcvt.s32.f32 %v3089
    %v3097 = vmul.f32 %v3096, %v3094
    %v3098 = vxor.u32 %v3097, 2147483648
    %v3099 = vsel %vm3016, %v3098, %v3097
    %v3100 = vsub.s32 4, %v3076
    %v3101 = vsel %vm3016, %v3100, %v3076
    %v3102 = vsel %vm3015, %v3013, %v3099
    %v3103 = vsel %vm3015, 0, %v3101
    %v3104 = vcosq.f32.pop %v3102
    %v3105 = vsinq.f32.pop %v3102
    %vm3106 = vweird.f32 %v3013
    %v3107 = vand.u32 %v3103, 3
    %vm3108 = vcmp.lt.s32.totalorder %v3107, 2
    %vm3109 = vcmp.eq.s32.totalorder %v3107, 0
    %v3110 = vxor.u32 %v3105, 2147483648
    %v3111 = vsel %vm3109, %v3104, %v3110
    %vm3112 = vcmp.eq.s32.totalorder %v3107, 2
    %v3113 = vxor.u32 %v3104, 2147483648
    %v3114 = vsel %vm3112, %v3113, %v3105
    %v3115 = vsel %vm3108, %v3111, %v3114
    %v3116 = vsel %vm3106, nan, %v3115
    %v3117 = vstv %s3010
    %v3118 = vmul.f32 %v3117, %v3116
    %v3119 = vadd.f32 %v3009, %v3118
    %s3120 = sld [smem:[#allocation2 + $0x10e]]
    %s3121 = sld [smem:[#allocation2 + $0xe]]
    %v3122 = vstv %s3121
    %v3123 = vmul.f32 %v3122, %v23
    %v3124 = vand.u32 2147483647, %v3123
    %vm3125 = vcmp.le.f32.partialorder %v3124, 0.7853982
    %vm3126 = vcmp.lt.s32.totalorder %v3123, 0
    %v3127 = vand.u32 %v3123, 2139095040
    %v3128 = vshrl.u32 %v3127, 23
    %v3129 = vsub.s32 %v3128, 127
    %v3130 = vand.u32 2147483647, %v3123
    %v3131 = vand.u32 %v3130, 8388607
    %v3132 = vor.u32 %v3131, 8388608
    %v3133 = vsub.s32 0, %v3132
    %v3134 = vadd.s32 %v3129, 1
    %vm3135 = vcmp.gt.s32.totalorder %v3134, 0
    %v3136 = vsel %vm3135, %v3134, 0
    %v3137 = vshrl.u32 %v3136, 5
    %v3138 = vand.u32 %v3136, 31
    %v3139 = vsub.s32 32, %v3138
    %v3140 = vshrl.u32 683565275, %v3139
    %v3141 = vshll.u32 683565275, %v3138
    %v3142 = vshrl.u32 2475754826, %v3139
    %v3143 = vor.u32 %v3141, %v3142
    %v3144 = vshll.u32 2475754826, %v3138
    %v3145 = vshrl.u32 2131351028, %v3139
    %v3146 = vor.u32 %v3144, %v3145
    %v3147 = vshll.u32 2131351028, %v3138
    %v3148 = vshrl.u32 2102212464, %v3139
    %v3149 = vor.u32 %v3147, %v3148
    %v3150 = vshll.u32 2102212464, %v3138
    %v3151 = vshrl.u32 920167782, %v3139
    %v3152 = vor.u32 %v3150, %v3151
    %v3153 = vshll.u32 920167782, %v3138
    %v3154 = vshrl.u32 1326507024, %v3139
    %v3155 = vor.u32 %v3153, %v3154
    %vm3156 = vcmp.lt.s32.totalorder %v3137, 1
    %vm3157 = vcmp.lt.s32.totalorder %v3137, 2
    %vm3158 = vcmp.lt.s32.totalorder %v3137, 3
    %vm3159 = vcmp.lt.s32.totalorder %v3137, 4
    %v3160 = vsel %vm3156, %v3140, %v3143
    %v3161 = vsel %vm3159, %v3149, 2102212464
    %v3162 = vsel %vm3158, %v3146, %v3161
    %v3163 = vsel %vm3157, %v3160, %v3162
    %v3164 = vsel %vm3156, %v3143, %v3146
    %v3165 = vsel %vm3159, %v3152, 920167782
    %v3166 = vsel %vm3158, %v3149, %v3165
    %v3167 = vsel %vm3157, %v3164, %v3166
    %v3168 = vsel %vm3156, %v3146, %v3149
    %v3169 = vsel %vm3159, %v3155, 1326507024
    %v3170 = vsel %vm3158, %v3152, %v3169
    %v3171 = vsel %vm3157, %v3168, %v3170
    %v3172 = vshll.u32 %v3132, 8
    %v3173 = vmul.u32.u64.compose %v3172, %v3171
    %v3174 = vextract.low.u32 %v3173
    %v3175 = vextract.high.u32 %v3173
    %v3176 = vmul.u32.u64.compose %v3172, %v3167
    %v3177 = vextract.low.u32 %v3176
    %v3178 = vextract.high.u32 %v3176
    %v3179 = vmul.u32 %v3172, %v3163
    %v3180 = vadd.s32 %v3175, %v3177
    %vm3181 = vc.u32 %v3175, %v3177
    %v3182 = vadd.s32 %v3178, 1
    %v3183 = vsel %vm3181, %v3182, %v3178
    %v3184 = vadd.s32 %v3179, %v3183
    %v3185 = vadd.s32 %v3184, 536870912
    %v3186 = vshrl.u32 %v3185, 30
    %v3187 = vshll.u32 %v3186, 30
    %v3188 = vsub.s32 %v3184, %v3187
    %vm3189 = vcmp.lt.s32.totalorder %v3188, 0
    %v3190 = vsub.s32 0, %v3188
    %v3191 = vsel %vm3189, %v3190, %v3188
    %v3192 = vclz %v3191
    %v3193 = vsub.s32 %v3192, 2
    %vm3194 = vcmp.gt.s32.totalorder 0, %v3193
    %v3195 = vsel %vm3194, 0, %v3193
    %v3196 = vsub.s32 32, %v3195
    %v3197 = vshll.u32 %v3188, %v3195
    %v3198 = vshrl.u32 %v3180, %v3196
    %v3199 = vor.u32 %v3197, %v3198
    %v3200 = vsub.s32 4294967266, %v3195
    %v3201 = vadd.s32 %v3200, 127
    %v3202 = vshll.u32 %v3201, 23
    %v3203 = vor.u32 4788187, %v3202
    %v3204 = vand.u32 2147483647, %v3203
    %v3206 = vcvt.s32.f32 %v3199
    %v3207 = vmul.f32 %v3206, %v3204
    %v3208 = vxor.u32 %v3207, 2147483648
    %v3209 = vsel %vm3126, %v3208, %v3207
    %v3210 = vsub.s32 4, %v3186
    %v3211 = vsel %vm3126, %v3210, %v3186
    %v3212 = vsel %vm3125, %v3123, %v3209
    %v3213 = vsel %vm3125, 0, %v3211
    %v3214 = vcosq.f32.pop %v3212
    %v3215 = vsinq.f32.pop %v3212
    %vm3216 = vweird.f32 %v3123
    %v3217 = vadd.s32 %v3213, 3
    %v3218 = vand.u32 %v3217, 3
    %vm3219 = vcmp.lt.s32.totalorder %v3218, 2
    %vm3220 = vcmp.eq.s32.totalorder %v3218, 0
    %v3221 = vxor.u32 %v3215, 2147483648
    %v3222 = vsel %vm3220, %v3214, %v3221
    %vm3223 = vcmp.eq.s32.totalorder %v3218, 2
    %v3224 = vxor.u32 %v3214, 2147483648
    %v3225 = vsel %vm3223, %v3224, %v3215
    %v3226 = vsel %vm3219, %v3222, %v3225
    %v3227 = vsel %vm3216, nan, %v3226
    %v3228 = vstv %s3120
    %v3229 = vmul.f32 %v3228, %v3227
    %v3230 = vadd.f32 %v3119, %v3229
    %s3231 = sld [smem:[#allocation2 + $0x18e]]
    %s3232 = sld [smem:[#allocation2 + $0x8e]]
    %v3233 = vstv %s3232
    %v3234 = vmul.f32 %v3233, %v23
    %v3235 = vand.u32 2147483647, %v3234
    %vm3236 = vcmp.le.f32.partialorder %v3235, 0.7853982
    %vm3237 = vcmp.lt.s32.totalorder %v3234, 0
    %v3238 = vand.u32 %v3234, 2139095040
    %v3239 = vshrl.u32 %v3238, 23
    %v3240 = vsub.s32 %v3239, 127
    %v3241 = vand.u32 2147483647, %v3234
    %v3242 = vand.u32 %v3241, 8388607
    %v3243 = vor.u32 %v3242, 8388608
    %v3244 = vsub.s32 0, %v3243
    %v3245 = vadd.s32 %v3240, 1
    %vm3246 = vcmp.gt.s32.totalorder %v3245, 0
    %v3247 = vsel %vm3246, %v3245, 0
    %v3248 = vshrl.u32 %v3247, 5
    %v3249 = vand.u32 %v3247, 31
    %v3250 = vsub.s32 32, %v3249
    %v3251 = vshrl.u32 683565275, %v3250
    %v3252 = vshll.u32 683565275, %v3249
    %v3253 = vshrl.u32 2475754826, %v3250
    %v3254 = vor.u32 %v3252, %v3253
    %v3255 = vshll.u32 2475754826, %v3249
    %v3256 = vshrl.u32 2131351028, %v3250
    %v3257 = vor.u32 %v3255, %v3256
    %v3258 = vshll.u32 2131351028, %v3249
    %v3259 = vshrl.u32 2102212464, %v3250
    %v3260 = vor.u32 %v3258, %v3259
    %v3261 = vshll.u32 2102212464, %v3249
    %v3262 = vshrl.u32 920167782, %v3250
    %v3263 = vor.u32 %v3261, %v3262
    %v3264 = vshll.u32 920167782, %v3249
    %v3265 = vshrl.u32 1326507024, %v3250
    %v3266 = vor.u32 %v3264, %v3265
    %vm3267 = vcmp.lt.s32.totalorder %v3248, 1
    %vm3268 = vcmp.lt.s32.totalorder %v3248, 2
    %vm3269 = vcmp.lt.s32.totalorder %v3248, 3
    %vm3270 = vcmp.lt.s32.totalorder %v3248, 4
    %v3271 = vsel %vm3267, %v3251, %v3254
    %v3272 = vsel %vm3270, %v3260, 2102212464
    %v3273 = vsel %vm3269, %v3257, %v3272
    %v3274 = vsel %vm3268, %v3271, %v3273
    %v3275 = vsel %vm3267, %v3254, %v3257
    %v3276 = vsel %vm3270, %v3263, 920167782
    %v3277 = vsel %vm3269, %v3260, %v3276
    %v3278 = vsel %vm3268, %v3275, %v3277
    %v3279 = vsel %vm3267, %v3257, %v3260
    %v3280 = vsel %vm3270, %v3266, 1326507024
    %v3281 = vsel %vm3269, %v3263, %v3280
    %v3282 = vsel %vm3268, %v3279, %v3281
    %v3283 = vshll.u32 %v3243, 8
    %v3284 = vmul.u32.u64.compose %v3283, %v3282
    %v3285 = vextract.low.u32 %v3284
    %v3286 = vextract.high.u32 %v3284
    %v3287 = vmul.u32.u64.compose %v3283, %v3278
    %v3288 = vextract.low.u32 %v3287
    %v3289 = vextract.high.u32 %v3287
    %v3290 = vmul.u32 %v3283, %v3274
    %v3291 = vadd.s32 %v3286, %v3288
    %vm3292 = vc.u32 %v3286, %v3288
    %v3293 = vadd.s32 %v3289, 1
    %v3294 = vsel %vm3292, %v3293, %v3289
    %v3295 = vadd.s32 %v3290, %v3294
    %v3296 = vadd.s32 %v3295, 536870912
    %v3297 = vshrl.u32 %v3296, 30
    %v3298 = vshll.u32 %v3297, 30
    %v3299 = vsub.s32 %v3295, %v3298
    %vm3300 = vcmp.lt.s32.totalorder %v3299, 0
    %v3301 = vsub.s32 0, %v3299
    %v3302 = vsel %vm3300, %v3301, %v3299
    %v3303 = vclz %v3302
    %v3304 = vsub.s32 %v3303, 2
    %vm3305 = vcmp.gt.s32.totalorder 0, %v3304
    %v3306 = vsel %vm3305, 0, %v3304
    %v3307 = vsub.s32 32, %v3306
    %v3308 = vshll.u32 %v3299, %v3306
    %v3309 = vshrl.u32 %v3291, %v3307
    %v3310 = vor.u32 %v3308, %v3309
    %v3311 = vsub.s32 4294967266, %v3306
    %v3312 = vadd.s32 %v3311, 127
    %v3313 = vshll.u32 %v3312, 23
    %v3314 = vor.u32 4788187, %v3313
    %v3315 = vand.u32 2147483647, %v3314
    %v3317 = vcvt.s32.f32 %v3310
    %v3318 = vmul.f32 %v3317, %v3315
    %v3319 = vxor.u32 %v3318, 2147483648
    %v3320 = vsel %vm3237, %v3319, %v3318
    %v3321 = vsub.s32 4, %v3297
    %v3322 = vsel %vm3237, %v3321, %v3297
    %v3323 = vsel %vm3236, %v3234, %v3320
    %v3324 = vsel %vm3236, 0, %v3322
    %v3325 = vcosq.f32.pop %v3323
    %v3326 = vsinq.f32.pop %v3323
    %vm3327 = vweird.f32 %v3234
    %v3328 = vand.u32 %v3324, 3
    %vm3329 = vcmp.lt.s32.totalorder %v3328, 2
    %vm3330 = vcmp.eq.s32.totalorder %v3328, 0
    %v3331 = vxor.u32 %v3326, 2147483648
    %v3332 = vsel %vm3330, %v3325, %v3331
    %vm3333 = vcmp.eq.s32.totalorder %v3328, 2
    %v3334 = vxor.u32 %v3325, 2147483648
    %v3335 = vsel %vm3333, %v3334, %v3326
    %v3336 = vsel %vm3329, %v3332, %v3335
    %v3337 = vsel %vm3327, nan, %v3336
    %v3338 = vstv %s3231
    %v3339 = vmul.f32 %v3338, %v3337
    %v3340 = vadd.f32 %v3230, %v3339
    %s3341 = sld [smem:[#allocation2 + $0x10f]]
    %s3342 = sld [smem:[#allocation2 + $0xf]]
    %v3343 = vstv %s3342
    %v3344 = vmul.f32 %v3343, %v23
    %v3345 = vand.u32 2147483647, %v3344
    %vm3346 = vcmp.le.f32.partialorder %v3345, 0.7853982
    %vm3347 = vcmp.lt.s32.totalorder %v3344, 0
    %v3348 = vand.u32 %v3344, 2139095040
    %v3349 = vshrl.u32 %v3348, 23
    %v3350 = vsub.s32 %v3349, 127
    %v3351 = vand.u32 2147483647, %v3344
    %v3352 = vand.u32 %v3351, 8388607
    %v3353 = vor.u32 %v3352, 8388608
    %v3354 = vsub.s32 0, %v3353
    %v3355 = vadd.s32 %v3350, 1
    %vm3356 = vcmp.gt.s32.totalorder %v3355, 0
    %v3357 = vsel %vm3356, %v3355, 0
    %v3358 = vshrl.u32 %v3357, 5
    %v3359 = vand.u32 %v3357, 31
    %v3360 = vsub.s32 32, %v3359
    %v3361 = vshrl.u32 683565275, %v3360
    %v3362 = vshll.u32 683565275, %v3359
    %v3363 = vshrl.u32 2475754826, %v3360
    %v3364 = vor.u32 %v3362, %v3363
    %v3365 = vshll.u32 2475754826, %v3359
    %v3366 = vshrl.u32 2131351028, %v3360
    %v3367 = vor.u32 %v3365, %v3366
    %v3368 = vshll.u32 2131351028, %v3359
    %v3369 = vshrl.u32 2102212464, %v3360
    %v3370 = vor.u32 %v3368, %v3369
    %v3371 = vshll.u32 2102212464, %v3359
    %v3372 = vshrl.u32 920167782, %v3360
    %v3373 = vor.u32 %v3371, %v3372
    %v3374 = vshll.u32 920167782, %v3359
    %v3375 = vshrl.u32 1326507024, %v3360
    %v3376 = vor.u32 %v3374, %v3375
    %vm3377 = vcmp.lt.s32.totalorder %v3358, 1
    %vm3378 = vcmp.lt.s32.totalorder %v3358, 2
    %vm3379 = vcmp.lt.s32.totalorder %v3358, 3
    %vm3380 = vcmp.lt.s32.totalorder %v3358, 4
    %v3381 = vsel %vm3377, %v3361, %v3364
    %v3382 = vsel %vm3380, %v3370, 2102212464
    %v3383 = vsel %vm3379, %v3367, %v3382
    %v3384 = vsel %vm3378, %v3381, %v3383
    %v3385 = vsel %vm3377, %v3364, %v3367
    %v3386 = vsel %vm3380, %v3373, 920167782
    %v3387 = vsel %vm3379, %v3370, %v3386
    %v3388 = vsel %vm3378, %v3385, %v3387
    %v3389 = vsel %vm3377, %v3367, %v3370
    %v3390 = vsel %vm3380, %v3376, 1326507024
    %v3391 = vsel %vm3379, %v3373, %v3390
    %v3392 = vsel %vm3378, %v3389, %v3391
    %v3393 = vshll.u32 %v3353, 8
    %v3394 = vmul.u32.u64.compose %v3393, %v3392
    %v3395 = vextract.low.u32 %v3394
    %v3396 = vextract.high.u32 %v3394
    %v3397 = vmul.u32.u64.compose %v3393, %v3388
    %v3398 = vextract.low.u32 %v3397
    %v3399 = vextract.high.u32 %v3397
    %v3400 = vmul.u32 %v3393, %v3384
    %v3401 = vadd.s32 %v3396, %v3398
    %vm3402 = vc.u32 %v3396, %v3398
    %v3403 = vadd.s32 %v3399, 1
    %v3404 = vsel %vm3402, %v3403, %v3399
    %v3405 = vadd.s32 %v3400, %v3404
    %v3406 = vadd.s32 %v3405, 536870912
    %v3407 = vshrl.u32 %v3406, 30
    %v3408 = vshll.u32 %v3407, 30
    %v3409 = vsub.s32 %v3405, %v3408
    %vm3410 = vcmp.lt.s32.totalorder %v3409, 0
    %v3411 = vsub.s32 0, %v3409
    %v3412 = vsel %vm3410, %v3411, %v3409
    %v3413 = vclz %v3412
    %v3414 = vsub.s32 %v3413, 2
    %vm3415 = vcmp.gt.s32.totalorder 0, %v3414
    %v3416 = vsel %vm3415, 0, %v3414
    %v3417 = vsub.s32 32, %v3416
    %v3418 = vshll.u32 %v3409, %v3416
    %v3419 = vshrl.u32 %v3401, %v3417
    %v3420 = vor.u32 %v3418, %v3419
    %v3421 = vsub.s32 4294967266, %v3416
    %v3422 = vadd.s32 %v3421, 127
    %v3423 = vshll.u32 %v3422, 23
    %v3424 = vor.u32 4788187, %v3423
    %v3425 = vand.u32 2147483647, %v3424
    %v3427 = vcvt.s32.f32 %v3420
    %v3428 = vmul.f32 %v3427, %v3425
    %v3429 = vxor.u32 %v3428, 2147483648
    %v3430 = vsel %vm3347, %v3429, %v3428
    %v3431 = vsub.s32 4, %v3407
    %v3432 = vsel %vm3347, %v3431, %v3407
    %v3433 = vsel %vm3346, %v3344, %v3430
    %v3434 = vsel %vm3346, 0, %v3432
    %v3435 = vcosq.f32.pop %v3433
    %v3436 = vsinq.f32.pop %v3433
    %vm3437 = vweird.f32 %v3344
    %v3438 = vadd.s32 %v3434, 3
    %v3439 = vand.u32 %v3438, 3
    %vm3440 = vcmp.lt.s32.totalorder %v3439, 2
    %vm3441 = vcmp.eq.s32.totalorder %v3439, 0
    %v3442 = vxor.u32 %v3436, 2147483648
    %v3443 = vsel %vm3441, %v3435, %v3442
    %vm3444 = vcmp.eq.s32.totalorder %v3439, 2
    %v3445 = vxor.u32 %v3435, 2147483648
    %v3446 = vsel %vm3444, %v3445, %v3436
    %v3447 = vsel %vm3440, %v3443, %v3446
    %v3448 = vsel %vm3437, nan, %v3447
    %v3449 = vstv %s3341
    %v3450 = vmul.f32 %v3449, %v3448
    %v3451 = vadd.f32 %v3340, %v3450
    %s3452 = sld [smem:[#allocation2 + $0x18f]]
    %s3453 = sld [smem:[#allocation2 + $0x8f]]
    %v3454 = vstv %s3453
    %v3455 = vmul.f32 %v3454, %v23
    %v3456 = vand.u32 2147483647, %v3455
    %vm3457 = vcmp.le.f32.partialorder %v3456, 0.7853982
    %vm3458 = vcmp.lt.s32.totalorder %v3455, 0
    %v3459 = vand.u32 %v3455, 2139095040
    %v3460 = vshrl.u32 %v3459, 23
    %v3461 = vsub.s32 %v3460, 127
    %v3462 = vand.u32 2147483647, %v3455
    %v3463 = vand.u32 %v3462, 8388607
    %v3464 = vor.u32 %v3463, 8388608
    %v3465 = vsub.s32 0, %v3464
    %v3466 = vadd.s32 %v3461, 1
    %vm3467 = vcmp.gt.s32.totalorder %v3466, 0
    %v3468 = vsel %vm3467, %v3466, 0
    %v3469 = vshrl.u32 %v3468, 5
    %v3470 = vand.u32 %v3468, 31
    %v3471 = vsub.s32 32, %v3470
    %v3472 = vshrl.u32 683565275, %v3471
    %v3473 = vshll.u32 683565275, %v3470
    %v3474 = vshrl.u32 2475754826, %v3471
    %v3475 = vor.u32 %v3473, %v3474
    %v3476 = vshll.u32 2475754826, %v3470
    %v3477 = vshrl.u32 2131351028, %v3471
    %v3478 = vor.u32 %v3476, %v3477
    %v3479 = vshll.u32 2131351028, %v3470
    %v3480 = vshrl.u32 2102212464, %v3471
    %v3481 = vor.u32 %v3479, %v3480
    %v3482 = vshll.u32 2102212464, %v3470
    %v3483 = vshrl.u32 920167782, %v3471
    %v3484 = vor.u32 %v3482, %v3483
    %v3485 = vshll.u32 920167782, %v3470
    %v3486 = vshrl.u32 1326507024, %v3471
    %v3487 = vor.u32 %v3485, %v3486
    %vm3488 = vcmp.lt.s32.totalorder %v3469, 1
    %vm3489 = vcmp.lt.s32.totalorder %v3469, 2
    %vm3490 = vcmp.lt.s32.totalorder %v3469, 3
    %vm3491 = vcmp.lt.s32.totalorder %v3469, 4
    %v3492 = vsel %vm3488, %v3472, %v3475
    %v3493 = vsel %vm3491, %v3481, 2102212464
    %v3494 = vsel %vm3490, %v3478, %v3493
    %v3495 = vsel %vm3489, %v3492, %v3494
    %v3496 = vsel %vm3488, %v3475, %v3478
    %v3497 = vsel %vm3491, %v3484, 920167782
    %v3498 = vsel %vm3490, %v3481, %v3497
    %v3499 = vsel %vm3489, %v3496, %v3498
    %v3500 = vsel %vm3488, %v3478, %v3481
    %v3501 = vsel %vm3491, %v3487, 1326507024
    %v3502 = vsel %vm3490, %v3484, %v3501
    %v3503 = vsel %vm3489, %v3500, %v3502
    %v3504 = vshll.u32 %v3464, 8
    %v3505 = vmul.u32.u64.compose %v3504, %v3503
    %v3506 = vextract.low.u32 %v3505
    %v3507 = vextract.high.u32 %v3505
    %v3508 = vmul.u32.u64.compose %v3504, %v3499
    %v3509 = vextract.low.u32 %v3508
    %v3510 = vextract.high.u32 %v3508
    %v3511 = vmul.u32 %v3504, %v3495
    %v3512 = vadd.s32 %v3507, %v3509
    %vm3513 = vc.u32 %v3507, %v3509
    %v3514 = vadd.s32 %v3510, 1
    %v3515 = vsel %vm3513, %v3514, %v3510
    %v3516 = vadd.s32 %v3511, %v3515
    %v3517 = vadd.s32 %v3516, 536870912
    %v3518 = vshrl.u32 %v3517, 30
    %v3519 = vshll.u32 %v3518, 30
    %v3520 = vsub.s32 %v3516, %v3519
    %vm3521 = vcmp.lt.s32.totalorder %v3520, 0
    %v3522 = vsub.s32 0, %v3520
    %v3523 = vsel %vm3521, %v3522, %v3520
    %v3524 = vclz %v3523
    %v3525 = vsub.s32 %v3524, 2
    %vm3526 = vcmp.gt.s32.totalorder 0, %v3525
    %v3527 = vsel %vm3526, 0, %v3525
    %v3528 = vsub.s32 32, %v3527
    %v3529 = vshll.u32 %v3520, %v3527
    %v3530 = vshrl.u32 %v3512, %v3528
    %v3531 = vor.u32 %v3529, %v3530
    %v3532 = vsub.s32 4294967266, %v3527
    %v3533 = vadd.s32 %v3532, 127
    %v3534 = vshll.u32 %v3533, 23
    %v3535 = vor.u32 4788187, %v3534
    %v3536 = vand.u32 2147483647, %v3535
    %v3538 = vcvt.s32.f32 %v3531
    %v3539 = vmul.f32 %v3538, %v3536
    %v3540 = vxor.u32 %v3539, 2147483648
    %v3541 = vsel %vm3458, %v3540, %v3539
    %v3542 = vsub.s32 4, %v3518
    %v3543 = vsel %vm3458, %v3542, %v3518
    %v3544 = vsel %vm3457, %v3455, %v3541
    %v3545 = vsel %vm3457, 0, %v3543
    %v3546 = vcosq.f32.pop %v3544
    %v3547 = vsinq.f32.pop %v3544
    %vm3548 = vweird.f32 %v3455
    %v3549 = vand.u32 %v3545, 3
    %vm3550 = vcmp.lt.s32.totalorder %v3549, 2
    %vm3551 = vcmp.eq.s32.totalorder %v3549, 0
    %v3552 = vxor.u32 %v3547, 2147483648
    %v3553 = vsel %vm3551, %v3546, %v3552
    %vm3554 = vcmp.eq.s32.totalorder %v3549, 2
    %v3555 = vxor.u32 %v3546, 2147483648
    %v3556 = vsel %vm3554, %v3555, %v3547
    %v3557 = vsel %vm3550, %v3553, %v3556
    %v3558 = vsel %vm3548, nan, %v3557
    %v3559 = vstv %s3452
    %v3560 = vmul.f32 %v3559, %v3558
    %v3561 = vadd.f32 %v3451, %v3560
    %s3562 = sld [smem:[#allocation2 + $0x110]]
    %s3563 = sld [smem:[#allocation2 + $0x10]]
    %v3564 = vstv %s3563
    %v3565 = vmul.f32 %v3564, %v23
    %v3566 = vand.u32 2147483647, %v3565
    %vm3567 = vcmp.le.f32.partialorder %v3566, 0.7853982
    %vm3568 = vcmp.lt.s32.totalorder %v3565, 0
    %v3569 = vand.u32 %v3565, 2139095040
    %v3570 = vshrl.u32 %v3569, 23
    %v3571 = vsub.s32 %v3570, 127
    %v3572 = vand.u32 2147483647, %v3565
    %v3573 = vand.u32 %v3572, 8388607
    %v3574 = vor.u32 %v3573, 8388608
    %v3575 = vsub.s32 0, %v3574
    %v3576 = vadd.s32 %v3571, 1
    %vm3577 = vcmp.gt.s32.totalorder %v3576, 0
    %v3578 = vsel %vm3577, %v3576, 0
    %v3579 = vshrl.u32 %v3578, 5
    %v3580 = vand.u32 %v3578, 31
    %v3581 = vsub.s32 32, %v3580
    %v3582 = vshrl.u32 683565275, %v3581
    %v3583 = vshll.u32 683565275, %v3580
    %v3584 = vshrl.u32 2475754826, %v3581
    %v3585 = vor.u32 %v3583, %v3584
    %v3586 = vshll.u32 2475754826, %v3580
    %v3587 = vshrl.u32 2131351028, %v3581
    %v3588 = vor.u32 %v3586, %v3587
    %v3589 = vshll.u32 2131351028, %v3580
    %v3590 = vshrl.u32 2102212464, %v3581
    %v3591 = vor.u32 %v3589, %v3590
    %v3592 = vshll.u32 2102212464, %v3580
    %v3593 = vshrl.u32 920167782, %v3581
    %v3594 = vor.u32 %v3592, %v3593
    %v3595 = vshll.u32 920167782, %v3580
    %v3596 = vshrl.u32 1326507024, %v3581
    %v3597 = vor.u32 %v3595, %v3596
    %vm3598 = vcmp.lt.s32.totalorder %v3579, 1
    %vm3599 = vcmp.lt.s32.totalorder %v3579, 2
    %vm3600 = vcmp.lt.s32.totalorder %v3579, 3
    %vm3601 = vcmp.lt.s32.totalorder %v3579, 4
    %v3602 = vsel %vm3598, %v3582, %v3585
    %v3603 = vsel %vm3601, %v3591, 2102212464
    %v3604 = vsel %vm3600, %v3588, %v3603
    %v3605 = vsel %vm3599, %v3602, %v3604
    %v3606 = vsel %vm3598, %v3585, %v3588
    %v3607 = vsel %vm3601, %v3594, 920167782
    %v3608 = vsel %vm3600, %v3591, %v3607
    %v3609 = vsel %vm3599, %v3606, %v3608
    %v3610 = vsel %vm3598, %v3588, %v3591
    %v3611 = vsel %vm3601, %v3597, 1326507024
    %v3612 = vsel %vm3600, %v3594, %v3611
    %v3613 = vsel %vm3599, %v3610, %v3612
    %v3614 = vshll.u32 %v3574, 8
    %v3615 = vmul.u32.u64.compose %v3614, %v3613
    %v3616 = vextract.low.u32 %v3615
    %v3617 = vextract.high.u32 %v3615
    %v3618 = vmul.u32.u64.compose %v3614, %v3609
    %v3619 = vextract.low.u32 %v3618
    %v3620 = vextract.high.u32 %v3618
    %v3621 = vmul.u32 %v3614, %v3605
    %v3622 = vadd.s32 %v3617, %v3619
    %vm3623 = vc.u32 %v3617, %v3619
    %v3624 = vadd.s32 %v3620, 1
    %v3625 = vsel %vm3623, %v3624, %v3620
    %v3626 = vadd.s32 %v3621, %v3625
    %v3627 = vadd.s32 %v3626, 536870912
    %v3628 = vshrl.u32 %v3627, 30
    %v3629 = vshll.u32 %v3628, 30
    %v3630 = vsub.s32 %v3626, %v3629
    %vm3631 = vcmp.lt.s32.totalorder %v3630, 0
    %v3632 = vsub.s32 0, %v3630
    %v3633 = vsel %vm3631, %v3632, %v3630
    %v3634 = vclz %v3633
    %v3635 = vsub.s32 %v3634, 2
    %vm3636 = vcmp.gt.s32.totalorder 0, %v3635
    %v3637 = vsel %vm3636, 0, %v3635
    %v3638 = vsub.s32 32, %v3637
    %v3639 = vshll.u32 %v3630, %v3637
    %v3640 = vshrl.u32 %v3622, %v3638
    %v3641 = vor.u32 %v3639, %v3640
    %v3642 = vsub.s32 4294967266, %v3637
    %v3643 = vadd.s32 %v3642, 127
    %v3644 = vshll.u32 %v3643, 23
    %v3645 = vor.u32 4788187, %v3644
    %v3646 = vand.u32 2147483647, %v3645
    %v3648 = vcvt.s32.f32 %v3641
    %v3649 = vmul.f32 %v3648, %v3646
    %v3650 = vxor.u32 %v3649, 2147483648
    %v3651 = vsel %vm3568, %v3650, %v3649
    %v3652 = vsub.s32 4, %v3628
    %v3653 = vsel %vm3568, %v3652, %v3628
    %v3654 = vsel %vm3567, %v3565, %v3651
    %v3655 = vsel %vm3567, 0, %v3653
    %v3656 = vcosq.f32.pop %v3654
    %v3657 = vsinq.f32.pop %v3654
    %vm3658 = vweird.f32 %v3565
    %v3659 = vadd.s32 %v3655, 3
    %v3660 = vand.u32 %v3659, 3
    %vm3661 = vcmp.lt.s32.totalorder %v3660, 2
    %vm3662 = vcmp.eq.s32.totalorder %v3660, 0
    %v3663 = vxor.u32 %v3657, 2147483648
    %v3664 = vsel %vm3662, %v3656, %v3663
    %vm3665 = vcmp.eq.s32.totalorder %v3660, 2
    %v3666 = vxor.u32 %v3656, 2147483648
    %v3667 = vsel %vm3665, %v3666, %v3657
    %v3668 = vsel %vm3661, %v3664, %v3667
    %v3669 = vsel %vm3658, nan, %v3668
    %v3670 = vstv %s3562
    %v3671 = vmul.f32 %v3670, %v3669
    %v3672 = vadd.f32 %v3561, %v3671
    %s3673 = sld [smem:[#allocation2 + $0x190]]
    %s3674 = sld [smem:[#allocation2 + $0x90]]
    %v3675 = vstv %s3674
    %v3676 = vmul.f32 %v3675, %v23
    %v3677 = vand.u32 2147483647, %v3676
    %vm3678 = vcmp.le.f32.partialorder %v3677, 0.7853982
    %vm3679 = vcmp.lt.s32.totalorder %v3676, 0
    %v3680 = vand.u32 %v3676, 2139095040
    %v3681 = vshrl.u32 %v3680, 23
    %v3682 = vsub.s32 %v3681, 127
    %v3683 = vand.u32 2147483647, %v3676
    %v3684 = vand.u32 %v3683, 8388607
    %v3685 = vor.u32 %v3684, 8388608
    %v3686 = vsub.s32 0, %v3685
    %v3687 = vadd.s32 %v3682, 1
    %vm3688 = vcmp.gt.s32.totalorder %v3687, 0
    %v3689 = vsel %vm3688, %v3687, 0
    %v3690 = vshrl.u32 %v3689, 5
    %v3691 = vand.u32 %v3689, 31
    %v3692 = vsub.s32 32, %v3691
    %v3693 = vshrl.u32 683565275, %v3692
    %v3694 = vshll.u32 683565275, %v3691
    %v3695 = vshrl.u32 2475754826, %v3692
    %v3696 = vor.u32 %v3694, %v3695
    %v3697 = vshll.u32 2475754826, %v3691
    %v3698 = vshrl.u32 2131351028, %v3692
    %v3699 = vor.u32 %v3697, %v3698
    %v3700 = vshll.u32 2131351028, %v3691
    %v3701 = vshrl.u32 2102212464, %v3692
    %v3702 = vor.u32 %v3700, %v3701
    %v3703 = vshll.u32 2102212464, %v3691
    %v3704 = vshrl.u32 920167782, %v3692
    %v3705 = vor.u32 %v3703, %v3704
    %v3706 = vshll.u32 920167782, %v3691
    %v3707 = vshrl.u32 1326507024, %v3692
    %v3708 = vor.u32 %v3706, %v3707
    %vm3709 = vcmp.lt.s32.totalorder %v3690, 1
    %vm3710 = vcmp.lt.s32.totalorder %v3690, 2
    %vm3711 = vcmp.lt.s32.totalorder %v3690, 3
    %vm3712 = vcmp.lt.s32.totalorder %v3690, 4
    %v3713 = vsel %vm3709, %v3693, %v3696
    %v3714 = vsel %vm3712, %v3702, 2102212464
    %v3715 = vsel %vm3711, %v3699, %v3714
    %v3716 = vsel %vm3710, %v3713, %v3715
    %v3717 = vsel %vm3709, %v3696, %v3699
    %v3718 = vsel %vm3712, %v3705, 920167782
    %v3719 = vsel %vm3711, %v3702, %v3718
    %v3720 = vsel %vm3710, %v3717, %v3719
    %v3721 = vsel %vm3709, %v3699, %v3702
    %v3722 = vsel %vm3712, %v3708, 1326507024
    %v3723 = vsel %vm3711, %v3705, %v3722
    %v3724 = vsel %vm3710, %v3721, %v3723
    %v3725 = vshll.u32 %v3685, 8
    %v3726 = vmul.u32.u64.compose %v3725, %v3724
    %v3727 = vextract.low.u32 %v3726
    %v3728 = vextract.high.u32 %v3726
    %v3729 = vmul.u32.u64.compose %v3725, %v3720
    %v3730 = vextract.low.u32 %v3729
    %v3731 = vextract.high.u32 %v3729
    %v3732 = vmul.u32 %v3725, %v3716
    %v3733 = vadd.s32 %v3728, %v3730
    %vm3734 = vc.u32 %v3728, %v3730
    %v3735 = vadd.s32 %v3731, 1
    %v3736 = vsel %vm3734, %v3735, %v3731
    %v3737 = vadd.s32 %v3732, %v3736
    %v3738 = vadd.s32 %v3737, 536870912
    %v3739 = vshrl.u32 %v3738, 30
    %v3740 = vshll.u32 %v3739, 30
    %v3741 = vsub.s32 %v3737, %v3740
    %vm3742 = vcmp.lt.s32.totalorder %v3741, 0
    %v3743 = vsub.s32 0, %v3741
    %v3744 = vsel %vm3742, %v3743, %v3741
    %v3745 = vclz %v3744
    %v3746 = vsub.s32 %v3745, 2
    %vm3747 = vcmp.gt.s32.totalorder 0, %v3746
    %v3748 = vsel %vm3747, 0, %v3746
    %v3749 = vsub.s32 32, %v3748
    %v3750 = vshll.u32 %v3741, %v3748
    %v3751 = vshrl.u32 %v3733, %v3749
    %v3752 = vor.u32 %v3750, %v3751
    %v3753 = vsub.s32 4294967266, %v3748
    %v3754 = vadd.s32 %v3753, 127
    %v3755 = vshll.u32 %v3754, 23
    %v3756 = vor.u32 4788187, %v3755
    %v3757 = vand.u32 2147483647, %v3756
    %v3759 = vcvt.s32.f32 %v3752
    %v3760 = vmul.f32 %v3759, %v3757
    %v3761 = vxor.u32 %v3760, 2147483648
    %v3762 = vsel %vm3679, %v3761, %v3760
    %v3763 = vsub.s32 4, %v3739
    %v3764 = vsel %vm3679, %v3763, %v3739
    %v3765 = vsel %vm3678, %v3676, %v3762
    %v3766 = vsel %vm3678, 0, %v3764
    %v3767 = vcosq.f32.pop %v3765
    %v3768 = vsinq.f32.pop %v3765
    %vm3769 = vweird.f32 %v3676
    %v3770 = vand.u32 %v3766, 3
    %vm3771 = vcmp.lt.s32.totalorder %v3770, 2
    %vm3772 = vcmp.eq.s32.totalorder %v3770, 0
    %v3773 = vxor.u32 %v3768, 2147483648
    %v3774 = vsel %vm3772, %v3767, %v3773
    %vm3775 = vcmp.eq.s32.totalorder %v3770, 2
    %v3776 = vxor.u32 %v3767, 2147483648
    %v3777 = vsel %vm3775, %v3776, %v3768
    %v3778 = vsel %vm3771, %v3774, %v3777
    %v3779 = vsel %vm3769, nan, %v3778
    %v3780 = vstv %s3673
    %v3781 = vmul.f32 %v3780, %v3779
    %v3782 = vadd.f32 %v3672, %v3781
    %s3783 = sld [smem:[#allocation2 + $0x111]]
    %s3784 = sld [smem:[#allocation2 + $0x11]]
    %v3785 = vstv %s3784
    %v3786 = vmul.f32 %v3785, %v23
    %v3787 = vand.u32 2147483647, %v3786
    %vm3788 = vcmp.le.f32.partialorder %v3787, 0.7853982
    %vm3789 = vcmp.lt.s32.totalorder %v3786, 0
    %v3790 = vand.u32 %v3786, 2139095040
    %v3791 = vshrl.u32 %v3790, 23
    %v3792 = vsub.s32 %v3791, 127
    %v3793 = vand.u32 2147483647, %v3786
    %v3794 = vand.u32 %v3793, 8388607
    %v3795 = vor.u32 %v3794, 8388608
    %v3796 = vsub.s32 0, %v3795
    %v3797 = vadd.s32 %v3792, 1
    %vm3798 = vcmp.gt.s32.totalorder %v3797, 0
    %v3799 = vsel %vm3798, %v3797, 0
    %v3800 = vshrl.u32 %v3799, 5
    %v3801 = vand.u32 %v3799, 31
    %v3802 = vsub.s32 32, %v3801
    %v3803 = vshrl.u32 683565275, %v3802
    %v3804 = vshll.u32 683565275, %v3801
    %v3805 = vshrl.u32 2475754826, %v3802
    %v3806 = vor.u32 %v3804, %v3805
    %v3807 = vshll.u32 2475754826, %v3801
    %v3808 = vshrl.u32 2131351028, %v3802
    %v3809 = vor.u32 %v3807, %v3808
    %v3810 = vshll.u32 2131351028, %v3801
    %v3811 = vshrl.u32 2102212464, %v3802
    %v3812 = vor.u32 %v3810, %v3811
    %v3813 = vshll.u32 2102212464, %v3801
    %v3814 = vshrl.u32 920167782, %v3802
    %v3815 = vor.u32 %v3813, %v3814
    %v3816 = vshll.u32 920167782, %v3801
    %v3817 = vshrl.u32 1326507024, %v3802
    %v3818 = vor.u32 %v3816, %v3817
    %vm3819 = vcmp.lt.s32.totalorder %v3800, 1
    %vm3820 = vcmp.lt.s32.totalorder %v3800, 2
    %vm3821 = vcmp.lt.s32.totalorder %v3800, 3
    %vm3822 = vcmp.lt.s32.totalorder %v3800, 4
    %v3823 = vsel %vm3819, %v3803, %v3806
    %v3824 = vsel %vm3822, %v3812, 2102212464
    %v3825 = vsel %vm3821, %v3809, %v3824
    %v3826 = vsel %vm3820, %v3823, %v3825
    %v3827 = vsel %vm3819, %v3806, %v3809
    %v3828 = vsel %vm3822, %v3815, 920167782
    %v3829 = vsel %vm3821, %v3812, %v3828
    %v3830 = vsel %vm3820, %v3827, %v3829
    %v3831 = vsel %vm3819, %v3809, %v3812
    %v3832 = vsel %vm3822, %v3818, 1326507024
    %v3833 = vsel %vm3821, %v3815, %v3832
    %v3834 = vsel %vm3820, %v3831, %v3833
    %v3835 = vshll.u32 %v3795, 8
    %v3836 = vmul.u32.u64.compose %v3835, %v3834
    %v3837 = vextract.low.u32 %v3836
    %v3838 = vextract.high.u32 %v3836
    %v3839 = vmul.u32.u64.compose %v3835, %v3830
    %v3840 = vextract.low.u32 %v3839
    %v3841 = vextract.high.u32 %v3839
    %v3842 = vmul.u32 %v3835, %v3826
    %v3843 = vadd.s32 %v3838, %v3840
    %vm3844 = vc.u32 %v3838, %v3840
    %v3845 = vadd.s32 %v3841, 1
    %v3846 = vsel %vm3844, %v3845, %v3841
    %v3847 = vadd.s32 %v3842, %v3846
    %v3848 = vadd.s32 %v3847, 536870912
    %v3849 = vshrl.u32 %v3848, 30
    %v3850 = vshll.u32 %v3849, 30
    %v3851 = vsub.s32 %v3847, %v3850
    %vm3852 = vcmp.lt.s32.totalorder %v3851, 0
    %v3853 = vsub.s32 0, %v3851
    %v3854 = vsel %vm3852, %v3853, %v3851
    %v3855 = vclz %v3854
    %v3856 = vsub.s32 %v3855, 2
    %vm3857 = vcmp.gt.s32.totalorder 0, %v3856
    %v3858 = vsel %vm3857, 0, %v3856
    %v3859 = vsub.s32 32, %v3858
    %v3860 = vshll.u32 %v3851, %v3858
    %v3861 = vshrl.u32 %v3843, %v3859
    %v3862 = vor.u32 %v3860, %v3861
    %v3863 = vsub.s32 4294967266, %v3858
    %v3864 = vadd.s32 %v3863, 127
    %v3865 = vshll.u32 %v3864, 23
    %v3866 = vor.u32 4788187, %v3865
    %v3867 = vand.u32 2147483647, %v3866
    %v3869 = vcvt.s32.f32 %v3862
    %v3870 = vmul.f32 %v3869, %v3867
    %v3871 = vxor.u32 %v3870, 2147483648
    %v3872 = vsel %vm3789, %v3871, %v3870
    %v3873 = vsub.s32 4, %v3849
    %v3874 = vsel %vm3789, %v3873, %v3849
    %v3875 = vsel %vm3788, %v3786, %v3872
    %v3876 = vsel %vm3788, 0, %v3874
    %v3877 = vcosq.f32.pop %v3875
    %v3878 = vsinq.f32.pop %v3875
    %vm3879 = vweird.f32 %v3786
    %v3880 = vadd.s32 %v3876, 3
    %v3881 = vand.u32 %v3880, 3
    %vm3882 = vcmp.lt.s32.totalorder %v3881, 2
    %vm3883 = vcmp.eq.s32.totalorder %v3881, 0
    %v3884 = vxor.u32 %v3878, 2147483648
    %v3885 = vsel %vm3883, %v3877, %v3884
    %vm3886 = vcmp.eq.s32.totalorder %v3881, 2
    %v3887 = vxor.u32 %v3877, 2147483648
    %v3888 = vsel %vm3886, %v3887, %v3878
    %v3889 = vsel %vm3882, %v3885, %v3888
    %v3890 = vsel %vm3879, nan, %v3889
    %v3891 = vstv %s3783
    %v3892 = vmul.f32 %v3891, %v3890
    %v3893 = vadd.f32 %v3782, %v3892
    %s3894 = sld [smem:[#allocation2 + $0x191]]
    %s3895 = sld [smem:[#allocation2 + $0x91]]
    %v3896 = vstv %s3895
    %v3897 = vmul.f32 %v3896, %v23
    %v3898 = vand.u32 2147483647, %v3897
    %vm3899 = vcmp.le.f32.partialorder %v3898, 0.7853982
    %vm3900 = vcmp.lt.s32.totalorder %v3897, 0
    %v3901 = vand.u32 %v3897, 2139095040
    %v3902 = vshrl.u32 %v3901, 23
    %v3903 = vsub.s32 %v3902, 127
    %v3904 = vand.u32 2147483647, %v3897
    %v3905 = vand.u32 %v3904, 8388607
    %v3906 = vor.u32 %v3905, 8388608
    %v3907 = vsub.s32 0, %v3906
    %v3908 = vadd.s32 %v3903, 1
    %vm3909 = vcmp.gt.s32.totalorder %v3908, 0
    %v3910 = vsel %vm3909, %v3908, 0
    %v3911 = vshrl.u32 %v3910, 5
    %v3912 = vand.u32 %v3910, 31
    %v3913 = vsub.s32 32, %v3912
    %v3914 = vshrl.u32 683565275, %v3913
    %v3915 = vshll.u32 683565275, %v3912
    %v3916 = vshrl.u32 2475754826, %v3913
    %v3917 = vor.u32 %v3915, %v3916
    %v3918 = vshll.u32 2475754826, %v3912
    %v3919 = vshrl.u32 2131351028, %v3913
    %v3920 = vor.u32 %v3918, %v3919
    %v3921 = vshll.u32 2131351028, %v3912
    %v3922 = vshrl.u32 2102212464, %v3913
    %v3923 = vor.u32 %v3921, %v3922
    %v3924 = vshll.u32 2102212464, %v3912
    %v3925 = vshrl.u32 920167782, %v3913
    %v3926 = vor.u32 %v3924, %v3925
    %v3927 = vshll.u32 920167782, %v3912
    %v3928 = vshrl.u32 1326507024, %v3913
    %v3929 = vor.u32 %v3927, %v3928
    %vm3930 = vcmp.lt.s32.totalorder %v3911, 1
    %vm3931 = vcmp.lt.s32.totalorder %v3911, 2
    %vm3932 = vcmp.lt.s32.totalorder %v3911, 3
    %vm3933 = vcmp.lt.s32.totalorder %v3911, 4
    %v3934 = vsel %vm3930, %v3914, %v3917
    %v3935 = vsel %vm3933, %v3923, 2102212464
    %v3936 = vsel %vm3932, %v3920, %v3935
    %v3937 = vsel %vm3931, %v3934, %v3936
    %v3938 = vsel %vm3930, %v3917, %v3920
    %v3939 = vsel %vm3933, %v3926, 920167782
    %v3940 = vsel %vm3932, %v3923, %v3939
    %v3941 = vsel %vm3931, %v3938, %v3940
    %v3942 = vsel %vm3930, %v3920, %v3923
    %v3943 = vsel %vm3933, %v3929, 1326507024
    %v3944 = vsel %vm3932, %v3926, %v3943
    %v3945 = vsel %vm3931, %v3942, %v3944
    %v3946 = vshll.u32 %v3906, 8
    %v3947 = vmul.u32.u64.compose %v3946, %v3945
    %v3948 = vextract.low.u32 %v3947
    %v3949 = vextract.high.u32 %v3947
    %v3950 = vmul.u32.u64.compose %v3946, %v3941
    %v3951 = vextract.low.u32 %v3950
    %v3952 = vextract.high.u32 %v3950
    %v3953 = vmul.u32 %v3946, %v3937
    %v3954 = vadd.s32 %v3949, %v3951
    %vm3955 = vc.u32 %v3949, %v3951
    %v3956 = vadd.s32 %v3952, 1
    %v3957 = vsel %vm3955, %v3956, %v3952
    %v3958 = vadd.s32 %v3953, %v3957
    %v3959 = vadd.s32 %v3958, 536870912
    %v3960 = vshrl.u32 %v3959, 30
    %v3961 = vshll.u32 %v3960, 30
    %v3962 = vsub.s32 %v3958, %v3961
    %vm3963 = vcmp.lt.s32.totalorder %v3962, 0
    %v3964 = vsub.s32 0, %v3962
    %v3965 = vsel %vm3963, %v3964, %v3962
    %v3966 = vclz %v3965
    %v3967 = vsub.s32 %v3966, 2
    %vm3968 = vcmp.gt.s32.totalorder 0, %v3967
    %v3969 = vsel %vm3968, 0, %v3967
    %v3970 = vsub.s32 32, %v3969
    %v3971 = vshll.u32 %v3962, %v3969
    %v3972 = vshrl.u32 %v3954, %v3970
    %v3973 = vor.u32 %v3971, %v3972
    %v3974 = vsub.s32 4294967266, %v3969
    %v3975 = vadd.s32 %v3974, 127
    %v3976 = vshll.u32 %v3975, 23
    %v3977 = vor.u32 4788187, %v3976
    %v3978 = vand.u32 2147483647, %v3977
    %v3980 = vcvt.s32.f32 %v3973
    %v3981 = vmul.f32 %v3980, %v3978
    %v3982 = vxor.u32 %v3981, 2147483648
    %v3983 = vsel %vm3900, %v3982, %v3981
    %v3984 = vsub.s32 4, %v3960
    %v3985 = vsel %vm3900, %v3984, %v3960
    %v3986 = vsel %vm3899, %v3897, %v3983
    %v3987 = vsel %vm3899, 0, %v3985
    %v3988 = vcosq.f32.pop %v3986
    %v3989 = vsinq.f32.pop %v3986
    %vm3990 = vweird.f32 %v3897
    %v3991 = vand.u32 %v3987, 3
    %vm3992 = vcmp.lt.s32.totalorder %v3991, 2
    %vm3993 = vcmp.eq.s32.totalorder %v3991, 0
    %v3994 = vxor.u32 %v3989, 2147483648
    %v3995 = vsel %vm3993, %v3988, %v3994
    %vm3996 = vcmp.eq.s32.totalorder %v3991, 2
    %v3997 = vxor.u32 %v3988, 2147483648
    %v3998 = vsel %vm3996, %v3997, %v3989
    %v3999 = vsel %vm3992, %v3995, %v3998
    %v4000 = vsel %vm3990, nan, %v3999
    %v4001 = vstv %s3894
    %v4002 = vmul.f32 %v4001, %v4000
    %v4003 = vadd.f32 %v3893, %v4002
    %s4004 = sld [smem:[#allocation2 + $0x112]]
    %s4005 = sld [smem:[#allocation2 + $0x12]]
    %v4006 = vstv %s4005
    %v4007 = vmul.f32 %v4006, %v23
    %v4008 = vand.u32 2147483647, %v4007
    %vm4009 = vcmp.le.f32.partialorder %v4008, 0.7853982
    %vm4010 = vcmp.lt.s32.totalorder %v4007, 0
    %v4011 = vand.u32 %v4007, 2139095040
    %v4012 = vshrl.u32 %v4011, 23
    %v4013 = vsub.s32 %v4012, 127
    %v4014 = vand.u32 2147483647, %v4007
    %v4015 = vand.u32 %v4014, 8388607
    %v4016 = vor.u32 %v4015, 8388608
    %v4017 = vsub.s32 0, %v4016
    %v4018 = vadd.s32 %v4013, 1
    %vm4019 = vcmp.gt.s32.totalorder %v4018, 0
    %v4020 = vsel %vm4019, %v4018, 0
    %v4021 = vshrl.u32 %v4020, 5
    %v4022 = vand.u32 %v4020, 31
    %v4023 = vsub.s32 32, %v4022
    %v4024 = vshrl.u32 683565275, %v4023
    %v4025 = vshll.u32 683565275, %v4022
    %v4026 = vshrl.u32 2475754826, %v4023
    %v4027 = vor.u32 %v4025, %v4026
    %v4028 = vshll.u32 2475754826, %v4022
    %v4029 = vshrl.u32 2131351028, %v4023
    %v4030 = vor.u32 %v4028, %v4029
    %v4031 = vshll.u32 2131351028, %v4022
    %v4032 = vshrl.u32 2102212464, %v4023
    %v4033 = vor.u32 %v4031, %v4032
    %v4034 = vshll.u32 2102212464, %v4022
    %v4035 = vshrl.u32 920167782, %v4023
    %v4036 = vor.u32 %v4034, %v4035
    %v4037 = vshll.u32 920167782, %v4022
    %v4038 = vshrl.u32 1326507024, %v4023
    %v4039 = vor.u32 %v4037, %v4038
    %vm4040 = vcmp.lt.s32.totalorder %v4021, 1
    %vm4041 = vcmp.lt.s32.totalorder %v4021, 2
    %vm4042 = vcmp.lt.s32.totalorder %v4021, 3
    %vm4043 = vcmp.lt.s32.totalorder %v4021, 4
    %v4044 = vsel %vm4040, %v4024, %v4027
    %v4045 = vsel %vm4043, %v4033, 2102212464
    %v4046 = vsel %vm4042, %v4030, %v4045
    %v4047 = vsel %vm4041, %v4044, %v4046
    %v4048 = vsel %vm4040, %v4027, %v4030
    %v4049 = vsel %vm4043, %v4036, 920167782
    %v4050 = vsel %vm4042, %v4033, %v4049
    %v4051 = vsel %vm4041, %v4048, %v4050
    %v4052 = vsel %vm4040, %v4030, %v4033
    %v4053 = vsel %vm4043, %v4039, 1326507024
    %v4054 = vsel %vm4042, %v4036, %v4053
    %v4055 = vsel %vm4041, %v4052, %v4054
    %v4056 = vshll.u32 %v4016, 8
    %v4057 = vmul.u32.u64.compose %v4056, %v4055
    %v4058 = vextract.low.u32 %v4057
    %v4059 = vextract.high.u32 %v4057
    %v4060 = vmul.u32.u64.compose %v4056, %v4051
    %v4061 = vextract.low.u32 %v4060
    %v4062 = vextract.high.u32 %v4060
    %v4063 = vmul.u32 %v4056, %v4047
    %v4064 = vadd.s32 %v4059, %v4061
    %vm4065 = vc.u32 %v4059, %v4061
    %v4066 = vadd.s32 %v4062, 1
    %v4067 = vsel %vm4065, %v4066, %v4062
    %v4068 = vadd.s32 %v4063, %v4067
    %v4069 = vadd.s32 %v4068, 536870912
    %v4070 = vshrl.u32 %v4069, 30
    %v4071 = vshll.u32 %v4070, 30
    %v4072 = vsub.s32 %v4068, %v4071
    %vm4073 = vcmp.lt.s32.totalorder %v4072, 0
    %v4074 = vsub.s32 0, %v4072
    %v4075 = vsel %vm4073, %v4074, %v4072
    %v4076 = vclz %v4075
    %v4077 = vsub.s32 %v4076, 2
    %vm4078 = vcmp.gt.s32.totalorder 0, %v4077
    %v4079 = vsel %vm4078, 0, %v4077
    %v4080 = vsub.s32 32, %v4079
    %v4081 = vshll.u32 %v4072, %v4079
    %v4082 = vshrl.u32 %v4064, %v4080
    %v4083 = vor.u32 %v4081, %v4082
    %v4084 = vsub.s32 4294967266, %v4079
    %v4085 = vadd.s32 %v4084, 127
    %v4086 = vshll.u32 %v4085, 23
    %v4087 = vor.u32 4788187, %v4086
    %v4088 = vand.u32 2147483647, %v4087
    %v4090 = vcvt.s32.f32 %v4083
    %v4091 = vmul.f32 %v4090, %v4088
    %v4092 = vxor.u32 %v4091, 2147483648
    %v4093 = vsel %vm4010, %v4092, %v4091
    %v4094 = vsub.s32 4, %v4070
    %v4095 = vsel %vm4010, %v4094, %v4070
    %v4096 = vsel %vm4009, %v4007, %v4093
    %v4097 = vsel %vm4009, 0, %v4095
    %v4098 = vcosq.f32.pop %v4096
    %v4099 = vsinq.f32.pop %v4096
    %vm4100 = vweird.f32 %v4007
    %v4101 = vadd.s32 %v4097, 3
    %v4102 = vand.u32 %v4101, 3
    %vm4103 = vcmp.lt.s32.totalorder %v4102, 2
    %vm4104 = vcmp.eq.s32.totalorder %v4102, 0
    %v4105 = vxor.u32 %v4099, 2147483648
    %v4106 = vsel %vm4104, %v4098, %v4105
    %vm4107 = vcmp.eq.s32.totalorder %v4102, 2
    %v4108 = vxor.u32 %v4098, 2147483648
    %v4109 = vsel %vm4107, %v4108, %v4099
    %v4110 = vsel %vm4103, %v4106, %v4109
    %v4111 = vsel %vm4100, nan, %v4110
    %v4112 = vstv %s4004
    %v4113 = vmul.f32 %v4112, %v4111
    %v4114 = vadd.f32 %v4003, %v4113
    %s4115 = sld [smem:[#allocation2 + $0x192]]
    %s4116 = sld [smem:[#allocation2 + $0x92]]
    %v4117 = vstv %s4116
    %v4118 = vmul.f32 %v4117, %v23
    %v4119 = vand.u32 2147483647, %v4118
    %vm4120 = vcmp.le.f32.partialorder %v4119, 0.7853982
    %vm4121 = vcmp.lt.s32.totalorder %v4118, 0
    %v4122 = vand.u32 %v4118, 2139095040
    %v4123 = vshrl.u32 %v4122, 23
    %v4124 = vsub.s32 %v4123, 127
    %v4125 = vand.u32 2147483647, %v4118
    %v4126 = vand.u32 %v4125, 8388607
    %v4127 = vor.u32 %v4126, 8388608
    %v4128 = vsub.s32 0, %v4127
    %v4129 = vadd.s32 %v4124, 1
    %vm4130 = vcmp.gt.s32.totalorder %v4129, 0
    %v4131 = vsel %vm4130, %v4129, 0
    %v4132 = vshrl.u32 %v4131, 5
    %v4133 = vand.u32 %v4131, 31
    %v4134 = vsub.s32 32, %v4133
    %v4135 = vshrl.u32 683565275, %v4134
    %v4136 = vshll.u32 683565275, %v4133
    %v4137 = vshrl.u32 2475754826, %v4134
    %v4138 = vor.u32 %v4136, %v4137
    %v4139 = vshll.u32 2475754826, %v4133
    %v4140 = vshrl.u32 2131351028, %v4134
    %v4141 = vor.u32 %v4139, %v4140
    %v4142 = vshll.u32 2131351028, %v4133
    %v4143 = vshrl.u32 2102212464, %v4134
    %v4144 = vor.u32 %v4142, %v4143
    %v4145 = vshll.u32 2102212464, %v4133
    %v4146 = vshrl.u32 920167782, %v4134
    %v4147 = vor.u32 %v4145, %v4146
    %v4148 = vshll.u32 920167782, %v4133
    %v4149 = vshrl.u32 1326507024, %v4134
    %v4150 = vor.u32 %v4148, %v4149
    %vm4151 = vcmp.lt.s32.totalorder %v4132, 1
    %vm4152 = vcmp.lt.s32.totalorder %v4132, 2
    %vm4153 = vcmp.lt.s32.totalorder %v4132, 3
    %vm4154 = vcmp.lt.s32.totalorder %v4132, 4
    %v4155 = vsel %vm4151, %v4135, %v4138
    %v4156 = vsel %vm4154, %v4144, 2102212464
    %v4157 = vsel %vm4153, %v4141, %v4156
    %v4158 = vsel %vm4152, %v4155, %v4157
    %v4159 = vsel %vm4151, %v4138, %v4141
    %v4160 = vsel %vm4154, %v4147, 920167782
    %v4161 = vsel %vm4153, %v4144, %v4160
    %v4162 = vsel %vm4152, %v4159, %v4161
    %v4163 = vsel %vm4151, %v4141, %v4144
    %v4164 = vsel %vm4154, %v4150, 1326507024
    %v4165 = vsel %vm4153, %v4147, %v4164
    %v4166 = vsel %vm4152, %v4163, %v4165
    %v4167 = vshll.u32 %v4127, 8
    %v4168 = vmul.u32.u64.compose %v4167, %v4166
    %v4169 = vextract.low.u32 %v4168
    %v4170 = vextract.high.u32 %v4168
    %v4171 = vmul.u32.u64.compose %v4167, %v4162
    %v4172 = vextract.low.u32 %v4171
    %v4173 = vextract.high.u32 %v4171
    %v4174 = vmul.u32 %v4167, %v4158
    %v4175 = vadd.s32 %v4170, %v4172
    %vm4176 = vc.u32 %v4170, %v4172
    %v4177 = vadd.s32 %v4173, 1
    %v4178 = vsel %vm4176, %v4177, %v4173
    %v4179 = vadd.s32 %v4174, %v4178
    %v4180 = vadd.s32 %v4179, 536870912
    %v4181 = vshrl.u32 %v4180, 30
    %v4182 = vshll.u32 %v4181, 30
    %v4183 = vsub.s32 %v4179, %v4182
    %vm4184 = vcmp.lt.s32.totalorder %v4183, 0
    %v4185 = vsub.s32 0, %v4183
    %v4186 = vsel %vm4184, %v4185, %v4183
    %v4187 = vclz %v4186
    %v4188 = vsub.s32 %v4187, 2
    %vm4189 = vcmp.gt.s32.totalorder 0, %v4188
    %v4190 = vsel %vm4189, 0, %v4188
    %v4191 = vsub.s32 32, %v4190
    %v4192 = vshll.u32 %v4183, %v4190
    %v4193 = vshrl.u32 %v4175, %v4191
    %v4194 = vor.u32 %v4192, %v4193
    %v4195 = vsub.s32 4294967266, %v4190
    %v4196 = vadd.s32 %v4195, 127
    %v4197 = vshll.u32 %v4196, 23
    %v4198 = vor.u32 4788187, %v4197
    %v4199 = vand.u32 2147483647, %v4198
    %v4201 = vcvt.s32.f32 %v4194
    %v4202 = vmul.f32 %v4201, %v4199
    %v4203 = vxor.u32 %v4202, 2147483648
    %v4204 = vsel %vm4121, %v4203, %v4202
    %v4205 = vsub.s32 4, %v4181
    %v4206 = vsel %vm4121, %v4205, %v4181
    %v4207 = vsel %vm4120, %v4118, %v4204
    %v4208 = vsel %vm4120, 0, %v4206
    %v4209 = vcosq.f32.pop %v4207
    %v4210 = vsinq.f32.pop %v4207
    %vm4211 = vweird.f32 %v4118
    %v4212 = vand.u32 %v4208, 3
    %vm4213 = vcmp.lt.s32.totalorder %v4212, 2
    %vm4214 = vcmp.eq.s32.totalorder %v4212, 0
    %v4215 = vxor.u32 %v4210, 2147483648
    %v4216 = vsel %vm4214, %v4209, %v4215
    %vm4217 = vcmp.eq.s32.totalorder %v4212, 2
    %v4218 = vxor.u32 %v4209, 2147483648
    %v4219 = vsel %vm4217, %v4218, %v4210
    %v4220 = vsel %vm4213, %v4216, %v4219
    %v4221 = vsel %vm4211, nan, %v4220
    %v4222 = vstv %s4115
    %v4223 = vmul.f32 %v4222, %v4221
    %v4224 = vadd.f32 %v4114, %v4223
    %s4225 = sld [smem:[#allocation2 + $0x113]]
    %s4226 = sld [smem:[#allocation2 + $0x13]]
    %v4227 = vstv %s4226
    %v4228 = vmul.f32 %v4227, %v23
    %v4229 = vand.u32 2147483647, %v4228
    %vm4230 = vcmp.le.f32.partialorder %v4229, 0.7853982
    %vm4231 = vcmp.lt.s32.totalorder %v4228, 0
    %v4232 = vand.u32 %v4228, 2139095040
    %v4233 = vshrl.u32 %v4232, 23
    %v4234 = vsub.s32 %v4233, 127
    %v4235 = vand.u32 2147483647, %v4228
    %v4236 = vand.u32 %v4235, 8388607
    %v4237 = vor.u32 %v4236, 8388608
    %v4238 = vsub.s32 0, %v4237
    %v4239 = vadd.s32 %v4234, 1
    %vm4240 = vcmp.gt.s32.totalorder %v4239, 0
    %v4241 = vsel %vm4240, %v4239, 0
    %v4242 = vshrl.u32 %v4241, 5
    %v4243 = vand.u32 %v4241, 31
    %v4244 = vsub.s32 32, %v4243
    %v4245 = vshrl.u32 683565275, %v4244
    %v4246 = vshll.u32 683565275, %v4243
    %v4247 = vshrl.u32 2475754826, %v4244
    %v4248 = vor.u32 %v4246, %v4247
    %v4249 = vshll.u32 2475754826, %v4243
    %v4250 = vshrl.u32 2131351028, %v4244
    %v4251 = vor.u32 %v4249, %v4250
    %v4252 = vshll.u32 2131351028, %v4243
    %v4253 = vshrl.u32 2102212464, %v4244
    %v4254 = vor.u32 %v4252, %v4253
    %v4255 = vshll.u32 2102212464, %v4243
    %v4256 = vshrl.u32 920167782, %v4244
    %v4257 = vor.u32 %v4255, %v4256
    %v4258 = vshll.u32 920167782, %v4243
    %v4259 = vshrl.u32 1326507024, %v4244
    %v4260 = vor.u32 %v4258, %v4259
    %vm4261 = vcmp.lt.s32.totalorder %v4242, 1
    %vm4262 = vcmp.lt.s32.totalorder %v4242, 2
    %vm4263 = vcmp.lt.s32.totalorder %v4242, 3
    %vm4264 = vcmp.lt.s32.totalorder %v4242, 4
    %v4265 = vsel %vm4261, %v4245, %v4248
    %v4266 = vsel %vm4264, %v4254, 2102212464
    %v4267 = vsel %vm4263, %v4251, %v4266
    %v4268 = vsel %vm4262, %v4265, %v4267
    %v4269 = vsel %vm4261, %v4248, %v4251
    %v4270 = vsel %vm4264, %v4257, 920167782
    %v4271 = vsel %vm4263, %v4254, %v4270
    %v4272 = vsel %vm4262, %v4269, %v4271
    %v4273 = vsel %vm4261, %v4251, %v4254
    %v4274 = vsel %vm4264, %v4260, 1326507024
    %v4275 = vsel %vm4263, %v4257, %v4274
    %v4276 = vsel %vm4262, %v4273, %v4275
    %v4277 = vshll.u32 %v4237, 8
    %v4278 = vmul.u32.u64.compose %v4277, %v4276
    %v4279 = vextract.low.u32 %v4278
    %v4280 = vextract.high.u32 %v4278
    %v4281 = vmul.u32.u64.compose %v4277, %v4272
    %v4282 = vextract.low.u32 %v4281
    %v4283 = vextract.high.u32 %v4281
    %v4284 = vmul.u32 %v4277, %v4268
    %v4285 = vadd.s32 %v4280, %v4282
    %vm4286 = vc.u32 %v4280, %v4282
    %v4287 = vadd.s32 %v4283, 1
    %v4288 = vsel %vm4286, %v4287, %v4283
    %v4289 = vadd.s32 %v4284, %v4288
    %v4290 = vadd.s32 %v4289, 536870912
    %v4291 = vshrl.u32 %v4290, 30
    %v4292 = vshll.u32 %v4291, 30
    %v4293 = vsub.s32 %v4289, %v4292
    %vm4294 = vcmp.lt.s32.totalorder %v4293, 0
    %v4295 = vsub.s32 0, %v4293
    %v4296 = vsel %vm4294, %v4295, %v4293
    %v4297 = vclz %v4296
    %v4298 = vsub.s32 %v4297, 2
    %vm4299 = vcmp.gt.s32.totalorder 0, %v4298
    %v4300 = vsel %vm4299, 0, %v4298
    %v4301 = vsub.s32 32, %v4300
    %v4302 = vshll.u32 %v4293, %v4300
    %v4303 = vshrl.u32 %v4285, %v4301
    %v4304 = vor.u32 %v4302, %v4303
    %v4305 = vsub.s32 4294967266, %v4300
    %v4306 = vadd.s32 %v4305, 127
    %v4307 = vshll.u32 %v4306, 23
    %v4308 = vor.u32 4788187, %v4307
    %v4309 = vand.u32 2147483647, %v4308
    %v4311 = vcvt.s32.f32 %v4304
    %v4312 = vmul.f32 %v4311, %v4309
    %v4313 = vxor.u32 %v4312, 2147483648
    %v4314 = vsel %vm4231, %v4313, %v4312
    %v4315 = vsub.s32 4, %v4291
    %v4316 = vsel %vm4231, %v4315, %v4291
    %v4317 = vsel %vm4230, %v4228, %v4314
    %v4318 = vsel %vm4230, 0, %v4316
    %v4319 = vcosq.f32.pop %v4317
    %v4320 = vsinq.f32.pop %v4317
    %vm4321 = vweird.f32 %v4228
    %v4322 = vadd.s32 %v4318, 3
    %v4323 = vand.u32 %v4322, 3
    %vm4324 = vcmp.lt.s32.totalorder %v4323, 2
    %vm4325 = vcmp.eq.s32.totalorder %v4323, 0
    %v4326 = vxor.u32 %v4320, 2147483648
    %v4327 = vsel %vm4325, %v4319, %v4326
    %vm4328 = vcmp.eq.s32.totalorder %v4323, 2
    %v4329 = vxor.u32 %v4319, 2147483648
    %v4330 = vsel %vm4328, %v4329, %v4320
    %v4331 = vsel %vm4324, %v4327, %v4330
    %v4332 = vsel %vm4321, nan, %v4331
    %v4333 = vstv %s4225
    %v4334 = vmul.f32 %v4333, %v4332
    %v4335 = vadd.f32 %v4224, %v4334
    %s4336 = sld [smem:[#allocation2 + $0x193]]
    %s4337 = sld [smem:[#allocation2 + $0x93]]
    %v4338 = vstv %s4337
    %v4339 = vmul.f32 %v4338, %v23
    %v4340 = vand.u32 2147483647, %v4339
    %vm4341 = vcmp.le.f32.partialorder %v4340, 0.7853982
    %vm4342 = vcmp.lt.s32.totalorder %v4339, 0
    %v4343 = vand.u32 %v4339, 2139095040
    %v4344 = vshrl.u32 %v4343, 23
    %v4345 = vsub.s32 %v4344, 127
    %v4346 = vand.u32 2147483647, %v4339
    %v4347 = vand.u32 %v4346, 8388607
    %v4348 = vor.u32 %v4347, 8388608
    %v4349 = vsub.s32 0, %v4348
    %v4350 = vadd.s32 %v4345, 1
    %vm4351 = vcmp.gt.s32.totalorder %v4350, 0
    %v4352 = vsel %vm4351, %v4350, 0
    %v4353 = vshrl.u32 %v4352, 5
    %v4354 = vand.u32 %v4352, 31
    %v4355 = vsub.s32 32, %v4354
    %v4356 = vshrl.u32 683565275, %v4355
    %v4357 = vshll.u32 683565275, %v4354
    %v4358 = vshrl.u32 2475754826, %v4355
    %v4359 = vor.u32 %v4357, %v4358
    %v4360 = vshll.u32 2475754826, %v4354
    %v4361 = vshrl.u32 2131351028, %v4355
    %v4362 = vor.u32 %v4360, %v4361
    %v4363 = vshll.u32 2131351028, %v4354
    %v4364 = vshrl.u32 2102212464, %v4355
    %v4365 = vor.u32 %v4363, %v4364
    %v4366 = vshll.u32 2102212464, %v4354
    %v4367 = vshrl.u32 920167782, %v4355
    %v4368 = vor.u32 %v4366, %v4367
    %v4369 = vshll.u32 920167782, %v4354
    %v4370 = vshrl.u32 1326507024, %v4355
    %v4371 = vor.u32 %v4369, %v4370
    %vm4372 = vcmp.lt.s32.totalorder %v4353, 1
    %vm4373 = vcmp.lt.s32.totalorder %v4353, 2
    %vm4374 = vcmp.lt.s32.totalorder %v4353, 3
    %vm4375 = vcmp.lt.s32.totalorder %v4353, 4
    %v4376 = vsel %vm4372, %v4356, %v4359
    %v4377 = vsel %vm4375, %v4365, 2102212464
    %v4378 = vsel %vm4374, %v4362, %v4377
    %v4379 = vsel %vm4373, %v4376, %v4378
    %v4380 = vsel %vm4372, %v4359, %v4362
    %v4381 = vsel %vm4375, %v4368, 920167782
    %v4382 = vsel %vm4374, %v4365, %v4381
    %v4383 = vsel %vm4373, %v4380, %v4382
    %v4384 = vsel %vm4372, %v4362, %v4365
    %v4385 = vsel %vm4375, %v4371, 1326507024
    %v4386 = vsel %vm4374, %v4368, %v4385
    %v4387 = vsel %vm4373, %v4384, %v4386
    %v4388 = vshll.u32 %v4348, 8
    %v4389 = vmul.u32.u64.compose %v4388, %v4387
    %v4390 = vextract.low.u32 %v4389
    %v4391 = vextract.high.u32 %v4389
    %v4392 = vmul.u32.u64.compose %v4388, %v4383
    %v4393 = vextract.low.u32 %v4392
    %v4394 = vextract.high.u32 %v4392
    %v4395 = vmul.u32 %v4388, %v4379
    %v4396 = vadd.s32 %v4391, %v4393
    %vm4397 = vc.u32 %v4391, %v4393
    %v4398 = vadd.s32 %v4394, 1
    %v4399 = vsel %vm4397, %v4398, %v4394
    %v4400 = vadd.s32 %v4395, %v4399
    %v4401 = vadd.s32 %v4400, 536870912
    %v4402 = vshrl.u32 %v4401, 30
    %v4403 = vshll.u32 %v4402, 30
    %v4404 = vsub.s32 %v4400, %v4403
    %vm4405 = vcmp.lt.s32.totalorder %v4404, 0
    %v4406 = vsub.s32 0, %v4404
    %v4407 = vsel %vm4405, %v4406, %v4404
    %v4408 = vclz %v4407
    %v4409 = vsub.s32 %v4408, 2
    %vm4410 = vcmp.gt.s32.totalorder 0, %v4409
    %v4411 = vsel %vm4410, 0, %v4409
    %v4412 = vsub.s32 32, %v4411
    %v4413 = vshll.u32 %v4404, %v4411
    %v4414 = vshrl.u32 %v4396, %v4412
    %v4415 = vor.u32 %v4413, %v4414
    %v4416 = vsub.s32 4294967266, %v4411
    %v4417 = vadd.s32 %v4416, 127
    %v4418 = vshll.u32 %v4417, 23
    %v4419 = vor.u32 4788187, %v4418
    %v4420 = vand.u32 2147483647, %v4419
    %v4422 = vcvt.s32.f32 %v4415
    %v4423 = vmul.f32 %v4422, %v4420
    %v4424 = vxor.u32 %v4423, 2147483648
    %v4425 = vsel %vm4342, %v4424, %v4423
    %v4426 = vsub.s32 4, %v4402
    %v4427 = vsel %vm4342, %v4426, %v4402
    %v4428 = vsel %vm4341, %v4339, %v4425
    %v4429 = vsel %vm4341, 0, %v4427
    %v4430 = vcosq.f32.pop %v4428
    %v4431 = vsinq.f32.pop %v4428
    %vm4432 = vweird.f32 %v4339
    %v4433 = vand.u32 %v4429, 3
    %vm4434 = vcmp.lt.s32.totalorder %v4433, 2
    %vm4435 = vcmp.eq.s32.totalorder %v4433, 0
    %v4436 = vxor.u32 %v4431, 2147483648
    %v4437 = vsel %vm4435, %v4430, %v4436
    %vm4438 = vcmp.eq.s32.totalorder %v4433, 2
    %v4439 = vxor.u32 %v4430, 2147483648
    %v4440 = vsel %vm4438, %v4439, %v4431
    %v4441 = vsel %vm4434, %v4437, %v4440
    %v4442 = vsel %vm4432, nan, %v4441
    %v4443 = vstv %s4336
    %v4444 = vmul.f32 %v4443, %v4442
    %v4445 = vadd.f32 %v4335, %v4444
    %s4446 = sld [smem:[#allocation2 + $0x114]]
    %s4447 = sld [smem:[#allocation2 + $0x14]]
    %v4448 = vstv %s4447
    %v4449 = vmul.f32 %v4448, %v23
    %v4450 = vand.u32 2147483647, %v4449
    %vm4451 = vcmp.le.f32.partialorder %v4450, 0.7853982
    %vm4452 = vcmp.lt.s32.totalorder %v4449, 0
    %v4453 = vand.u32 %v4449, 2139095040
    %v4454 = vshrl.u32 %v4453, 23
    %v4455 = vsub.s32 %v4454, 127
    %v4456 = vand.u32 2147483647, %v4449
    %v4457 = vand.u32 %v4456, 8388607
    %v4458 = vor.u32 %v4457, 8388608
    %v4459 = vsub.s32 0, %v4458
    %v4460 = vadd.s32 %v4455, 1
    %vm4461 = vcmp.gt.s32.totalorder %v4460, 0
    %v4462 = vsel %vm4461, %v4460, 0
    %v4463 = vshrl.u32 %v4462, 5
    %v4464 = vand.u32 %v4462, 31
    %v4465 = vsub.s32 32, %v4464
    %v4466 = vshrl.u32 683565275, %v4465
    %v4467 = vshll.u32 683565275, %v4464
    %v4468 = vshrl.u32 2475754826, %v4465
    %v4469 = vor.u32 %v4467, %v4468
    %v4470 = vshll.u32 2475754826, %v4464
    %v4471 = vshrl.u32 2131351028, %v4465
    %v4472 = vor.u32 %v4470, %v4471
    %v4473 = vshll.u32 2131351028, %v4464
    %v4474 = vshrl.u32 2102212464, %v4465
    %v4475 = vor.u32 %v4473, %v4474
    %v4476 = vshll.u32 2102212464, %v4464
    %v4477 = vshrl.u32 920167782, %v4465
    %v4478 = vor.u32 %v4476, %v4477
    %v4479 = vshll.u32 920167782, %v4464
    %v4480 = vshrl.u32 1326507024, %v4465
    %v4481 = vor.u32 %v4479, %v4480
    %vm4482 = vcmp.lt.s32.totalorder %v4463, 1
    %vm4483 = vcmp.lt.s32.totalorder %v4463, 2
    %vm4484 = vcmp.lt.s32.totalorder %v4463, 3
    %vm4485 = vcmp.lt.s32.totalorder %v4463, 4
    %v4486 = vsel %vm4482, %v4466, %v4469
    %v4487 = vsel %vm4485, %v4475, 2102212464
    %v4488 = vsel %vm4484, %v4472, %v4487
    %v4489 = vsel %vm4483, %v4486, %v4488
    %v4490 = vsel %vm4482, %v4469, %v4472
    %v4491 = vsel %vm4485, %v4478, 920167782
    %v4492 = vsel %vm4484, %v4475, %v4491
    %v4493 = vsel %vm4483, %v4490, %v4492
    %v4494 = vsel %vm4482, %v4472, %v4475
    %v4495 = vsel %vm4485, %v4481, 1326507024
    %v4496 = vsel %vm4484, %v4478, %v4495
    %v4497 = vsel %vm4483, %v4494, %v4496
    %v4498 = vshll.u32 %v4458, 8
    %v4499 = vmul.u32.u64.compose %v4498, %v4497
    %v4500 = vextract.low.u32 %v4499
    %v4501 = vextract.high.u32 %v4499
    %v4502 = vmul.u32.u64.compose %v4498, %v4493
    %v4503 = vextract.low.u32 %v4502
    %v4504 = vextract.high.u32 %v4502
    %v4505 = vmul.u32 %v4498, %v4489
    %v4506 = vadd.s32 %v4501, %v4503
    %vm4507 = vc.u32 %v4501, %v4503
    %v4508 = vadd.s32 %v4504, 1
    %v4509 = vsel %vm4507, %v4508, %v4504
    %v4510 = vadd.s32 %v4505, %v4509
    %v4511 = vadd.s32 %v4510, 536870912
    %v4512 = vshrl.u32 %v4511, 30
    %v4513 = vshll.u32 %v4512, 30
    %v4514 = vsub.s32 %v4510, %v4513
    %vm4515 = vcmp.lt.s32.totalorder %v4514, 0
    %v4516 = vsub.s32 0, %v4514
    %v4517 = vsel %vm4515, %v4516, %v4514
    %v4518 = vclz %v4517
    %v4519 = vsub.s32 %v4518, 2
    %vm4520 = vcmp.gt.s32.totalorder 0, %v4519
    %v4521 = vsel %vm4520, 0, %v4519
    %v4522 = vsub.s32 32, %v4521
    %v4523 = vshll.u32 %v4514, %v4521
    %v4524 = vshrl.u32 %v4506, %v4522
    %v4525 = vor.u32 %v4523, %v4524
    %v4526 = vsub.s32 4294967266, %v4521
    %v4527 = vadd.s32 %v4526, 127
    %v4528 = vshll.u32 %v4527, 23
    %v4529 = vor.u32 4788187, %v4528
    %v4530 = vand.u32 2147483647, %v4529
    %v4532 = vcvt.s32.f32 %v4525
    %v4533 = vmul.f32 %v4532, %v4530
    %v4534 = vxor.u32 %v4533, 2147483648
    %v4535 = vsel %vm4452, %v4534, %v4533
    %v4536 = vsub.s32 4, %v4512
    %v4537 = vsel %vm4452, %v4536, %v4512
    %v4538 = vsel %vm4451, %v4449, %v4535
    %v4539 = vsel %vm4451, 0, %v4537
    %v4540 = vcosq.f32.pop %v4538
    %v4541 = vsinq.f32.pop %v4538
    %vm4542 = vweird.f32 %v4449
    %v4543 = vadd.s32 %v4539, 3
    %v4544 = vand.u32 %v4543, 3
    %vm4545 = vcmp.lt.s32.totalorder %v4544, 2
    %vm4546 = vcmp.eq.s32.totalorder %v4544, 0
    %v4547 = vxor.u32 %v4541, 2147483648
    %v4548 = vsel %vm4546, %v4540, %v4547
    %vm4549 = vcmp.eq.s32.totalorder %v4544, 2
    %v4550 = vxor.u32 %v4540, 2147483648
    %v4551 = vsel %vm4549, %v4550, %v4541
    %v4552 = vsel %vm4545, %v4548, %v4551
    %v4553 = vsel %vm4542, nan, %v4552
    %v4554 = vstv %s4446
    %v4555 = vmul.f32 %v4554, %v4553
    %v4556 = vadd.f32 %v4445, %v4555
    %s4557 = sld [smem:[#allocation2 + $0x194]]
    %s4558 = sld [smem:[#allocation2 + $0x94]]
    %v4559 = vstv %s4558
    %v4560 = vmul.f32 %v4559, %v23
    %v4561 = vand.u32 2147483647, %v4560
    %vm4562 = vcmp.le.f32.partialorder %v4561, 0.7853982
    %vm4563 = vcmp.lt.s32.totalorder %v4560, 0
    %v4564 = vand.u32 %v4560, 2139095040
    %v4565 = vshrl.u32 %v4564, 23
    %v4566 = vsub.s32 %v4565, 127
    %v4567 = vand.u32 2147483647, %v4560
    %v4568 = vand.u32 %v4567, 8388607
    %v4569 = vor.u32 %v4568, 8388608
    %v4570 = vsub.s32 0, %v4569
    %v4571 = vadd.s32 %v4566, 1
    %vm4572 = vcmp.gt.s32.totalorder %v4571, 0
    %v4573 = vsel %vm4572, %v4571, 0
    %v4574 = vshrl.u32 %v4573, 5
    %v4575 = vand.u32 %v4573, 31
    %v4576 = vsub.s32 32, %v4575
    %v4577 = vshrl.u32 683565275, %v4576
    %v4578 = vshll.u32 683565275, %v4575
    %v4579 = vshrl.u32 2475754826, %v4576
    %v4580 = vor.u32 %v4578, %v4579
    %v4581 = vshll.u32 2475754826, %v4575
    %v4582 = vshrl.u32 2131351028, %v4576
    %v4583 = vor.u32 %v4581, %v4582
    %v4584 = vshll.u32 2131351028, %v4575
    %v4585 = vshrl.u32 2102212464, %v4576
    %v4586 = vor.u32 %v4584, %v4585
    %v4587 = vshll.u32 2102212464, %v4575
    %v4588 = vshrl.u32 920167782, %v4576
    %v4589 = vor.u32 %v4587, %v4588
    %v4590 = vshll.u32 920167782, %v4575
    %v4591 = vshrl.u32 1326507024, %v4576
    %v4592 = vor.u32 %v4590, %v4591
    %vm4593 = vcmp.lt.s32.totalorder %v4574, 1
    %vm4594 = vcmp.lt.s32.totalorder %v4574, 2
    %vm4595 = vcmp.lt.s32.totalorder %v4574, 3
    %vm4596 = vcmp.lt.s32.totalorder %v4574, 4
    %v4597 = vsel %vm4593, %v4577, %v4580
    %v4598 = vsel %vm4596, %v4586, 2102212464
    %v4599 = vsel %vm4595, %v4583, %v4598
    %v4600 = vsel %vm4594, %v4597, %v4599
    %v4601 = vsel %vm4593, %v4580, %v4583
    %v4602 = vsel %vm4596, %v4589, 920167782
    %v4603 = vsel %vm4595, %v4586, %v4602
    %v4604 = vsel %vm4594, %v4601, %v4603
    %v4605 = vsel %vm4593, %v4583, %v4586
    %v4606 = vsel %vm4596, %v4592, 1326507024
    %v4607 = vsel %vm4595, %v4589, %v4606
    %v4608 = vsel %vm4594, %v4605, %v4607
    %v4609 = vshll.u32 %v4569, 8
    %v4610 = vmul.u32.u64.compose %v4609, %v4608
    %v4611 = vextract.low.u32 %v4610
    %v4612 = vextract.high.u32 %v4610
    %v4613 = vmul.u32.u64.compose %v4609, %v4604
    %v4614 = vextract.low.u32 %v4613
    %v4615 = vextract.high.u32 %v4613
    %v4616 = vmul.u32 %v4609, %v4600
    %v4617 = vadd.s32 %v4612, %v4614
    %vm4618 = vc.u32 %v4612, %v4614
    %v4619 = vadd.s32 %v4615, 1
    %v4620 = vsel %vm4618, %v4619, %v4615
    %v4621 = vadd.s32 %v4616, %v4620
    %v4622 = vadd.s32 %v4621, 536870912
    %v4623 = vshrl.u32 %v4622, 30
    %v4624 = vshll.u32 %v4623, 30
    %v4625 = vsub.s32 %v4621, %v4624
    %vm4626 = vcmp.lt.s32.totalorder %v4625, 0
    %v4627 = vsub.s32 0, %v4625
    %v4628 = vsel %vm4626, %v4627, %v4625
    %v4629 = vclz %v4628
    %v4630 = vsub.s32 %v4629, 2
    %vm4631 = vcmp.gt.s32.totalorder 0, %v4630
    %v4632 = vsel %vm4631, 0, %v4630
    %v4633 = vsub.s32 32, %v4632
    %v4634 = vshll.u32 %v4625, %v4632
    %v4635 = vshrl.u32 %v4617, %v4633
    %v4636 = vor.u32 %v4634, %v4635
    %v4637 = vsub.s32 4294967266, %v4632
    %v4638 = vadd.s32 %v4637, 127
    %v4639 = vshll.u32 %v4638, 23
    %v4640 = vor.u32 4788187, %v4639
    %v4641 = vand.u32 2147483647, %v4640
    %v4643 = vcvt.s32.f32 %v4636
    %v4644 = vmul.f32 %v4643, %v4641
    %v4645 = vxor.u32 %v4644, 2147483648
    %v4646 = vsel %vm4563, %v4645, %v4644
    %v4647 = vsub.s32 4, %v4623
    %v4648 = vsel %vm4563, %v4647, %v4623
    %v4649 = vsel %vm4562, %v4560, %v4646
    %v4650 = vsel %vm4562, 0, %v4648
    %v4651 = vcosq.f32.pop %v4649
    %v4652 = vsinq.f32.pop %v4649
    %vm4653 = vweird.f32 %v4560
    %v4654 = vand.u32 %v4650, 3
    %vm4655 = vcmp.lt.s32.totalorder %v4654, 2
    %vm4656 = vcmp.eq.s32.totalorder %v4654, 0
    %v4657 = vxor.u32 %v4652, 2147483648
    %v4658 = vsel %vm4656, %v4651, %v4657
    %vm4659 = vcmp.eq.s32.totalorder %v4654, 2
    %v4660 = vxor.u32 %v4651, 2147483648
    %v4661 = vsel %vm4659, %v4660, %v4652
    %v4662 = vsel %vm4655, %v4658, %v4661
    %v4663 = vsel %vm4653, nan, %v4662
    %v4664 = vstv %s4557
    %v4665 = vmul.f32 %v4664, %v4663
    %v4666 = vadd.f32 %v4556, %v4665
    %s4667 = sld [smem:[#allocation2 + $0x115]]
    %s4668 = sld [smem:[#allocation2 + $0x15]]
    %v4669 = vstv %s4668
    %v4670 = vmul.f32 %v4669, %v23
    %v4671 = vand.u32 2147483647, %v4670
    %vm4672 = vcmp.le.f32.partialorder %v4671, 0.7853982
    %vm4673 = vcmp.lt.s32.totalorder %v4670, 0
    %v4674 = vand.u32 %v4670, 2139095040
    %v4675 = vshrl.u32 %v4674, 23
    %v4676 = vsub.s32 %v4675, 127
    %v4677 = vand.u32 2147483647, %v4670
    %v4678 = vand.u32 %v4677, 8388607
    %v4679 = vor.u32 %v4678, 8388608
    %v4680 = vsub.s32 0, %v4679
    %v4681 = vadd.s32 %v4676, 1
    %vm4682 = vcmp.gt.s32.totalorder %v4681, 0
    %v4683 = vsel %vm4682, %v4681, 0
    %v4684 = vshrl.u32 %v4683, 5
    %v4685 = vand.u32 %v4683, 31
    %v4686 = vsub.s32 32, %v4685
    %v4687 = vshrl.u32 683565275, %v4686
    %v4688 = vshll.u32 683565275, %v4685
    %v4689 = vshrl.u32 2475754826, %v4686
    %v4690 = vor.u32 %v4688, %v4689
    %v4691 = vshll.u32 2475754826, %v4685
    %v4692 = vshrl.u32 2131351028, %v4686
    %v4693 = vor.u32 %v4691, %v4692
    %v4694 = vshll.u32 2131351028, %v4685
    %v4695 = vshrl.u32 2102212464, %v4686
    %v4696 = vor.u32 %v4694, %v4695
    %v4697 = vshll.u32 2102212464, %v4685
    %v4698 = vshrl.u32 920167782, %v4686
    %v4699 = vor.u32 %v4697, %v4698
    %v4700 = vshll.u32 920167782, %v4685
    %v4701 = vshrl.u32 1326507024, %v4686
    %v4702 = vor.u32 %v4700, %v4701
    %vm4703 = vcmp.lt.s32.totalorder %v4684, 1
    %vm4704 = vcmp.lt.s32.totalorder %v4684, 2
    %vm4705 = vcmp.lt.s32.totalorder %v4684, 3
    %vm4706 = vcmp.lt.s32.totalorder %v4684, 4
    %v4707 = vsel %vm4703, %v4687, %v4690
    %v4708 = vsel %vm4706, %v4696, 2102212464
    %v4709 = vsel %vm4705, %v4693, %v4708
    %v4710 = vsel %vm4704, %v4707, %v4709
    %v4711 = vsel %vm4703, %v4690, %v4693
    %v4712 = vsel %vm4706, %v4699, 920167782
    %v4713 = vsel %vm4705, %v4696, %v4712
    %v4714 = vsel %vm4704, %v4711, %v4713
    %v4715 = vsel %vm4703, %v4693, %v4696
    %v4716 = vsel %vm4706, %v4702, 1326507024
    %v4717 = vsel %vm4705, %v4699, %v4716
    %v4718 = vsel %vm4704, %v4715, %v4717
    %v4719 = vshll.u32 %v4679, 8
    %v4720 = vmul.u32.u64.compose %v4719, %v4718
    %v4721 = vextract.low.u32 %v4720
    %v4722 = vextract.high.u32 %v4720
    %v4723 = vmul.u32.u64.compose %v4719, %v4714
    %v4724 = vextract.low.u32 %v4723
    %v4725 = vextract.high.u32 %v4723
    %v4726 = vmul.u32 %v4719, %v4710
    %v4727 = vadd.s32 %v4722, %v4724
    %vm4728 = vc.u32 %v4722, %v4724
    %v4729 = vadd.s32 %v4725, 1
    %v4730 = vsel %vm4728, %v4729, %v4725
    %v4731 = vadd.s32 %v4726, %v4730
    %v4732 = vadd.s32 %v4731, 536870912
    %v4733 = vshrl.u32 %v4732, 30
    %v4734 = vshll.u32 %v4733, 30
    %v4735 = vsub.s32 %v4731, %v4734
    %vm4736 = vcmp.lt.s32.totalorder %v4735, 0
    %v4737 = vsub.s32 0, %v4735
    %v4738 = vsel %vm4736, %v4737, %v4735
    %v4739 = vclz %v4738
    %v4740 = vsub.s32 %v4739, 2
    %vm4741 = vcmp.gt.s32.totalorder 0, %v4740
    %v4742 = vsel %vm4741, 0, %v4740
    %v4743 = vsub.s32 32, %v4742
    %v4744 = vshll.u32 %v4735, %v4742
    %v4745 = vshrl.u32 %v4727, %v4743
    %v4746 = vor.u32 %v4744, %v4745
    %v4747 = vsub.s32 4294967266, %v4742
    %v4748 = vadd.s32 %v4747, 127
    %v4749 = vshll.u32 %v4748, 23
    %v4750 = vor.u32 4788187, %v4749
    %v4751 = vand.u32 2147483647, %v4750
    %v4753 = vcvt.s32.f32 %v4746
    %v4754 = vmul.f32 %v4753, %v4751
    %v4755 = vxor.u32 %v4754, 2147483648
    %v4756 = vsel %vm4673, %v4755, %v4754
    %v4757 = vsub.s32 4, %v4733
    %v4758 = vsel %vm4673, %v4757, %v4733
    %v4759 = vsel %vm4672, %v4670, %v4756
    %v4760 = vsel %vm4672, 0, %v4758
    %v4761 = vcosq.f32.pop %v4759
    %v4762 = vsinq.f32.pop %v4759
    %vm4763 = vweird.f32 %v4670
    %v4764 = vadd.s32 %v4760, 3
    %v4765 = vand.u32 %v4764, 3
    %vm4766 = vcmp.lt.s32.totalorder %v4765, 2
    %vm4767 = vcmp.eq.s32.totalorder %v4765, 0
    %v4768 = vxor.u32 %v4762, 2147483648
    %v4769 = vsel %vm4767, %v4761, %v4768
    %vm4770 = vcmp.eq.s32.totalorder %v4765, 2
    %v4771 = vxor.u32 %v4761, 2147483648
    %v4772 = vsel %vm4770, %v4771, %v4762
    %v4773 = vsel %vm4766, %v4769, %v4772
    %v4774 = vsel %vm4763, nan, %v4773
    %v4775 = vstv %s4667
    %v4776 = vmul.f32 %v4775, %v4774
    %v4777 = vadd.f32 %v4666, %v4776
    %s4778 = sld [smem:[#allocation2 + $0x195]]
    %s4779 = sld [smem:[#allocation2 + $0x95]]
    %v4780 = vstv %s4779
    %v4781 = vmul.f32 %v4780, %v23
    %v4782 = vand.u32 2147483647, %v4781
    %vm4783 = vcmp.le.f32.partialorder %v4782, 0.7853982
    %vm4784 = vcmp.lt.s32.totalorder %v4781, 0
    %v4785 = vand.u32 %v4781, 2139095040
    %v4786 = vshrl.u32 %v4785, 23
    %v4787 = vsub.s32 %v4786, 127
    %v4788 = vand.u32 2147483647, %v4781
    %v4789 = vand.u32 %v4788, 8388607
    %v4790 = vor.u32 %v4789, 8388608
    %v4791 = vsub.s32 0, %v4790
    %v4792 = vadd.s32 %v4787, 1
    %vm4793 = vcmp.gt.s32.totalorder %v4792, 0
    %v4794 = vsel %vm4793, %v4792, 0
    %v4795 = vshrl.u32 %v4794, 5
    %v4796 = vand.u32 %v4794, 31
    %v4797 = vsub.s32 32, %v4796
    %v4798 = vshrl.u32 683565275, %v4797
    %v4799 = vshll.u32 683565275, %v4796
    %v4800 = vshrl.u32 2475754826, %v4797
    %v4801 = vor.u32 %v4799, %v4800
    %v4802 = vshll.u32 2475754826, %v4796
    %v4803 = vshrl.u32 2131351028, %v4797
    %v4804 = vor.u32 %v4802, %v4803
    %v4805 = vshll.u32 2131351028, %v4796
    %v4806 = vshrl.u32 2102212464, %v4797
    %v4807 = vor.u32 %v4805, %v4806
    %v4808 = vshll.u32 2102212464, %v4796
    %v4809 = vshrl.u32 920167782, %v4797
    %v4810 = vor.u32 %v4808, %v4809
    %v4811 = vshll.u32 920167782, %v4796
    %v4812 = vshrl.u32 1326507024, %v4797
    %v4813 = vor.u32 %v4811, %v4812
    %vm4814 = vcmp.lt.s32.totalorder %v4795, 1
    %vm4815 = vcmp.lt.s32.totalorder %v4795, 2
    %vm4816 = vcmp.lt.s32.totalorder %v4795, 3
    %vm4817 = vcmp.lt.s32.totalorder %v4795, 4
    %v4818 = vsel %vm4814, %v4798, %v4801
    %v4819 = vsel %vm4817, %v4807, 2102212464
    %v4820 = vsel %vm4816, %v4804, %v4819
    %v4821 = vsel %vm4815, %v4818, %v4820
    %v4822 = vsel %vm4814, %v4801, %v4804
    %v4823 = vsel %vm4817, %v4810, 920167782
    %v4824 = vsel %vm4816, %v4807, %v4823
    %v4825 = vsel %vm4815, %v4822, %v4824
    %v4826 = vsel %vm4814, %v4804, %v4807
    %v4827 = vsel %vm4817, %v4813, 1326507024
    %v4828 = vsel %vm4816, %v4810, %v4827
    %v4829 = vsel %vm4815, %v4826, %v4828
    %v4830 = vshll.u32 %v4790, 8
    %v4831 = vmul.u32.u64.compose %v4830, %v4829
    %v4832 = vextract.low.u32 %v4831
    %v4833 = vextract.high.u32 %v4831
    %v4834 = vmul.u32.u64.compose %v4830, %v4825
    %v4835 = vextract.low.u32 %v4834
    %v4836 = vextract.high.u32 %v4834
    %v4837 = vmul.u32 %v4830, %v4821
    %v4838 = vadd.s32 %v4833, %v4835
    %vm4839 = vc.u32 %v4833, %v4835
    %v4840 = vadd.s32 %v4836, 1
    %v4841 = vsel %vm4839, %v4840, %v4836
    %v4842 = vadd.s32 %v4837, %v4841
    %v4843 = vadd.s32 %v4842, 536870912
    %v4844 = vshrl.u32 %v4843, 30
    %v4845 = vshll.u32 %v4844, 30
    %v4846 = vsub.s32 %v4842, %v4845
    %vm4847 = vcmp.lt.s32.totalorder %v4846, 0
    %v4848 = vsub.s32 0, %v4846
    %v4849 = vsel %vm4847, %v4848, %v4846
    %v4850 = vclz %v4849
    %v4851 = vsub.s32 %v4850, 2
    %vm4852 = vcmp.gt.s32.totalorder 0, %v4851
    %v4853 = vsel %vm4852, 0, %v4851
    %v4854 = vsub.s32 32, %v4853
    %v4855 = vshll.u32 %v4846, %v4853
    %v4856 = vshrl.u32 %v4838, %v4854
    %v4857 = vor.u32 %v4855, %v4856
    %v4858 = vsub.s32 4294967266, %v4853
    %v4859 = vadd.s32 %v4858, 127
    %v4860 = vshll.u32 %v4859, 23
    %v4861 = vor.u32 4788187, %v4860
    %v4862 = vand.u32 2147483647, %v4861
    %v4864 = vcvt.s32.f32 %v4857
    %v4865 = vmul.f32 %v4864, %v4862
    %v4866 = vxor.u32 %v4865, 2147483648
    %v4867 = vsel %vm4784, %v4866, %v4865
    %v4868 = vsub.s32 4, %v4844
    %v4869 = vsel %vm4784, %v4868, %v4844
    %v4870 = vsel %vm4783, %v4781, %v4867
    %v4871 = vsel %vm4783, 0, %v4869
    %v4872 = vcosq.f32.pop %v4870
    %v4873 = vsinq.f32.pop %v4870
    %vm4874 = vweird.f32 %v4781
    %v4875 = vand.u32 %v4871, 3
    %vm4876 = vcmp.lt.s32.totalorder %v4875, 2
    %vm4877 = vcmp.eq.s32.totalorder %v4875, 0
    %v4878 = vxor.u32 %v4873, 2147483648
    %v4879 = vsel %vm4877, %v4872, %v4878
    %vm4880 = vcmp.eq.s32.totalorder %v4875, 2
    %v4881 = vxor.u32 %v4872, 2147483648
    %v4882 = vsel %vm4880, %v4881, %v4873
    %v4883 = vsel %vm4876, %v4879, %v4882
    %v4884 = vsel %vm4874, nan, %v4883
    %v4885 = vstv %s4778
    %v4886 = vmul.f32 %v4885, %v4884
    %v4887 = vadd.f32 %v4777, %v4886
    %s4888 = sld [smem:[#allocation2 + $0x116]]
    %s4889 = sld [smem:[#allocation2 + $0x16]]
    %v4890 = vstv %s4889
    %v4891 = vmul.f32 %v4890, %v23
    %v4892 = vand.u32 2147483647, %v4891
    %vm4893 = vcmp.le.f32.partialorder %v4892, 0.7853982
    %vm4894 = vcmp.lt.s32.totalorder %v4891, 0
    %v4895 = vand.u32 %v4891, 2139095040
    %v4896 = vshrl.u32 %v4895, 23
    %v4897 = vsub.s32 %v4896, 127
    %v4898 = vand.u32 2147483647, %v4891
    %v4899 = vand.u32 %v4898, 8388607
    %v4900 = vor.u32 %v4899, 8388608
    %v4901 = vsub.s32 0, %v4900
    %v4902 = vadd.s32 %v4897, 1
    %vm4903 = vcmp.gt.s32.totalorder %v4902, 0
    %v4904 = vsel %vm4903, %v4902, 0
    %v4905 = vshrl.u32 %v4904, 5
    %v4906 = vand.u32 %v4904, 31
    %v4907 = vsub.s32 32, %v4906
    %v4908 = vshrl.u32 683565275, %v4907
    %v4909 = vshll.u32 683565275, %v4906
    %v4910 = vshrl.u32 2475754826, %v4907
    %v4911 = vor.u32 %v4909, %v4910
    %v4912 = vshll.u32 2475754826, %v4906
    %v4913 = vshrl.u32 2131351028, %v4907
    %v4914 = vor.u32 %v4912, %v4913
    %v4915 = vshll.u32 2131351028, %v4906
    %v4916 = vshrl.u32 2102212464, %v4907
    %v4917 = vor.u32 %v4915, %v4916
    %v4918 = vshll.u32 2102212464, %v4906
    %v4919 = vshrl.u32 920167782, %v4907
    %v4920 = vor.u32 %v4918, %v4919
    %v4921 = vshll.u32 920167782, %v4906
    %v4922 = vshrl.u32 1326507024, %v4907
    %v4923 = vor.u32 %v4921, %v4922
    %vm4924 = vcmp.lt.s32.totalorder %v4905, 1
    %vm4925 = vcmp.lt.s32.totalorder %v4905, 2
    %vm4926 = vcmp.lt.s32.totalorder %v4905, 3
    %vm4927 = vcmp.lt.s32.totalorder %v4905, 4
    %v4928 = vsel %vm4924, %v4908, %v4911
    %v4929 = vsel %vm4927, %v4917, 2102212464
    %v4930 = vsel %vm4926, %v4914, %v4929
    %v4931 = vsel %vm4925, %v4928, %v4930
    %v4932 = vsel %vm4924, %v4911, %v4914
    %v4933 = vsel %vm4927, %v4920, 920167782
    %v4934 = vsel %vm4926, %v4917, %v4933
    %v4935 = vsel %vm4925, %v4932, %v4934
    %v4936 = vsel %vm4924, %v4914, %v4917
    %v4937 = vsel %vm4927, %v4923, 1326507024
    %v4938 = vsel %vm4926, %v4920, %v4937
    %v4939 = vsel %vm4925, %v4936, %v4938
    %v4940 = vshll.u32 %v4900, 8
    %v4941 = vmul.u32.u64.compose %v4940, %v4939
    %v4942 = vextract.low.u32 %v4941
    %v4943 = vextract.high.u32 %v4941
    %v4944 = vmul.u32.u64.compose %v4940, %v4935
    %v4945 = vextract.low.u32 %v4944
    %v4946 = vextract.high.u32 %v4944
    %v4947 = vmul.u32 %v4940, %v4931
    %v4948 = vadd.s32 %v4943, %v4945
    %vm4949 = vc.u32 %v4943, %v4945
    %v4950 = vadd.s32 %v4946, 1
    %v4951 = vsel %vm4949, %v4950, %v4946
    %v4952 = vadd.s32 %v4947, %v4951
    %v4953 = vadd.s32 %v4952, 536870912
    %v4954 = vshrl.u32 %v4953, 30
    %v4955 = vshll.u32 %v4954, 30
    %v4956 = vsub.s32 %v4952, %v4955
    %vm4957 = vcmp.lt.s32.totalorder %v4956, 0
    %v4958 = vsub.s32 0, %v4956
    %v4959 = vsel %vm4957, %v4958, %v4956
    %v4960 = vclz %v4959
    %v4961 = vsub.s32 %v4960, 2
    %vm4962 = vcmp.gt.s32.totalorder 0, %v4961
    %v4963 = vsel %vm4962, 0, %v4961
    %v4964 = vsub.s32 32, %v4963
    %v4965 = vshll.u32 %v4956, %v4963
    %v4966 = vshrl.u32 %v4948, %v4964
    %v4967 = vor.u32 %v4965, %v4966
    %v4968 = vsub.s32 4294967266, %v4963
    %v4969 = vadd.s32 %v4968, 127
    %v4970 = vshll.u32 %v4969, 23
    %v4971 = vor.u32 4788187, %v4970
    %v4972 = vand.u32 2147483647, %v4971
    %v4974 = vcvt.s32.f32 %v4967
    %v4975 = vmul.f32 %v4974, %v4972
    %v4976 = vxor.u32 %v4975, 2147483648
    %v4977 = vsel %vm4894, %v4976, %v4975
    %v4978 = vsub.s32 4, %v4954
    %v4979 = vsel %vm4894, %v4978, %v4954
    %v4980 = vsel %vm4893, %v4891, %v4977
    %v4981 = vsel %vm4893, 0, %v4979
    %v4982 = vcosq.f32.pop %v4980
    %v4983 = vsinq.f32.pop %v4980
    %vm4984 = vweird.f32 %v4891
    %v4985 = vadd.s32 %v4981, 3
    %v4986 = vand.u32 %v4985, 3
    %vm4987 = vcmp.lt.s32.totalorder %v4986, 2
    %vm4988 = vcmp.eq.s32.totalorder %v4986, 0
    %v4989 = vxor.u32 %v4983, 2147483648
    %v4990 = vsel %vm4988, %v4982, %v4989
    %vm4991 = vcmp.eq.s32.totalorder %v4986, 2
    %v4992 = vxor.u32 %v4982, 2147483648
    %v4993 = vsel %vm4991, %v4992, %v4983
    %v4994 = vsel %vm4987, %v4990, %v4993
    %v4995 = vsel %vm4984, nan, %v4994
    %v4996 = vstv %s4888
    %v4997 = vmul.f32 %v4996, %v4995
    %v4998 = vadd.f32 %v4887, %v4997
    %s4999 = sld [smem:[#allocation2 + $0x196]]
    %s5000 = sld [smem:[#allocation2 + $0x96]]
    %v5001 = vstv %s5000
    %v5002 = vmul.f32 %v5001, %v23
    %v5003 = vand.u32 2147483647, %v5002
    %vm5004 = vcmp.le.f32.partialorder %v5003, 0.7853982
    %vm5005 = vcmp.lt.s32.totalorder %v5002, 0
    %v5006 = vand.u32 %v5002, 2139095040
    %v5007 = vshrl.u32 %v5006, 23
    %v5008 = vsub.s32 %v5007, 127
    %v5009 = vand.u32 2147483647, %v5002
    %v5010 = vand.u32 %v5009, 8388607
    %v5011 = vor.u32 %v5010, 8388608
    %v5012 = vsub.s32 0, %v5011
    %v5013 = vadd.s32 %v5008, 1
    %vm5014 = vcmp.gt.s32.totalorder %v5013, 0
    %v5015 = vsel %vm5014, %v5013, 0
    %v5016 = vshrl.u32 %v5015, 5
    %v5017 = vand.u32 %v5015, 31
    %v5018 = vsub.s32 32, %v5017
    %v5019 = vshrl.u32 683565275, %v5018
    %v5020 = vshll.u32 683565275, %v5017
    %v5021 = vshrl.u32 2475754826, %v5018
    %v5022 = vor.u32 %v5020, %v5021
    %v5023 = vshll.u32 2475754826, %v5017
    %v5024 = vshrl.u32 2131351028, %v5018
    %v5025 = vor.u32 %v5023, %v5024
    %v5026 = vshll.u32 2131351028, %v5017
    %v5027 = vshrl.u32 2102212464, %v5018
    %v5028 = vor.u32 %v5026, %v5027
    %v5029 = vshll.u32 2102212464, %v5017
    %v5030 = vshrl.u32 920167782, %v5018
    %v5031 = vor.u32 %v5029, %v5030
    %v5032 = vshll.u32 920167782, %v5017
    %v5033 = vshrl.u32 1326507024, %v5018
    %v5034 = vor.u32 %v5032, %v5033
    %vm5035 = vcmp.lt.s32.totalorder %v5016, 1
    %vm5036 = vcmp.lt.s32.totalorder %v5016, 2
    %vm5037 = vcmp.lt.s32.totalorder %v5016, 3
    %vm5038 = vcmp.lt.s32.totalorder %v5016, 4
    %v5039 = vsel %vm5035, %v5019, %v5022
    %v5040 = vsel %vm5038, %v5028, 2102212464
    %v5041 = vsel %vm5037, %v5025, %v5040
    %v5042 = vsel %vm5036, %v5039, %v5041
    %v5043 = vsel %vm5035, %v5022, %v5025
    %v5044 = vsel %vm5038, %v5031, 920167782
    %v5045 = vsel %vm5037, %v5028, %v5044
    %v5046 = vsel %vm5036, %v5043, %v5045
    %v5047 = vsel %vm5035, %v5025, %v5028
    %v5048 = vsel %vm5038, %v5034, 1326507024
    %v5049 = vsel %vm5037, %v5031, %v5048
    %v5050 = vsel %vm5036, %v5047, %v5049
    %v5051 = vshll.u32 %v5011, 8
    %v5052 = vmul.u32.u64.compose %v5051, %v5050
    %v5053 = vextract.low.u32 %v5052
    %v5054 = vextract.high.u32 %v5052
    %v5055 = vmul.u32.u64.compose %v5051, %v5046
    %v5056 = vextract.low.u32 %v5055
    %v5057 = vextract.high.u32 %v5055
    %v5058 = vmul.u32 %v5051, %v5042
    %v5059 = vadd.s32 %v5054, %v5056
    %vm5060 = vc.u32 %v5054, %v5056
    %v5061 = vadd.s32 %v5057, 1
    %v5062 = vsel %vm5060, %v5061, %v5057
    %v5063 = vadd.s32 %v5058, %v5062
    %v5064 = vadd.s32 %v5063, 536870912
    %v5065 = vshrl.u32 %v5064, 30
    %v5066 = vshll.u32 %v5065, 30
    %v5067 = vsub.s32 %v5063, %v5066
    %vm5068 = vcmp.lt.s32.totalorder %v5067, 0
    %v5069 = vsub.s32 0, %v5067
    %v5070 = vsel %vm5068, %v5069, %v5067
    %v5071 = vclz %v5070
    %v5072 = vsub.s32 %v5071, 2
    %vm5073 = vcmp.gt.s32.totalorder 0, %v5072
    %v5074 = vsel %vm5073, 0, %v5072
    %v5075 = vsub.s32 32, %v5074
    %v5076 = vshll.u32 %v5067, %v5074
    %v5077 = vshrl.u32 %v5059, %v5075
    %v5078 = vor.u32 %v5076, %v5077
    %v5079 = vsub.s32 4294967266, %v5074
    %v5080 = vadd.s32 %v5079, 127
    %v5081 = vshll.u32 %v5080, 23
    %v5082 = vor.u32 4788187, %v5081
    %v5083 = vand.u32 2147483647, %v5082
    %v5085 = vcvt.s32.f32 %v5078
    %v5086 = vmul.f32 %v5085, %v5083
    %v5087 = vxor.u32 %v5086, 2147483648
    %v5088 = vsel %vm5005, %v5087, %v5086
    %v5089 = vsub.s32 4, %v5065
    %v5090 = vsel %vm5005, %v5089, %v5065
    %v5091 = vsel %vm5004, %v5002, %v5088
    %v5092 = vsel %vm5004, 0, %v5090
    %v5093 = vcosq.f32.pop %v5091
    %v5094 = vsinq.f32.pop %v5091
    %vm5095 = vweird.f32 %v5002
    %v5096 = vand.u32 %v5092, 3
    %vm5097 = vcmp.lt.s32.totalorder %v5096, 2
    %vm5098 = vcmp.eq.s32.totalorder %v5096, 0
    %v5099 = vxor.u32 %v5094, 2147483648
    %v5100 = vsel %vm5098, %v5093, %v5099
    %vm5101 = vcmp.eq.s32.totalorder %v5096, 2
    %v5102 = vxor.u32 %v5093, 2147483648
    %v5103 = vsel %vm5101, %v5102, %v5094
    %v5104 = vsel %vm5097, %v5100, %v5103
    %v5105 = vsel %vm5095, nan, %v5104
    %v5106 = vstv %s4999
    %v5107 = vmul.f32 %v5106, %v5105
    %v5108 = vadd.f32 %v4998, %v5107
    %s5109 = sld [smem:[#allocation2 + $0x117]]
    %s5110 = sld [smem:[#allocation2 + $0x17]]
    %v5111 = vstv %s5110
    %v5112 = vmul.f32 %v5111, %v23
    %v5113 = vand.u32 2147483647, %v5112
    %vm5114 = vcmp.le.f32.partialorder %v5113, 0.7853982
    %vm5115 = vcmp.lt.s32.totalorder %v5112, 0
    %v5116 = vand.u32 %v5112, 2139095040
    %v5117 = vshrl.u32 %v5116, 23
    %v5118 = vsub.s32 %v5117, 127
    %v5119 = vand.u32 2147483647, %v5112
    %v5120 = vand.u32 %v5119, 8388607
    %v5121 = vor.u32 %v5120, 8388608
    %v5122 = vsub.s32 0, %v5121
    %v5123 = vadd.s32 %v5118, 1
    %vm5124 = vcmp.gt.s32.totalorder %v5123, 0
    %v5125 = vsel %vm5124, %v5123, 0
    %v5126 = vshrl.u32 %v5125, 5
    %v5127 = vand.u32 %v5125, 31
    %v5128 = vsub.s32 32, %v5127
    %v5129 = vshrl.u32 683565275, %v5128
    %v5130 = vshll.u32 683565275, %v5127
    %v5131 = vshrl.u32 2475754826, %v5128
    %v5132 = vor.u32 %v5130, %v5131
    %v5133 = vshll.u32 2475754826, %v5127
    %v5134 = vshrl.u32 2131351028, %v5128
    %v5135 = vor.u32 %v5133, %v5134
    %v5136 = vshll.u32 2131351028, %v5127
    %v5137 = vshrl.u32 2102212464, %v5128
    %v5138 = vor.u32 %v5136, %v5137
    %v5139 = vshll.u32 2102212464, %v5127
    %v5140 = vshrl.u32 920167782, %v5128
    %v5141 = vor.u32 %v5139, %v5140
    %v5142 = vshll.u32 920167782, %v5127
    %v5143 = vshrl.u32 1326507024, %v5128
    %v5144 = vor.u32 %v5142, %v5143
    %vm5145 = vcmp.lt.s32.totalorder %v5126, 1
    %vm5146 = vcmp.lt.s32.totalorder %v5126, 2
    %vm5147 = vcmp.lt.s32.totalorder %v5126, 3
    %vm5148 = vcmp.lt.s32.totalorder %v5126, 4
    %v5149 = vsel %vm5145, %v5129, %v5132
    %v5150 = vsel %vm5148, %v5138, 2102212464
    %v5151 = vsel %vm5147, %v5135, %v5150
    %v5152 = vsel %vm5146, %v5149, %v5151
    %v5153 = vsel %vm5145, %v5132, %v5135
    %v5154 = vsel %vm5148, %v5141, 920167782
    %v5155 = vsel %vm5147, %v5138, %v5154
    %v5156 = vsel %vm5146, %v5153, %v5155
    %v5157 = vsel %vm5145, %v5135, %v5138
    %v5158 = vsel %vm5148, %v5144, 1326507024
    %v5159 = vsel %vm5147, %v5141, %v5158
    %v5160 = vsel %vm5146, %v5157, %v5159
    %v5161 = vshll.u32 %v5121, 8
    %v5162 = vmul.u32.u64.compose %v5161, %v5160
    %v5163 = vextract.low.u32 %v5162
    %v5164 = vextract.high.u32 %v5162
    %v5165 = vmul.u32.u64.compose %v5161, %v5156
    %v5166 = vextract.low.u32 %v5165
    %v5167 = vextract.high.u32 %v5165
    %v5168 = vmul.u32 %v5161, %v5152
    %v5169 = vadd.s32 %v5164, %v5166
    %vm5170 = vc.u32 %v5164, %v5166
    %v5171 = vadd.s32 %v5167, 1
    %v5172 = vsel %vm5170, %v5171, %v5167
    %v5173 = vadd.s32 %v5168, %v5172
    %v5174 = vadd.s32 %v5173, 536870912
    %v5175 = vshrl.u32 %v5174, 30
    %v5176 = vshll.u32 %v5175, 30
    %v5177 = vsub.s32 %v5173, %v5176
    %vm5178 = vcmp.lt.s32.totalorder %v5177, 0
    %v5179 = vsub.s32 0, %v5177
    %v5180 = vsel %vm5178, %v5179, %v5177
    %v5181 = vclz %v5180
    %v5182 = vsub.s32 %v5181, 2
    %vm5183 = vcmp.gt.s32.totalorder 0, %v5182
    %v5184 = vsel %vm5183, 0, %v5182
    %v5185 = vsub.s32 32, %v5184
    %v5186 = vshll.u32 %v5177, %v5184
    %v5187 = vshrl.u32 %v5169, %v5185
    %v5188 = vor.u32 %v5186, %v5187
    %v5189 = vsub.s32 4294967266, %v5184
    %v5190 = vadd.s32 %v5189, 127
    %v5191 = vshll.u32 %v5190, 23
    %v5192 = vor.u32 4788187, %v5191
    %v5193 = vand.u32 2147483647, %v5192
    %v5195 = vcvt.s32.f32 %v5188
    %v5196 = vmul.f32 %v5195, %v5193
    %v5197 = vxor.u32 %v5196, 2147483648
    %v5198 = vsel %vm5115, %v5197, %v5196
    %v5199 = vsub.s32 4, %v5175
    %v5200 = vsel %vm5115, %v5199, %v5175
    %v5201 = vsel %vm5114, %v5112, %v5198
    %v5202 = vsel %vm5114, 0, %v5200
    %v5203 = vcosq.f32.pop %v5201
    %v5204 = vsinq.f32.pop %v5201
    %vm5205 = vweird.f32 %v5112
    %v5206 = vadd.s32 %v5202, 3
    %v5207 = vand.u32 %v5206, 3
    %vm5208 = vcmp.lt.s32.totalorder %v5207, 2
    %vm5209 = vcmp.eq.s32.totalorder %v5207, 0
    %v5210 = vxor.u32 %v5204, 2147483648
    %v5211 = vsel %vm5209, %v5203, %v5210
    %vm5212 = vcmp.eq.s32.totalorder %v5207, 2
    %v5213 = vxor.u32 %v5203, 2147483648
    %v5214 = vsel %vm5212, %v5213, %v5204
    %v5215 = vsel %vm5208, %v5211, %v5214
    %v5216 = vsel %vm5205, nan, %v5215
    %v5217 = vstv %s5109
    %v5218 = vmul.f32 %v5217, %v5216
    %v5219 = vadd.f32 %v5108, %v5218
    %s5220 = sld [smem:[#allocation2 + $0x197]]
    %s5221 = sld [smem:[#allocation2 + $0x97]]
    %v5222 = vstv %s5221
    %v5223 = vmul.f32 %v5222, %v23
    %v5224 = vand.u32 2147483647, %v5223
    %vm5225 = vcmp.le.f32.partialorder %v5224, 0.7853982
    %vm5226 = vcmp.lt.s32.totalorder %v5223, 0
    %v5227 = vand.u32 %v5223, 2139095040
    %v5228 = vshrl.u32 %v5227, 23
    %v5229 = vsub.s32 %v5228, 127
    %v5230 = vand.u32 2147483647, %v5223
    %v5231 = vand.u32 %v5230, 8388607
    %v5232 = vor.u32 %v5231, 8388608
    %v5233 = vsub.s32 0, %v5232
    %v5234 = vadd.s32 %v5229, 1
    %vm5235 = vcmp.gt.s32.totalorder %v5234, 0
    %v5236 = vsel %vm5235, %v5234, 0
    %v5237 = vshrl.u32 %v5236, 5
    %v5238 = vand.u32 %v5236, 31
    %v5239 = vsub.s32 32, %v5238
    %v5240 = vshrl.u32 683565275, %v5239
    %v5241 = vshll.u32 683565275, %v5238
    %v5242 = vshrl.u32 2475754826, %v5239
    %v5243 = vor.u32 %v5241, %v5242
    %v5244 = vshll.u32 2475754826, %v5238
    %v5245 = vshrl.u32 2131351028, %v5239
    %v5246 = vor.u32 %v5244, %v5245
    %v5247 = vshll.u32 2131351028, %v5238
    %v5248 = vshrl.u32 2102212464, %v5239
    %v5249 = vor.u32 %v5247, %v5248
    %v5250 = vshll.u32 2102212464, %v5238
    %v5251 = vshrl.u32 920167782, %v5239
    %v5252 = vor.u32 %v5250, %v5251
    %v5253 = vshll.u32 920167782, %v5238
    %v5254 = vshrl.u32 1326507024, %v5239
    %v5255 = vor.u32 %v5253, %v5254
    %vm5256 = vcmp.lt.s32.totalorder %v5237, 1
    %vm5257 = vcmp.lt.s32.totalorder %v5237, 2
    %vm5258 = vcmp.lt.s32.totalorder %v5237, 3
    %vm5259 = vcmp.lt.s32.totalorder %v5237, 4
    %v5260 = vsel %vm5256, %v5240, %v5243
    %v5261 = vsel %vm5259, %v5249, 2102212464
    %v5262 = vsel %vm5258, %v5246, %v5261
    %v5263 = vsel %vm5257, %v5260, %v5262
    %v5264 = vsel %vm5256, %v5243, %v5246
    %v5265 = vsel %vm5259, %v5252, 920167782
    %v5266 = vsel %vm5258, %v5249, %v5265
    %v5267 = vsel %vm5257, %v5264, %v5266
    %v5268 = vsel %vm5256, %v5246, %v5249
    %v5269 = vsel %vm5259, %v5255, 1326507024
    %v5270 = vsel %vm5258, %v5252, %v5269
    %v5271 = vsel %vm5257, %v5268, %v5270
    %v5272 = vshll.u32 %v5232, 8
    %v5273 = vmul.u32.u64.compose %v5272, %v5271
    %v5274 = vextract.low.u32 %v5273
    %v5275 = vextract.high.u32 %v5273
    %v5276 = vmul.u32.u64.compose %v5272, %v5267
    %v5277 = vextract.low.u32 %v5276
    %v5278 = vextract.high.u32 %v5276
    %v5279 = vmul.u32 %v5272, %v5263
    %v5280 = vadd.s32 %v5275, %v5277
    %vm5281 = vc.u32 %v5275, %v5277
    %v5282 = vadd.s32 %v5278, 1
    %v5283 = vsel %vm5281, %v5282, %v5278
    %v5284 = vadd.s32 %v5279, %v5283
    %v5285 = vadd.s32 %v5284, 536870912
    %v5286 = vshrl.u32 %v5285, 30
    %v5287 = vshll.u32 %v5286, 30
    %v5288 = vsub.s32 %v5284, %v5287
    %vm5289 = vcmp.lt.s32.totalorder %v5288, 0
    %v5290 = vsub.s32 0, %v5288
    %v5291 = vsel %vm5289, %v5290, %v5288
    %v5292 = vclz %v5291
    %v5293 = vsub.s32 %v5292, 2
    %vm5294 = vcmp.gt.s32.totalorder 0, %v5293
    %v5295 = vsel %vm5294, 0, %v5293
    %v5296 = vsub.s32 32, %v5295
    %v5297 = vshll.u32 %v5288, %v5295
    %v5298 = vshrl.u32 %v5280, %v5296
    %v5299 = vor.u32 %v5297, %v5298
    %v5300 = vsub.s32 4294967266, %v5295
    %v5301 = vadd.s32 %v5300, 127
    %v5302 = vshll.u32 %v5301, 23
    %v5303 = vor.u32 4788187, %v5302
    %v5304 = vand.u32 2147483647, %v5303
    %v5306 = vcvt.s32.f32 %v5299
    %v5307 = vmul.f32 %v5306, %v5304
    %v5308 = vxor.u32 %v5307, 2147483648
    %v5309 = vsel %vm5226, %v5308, %v5307
    %v5310 = vsub.s32 4, %v5286
    %v5311 = vsel %vm5226, %v5310, %v5286
    %v5312 = vsel %vm5225, %v5223, %v5309
    %v5313 = vsel %vm5225, 0, %v5311
    %v5314 = vcosq.f32.pop %v5312
    %v5315 = vsinq.f32.pop %v5312
    %vm5316 = vweird.f32 %v5223
    %v5317 = vand.u32 %v5313, 3
    %vm5318 = vcmp.lt.s32.totalorder %v5317, 2
    %vm5319 = vcmp.eq.s32.totalorder %v5317, 0
    %v5320 = vxor.u32 %v5315, 2147483648
    %v5321 = vsel %vm5319, %v5314, %v5320
    %vm5322 = vcmp.eq.s32.totalorder %v5317, 2
    %v5323 = vxor.u32 %v5314, 2147483648
    %v5324 = vsel %vm5322, %v5323, %v5315
    %v5325 = vsel %vm5318, %v5321, %v5324
    %v5326 = vsel %vm5316, nan, %v5325
    %v5327 = vstv %s5220
    %v5328 = vmul.f32 %v5327, %v5326
    %v5329 = vadd.f32 %v5219, %v5328
    %s5330 = sld [smem:[#allocation2 + $0x118]]
    %s5331 = sld [smem:[#allocation2 + $0x18]]
    %v5332 = vstv %s5331
    %v5333 = vmul.f32 %v5332, %v23
    %v5334 = vand.u32 2147483647, %v5333
    %vm5335 = vcmp.le.f32.partialorder %v5334, 0.7853982
    %vm5336 = vcmp.lt.s32.totalorder %v5333, 0
    %v5337 = vand.u32 %v5333, 2139095040
    %v5338 = vshrl.u32 %v5337, 23
    %v5339 = vsub.s32 %v5338, 127
    %v5340 = vand.u32 2147483647, %v5333
    %v5341 = vand.u32 %v5340, 8388607
    %v5342 = vor.u32 %v5341, 8388608
    %v5343 = vsub.s32 0, %v5342
    %v5344 = vadd.s32 %v5339, 1
    %vm5345 = vcmp.gt.s32.totalorder %v5344, 0
    %v5346 = vsel %vm5345, %v5344, 0
    %v5347 = vshrl.u32 %v5346, 5
    %v5348 = vand.u32 %v5346, 31
    %v5349 = vsub.s32 32, %v5348
    %v5350 = vshrl.u32 683565275, %v5349
    %v5351 = vshll.u32 683565275, %v5348
    %v5352 = vshrl.u32 2475754826, %v5349
    %v5353 = vor.u32 %v5351, %v5352
    %v5354 = vshll.u32 2475754826, %v5348
    %v5355 = vshrl.u32 2131351028, %v5349
    %v5356 = vor.u32 %v5354, %v5355
    %v5357 = vshll.u32 2131351028, %v5348
    %v5358 = vshrl.u32 2102212464, %v5349
    %v5359 = vor.u32 %v5357, %v5358
    %v5360 = vshll.u32 2102212464, %v5348
    %v5361 = vshrl.u32 920167782, %v5349
    %v5362 = vor.u32 %v5360, %v5361
    %v5363 = vshll.u32 920167782, %v5348
    %v5364 = vshrl.u32 1326507024, %v5349
    %v5365 = vor.u32 %v5363, %v5364
    %vm5366 = vcmp.lt.s32.totalorder %v5347, 1
    %vm5367 = vcmp.lt.s32.totalorder %v5347, 2
    %vm5368 = vcmp.lt.s32.totalorder %v5347, 3
    %vm5369 = vcmp.lt.s32.totalorder %v5347, 4
    %v5370 = vsel %vm5366, %v5350, %v5353
    %v5371 = vsel %vm5369, %v5359, 2102212464
    %v5372 = vsel %vm5368, %v5356, %v5371
    %v5373 = vsel %vm5367, %v5370, %v5372
    %v5374 = vsel %vm5366, %v5353, %v5356
    %v5375 = vsel %vm5369, %v5362, 920167782
    %v5376 = vsel %vm5368, %v5359, %v5375
    %v5377 = vsel %vm5367, %v5374, %v5376
    %v5378 = vsel %vm5366, %v5356, %v5359
    %v5379 = vsel %vm5369, %v5365, 1326507024
    %v5380 = vsel %vm5368, %v5362, %v5379
    %v5381 = vsel %vm5367, %v5378, %v5380
    %v5382 = vshll.u32 %v5342, 8
    %v5383 = vmul.u32.u64.compose %v5382, %v5381
    %v5384 = vextract.low.u32 %v5383
    %v5385 = vextract.high.u32 %v5383
    %v5386 = vmul.u32.u64.compose %v5382, %v5377
    %v5387 = vextract.low.u32 %v5386
    %v5388 = vextract.high.u32 %v5386
    %v5389 = vmul.u32 %v5382, %v5373
    %v5390 = vadd.s32 %v5385, %v5387
    %vm5391 = vc.u32 %v5385, %v5387
    %v5392 = vadd.s32 %v5388, 1
    %v5393 = vsel %vm5391, %v5392, %v5388
    %v5394 = vadd.s32 %v5389, %v5393
    %v5395 = vadd.s32 %v5394, 536870912
    %v5396 = vshrl.u32 %v5395, 30
    %v5397 = vshll.u32 %v5396, 30
    %v5398 = vsub.s32 %v5394, %v5397
    %vm5399 = vcmp.lt.s32.totalorder %v5398, 0
    %v5400 = vsub.s32 0, %v5398
    %v5401 = vsel %vm5399, %v5400, %v5398
    %v5402 = vclz %v5401
    %v5403 = vsub.s32 %v5402, 2
    %vm5404 = vcmp.gt.s32.totalorder 0, %v5403
    %v5405 = vsel %vm5404, 0, %v5403
    %v5406 = vsub.s32 32, %v5405
    %v5407 = vshll.u32 %v5398, %v5405
    %v5408 = vshrl.u32 %v5390, %v5406
    %v5409 = vor.u32 %v5407, %v5408
    %v5410 = vsub.s32 4294967266, %v5405
    %v5411 = vadd.s32 %v5410, 127
    %v5412 = vshll.u32 %v5411, 23
    %v5413 = vor.u32 4788187, %v5412
    %v5414 = vand.u32 2147483647, %v5413
    %v5416 = vcvt.s32.f32 %v5409
    %v5417 = vmul.f32 %v5416, %v5414
    %v5418 = vxor.u32 %v5417, 2147483648
    %v5419 = vsel %vm5336, %v5418, %v5417
    %v5420 = vsub.s32 4, %v5396
    %v5421 = vsel %vm5336, %v5420, %v5396
    %v5422 = vsel %vm5335, %v5333, %v5419
    %v5423 = vsel %vm5335, 0, %v5421
    %v5424 = vcosq.f32.pop %v5422
    %v5425 = vsinq.f32.pop %v5422
    %vm5426 = vweird.f32 %v5333
    %v5427 = vadd.s32 %v5423, 3
    %v5428 = vand.u32 %v5427, 3
    %vm5429 = vcmp.lt.s32.totalorder %v5428, 2
    %vm5430 = vcmp.eq.s32.totalorder %v5428, 0
    %v5431 = vxor.u32 %v5425, 2147483648
    %v5432 = vsel %vm5430, %v5424, %v5431
    %vm5433 = vcmp.eq.s32.totalorder %v5428, 2
    %v5434 = vxor.u32 %v5424, 2147483648
    %v5435 = vsel %vm5433, %v5434, %v5425
    %v5436 = vsel %vm5429, %v5432, %v5435
    %v5437 = vsel %vm5426, nan, %v5436
    %v5438 = vstv %s5330
    %v5439 = vmul.f32 %v5438, %v5437
    %v5440 = vadd.f32 %v5329, %v5439
    %s5441 = sld [smem:[#allocation2 + $0x198]]
    %s5442 = sld [smem:[#allocation2 + $0x98]]
    %v5443 = vstv %s5442
    %v5444 = vmul.f32 %v5443, %v23
    %v5445 = vand.u32 2147483647, %v5444
    %vm5446 = vcmp.le.f32.partialorder %v5445, 0.7853982
    %vm5447 = vcmp.lt.s32.totalorder %v5444, 0
    %v5448 = vand.u32 %v5444, 2139095040
    %v5449 = vshrl.u32 %v5448, 23
    %v5450 = vsub.s32 %v5449, 127
    %v5451 = vand.u32 2147483647, %v5444
    %v5452 = vand.u32 %v5451, 8388607
    %v5453 = vor.u32 %v5452, 8388608
    %v5454 = vsub.s32 0, %v5453
    %v5455 = vadd.s32 %v5450, 1
    %vm5456 = vcmp.gt.s32.totalorder %v5455, 0
    %v5457 = vsel %vm5456, %v5455, 0
    %v5458 = vshrl.u32 %v5457, 5
    %v5459 = vand.u32 %v5457, 31
    %v5460 = vsub.s32 32, %v5459
    %v5461 = vshrl.u32 683565275, %v5460
    %v5462 = vshll.u32 683565275, %v5459
    %v5463 = vshrl.u32 2475754826, %v5460
    %v5464 = vor.u32 %v5462, %v5463
    %v5465 = vshll.u32 2475754826, %v5459
    %v5466 = vshrl.u32 2131351028, %v5460
    %v5467 = vor.u32 %v5465, %v5466
    %v5468 = vshll.u32 2131351028, %v5459
    %v5469 = vshrl.u32 2102212464, %v5460
    %v5470 = vor.u32 %v5468, %v5469
    %v5471 = vshll.u32 2102212464, %v5459
    %v5472 = vshrl.u32 920167782, %v5460
    %v5473 = vor.u32 %v5471, %v5472
    %v5474 = vshll.u32 920167782, %v5459
    %v5475 = vshrl.u32 1326507024, %v5460
    %v5476 = vor.u32 %v5474, %v5475
    %vm5477 = vcmp.lt.s32.totalorder %v5458, 1
    %vm5478 = vcmp.lt.s32.totalorder %v5458, 2
    %vm5479 = vcmp.lt.s32.totalorder %v5458, 3
    %vm5480 = vcmp.lt.s32.totalorder %v5458, 4
    %v5481 = vsel %vm5477, %v5461, %v5464
    %v5482 = vsel %vm5480, %v5470, 2102212464
    %v5483 = vsel %vm5479, %v5467, %v5482
    %v5484 = vsel %vm5478, %v5481, %v5483
    %v5485 = vsel %vm5477, %v5464, %v5467
    %v5486 = vsel %vm5480, %v5473, 920167782
    %v5487 = vsel %vm5479, %v5470, %v5486
    %v5488 = vsel %vm5478, %v5485, %v5487
    %v5489 = vsel %vm5477, %v5467, %v5470
    %v5490 = vsel %vm5480, %v5476, 1326507024
    %v5491 = vsel %vm5479, %v5473, %v5490
    %v5492 = vsel %vm5478, %v5489, %v5491
    %v5493 = vshll.u32 %v5453, 8
    %v5494 = vmul.u32.u64.compose %v5493, %v5492
    %v5495 = vextract.low.u32 %v5494
    %v5496 = vextract.high.u32 %v5494
    %v5497 = vmul.u32.u64.compose %v5493, %v5488
    %v5498 = vextract.low.u32 %v5497
    %v5499 = vextract.high.u32 %v5497
    %v5500 = vmul.u32 %v5493, %v5484
    %v5501 = vadd.s32 %v5496, %v5498
    %vm5502 = vc.u32 %v5496, %v5498
    %v5503 = vadd.s32 %v5499, 1
    %v5504 = vsel %vm5502, %v5503, %v5499
    %v5505 = vadd.s32 %v5500, %v5504
    %v5506 = vadd.s32 %v5505, 536870912
    %v5507 = vshrl.u32 %v5506, 30
    %v5508 = vshll.u32 %v5507, 30
    %v5509 = vsub.s32 %v5505, %v5508
    %vm5510 = vcmp.lt.s32.totalorder %v5509, 0
    %v5511 = vsub.s32 0, %v5509
    %v5512 = vsel %vm5510, %v5511, %v5509
    %v5513 = vclz %v5512
    %v5514 = vsub.s32 %v5513, 2
    %vm5515 = vcmp.gt.s32.totalorder 0, %v5514
    %v5516 = vsel %vm5515, 0, %v5514
    %v5517 = vsub.s32 32, %v5516
    %v5518 = vshll.u32 %v5509, %v5516
    %v5519 = vshrl.u32 %v5501, %v5517
    %v5520 = vor.u32 %v5518, %v5519
    %v5521 = vsub.s32 4294967266, %v5516
    %v5522 = vadd.s32 %v5521, 127
    %v5523 = vshll.u32 %v5522, 23
    %v5524 = vor.u32 4788187, %v5523
    %v5525 = vand.u32 2147483647, %v5524
    %v5527 = vcvt.s32.f32 %v5520
    %v5528 = vmul.f32 %v5527, %v5525
    %v5529 = vxor.u32 %v5528, 2147483648
    %v5530 = vsel %vm5447, %v5529, %v5528
    %v5531 = vsub.s32 4, %v5507
    %v5532 = vsel %vm5447, %v5531, %v5507
    %v5533 = vsel %vm5446, %v5444, %v5530
    %v5534 = vsel %vm5446, 0, %v5532
    %v5535 = vcosq.f32.pop %v5533
    %v5536 = vsinq.f32.pop %v5533
    %vm5537 = vweird.f32 %v5444
    %v5538 = vand.u32 %v5534, 3
    %vm5539 = vcmp.lt.s32.totalorder %v5538, 2
    %vm5540 = vcmp.eq.s32.totalorder %v5538, 0
    %v5541 = vxor.u32 %v5536, 2147483648
    %v5542 = vsel %vm5540, %v5535, %v5541
    %vm5543 = vcmp.eq.s32.totalorder %v5538, 2
    %v5544 = vxor.u32 %v5535, 2147483648
    %v5545 = vsel %vm5543, %v5544, %v5536
    %v5546 = vsel %vm5539, %v5542, %v5545
    %v5547 = vsel %vm5537, nan, %v5546
    %v5548 = vstv %s5441
    %v5549 = vmul.f32 %v5548, %v5547
    %v5550 = vadd.f32 %v5440, %v5549
    %s5551 = sld [smem:[#allocation2 + $0x119]]
    %s5552 = sld [smem:[#allocation2 + $0x19]]
    %v5553 = vstv %s5552
    %v5554 = vmul.f32 %v5553, %v23
    %v5555 = vand.u32 2147483647, %v5554
    %vm5556 = vcmp.le.f32.partialorder %v5555, 0.7853982
    %vm5557 = vcmp.lt.s32.totalorder %v5554, 0
    %v5558 = vand.u32 %v5554, 2139095040
    %v5559 = vshrl.u32 %v5558, 23
    %v5560 = vsub.s32 %v5559, 127
    %v5561 = vand.u32 2147483647, %v5554
    %v5562 = vand.u32 %v5561, 8388607
    %v5563 = vor.u32 %v5562, 8388608
    %v5564 = vsub.s32 0, %v5563
    %v5565 = vadd.s32 %v5560, 1
    %vm5566 = vcmp.gt.s32.totalorder %v5565, 0
    %v5567 = vsel %vm5566, %v5565, 0
    %v5568 = vshrl.u32 %v5567, 5
    %v5569 = vand.u32 %v5567, 31
    %v5570 = vsub.s32 32, %v5569
    %v5571 = vshrl.u32 683565275, %v5570
    %v5572 = vshll.u32 683565275, %v5569
    %v5573 = vshrl.u32 2475754826, %v5570
    %v5574 = vor.u32 %v5572, %v5573
    %v5575 = vshll.u32 2475754826, %v5569
    %v5576 = vshrl.u32 2131351028, %v5570
    %v5577 = vor.u32 %v5575, %v5576
    %v5578 = vshll.u32 2131351028, %v5569
    %v5579 = vshrl.u32 2102212464, %v5570
    %v5580 = vor.u32 %v5578, %v5579
    %v5581 = vshll.u32 2102212464, %v5569
    %v5582 = vshrl.u32 920167782, %v5570
    %v5583 = vor.u32 %v5581, %v5582
    %v5584 = vshll.u32 920167782, %v5569
    %v5585 = vshrl.u32 1326507024, %v5570
    %v5586 = vor.u32 %v5584, %v5585
    %vm5587 = vcmp.lt.s32.totalorder %v5568, 1
    %vm5588 = vcmp.lt.s32.totalorder %v5568, 2
    %vm5589 = vcmp.lt.s32.totalorder %v5568, 3
    %vm5590 = vcmp.lt.s32.totalorder %v5568, 4
    %v5591 = vsel %vm5587, %v5571, %v5574
    %v5592 = vsel %vm5590, %v5580, 2102212464
    %v5593 = vsel %vm5589, %v5577, %v5592
    %v5594 = vsel %vm5588, %v5591, %v5593
    %v5595 = vsel %vm5587, %v5574, %v5577
    %v5596 = vsel %vm5590, %v5583, 920167782
    %v5597 = vsel %vm5589, %v5580, %v5596
    %v5598 = vsel %vm5588, %v5595, %v5597
    %v5599 = vsel %vm5587, %v5577, %v5580
    %v5600 = vsel %vm5590, %v5586, 1326507024
    %v5601 = vsel %vm5589, %v5583, %v5600
    %v5602 = vsel %vm5588, %v5599, %v5601
    %v5603 = vshll.u32 %v5563, 8
    %v5604 = vmul.u32.u64.compose %v5603, %v5602
    %v5605 = vextract.low.u32 %v5604
    %v5606 = vextract.high.u32 %v5604
    %v5607 = vmul.u32.u64.compose %v5603, %v5598
    %v5608 = vextract.low.u32 %v5607
    %v5609 = vextract.high.u32 %v5607
    %v5610 = vmul.u32 %v5603, %v5594
    %v5611 = vadd.s32 %v5606, %v5608
    %vm5612 = vc.u32 %v5606, %v5608
    %v5613 = vadd.s32 %v5609, 1
    %v5614 = vsel %vm5612, %v5613, %v5609
    %v5615 = vadd.s32 %v5610, %v5614
    %v5616 = vadd.s32 %v5615, 536870912
    %v5617 = vshrl.u32 %v5616, 30
    %v5618 = vshll.u32 %v5617, 30
    %v5619 = vsub.s32 %v5615, %v5618
    %vm5620 = vcmp.lt.s32.totalorder %v5619, 0
    %v5621 = vsub.s32 0, %v5619
    %v5622 = vsel %vm5620, %v5621, %v5619
    %v5623 = vclz %v5622
    %v5624 = vsub.s32 %v5623, 2
    %vm5625 = vcmp.gt.s32.totalorder 0, %v5624
    %v5626 = vsel %vm5625, 0, %v5624
    %v5627 = vsub.s32 32, %v5626
    %v5628 = vshll.u32 %v5619, %v5626
    %v5629 = vshrl.u32 %v5611, %v5627
    %v5630 = vor.u32 %v5628, %v5629
    %v5631 = vsub.s32 4294967266, %v5626
    %v5632 = vadd.s32 %v5631, 127
    %v5633 = vshll.u32 %v5632, 23
    %v5634 = vor.u32 4788187, %v5633
    %v5635 = vand.u32 2147483647, %v5634
    %v5637 = vcvt.s32.f32 %v5630
    %v5638 = vmul.f32 %v5637, %v5635
    %v5639 = vxor.u32 %v5638, 2147483648
    %v5640 = vsel %vm5557, %v5639, %v5638
    %v5641 = vsub.s32 4, %v5617
    %v5642 = vsel %vm5557, %v5641, %v5617
    %v5643 = vsel %vm5556, %v5554, %v5640
    %v5644 = vsel %vm5556, 0, %v5642
    %v5645 = vcosq.f32.pop %v5643
    %v5646 = vsinq.f32.pop %v5643
    %vm5647 = vweird.f32 %v5554
    %v5648 = vadd.s32 %v5644, 3
    %v5649 = vand.u32 %v5648, 3
    %vm5650 = vcmp.lt.s32.totalorder %v5649, 2
    %vm5651 = vcmp.eq.s32.totalorder %v5649, 0
    %v5652 = vxor.u32 %v5646, 2147483648
    %v5653 = vsel %vm5651, %v5645, %v5652
    %vm5654 = vcmp.eq.s32.totalorder %v5649, 2
    %v5655 = vxor.u32 %v5645, 2147483648
    %v5656 = vsel %vm5654, %v5655, %v5646
    %v5657 = vsel %vm5650, %v5653, %v5656
    %v5658 = vsel %vm5647, nan, %v5657
    %v5659 = vstv %s5551
    %v5660 = vmul.f32 %v5659, %v5658
    %v5661 = vadd.f32 %v5550, %v5660
    %s5662 = sld [smem:[#allocation2 + $0x199]]
    %s5663 = sld [smem:[#allocation2 + $0x99]]
    %v5664 = vstv %s5663
    %v5665 = vmul.f32 %v5664, %v23
    %v5666 = vand.u32 2147483647, %v5665
    %vm5667 = vcmp.le.f32.partialorder %v5666, 0.7853982
    %vm5668 = vcmp.lt.s32.totalorder %v5665, 0
    %v5669 = vand.u32 %v5665, 2139095040
    %v5670 = vshrl.u32 %v5669, 23
    %v5671 = vsub.s32 %v5670, 127
    %v5672 = vand.u32 2147483647, %v5665
    %v5673 = vand.u32 %v5672, 8388607
    %v5674 = vor.u32 %v5673, 8388608
    %v5675 = vsub.s32 0, %v5674
    %v5676 = vadd.s32 %v5671, 1
    %vm5677 = vcmp.gt.s32.totalorder %v5676, 0
    %v5678 = vsel %vm5677, %v5676, 0
    %v5679 = vshrl.u32 %v5678, 5
    %v5680 = vand.u32 %v5678, 31
    %v5681 = vsub.s32 32, %v5680
    %v5682 = vshrl.u32 683565275, %v5681
    %v5683 = vshll.u32 683565275, %v5680
    %v5684 = vshrl.u32 2475754826, %v5681
    %v5685 = vor.u32 %v5683, %v5684
    %v5686 = vshll.u32 2475754826, %v5680
    %v5687 = vshrl.u32 2131351028, %v5681
    %v5688 = vor.u32 %v5686, %v5687
    %v5689 = vshll.u32 2131351028, %v5680
    %v5690 = vshrl.u32 2102212464, %v5681
    %v5691 = vor.u32 %v5689, %v5690
    %v5692 = vshll.u32 2102212464, %v5680
    %v5693 = vshrl.u32 920167782, %v5681
    %v5694 = vor.u32 %v5692, %v5693
    %v5695 = vshll.u32 920167782, %v5680
    %v5696 = vshrl.u32 1326507024, %v5681
    %v5697 = vor.u32 %v5695, %v5696
    %vm5698 = vcmp.lt.s32.totalorder %v5679, 1
    %vm5699 = vcmp.lt.s32.totalorder %v5679, 2
    %vm5700 = vcmp.lt.s32.totalorder %v5679, 3
    %vm5701 = vcmp.lt.s32.totalorder %v5679, 4
    %v5702 = vsel %vm5698, %v5682, %v5685
    %v5703 = vsel %vm5701, %v5691, 2102212464
    %v5704 = vsel %vm5700, %v5688, %v5703
    %v5705 = vsel %vm5699, %v5702, %v5704
    %v5706 = vsel %vm5698, %v5685, %v5688
    %v5707 = vsel %vm5701, %v5694, 920167782
    %v5708 = vsel %vm5700, %v5691, %v5707
    %v5709 = vsel %vm5699, %v5706, %v5708
    %v5710 = vsel %vm5698, %v5688, %v5691
    %v5711 = vsel %vm5701, %v5697, 1326507024
    %v5712 = vsel %vm5700, %v5694, %v5711
    %v5713 = vsel %vm5699, %v5710, %v5712
    %v5714 = vshll.u32 %v5674, 8
    %v5715 = vmul.u32.u64.compose %v5714, %v5713
    %v5716 = vextract.low.u32 %v5715
    %v5717 = vextract.high.u32 %v5715
    %v5718 = vmul.u32.u64.compose %v5714, %v5709
    %v5719 = vextract.low.u32 %v5718
    %v5720 = vextract.high.u32 %v5718
    %v5721 = vmul.u32 %v5714, %v5705
    %v5722 = vadd.s32 %v5717, %v5719
    %vm5723 = vc.u32 %v5717, %v5719
    %v5724 = vadd.s32 %v5720, 1
    %v5725 = vsel %vm5723, %v5724, %v5720
    %v5726 = vadd.s32 %v5721, %v5725
    %v5727 = vadd.s32 %v5726, 536870912
    %v5728 = vshrl.u32 %v5727, 30
    %v5729 = vshll.u32 %v5728, 30
    %v5730 = vsub.s32 %v5726, %v5729
    %vm5731 = vcmp.lt.s32.totalorder %v5730, 0
    %v5732 = vsub.s32 0, %v5730
    %v5733 = vsel %vm5731, %v5732, %v5730
    %v5734 = vclz %v5733
    %v5735 = vsub.s32 %v5734, 2
    %vm5736 = vcmp.gt.s32.totalorder 0, %v5735
    %v5737 = vsel %vm5736, 0, %v5735
    %v5738 = vsub.s32 32, %v5737
    %v5739 = vshll.u32 %v5730, %v5737
    %v5740 = vshrl.u32 %v5722, %v5738
    %v5741 = vor.u32 %v5739, %v5740
    %v5742 = vsub.s32 4294967266, %v5737
    %v5743 = vadd.s32 %v5742, 127
    %v5744 = vshll.u32 %v5743, 23
    %v5745 = vor.u32 4788187, %v5744
    %v5746 = vand.u32 2147483647, %v5745
    %v5748 = vcvt.s32.f32 %v5741
    %v5749 = vmul.f32 %v5748, %v5746
    %v5750 = vxor.u32 %v5749, 2147483648
    %v5751 = vsel %vm5668, %v5750, %v5749
    %v5752 = vsub.s32 4, %v5728
    %v5753 = vsel %vm5668, %v5752, %v5728
    %v5754 = vsel %vm5667, %v5665, %v5751
    %v5755 = vsel %vm5667, 0, %v5753
    %v5756 = vcosq.f32.pop %v5754
    %v5757 = vsinq.f32.pop %v5754
    %vm5758 = vweird.f32 %v5665
    %v5759 = vand.u32 %v5755, 3
    %vm5760 = vcmp.lt.s32.totalorder %v5759, 2
    %vm5761 = vcmp.eq.s32.totalorder %v5759, 0
    %v5762 = vxor.u32 %v5757, 2147483648
    %v5763 = vsel %vm5761, %v5756, %v5762
    %vm5764 = vcmp.eq.s32.totalorder %v5759, 2
    %v5765 = vxor.u32 %v5756, 2147483648
    %v5766 = vsel %vm5764, %v5765, %v5757
    %v5767 = vsel %vm5760, %v5763, %v5766
    %v5768 = vsel %vm5758, nan, %v5767
    %v5769 = vstv %s5662
    %v5770 = vmul.f32 %v5769, %v5768
    %v5771 = vadd.f32 %v5661, %v5770
    %s5772 = sld [smem:[#allocation2 + $0x11a]]
    %s5773 = sld [smem:[#allocation2 + $0x1a]]
    %v5774 = vstv %s5773
    %v5775 = vmul.f32 %v5774, %v23
    %v5776 = vand.u32 2147483647, %v5775
    %vm5777 = vcmp.le.f32.partialorder %v5776, 0.7853982
    %vm5778 = vcmp.lt.s32.totalorder %v5775, 0
    %v5779 = vand.u32 %v5775, 2139095040
    %v5780 = vshrl.u32 %v5779, 23
    %v5781 = vsub.s32 %v5780, 127
    %v5782 = vand.u32 2147483647, %v5775
    %v5783 = vand.u32 %v5782, 8388607
    %v5784 = vor.u32 %v5783, 8388608
    %v5785 = vsub.s32 0, %v5784
    %v5786 = vadd.s32 %v5781, 1
    %vm5787 = vcmp.gt.s32.totalorder %v5786, 0
    %v5788 = vsel %vm5787, %v5786, 0
    %v5789 = vshrl.u32 %v5788, 5
    %v5790 = vand.u32 %v5788, 31
    %v5791 = vsub.s32 32, %v5790
    %v5792 = vshrl.u32 683565275, %v5791
    %v5793 = vshll.u32 683565275, %v5790
    %v5794 = vshrl.u32 2475754826, %v5791
    %v5795 = vor.u32 %v5793, %v5794
    %v5796 = vshll.u32 2475754826, %v5790
    %v5797 = vshrl.u32 2131351028, %v5791
    %v5798 = vor.u32 %v5796, %v5797
    %v5799 = vshll.u32 2131351028, %v5790
    %v5800 = vshrl.u32 2102212464, %v5791
    %v5801 = vor.u32 %v5799, %v5800
    %v5802 = vshll.u32 2102212464, %v5790
    %v5803 = vshrl.u32 920167782, %v5791
    %v5804 = vor.u32 %v5802, %v5803
    %v5805 = vshll.u32 920167782, %v5790
    %v5806 = vshrl.u32 1326507024, %v5791
    %v5807 = vor.u32 %v5805, %v5806
    %vm5808 = vcmp.lt.s32.totalorder %v5789, 1
    %vm5809 = vcmp.lt.s32.totalorder %v5789, 2
    %vm5810 = vcmp.lt.s32.totalorder %v5789, 3
    %vm5811 = vcmp.lt.s32.totalorder %v5789, 4
    %v5812 = vsel %vm5808, %v5792, %v5795
    %v5813 = vsel %vm5811, %v5801, 2102212464
    %v5814 = vsel %vm5810, %v5798, %v5813
    %v5815 = vsel %vm5809, %v5812, %v5814
    %v5816 = vsel %vm5808, %v5795, %v5798
    %v5817 = vsel %vm5811, %v5804, 920167782
    %v5818 = vsel %vm5810, %v5801, %v5817
    %v5819 = vsel %vm5809, %v5816, %v5818
    %v5820 = vsel %vm5808, %v5798, %v5801
    %v5821 = vsel %vm5811, %v5807, 1326507024
    %v5822 = vsel %vm5810, %v5804, %v5821
    %v5823 = vsel %vm5809, %v5820, %v5822
    %v5824 = vshll.u32 %v5784, 8
    %v5825 = vmul.u32.u64.compose %v5824, %v5823
    %v5826 = vextract.low.u32 %v5825
    %v5827 = vextract.high.u32 %v5825
    %v5828 = vmul.u32.u64.compose %v5824, %v5819
    %v5829 = vextract.low.u32 %v5828
    %v5830 = vextract.high.u32 %v5828
    %v5831 = vmul.u32 %v5824, %v5815
    %v5832 = vadd.s32 %v5827, %v5829
    %vm5833 = vc.u32 %v5827, %v5829
    %v5834 = vadd.s32 %v5830, 1
    %v5835 = vsel %vm5833, %v5834, %v5830
    %v5836 = vadd.s32 %v5831, %v5835
    %v5837 = vadd.s32 %v5836, 536870912
    %v5838 = vshrl.u32 %v5837, 30
    %v5839 = vshll.u32 %v5838, 30
    %v5840 = vsub.s32 %v5836, %v5839
    %vm5841 = vcmp.lt.s32.totalorder %v5840, 0
    %v5842 = vsub.s32 0, %v5840
    %v5843 = vsel %vm5841, %v5842, %v5840
    %v5844 = vclz %v5843
    %v5845 = vsub.s32 %v5844, 2
    %vm5846 = vcmp.gt.s32.totalorder 0, %v5845
    %v5847 = vsel %vm5846, 0, %v5845
    %v5848 = vsub.s32 32, %v5847
    %v5849 = vshll.u32 %v5840, %v5847
    %v5850 = vshrl.u32 %v5832, %v5848
    %v5851 = vor.u32 %v5849, %v5850
    %v5852 = vsub.s32 4294967266, %v5847
    %v5853 = vadd.s32 %v5852, 127
    %v5854 = vshll.u32 %v5853, 23
    %v5855 = vor.u32 4788187, %v5854
    %v5856 = vand.u32 2147483647, %v5855
    %v5858 = vcvt.s32.f32 %v5851
    %v5859 = vmul.f32 %v5858, %v5856
    %v5860 = vxor.u32 %v5859, 2147483648
    %v5861 = vsel %vm5778, %v5860, %v5859
    %v5862 = vsub.s32 4, %v5838
    %v5863 = vsel %vm5778, %v5862, %v5838
    %v5864 = vsel %vm5777, %v5775, %v5861
    %v5865 = vsel %vm5777, 0, %v5863
    %v5866 = vcosq.f32.pop %v5864
    %v5867 = vsinq.f32.pop %v5864
    %vm5868 = vweird.f32 %v5775
    %v5869 = vadd.s32 %v5865, 3
    %v5870 = vand.u32 %v5869, 3
    %vm5871 = vcmp.lt.s32.totalorder %v5870, 2
    %vm5872 = vcmp.eq.s32.totalorder %v5870, 0
    %v5873 = vxor.u32 %v5867, 2147483648
    %v5874 = vsel %vm5872, %v5866, %v5873
    %vm5875 = vcmp.eq.s32.totalorder %v5870, 2
    %v5876 = vxor.u32 %v5866, 2147483648
    %v5877 = vsel %vm5875, %v5876, %v5867
    %v5878 = vsel %vm5871, %v5874, %v5877
    %v5879 = vsel %vm5868, nan, %v5878
    %v5880 = vstv %s5772
    %v5881 = vmul.f32 %v5880, %v5879
    %v5882 = vadd.f32 %v5771, %v5881
    %s5883 = sld [smem:[#allocation2 + $0x19a]]
    %s5884 = sld [smem:[#allocation2 + $0x9a]]
    %v5885 = vstv %s5884
    %v5886 = vmul.f32 %v5885, %v23
    %v5887 = vand.u32 2147483647, %v5886
    %vm5888 = vcmp.le.f32.partialorder %v5887, 0.7853982
    %vm5889 = vcmp.lt.s32.totalorder %v5886, 0
    %v5890 = vand.u32 %v5886, 2139095040
    %v5891 = vshrl.u32 %v5890, 23
    %v5892 = vsub.s32 %v5891, 127
    %v5893 = vand.u32 2147483647, %v5886
    %v5894 = vand.u32 %v5893, 8388607
    %v5895 = vor.u32 %v5894, 8388608
    %v5896 = vsub.s32 0, %v5895
    %v5897 = vadd.s32 %v5892, 1
    %vm5898 = vcmp.gt.s32.totalorder %v5897, 0
    %v5899 = vsel %vm5898, %v5897, 0
    %v5900 = vshrl.u32 %v5899, 5
    %v5901 = vand.u32 %v5899, 31
    %v5902 = vsub.s32 32, %v5901
    %v5903 = vshrl.u32 683565275, %v5902
    %v5904 = vshll.u32 683565275, %v5901
    %v5905 = vshrl.u32 2475754826, %v5902
    %v5906 = vor.u32 %v5904, %v5905
    %v5907 = vshll.u32 2475754826, %v5901
    %v5908 = vshrl.u32 2131351028, %v5902
    %v5909 = vor.u32 %v5907, %v5908
    %v5910 = vshll.u32 2131351028, %v5901
    %v5911 = vshrl.u32 2102212464, %v5902
    %v5912 = vor.u32 %v5910, %v5911
    %v5913 = vshll.u32 2102212464, %v5901
    %v5914 = vshrl.u32 920167782, %v5902
    %v5915 = vor.u32 %v5913, %v5914
    %v5916 = vshll.u32 920167782, %v5901
    %v5917 = vshrl.u32 1326507024, %v5902
    %v5918 = vor.u32 %v5916, %v5917
    %vm5919 = vcmp.lt.s32.totalorder %v5900, 1
    %vm5920 = vcmp.lt.s32.totalorder %v5900, 2
    %vm5921 = vcmp.lt.s32.totalorder %v5900, 3
    %vm5922 = vcmp.lt.s32.totalorder %v5900, 4
    %v5923 = vsel %vm5919, %v5903, %v5906
    %v5924 = vsel %vm5922, %v5912, 2102212464
    %v5925 = vsel %vm5921, %v5909, %v5924
    %v5926 = vsel %vm5920, %v5923, %v5925
    %v5927 = vsel %vm5919, %v5906, %v5909
    %v5928 = vsel %vm5922, %v5915, 920167782
    %v5929 = vsel %vm5921, %v5912, %v5928
    %v5930 = vsel %vm5920, %v5927, %v5929
    %v5931 = vsel %vm5919, %v5909, %v5912
    %v5932 = vsel %vm5922, %v5918, 1326507024
    %v5933 = vsel %vm5921, %v5915, %v5932
    %v5934 = vsel %vm5920, %v5931, %v5933
    %v5935 = vshll.u32 %v5895, 8
    %v5936 = vmul.u32.u64.compose %v5935, %v5934
    %v5937 = vextract.low.u32 %v5936
    %v5938 = vextract.high.u32 %v5936
    %v5939 = vmul.u32.u64.compose %v5935, %v5930
    %v5940 = vextract.low.u32 %v5939
    %v5941 = vextract.high.u32 %v5939
    %v5942 = vmul.u32 %v5935, %v5926
    %v5943 = vadd.s32 %v5938, %v5940
    %vm5944 = vc.u32 %v5938, %v5940
    %v5945 = vadd.s32 %v5941, 1
    %v5946 = vsel %vm5944, %v5945, %v5941
    %v5947 = vadd.s32 %v5942, %v5946
    %v5948 = vadd.s32 %v5947, 536870912
    %v5949 = vshrl.u32 %v5948, 30
    %v5950 = vshll.u32 %v5949, 30
    %v5951 = vsub.s32 %v5947, %v5950
    %vm5952 = vcmp.lt.s32.totalorder %v5951, 0
    %v5953 = vsub.s32 0, %v5951
    %v5954 = vsel %vm5952, %v5953, %v5951
    %v5955 = vclz %v5954
    %v5956 = vsub.s32 %v5955, 2
    %vm5957 = vcmp.gt.s32.totalorder 0, %v5956
    %v5958 = vsel %vm5957, 0, %v5956
    %v5959 = vsub.s32 32, %v5958
    %v5960 = vshll.u32 %v5951, %v5958
    %v5961 = vshrl.u32 %v5943, %v5959
    %v5962 = vor.u32 %v5960, %v5961
    %v5963 = vsub.s32 4294967266, %v5958
    %v5964 = vadd.s32 %v5963, 127
    %v5965 = vshll.u32 %v5964, 23
    %v5966 = vor.u32 4788187, %v5965
    %v5967 = vand.u32 2147483647, %v5966
    %v5969 = vcvt.s32.f32 %v5962
    %v5970 = vmul.f32 %v5969, %v5967
    %v5971 = vxor.u32 %v5970, 2147483648
    %v5972 = vsel %vm5889, %v5971, %v5970
    %v5973 = vsub.s32 4, %v5949
    %v5974 = vsel %vm5889, %v5973, %v5949
    %v5975 = vsel %vm5888, %v5886, %v5972
    %v5976 = vsel %vm5888, 0, %v5974
    %v5977 = vcosq.f32.pop %v5975
    %v5978 = vsinq.f32.pop %v5975
    %vm5979 = vweird.f32 %v5886
    %v5980 = vand.u32 %v5976, 3
    %vm5981 = vcmp.lt.s32.totalorder %v5980, 2
    %vm5982 = vcmp.eq.s32.totalorder %v5980, 0
    %v5983 = vxor.u32 %v5978, 2147483648
    %v5984 = vsel %vm5982, %v5977, %v5983
    %vm5985 = vcmp.eq.s32.totalorder %v5980, 2
    %v5986 = vxor.u32 %v5977, 2147483648
    %v5987 = vsel %vm5985, %v5986, %v5978
    %v5988 = vsel %vm5981, %v5984, %v5987
    %v5989 = vsel %vm5979, nan, %v5988
    %v5990 = vstv %s5883
    %v5991 = vmul.f32 %v5990, %v5989
    %v5992 = vadd.f32 %v5882, %v5991
    %s5993 = sld [smem:[#allocation2 + $0x11b]]
    %s5994 = sld [smem:[#allocation2 + $0x1b]]
    %v5995 = vstv %s5994
    %v5996 = vmul.f32 %v5995, %v23
    %v5997 = vand.u32 2147483647, %v5996
    %vm5998 = vcmp.le.f32.partialorder %v5997, 0.7853982
    %vm5999 = vcmp.lt.s32.totalorder %v5996, 0
    %v6000 = vand.u32 %v5996, 2139095040
    %v6001 = vshrl.u32 %v6000, 23
    %v6002 = vsub.s32 %v6001, 127
    %v6003 = vand.u32 2147483647, %v5996
    %v6004 = vand.u32 %v6003, 8388607
    %v6005 = vor.u32 %v6004, 8388608
    %v6006 = vsub.s32 0, %v6005
    %v6007 = vadd.s32 %v6002, 1
    %vm6008 = vcmp.gt.s32.totalorder %v6007, 0
    %v6009 = vsel %vm6008, %v6007, 0
    %v6010 = vshrl.u32 %v6009, 5
    %v6011 = vand.u32 %v6009, 31
    %v6012 = vsub.s32 32, %v6011
    %v6013 = vshrl.u32 683565275, %v6012
    %v6014 = vshll.u32 683565275, %v6011
    %v6015 = vshrl.u32 2475754826, %v6012
    %v6016 = vor.u32 %v6014, %v6015
    %v6017 = vshll.u32 2475754826, %v6011
    %v6018 = vshrl.u32 2131351028, %v6012
    %v6019 = vor.u32 %v6017, %v6018
    %v6020 = vshll.u32 2131351028, %v6011
    %v6021 = vshrl.u32 2102212464, %v6012
    %v6022 = vor.u32 %v6020, %v6021
    %v6023 = vshll.u32 2102212464, %v6011
    %v6024 = vshrl.u32 920167782, %v6012
    %v6025 = vor.u32 %v6023, %v6024
    %v6026 = vshll.u32 920167782, %v6011
    %v6027 = vshrl.u32 1326507024, %v6012
    %v6028 = vor.u32 %v6026, %v6027
    %vm6029 = vcmp.lt.s32.totalorder %v6010, 1
    %vm6030 = vcmp.lt.s32.totalorder %v6010, 2
    %vm6031 = vcmp.lt.s32.totalorder %v6010, 3
    %vm6032 = vcmp.lt.s32.totalorder %v6010, 4
    %v6033 = vsel %vm6029, %v6013, %v6016
    %v6034 = vsel %vm6032, %v6022, 2102212464
    %v6035 = vsel %vm6031, %v6019, %v6034
    %v6036 = vsel %vm6030, %v6033, %v6035
    %v6037 = vsel %vm6029, %v6016, %v6019
    %v6038 = vsel %vm6032, %v6025, 920167782
    %v6039 = vsel %vm6031, %v6022, %v6038
    %v6040 = vsel %vm6030, %v6037, %v6039
    %v6041 = vsel %vm6029, %v6019, %v6022
    %v6042 = vsel %vm6032, %v6028, 1326507024
    %v6043 = vsel %vm6031, %v6025, %v6042
    %v6044 = vsel %vm6030, %v6041, %v6043
    %v6045 = vshll.u32 %v6005, 8
    %v6046 = vmul.u32.u64.compose %v6045, %v6044
    %v6047 = vextract.low.u32 %v6046
    %v6048 = vextract.high.u32 %v6046
    %v6049 = vmul.u32.u64.compose %v6045, %v6040
    %v6050 = vextract.low.u32 %v6049
    %v6051 = vextract.high.u32 %v6049
    %v6052 = vmul.u32 %v6045, %v6036
    %v6053 = vadd.s32 %v6048, %v6050
    %vm6054 = vc.u32 %v6048, %v6050
    %v6055 = vadd.s32 %v6051, 1
    %v6056 = vsel %vm6054, %v6055, %v6051
    %v6057 = vadd.s32 %v6052, %v6056
    %v6058 = vadd.s32 %v6057, 536870912
    %v6059 = vshrl.u32 %v6058, 30
    %v6060 = vshll.u32 %v6059, 30
    %v6061 = vsub.s32 %v6057, %v6060
    %vm6062 = vcmp.lt.s32.totalorder %v6061, 0
    %v6063 = vsub.s32 0, %v6061
    %v6064 = vsel %vm6062, %v6063, %v6061
    %v6065 = vclz %v6064
    %v6066 = vsub.s32 %v6065, 2
    %vm6067 = vcmp.gt.s32.totalorder 0, %v6066
    %v6068 = vsel %vm6067, 0, %v6066
    %v6069 = vsub.s32 32, %v6068
    %v6070 = vshll.u32 %v6061, %v6068
    %v6071 = vshrl.u32 %v6053, %v6069
    %v6072 = vor.u32 %v6070, %v6071
    %v6073 = vsub.s32 4294967266, %v6068
    %v6074 = vadd.s32 %v6073, 127
    %v6075 = vshll.u32 %v6074, 23
    %v6076 = vor.u32 4788187, %v6075
    %v6077 = vand.u32 2147483647, %v6076
    %v6079 = vcvt.s32.f32 %v6072
    %v6080 = vmul.f32 %v6079, %v6077
    %v6081 = vxor.u32 %v6080, 2147483648
    %v6082 = vsel %vm5999, %v6081, %v6080
    %v6083 = vsub.s32 4, %v6059
    %v6084 = vsel %vm5999, %v6083, %v6059
    %v6085 = vsel %vm5998, %v5996, %v6082
    %v6086 = vsel %vm5998, 0, %v6084
    %v6087 = vcosq.f32.pop %v6085
    %v6088 = vsinq.f32.pop %v6085
    %vm6089 = vweird.f32 %v5996
    %v6090 = vadd.s32 %v6086, 3
    %v6091 = vand.u32 %v6090, 3
    %vm6092 = vcmp.lt.s32.totalorder %v6091, 2
    %vm6093 = vcmp.eq.s32.totalorder %v6091, 0
    %v6094 = vxor.u32 %v6088, 2147483648
    %v6095 = vsel %vm6093, %v6087, %v6094
    %vm6096 = vcmp.eq.s32.totalorder %v6091, 2
    %v6097 = vxor.u32 %v6087, 2147483648
    %v6098 = vsel %vm6096, %v6097, %v6088
    %v6099 = vsel %vm6092, %v6095, %v6098
    %v6100 = vsel %vm6089, nan, %v6099
    %v6101 = vstv %s5993
    %v6102 = vmul.f32 %v6101, %v6100
    %v6103 = vadd.f32 %v5992, %v6102
    %s6104 = sld [smem:[#allocation2 + $0x19b]]
    %s6105 = sld [smem:[#allocation2 + $0x9b]]
    %v6106 = vstv %s6105
    %v6107 = vmul.f32 %v6106, %v23
    %v6108 = vand.u32 2147483647, %v6107
    %vm6109 = vcmp.le.f32.partialorder %v6108, 0.7853982
    %vm6110 = vcmp.lt.s32.totalorder %v6107, 0
    %v6111 = vand.u32 %v6107, 2139095040
    %v6112 = vshrl.u32 %v6111, 23
    %v6113 = vsub.s32 %v6112, 127
    %v6114 = vand.u32 2147483647, %v6107
    %v6115 = vand.u32 %v6114, 8388607
    %v6116 = vor.u32 %v6115, 8388608
    %v6117 = vsub.s32 0, %v6116
    %v6118 = vadd.s32 %v6113, 1
    %vm6119 = vcmp.gt.s32.totalorder %v6118, 0
    %v6120 = vsel %vm6119, %v6118, 0
    %v6121 = vshrl.u32 %v6120, 5
    %v6122 = vand.u32 %v6120, 31
    %v6123 = vsub.s32 32, %v6122
    %v6124 = vshrl.u32 683565275, %v6123
    %v6125 = vshll.u32 683565275, %v6122
    %v6126 = vshrl.u32 2475754826, %v6123
    %v6127 = vor.u32 %v6125, %v6126
    %v6128 = vshll.u32 2475754826, %v6122
    %v6129 = vshrl.u32 2131351028, %v6123
    %v6130 = vor.u32 %v6128, %v6129
    %v6131 = vshll.u32 2131351028, %v6122
    %v6132 = vshrl.u32 2102212464, %v6123
    %v6133 = vor.u32 %v6131, %v6132
    %v6134 = vshll.u32 2102212464, %v6122
    %v6135 = vshrl.u32 920167782, %v6123
    %v6136 = vor.u32 %v6134, %v6135
    %v6137 = vshll.u32 920167782, %v6122
    %v6138 = vshrl.u32 1326507024, %v6123
    %v6139 = vor.u32 %v6137, %v6138
    %vm6140 = vcmp.lt.s32.totalorder %v6121, 1
    %vm6141 = vcmp.lt.s32.totalorder %v6121, 2
    %vm6142 = vcmp.lt.s32.totalorder %v6121, 3
    %vm6143 = vcmp.lt.s32.totalorder %v6121, 4
    %v6144 = vsel %vm6140, %v6124, %v6127
    %v6145 = vsel %vm6143, %v6133, 2102212464
    %v6146 = vsel %vm6142, %v6130, %v6145
    %v6147 = vsel %vm6141, %v6144, %v6146
    %v6148 = vsel %vm6140, %v6127, %v6130
    %v6149 = vsel %vm6143, %v6136, 920167782
    %v6150 = vsel %vm6142, %v6133, %v6149
    %v6151 = vsel %vm6141, %v6148, %v6150
    %v6152 = vsel %vm6140, %v6130, %v6133
    %v6153 = vsel %vm6143, %v6139, 1326507024
    %v6154 = vsel %vm6142, %v6136, %v6153
    %v6155 = vsel %vm6141, %v6152, %v6154
    %v6156 = vshll.u32 %v6116, 8
    %v6157 = vmul.u32.u64.compose %v6156, %v6155
    %v6158 = vextract.low.u32 %v6157
    %v6159 = vextract.high.u32 %v6157
    %v6160 = vmul.u32.u64.compose %v6156, %v6151
    %v6161 = vextract.low.u32 %v6160
    %v6162 = vextract.high.u32 %v6160
    %v6163 = vmul.u32 %v6156, %v6147
    %v6164 = vadd.s32 %v6159, %v6161
    %vm6165 = vc.u32 %v6159, %v6161
    %v6166 = vadd.s32 %v6162, 1
    %v6167 = vsel %vm6165, %v6166, %v6162
    %v6168 = vadd.s32 %v6163, %v6167
    %v6169 = vadd.s32 %v6168, 536870912
    %v6170 = vshrl.u32 %v6169, 30
    %v6171 = vshll.u32 %v6170, 30
    %v6172 = vsub.s32 %v6168, %v6171
    %vm6173 = vcmp.lt.s32.totalorder %v6172, 0
    %v6174 = vsub.s32 0, %v6172
    %v6175 = vsel %vm6173, %v6174, %v6172
    %v6176 = vclz %v6175
    %v6177 = vsub.s32 %v6176, 2
    %vm6178 = vcmp.gt.s32.totalorder 0, %v6177
    %v6179 = vsel %vm6178, 0, %v6177
    %v6180 = vsub.s32 32, %v6179
    %v6181 = vshll.u32 %v6172, %v6179
    %v6182 = vshrl.u32 %v6164, %v6180
    %v6183 = vor.u32 %v6181, %v6182
    %v6184 = vsub.s32 4294967266, %v6179
    %v6185 = vadd.s32 %v6184, 127
    %v6186 = vshll.u32 %v6185, 23
    %v6187 = vor.u32 4788187, %v6186
    %v6188 = vand.u32 2147483647, %v6187
    %v6190 = vcvt.s32.f32 %v6183
    %v6191 = vmul.f32 %v6190, %v6188
    %v6192 = vxor.u32 %v6191, 2147483648
    %v6193 = vsel %vm6110, %v6192, %v6191
    %v6194 = vsub.s32 4, %v6170
    %v6195 = vsel %vm6110, %v6194, %v6170
    %v6196 = vsel %vm6109, %v6107, %v6193
    %v6197 = vsel %vm6109, 0, %v6195
    %v6198 = vcosq.f32.pop %v6196
    %v6199 = vsinq.f32.pop %v6196
    %vm6200 = vweird.f32 %v6107
    %v6201 = vand.u32 %v6197, 3
    %vm6202 = vcmp.lt.s32.totalorder %v6201, 2
    %vm6203 = vcmp.eq.s32.totalorder %v6201, 0
    %v6204 = vxor.u32 %v6199, 2147483648
    %v6205 = vsel %vm6203, %v6198, %v6204
    %vm6206 = vcmp.eq.s32.totalorder %v6201, 2
    %v6207 = vxor.u32 %v6198, 2147483648
    %v6208 = vsel %vm6206, %v6207, %v6199
    %v6209 = vsel %vm6202, %v6205, %v6208
    %v6210 = vsel %vm6200, nan, %v6209
    %v6211 = vstv %s6104
    %v6212 = vmul.f32 %v6211, %v6210
    %v6213 = vadd.f32 %v6103, %v6212
    %s6214 = sld [smem:[#allocation2 + $0x11c]]
    %s6215 = sld [smem:[#allocation2 + $0x1c]]
    %v6216 = vstv %s6215
    %v6217 = vmul.f32 %v6216, %v23
    %v6218 = vand.u32 2147483647, %v6217
    %vm6219 = vcmp.le.f32.partialorder %v6218, 0.7853982
    %vm6220 = vcmp.lt.s32.totalorder %v6217, 0
    %v6221 = vand.u32 %v6217, 2139095040
    %v6222 = vshrl.u32 %v6221, 23
    %v6223 = vsub.s32 %v6222, 127
    %v6224 = vand.u32 2147483647, %v6217
    %v6225 = vand.u32 %v6224, 8388607
    %v6226 = vor.u32 %v6225, 8388608
    %v6227 = vsub.s32 0, %v6226
    %v6228 = vadd.s32 %v6223, 1
    %vm6229 = vcmp.gt.s32.totalorder %v6228, 0
    %v6230 = vsel %vm6229, %v6228, 0
    %v6231 = vshrl.u32 %v6230, 5
    %v6232 = vand.u32 %v6230, 31
    %v6233 = vsub.s32 32, %v6232
    %v6234 = vshrl.u32 683565275, %v6233
    %v6235 = vshll.u32 683565275, %v6232
    %v6236 = vshrl.u32 2475754826, %v6233
    %v6237 = vor.u32 %v6235, %v6236
    %v6238 = vshll.u32 2475754826, %v6232
    %v6239 = vshrl.u32 2131351028, %v6233
    %v6240 = vor.u32 %v6238, %v6239
    %v6241 = vshll.u32 2131351028, %v6232
    %v6242 = vshrl.u32 2102212464, %v6233
    %v6243 = vor.u32 %v6241, %v6242
    %v6244 = vshll.u32 2102212464, %v6232
    %v6245 = vshrl.u32 920167782, %v6233
    %v6246 = vor.u32 %v6244, %v6245
    %v6247 = vshll.u32 920167782, %v6232
    %v6248 = vshrl.u32 1326507024, %v6233
    %v6249 = vor.u32 %v6247, %v6248
    %vm6250 = vcmp.lt.s32.totalorder %v6231, 1
    %vm6251 = vcmp.lt.s32.totalorder %v6231, 2
    %vm6252 = vcmp.lt.s32.totalorder %v6231, 3
    %vm6253 = vcmp.lt.s32.totalorder %v6231, 4
    %v6254 = vsel %vm6250, %v6234, %v6237
    %v6255 = vsel %vm6253, %v6243, 2102212464
    %v6256 = vsel %vm6252, %v6240, %v6255
    %v6257 = vsel %vm6251, %v6254, %v6256
    %v6258 = vsel %vm6250, %v6237, %v6240
    %v6259 = vsel %vm6253, %v6246, 920167782
    %v6260 = vsel %vm6252, %v6243, %v6259
    %v6261 = vsel %vm6251, %v6258, %v6260
    %v6262 = vsel %vm6250, %v6240, %v6243
    %v6263 = vsel %vm6253, %v6249, 1326507024
    %v6264 = vsel %vm6252, %v6246, %v6263
    %v6265 = vsel %vm6251, %v6262, %v6264
    %v6266 = vshll.u32 %v6226, 8
    %v6267 = vmul.u32.u64.compose %v6266, %v6265
    %v6268 = vextract.low.u32 %v6267
    %v6269 = vextract.high.u32 %v6267
    %v6270 = vmul.u32.u64.compose %v6266, %v6261
    %v6271 = vextract.low.u32 %v6270
    %v6272 = vextract.high.u32 %v6270
    %v6273 = vmul.u32 %v6266, %v6257
    %v6274 = vadd.s32 %v6269, %v6271
    %vm6275 = vc.u32 %v6269, %v6271
    %v6276 = vadd.s32 %v6272, 1
    %v6277 = vsel %vm6275, %v6276, %v6272
    %v6278 = vadd.s32 %v6273, %v6277
    %v6279 = vadd.s32 %v6278, 536870912
    %v6280 = vshrl.u32 %v6279, 30
    %v6281 = vshll.u32 %v6280, 30
    %v6282 = vsub.s32 %v6278, %v6281
    %vm6283 = vcmp.lt.s32.totalorder %v6282, 0
    %v6284 = vsub.s32 0, %v6282
    %v6285 = vsel %vm6283, %v6284, %v6282
    %v6286 = vclz %v6285
    %v6287 = vsub.s32 %v6286, 2
    %vm6288 = vcmp.gt.s32.totalorder 0, %v6287
    %v6289 = vsel %vm6288, 0, %v6287
    %v6290 = vsub.s32 32, %v6289
    %v6291 = vshll.u32 %v6282, %v6289
    %v6292 = vshrl.u32 %v6274, %v6290
    %v6293 = vor.u32 %v6291, %v6292
    %v6294 = vsub.s32 4294967266, %v6289
    %v6295 = vadd.s32 %v6294, 127
    %v6296 = vshll.u32 %v6295, 23
    %v6297 = vor.u32 4788187, %v6296
    %v6298 = vand.u32 2147483647, %v6297
    %v6300 = vcvt.s32.f32 %v6293
    %v6301 = vmul.f32 %v6300, %v6298
    %v6302 = vxor.u32 %v6301, 2147483648
    %v6303 = vsel %vm6220, %v6302, %v6301
    %v6304 = vsub.s32 4, %v6280
    %v6305 = vsel %vm6220, %v6304, %v6280
    %v6306 = vsel %vm6219, %v6217, %v6303
    %v6307 = vsel %vm6219, 0, %v6305
    %v6308 = vcosq.f32.pop %v6306
    %v6309 = vsinq.f32.pop %v6306
    %vm6310 = vweird.f32 %v6217
    %v6311 = vadd.s32 %v6307, 3
    %v6312 = vand.u32 %v6311, 3
    %vm6313 = vcmp.lt.s32.totalorder %v6312, 2
    %vm6314 = vcmp.eq.s32.totalorder %v6312, 0
    %v6315 = vxor.u32 %v6309, 2147483648
    %v6316 = vsel %vm6314, %v6308, %v6315
    %vm6317 = vcmp.eq.s32.totalorder %v6312, 2
    %v6318 = vxor.u32 %v6308, 2147483648
    %v6319 = vsel %vm6317, %v6318, %v6309
    %v6320 = vsel %vm6313, %v6316, %v6319
    %v6321 = vsel %vm6310, nan, %v6320
    %v6322 = vstv %s6214
    %v6323 = vmul.f32 %v6322, %v6321
    %v6324 = vadd.f32 %v6213, %v6323
    %s6325 = sld [smem:[#allocation2 + $0x19c]]
    %s6326 = sld [smem:[#allocation2 + $0x9c]]
    %v6327 = vstv %s6326
    %v6328 = vmul.f32 %v6327, %v23
    %v6329 = vand.u32 2147483647, %v6328
    %vm6330 = vcmp.le.f32.partialorder %v6329, 0.7853982
    %vm6331 = vcmp.lt.s32.totalorder %v6328, 0
    %v6332 = vand.u32 %v6328, 2139095040
    %v6333 = vshrl.u32 %v6332, 23
    %v6334 = vsub.s32 %v6333, 127
    %v6335 = vand.u32 2147483647, %v6328
    %v6336 = vand.u32 %v6335, 8388607
    %v6337 = vor.u32 %v6336, 8388608
    %v6338 = vsub.s32 0, %v6337
    %v6339 = vadd.s32 %v6334, 1
    %vm6340 = vcmp.gt.s32.totalorder %v6339, 0
    %v6341 = vsel %vm6340, %v6339, 0
    %v6342 = vshrl.u32 %v6341, 5
    %v6343 = vand.u32 %v6341, 31
    %v6344 = vsub.s32 32, %v6343
    %v6345 = vshrl.u32 683565275, %v6344
    %v6346 = vshll.u32 683565275, %v6343
    %v6347 = vshrl.u32 2475754826, %v6344
    %v6348 = vor.u32 %v6346, %v6347
    %v6349 = vshll.u32 2475754826, %v6343
    %v6350 = vshrl.u32 2131351028, %v6344
    %v6351 = vor.u32 %v6349, %v6350
    %v6352 = vshll.u32 2131351028, %v6343
    %v6353 = vshrl.u32 2102212464, %v6344
    %v6354 = vor.u32 %v6352, %v6353
    %v6355 = vshll.u32 2102212464, %v6343
    %v6356 = vshrl.u32 920167782, %v6344
    %v6357 = vor.u32 %v6355, %v6356
    %v6358 = vshll.u32 920167782, %v6343
    %v6359 = vshrl.u32 1326507024, %v6344
    %v6360 = vor.u32 %v6358, %v6359
    %vm6361 = vcmp.lt.s32.totalorder %v6342, 1
    %vm6362 = vcmp.lt.s32.totalorder %v6342, 2
    %vm6363 = vcmp.lt.s32.totalorder %v6342, 3
    %vm6364 = vcmp.lt.s32.totalorder %v6342, 4
    %v6365 = vsel %vm6361, %v6345, %v6348
    %v6366 = vsel %vm6364, %v6354, 2102212464
    %v6367 = vsel %vm6363, %v6351, %v6366
    %v6368 = vsel %vm6362, %v6365, %v6367
    %v6369 = vsel %vm6361, %v6348, %v6351
    %v6370 = vsel %vm6364, %v6357, 920167782
    %v6371 = vsel %vm6363, %v6354, %v6370
    %v6372 = vsel %vm6362, %v6369, %v6371
    %v6373 = vsel %vm6361, %v6351, %v6354
    %v6374 = vsel %vm6364, %v6360, 1326507024
    %v6375 = vsel %vm6363, %v6357, %v6374
    %v6376 = vsel %vm6362, %v6373, %v6375
    %v6377 = vshll.u32 %v6337, 8
    %v6378 = vmul.u32.u64.compose %v6377, %v6376
    %v6379 = vextract.low.u32 %v6378
    %v6380 = vextract.high.u32 %v6378
    %v6381 = vmul.u32.u64.compose %v6377, %v6372
    %v6382 = vextract.low.u32 %v6381
    %v6383 = vextract.high.u32 %v6381
    %v6384 = vmul.u32 %v6377, %v6368
    %v6385 = vadd.s32 %v6380, %v6382
    %vm6386 = vc.u32 %v6380, %v6382
    %v6387 = vadd.s32 %v6383, 1
    %v6388 = vsel %vm6386, %v6387, %v6383
    %v6389 = vadd.s32 %v6384, %v6388
    %v6390 = vadd.s32 %v6389, 536870912
    %v6391 = vshrl.u32 %v6390, 30
    %v6392 = vshll.u32 %v6391, 30
    %v6393 = vsub.s32 %v6389, %v6392
    %vm6394 = vcmp.lt.s32.totalorder %v6393, 0
    %v6395 = vsub.s32 0, %v6393
    %v6396 = vsel %vm6394, %v6395, %v6393
    %v6397 = vclz %v6396
    %v6398 = vsub.s32 %v6397, 2
    %vm6399 = vcmp.gt.s32.totalorder 0, %v6398
    %v6400 = vsel %vm6399, 0, %v6398
    %v6401 = vsub.s32 32, %v6400
    %v6402 = vshll.u32 %v6393, %v6400
    %v6403 = vshrl.u32 %v6385, %v6401
    %v6404 = vor.u32 %v6402, %v6403
    %v6405 = vsub.s32 4294967266, %v6400
    %v6406 = vadd.s32 %v6405, 127
    %v6407 = vshll.u32 %v6406, 23
    %v6408 = vor.u32 4788187, %v6407
    %v6409 = vand.u32 2147483647, %v6408
    %v6411 = vcvt.s32.f32 %v6404
    %v6412 = vmul.f32 %v6411, %v6409
    %v6413 = vxor.u32 %v6412, 2147483648
    %v6414 = vsel %vm6331, %v6413, %v6412
    %v6415 = vsub.s32 4, %v6391
    %v6416 = vsel %vm6331, %v6415, %v6391
    %v6417 = vsel %vm6330, %v6328, %v6414
    %v6418 = vsel %vm6330, 0, %v6416
    %v6419 = vcosq.f32.pop %v6417
    %v6420 = vsinq.f32.pop %v6417
    %vm6421 = vweird.f32 %v6328
    %v6422 = vand.u32 %v6418, 3
    %vm6423 = vcmp.lt.s32.totalorder %v6422, 2
    %vm6424 = vcmp.eq.s32.totalorder %v6422, 0
    %v6425 = vxor.u32 %v6420, 2147483648
    %v6426 = vsel %vm6424, %v6419, %v6425
    %vm6427 = vcmp.eq.s32.totalorder %v6422, 2
    %v6428 = vxor.u32 %v6419, 2147483648
    %v6429 = vsel %vm6427, %v6428, %v6420
    %v6430 = vsel %vm6423, %v6426, %v6429
    %v6431 = vsel %vm6421, nan, %v6430
    %v6432 = vstv %s6325
    %v6433 = vmul.f32 %v6432, %v6431
    %v6434 = vadd.f32 %v6324, %v6433
    %s6435 = sld [smem:[#allocation2 + $0x11d]]
    %s6436 = sld [smem:[#allocation2 + $0x1d]]
    %v6437 = vstv %s6436
    %v6438 = vmul.f32 %v6437, %v23
    %v6439 = vand.u32 2147483647, %v6438
    %vm6440 = vcmp.le.f32.partialorder %v6439, 0.7853982
    %vm6441 = vcmp.lt.s32.totalorder %v6438, 0
    %v6442 = vand.u32 %v6438, 2139095040
    %v6443 = vshrl.u32 %v6442, 23
    %v6444 = vsub.s32 %v6443, 127
    %v6445 = vand.u32 2147483647, %v6438
    %v6446 = vand.u32 %v6445, 8388607
    %v6447 = vor.u32 %v6446, 8388608
    %v6448 = vsub.s32 0, %v6447
    %v6449 = vadd.s32 %v6444, 1
    %vm6450 = vcmp.gt.s32.totalorder %v6449, 0
    %v6451 = vsel %vm6450, %v6449, 0
    %v6452 = vshrl.u32 %v6451, 5
    %v6453 = vand.u32 %v6451, 31
    %v6454 = vsub.s32 32, %v6453
    %v6455 = vshrl.u32 683565275, %v6454
    %v6456 = vshll.u32 683565275, %v6453
    %v6457 = vshrl.u32 2475754826, %v6454
    %v6458 = vor.u32 %v6456, %v6457
    %v6459 = vshll.u32 2475754826, %v6453
    %v6460 = vshrl.u32 2131351028, %v6454
    %v6461 = vor.u32 %v6459, %v6460
    %v6462 = vshll.u32 2131351028, %v6453
    %v6463 = vshrl.u32 2102212464, %v6454
    %v6464 = vor.u32 %v6462, %v6463
    %v6465 = vshll.u32 2102212464, %v6453
    %v6466 = vshrl.u32 920167782, %v6454
    %v6467 = vor.u32 %v6465, %v6466
    %v6468 = vshll.u32 920167782, %v6453
    %v6469 = vshrl.u32 1326507024, %v6454
    %v6470 = vor.u32 %v6468, %v6469
    %vm6471 = vcmp.lt.s32.totalorder %v6452, 1
    %vm6472 = vcmp.lt.s32.totalorder %v6452, 2
    %vm6473 = vcmp.lt.s32.totalorder %v6452, 3
    %vm6474 = vcmp.lt.s32.totalorder %v6452, 4
    %v6475 = vsel %vm6471, %v6455, %v6458
    %v6476 = vsel %vm6474, %v6464, 2102212464
    %v6477 = vsel %vm6473, %v6461, %v6476
    %v6478 = vsel %vm6472, %v6475, %v6477
    %v6479 = vsel %vm6471, %v6458, %v6461
    %v6480 = vsel %vm6474, %v6467, 920167782
    %v6481 = vsel %vm6473, %v6464, %v6480
    %v6482 = vsel %vm6472, %v6479, %v6481
    %v6483 = vsel %vm6471, %v6461, %v6464
    %v6484 = vsel %vm6474, %v6470, 1326507024
    %v6485 = vsel %vm6473, %v6467, %v6484
    %v6486 = vsel %vm6472, %v6483, %v6485
    %v6487 = vshll.u32 %v6447, 8
    %v6488 = vmul.u32.u64.compose %v6487, %v6486
    %v6489 = vextract.low.u32 %v6488
    %v6490 = vextract.high.u32 %v6488
    %v6491 = vmul.u32.u64.compose %v6487, %v6482
    %v6492 = vextract.low.u32 %v6491
    %v6493 = vextract.high.u32 %v6491
    %v6494 = vmul.u32 %v6487, %v6478
    %v6495 = vadd.s32 %v6490, %v6492
    %vm6496 = vc.u32 %v6490, %v6492
    %v6497 = vadd.s32 %v6493, 1
    %v6498 = vsel %vm6496, %v6497, %v6493
    %v6499 = vadd.s32 %v6494, %v6498
    %v6500 = vadd.s32 %v6499, 536870912
    %v6501 = vshrl.u32 %v6500, 30
    %v6502 = vshll.u32 %v6501, 30
    %v6503 = vsub.s32 %v6499, %v6502
    %vm6504 = vcmp.lt.s32.totalorder %v6503, 0
    %v6505 = vsub.s32 0, %v6503
    %v6506 = vsel %vm6504, %v6505, %v6503
    %v6507 = vclz %v6506
    %v6508 = vsub.s32 %v6507, 2
    %vm6509 = vcmp.gt.s32.totalorder 0, %v6508
    %v6510 = vsel %vm6509, 0, %v6508
    %v6511 = vsub.s32 32, %v6510
    %v6512 = vshll.u32 %v6503, %v6510
    %v6513 = vshrl.u32 %v6495, %v6511
    %v6514 = vor.u32 %v6512, %v6513
    %v6515 = vsub.s32 4294967266, %v6510
    %v6516 = vadd.s32 %v6515, 127
    %v6517 = vshll.u32 %v6516, 23
    %v6518 = vor.u32 4788187, %v6517
    %v6519 = vand.u32 2147483647, %v6518
    %v6521 = vcvt.s32.f32 %v6514
    %v6522 = vmul.f32 %v6521, %v6519
    %v6523 = vxor.u32 %v6522, 2147483648
    %v6524 = vsel %vm6441, %v6523, %v6522
    %v6525 = vsub.s32 4, %v6501
    %v6526 = vsel %vm6441, %v6525, %v6501
    %v6527 = vsel %vm6440, %v6438, %v6524
    %v6528 = vsel %vm6440, 0, %v6526
    %v6529 = vcosq.f32.pop %v6527
    %v6530 = vsinq.f32.pop %v6527
    %vm6531 = vweird.f32 %v6438
    %v6532 = vadd.s32 %v6528, 3
    %v6533 = vand.u32 %v6532, 3
    %vm6534 = vcmp.lt.s32.totalorder %v6533, 2
    %vm6535 = vcmp.eq.s32.totalorder %v6533, 0
    %v6536 = vxor.u32 %v6530, 2147483648
    %v6537 = vsel %vm6535, %v6529, %v6536
    %vm6538 = vcmp.eq.s32.totalorder %v6533, 2
    %v6539 = vxor.u32 %v6529, 2147483648
    %v6540 = vsel %vm6538, %v6539, %v6530
    %v6541 = vsel %vm6534, %v6537, %v6540
    %v6542 = vsel %vm6531, nan, %v6541
    %v6543 = vstv %s6435
    %v6544 = vmul.f32 %v6543, %v6542
    %v6545 = vadd.f32 %v6434, %v6544
    %s6546 = sld [smem:[#allocation2 + $0x19d]]
    %s6547 = sld [smem:[#allocation2 + $0x9d]]
    %v6548 = vstv %s6547
    %v6549 = vmul.f32 %v6548, %v23
    %v6550 = vand.u32 2147483647, %v6549
    %vm6551 = vcmp.le.f32.partialorder %v6550, 0.7853982
    %vm6552 = vcmp.lt.s32.totalorder %v6549, 0
    %v6553 = vand.u32 %v6549, 2139095040
    %v6554 = vshrl.u32 %v6553, 23
    %v6555 = vsub.s32 %v6554, 127
    %v6556 = vand.u32 2147483647, %v6549
    %v6557 = vand.u32 %v6556, 8388607
    %v6558 = vor.u32 %v6557, 8388608
    %v6559 = vsub.s32 0, %v6558
    %v6560 = vadd.s32 %v6555, 1
    %vm6561 = vcmp.gt.s32.totalorder %v6560, 0
    %v6562 = vsel %vm6561, %v6560, 0
    %v6563 = vshrl.u32 %v6562, 5
    %v6564 = vand.u32 %v6562, 31
    %v6565 = vsub.s32 32, %v6564
    %v6566 = vshrl.u32 683565275, %v6565
    %v6567 = vshll.u32 683565275, %v6564
    %v6568 = vshrl.u32 2475754826, %v6565
    %v6569 = vor.u32 %v6567, %v6568
    %v6570 = vshll.u32 2475754826, %v6564
    %v6571 = vshrl.u32 2131351028, %v6565
    %v6572 = vor.u32 %v6570, %v6571
    %v6573 = vshll.u32 2131351028, %v6564
    %v6574 = vshrl.u32 2102212464, %v6565
    %v6575 = vor.u32 %v6573, %v6574
    %v6576 = vshll.u32 2102212464, %v6564
    %v6577 = vshrl.u32 920167782, %v6565
    %v6578 = vor.u32 %v6576, %v6577
    %v6579 = vshll.u32 920167782, %v6564
    %v6580 = vshrl.u32 1326507024, %v6565
    %v6581 = vor.u32 %v6579, %v6580
    %vm6582 = vcmp.lt.s32.totalorder %v6563, 1
    %vm6583 = vcmp.lt.s32.totalorder %v6563, 2
    %vm6584 = vcmp.lt.s32.totalorder %v6563, 3
    %vm6585 = vcmp.lt.s32.totalorder %v6563, 4
    %v6586 = vsel %vm6582, %v6566, %v6569
    %v6587 = vsel %vm6585, %v6575, 2102212464
    %v6588 = vsel %vm6584, %v6572, %v6587
    %v6589 = vsel %vm6583, %v6586, %v6588
    %v6590 = vsel %vm6582, %v6569, %v6572
    %v6591 = vsel %vm6585, %v6578, 920167782
    %v6592 = vsel %vm6584, %v6575, %v6591
    %v6593 = vsel %vm6583, %v6590, %v6592
    %v6594 = vsel %vm6582, %v6572, %v6575
    %v6595 = vsel %vm6585, %v6581, 1326507024
    %v6596 = vsel %vm6584, %v6578, %v6595
    %v6597 = vsel %vm6583, %v6594, %v6596
    %v6598 = vshll.u32 %v6558, 8
    %v6599 = vmul.u32.u64.compose %v6598, %v6597
    %v6600 = vextract.low.u32 %v6599
    %v6601 = vextract.high.u32 %v6599
    %v6602 = vmul.u32.u64.compose %v6598, %v6593
    %v6603 = vextract.low.u32 %v6602
    %v6604 = vextract.high.u32 %v6602
    %v6605 = vmul.u32 %v6598, %v6589
    %v6606 = vadd.s32 %v6601, %v6603
    %vm6607 = vc.u32 %v6601, %v6603
    %v6608 = vadd.s32 %v6604, 1
    %v6609 = vsel %vm6607, %v6608, %v6604
    %v6610 = vadd.s32 %v6605, %v6609
    %v6611 = vadd.s32 %v6610, 536870912
    %v6612 = vshrl.u32 %v6611, 30
    %v6613 = vshll.u32 %v6612, 30
    %v6614 = vsub.s32 %v6610, %v6613
    %vm6615 = vcmp.lt.s32.totalorder %v6614, 0
    %v6616 = vsub.s32 0, %v6614
    %v6617 = vsel %vm6615, %v6616, %v6614
    %v6618 = vclz %v6617
    %v6619 = vsub.s32 %v6618, 2
    %vm6620 = vcmp.gt.s32.totalorder 0, %v6619
    %v6621 = vsel %vm6620, 0, %v6619
    %v6622 = vsub.s32 32, %v6621
    %v6623 = vshll.u32 %v6614, %v6621
    %v6624 = vshrl.u32 %v6606, %v6622
    %v6625 = vor.u32 %v6623, %v6624
    %v6626 = vsub.s32 4294967266, %v6621
    %v6627 = vadd.s32 %v6626, 127
    %v6628 = vshll.u32 %v6627, 23
    %v6629 = vor.u32 4788187, %v6628
    %v6630 = vand.u32 2147483647, %v6629
    %v6632 = vcvt.s32.f32 %v6625
    %v6633 = vmul.f32 %v6632, %v6630
    %v6634 = vxor.u32 %v6633, 2147483648
    %v6635 = vsel %vm6552, %v6634, %v6633
    %v6636 = vsub.s32 4, %v6612
    %v6637 = vsel %vm6552, %v6636, %v6612
    %v6638 = vsel %vm6551, %v6549, %v6635
    %v6639 = vsel %vm6551, 0, %v6637
    %v6640 = vcosq.f32.pop %v6638
    %v6641 = vsinq.f32.pop %v6638
    %vm6642 = vweird.f32 %v6549
    %v6643 = vand.u32 %v6639, 3
    %vm6644 = vcmp.lt.s32.totalorder %v6643, 2
    %vm6645 = vcmp.eq.s32.totalorder %v6643, 0
    %v6646 = vxor.u32 %v6641, 2147483648
    %v6647 = vsel %vm6645, %v6640, %v6646
    %vm6648 = vcmp.eq.s32.totalorder %v6643, 2
    %v6649 = vxor.u32 %v6640, 2147483648
    %v6650 = vsel %vm6648, %v6649, %v6641
    %v6651 = vsel %vm6644, %v6647, %v6650
    %v6652 = vsel %vm6642, nan, %v6651
    %v6653 = vstv %s6546
    %v6654 = vmul.f32 %v6653, %v6652
    %v6655 = vadd.f32 %v6545, %v6654
    %s6656 = sld [smem:[#allocation2 + $0x11e]]
    %s6657 = sld [smem:[#allocation2 + $0x1e]]
    %v6658 = vstv %s6657
    %v6659 = vmul.f32 %v6658, %v23
    %v6660 = vand.u32 2147483647, %v6659
    %vm6661 = vcmp.le.f32.partialorder %v6660, 0.7853982
    %vm6662 = vcmp.lt.s32.totalorder %v6659, 0
    %v6663 = vand.u32 %v6659, 2139095040
    %v6664 = vshrl.u32 %v6663, 23
    %v6665 = vsub.s32 %v6664, 127
    %v6666 = vand.u32 2147483647, %v6659
    %v6667 = vand.u32 %v6666, 8388607
    %v6668 = vor.u32 %v6667, 8388608
    %v6669 = vsub.s32 0, %v6668
    %v6670 = vadd.s32 %v6665, 1
    %vm6671 = vcmp.gt.s32.totalorder %v6670, 0
    %v6672 = vsel %vm6671, %v6670, 0
    %v6673 = vshrl.u32 %v6672, 5
    %v6674 = vand.u32 %v6672, 31
    %v6675 = vsub.s32 32, %v6674
    %v6676 = vshrl.u32 683565275, %v6675
    %v6677 = vshll.u32 683565275, %v6674
    %v6678 = vshrl.u32 2475754826, %v6675
    %v6679 = vor.u32 %v6677, %v6678
    %v6680 = vshll.u32 2475754826, %v6674
    %v6681 = vshrl.u32 2131351028, %v6675
    %v6682 = vor.u32 %v6680, %v6681
    %v6683 = vshll.u32 2131351028, %v6674
    %v6684 = vshrl.u32 2102212464, %v6675
    %v6685 = vor.u32 %v6683, %v6684
    %v6686 = vshll.u32 2102212464, %v6674
    %v6687 = vshrl.u32 920167782, %v6675
    %v6688 = vor.u32 %v6686, %v6687
    %v6689 = vshll.u32 920167782, %v6674
    %v6690 = vshrl.u32 1326507024, %v6675
    %v6691 = vor.u32 %v6689, %v6690
    %vm6692 = vcmp.lt.s32.totalorder %v6673, 1
    %vm6693 = vcmp.lt.s32.totalorder %v6673, 2
    %vm6694 = vcmp.lt.s32.totalorder %v6673, 3
    %vm6695 = vcmp.lt.s32.totalorder %v6673, 4
    %v6696 = vsel %vm6692, %v6676, %v6679
    %v6697 = vsel %vm6695, %v6685, 2102212464
    %v6698 = vsel %vm6694, %v6682, %v6697
    %v6699 = vsel %vm6693, %v6696, %v6698
    %v6700 = vsel %vm6692, %v6679, %v6682
    %v6701 = vsel %vm6695, %v6688, 920167782
    %v6702 = vsel %vm6694, %v6685, %v6701
    %v6703 = vsel %vm6693, %v6700, %v6702
    %v6704 = vsel %vm6692, %v6682, %v6685
    %v6705 = vsel %vm6695, %v6691, 1326507024
    %v6706 = vsel %vm6694, %v6688, %v6705
    %v6707 = vsel %vm6693, %v6704, %v6706
    %v6708 = vshll.u32 %v6668, 8
    %v6709 = vmul.u32.u64.compose %v6708, %v6707
    %v6710 = vextract.low.u32 %v6709
    %v6711 = vextract.high.u32 %v6709
    %v6712 = vmul.u32.u64.compose %v6708, %v6703
    %v6713 = vextract.low.u32 %v6712
    %v6714 = vextract.high.u32 %v6712
    %v6715 = vmul.u32 %v6708, %v6699
    %v6716 = vadd.s32 %v6711, %v6713
    %vm6717 = vc.u32 %v6711, %v6713
    %v6718 = vadd.s32 %v6714, 1
    %v6719 = vsel %vm6717, %v6718, %v6714
    %v6720 = vadd.s32 %v6715, %v6719
    %v6721 = vadd.s32 %v6720, 536870912
    %v6722 = vshrl.u32 %v6721, 30
    %v6723 = vshll.u32 %v6722, 30
    %v6724 = vsub.s32 %v6720, %v6723
    %vm6725 = vcmp.lt.s32.totalorder %v6724, 0
    %v6726 = vsub.s32 0, %v6724
    %v6727 = vsel %vm6725, %v6726, %v6724
    %v6728 = vclz %v6727
    %v6729 = vsub.s32 %v6728, 2
    %vm6730 = vcmp.gt.s32.totalorder 0, %v6729
    %v6731 = vsel %vm6730, 0, %v6729
    %v6732 = vsub.s32 32, %v6731
    %v6733 = vshll.u32 %v6724, %v6731
    %v6734 = vshrl.u32 %v6716, %v6732
    %v6735 = vor.u32 %v6733, %v6734
    %v6736 = vsub.s32 4294967266, %v6731
    %v6737 = vadd.s32 %v6736, 127
    %v6738 = vshll.u32 %v6737, 23
    %v6739 = vor.u32 4788187, %v6738
    %v6740 = vand.u32 2147483647, %v6739
    %v6742 = vcvt.s32.f32 %v6735
    %v6743 = vmul.f32 %v6742, %v6740
    %v6744 = vxor.u32 %v6743, 2147483648
    %v6745 = vsel %vm6662, %v6744, %v6743
    %v6746 = vsub.s32 4, %v6722
    %v6747 = vsel %vm6662, %v6746, %v6722
    %v6748 = vsel %vm6661, %v6659, %v6745
    %v6749 = vsel %vm6661, 0, %v6747
    %v6750 = vcosq.f32.pop %v6748
    %v6751 = vsinq.f32.pop %v6748
    %vm6752 = vweird.f32 %v6659
    %v6753 = vadd.s32 %v6749, 3
    %v6754 = vand.u32 %v6753, 3
    %vm6755 = vcmp.lt.s32.totalorder %v6754, 2
    %vm6756 = vcmp.eq.s32.totalorder %v6754, 0
    %v6757 = vxor.u32 %v6751, 2147483648
    %v6758 = vsel %vm6756, %v6750, %v6757
    %vm6759 = vcmp.eq.s32.totalorder %v6754, 2
    %v6760 = vxor.u32 %v6750, 2147483648
    %v6761 = vsel %vm6759, %v6760, %v6751
    %v6762 = vsel %vm6755, %v6758, %v6761
    %v6763 = vsel %vm6752, nan, %v6762
    %v6764 = vstv %s6656
    %v6765 = vmul.f32 %v6764, %v6763
    %v6766 = vadd.f32 %v6655, %v6765
    %s6767 = sld [smem:[#allocation2 + $0x19e]]
    %s6768 = sld [smem:[#allocation2 + $0x9e]]
    %v6769 = vstv %s6768
    %v6770 = vmul.f32 %v6769, %v23
    %v6771 = vand.u32 2147483647, %v6770
    %vm6772 = vcmp.le.f32.partialorder %v6771, 0.7853982
    %vm6773 = vcmp.lt.s32.totalorder %v6770, 0
    %v6774 = vand.u32 %v6770, 2139095040
    %v6775 = vshrl.u32 %v6774, 23
    %v6776 = vsub.s32 %v6775, 127
    %v6777 = vand.u32 2147483647, %v6770
    %v6778 = vand.u32 %v6777, 8388607
    %v6779 = vor.u32 %v6778, 8388608
    %v6780 = vsub.s32 0, %v6779
    %v6781 = vadd.s32 %v6776, 1
    %vm6782 = vcmp.gt.s32.totalorder %v6781, 0
    %v6783 = vsel %vm6782, %v6781, 0
    %v6784 = vshrl.u32 %v6783, 5
    %v6785 = vand.u32 %v6783, 31
    %v6786 = vsub.s32 32, %v6785
    %v6787 = vshrl.u32 683565275, %v6786
    %v6788 = vshll.u32 683565275, %v6785
    %v6789 = vshrl.u32 2475754826, %v6786
    %v6790 = vor.u32 %v6788, %v6789
    %v6791 = vshll.u32 2475754826, %v6785
    %v6792 = vshrl.u32 2131351028, %v6786
    %v6793 = vor.u32 %v6791, %v6792
    %v6794 = vshll.u32 2131351028, %v6785
    %v6795 = vshrl.u32 2102212464, %v6786
    %v6796 = vor.u32 %v6794, %v6795
    %v6797 = vshll.u32 2102212464, %v6785
    %v6798 = vshrl.u32 920167782, %v6786
    %v6799 = vor.u32 %v6797, %v6798
    %v6800 = vshll.u32 920167782, %v6785
    %v6801 = vshrl.u32 1326507024, %v6786
    %v6802 = vor.u32 %v6800, %v6801
    %vm6803 = vcmp.lt.s32.totalorder %v6784, 1
    %vm6804 = vcmp.lt.s32.totalorder %v6784, 2
    %vm6805 = vcmp.lt.s32.totalorder %v6784, 3
    %vm6806 = vcmp.lt.s32.totalorder %v6784, 4
    %v6807 = vsel %vm6803, %v6787, %v6790
    %v6808 = vsel %vm6806, %v6796, 2102212464
    %v6809 = vsel %vm6805, %v6793, %v6808
    %v6810 = vsel %vm6804, %v6807, %v6809
    %v6811 = vsel %vm6803, %v6790, %v6793
    %v6812 = vsel %vm6806, %v6799, 920167782
    %v6813 = vsel %vm6805, %v6796, %v6812
    %v6814 = vsel %vm6804, %v6811, %v6813
    %v6815 = vsel %vm6803, %v6793, %v6796
    %v6816 = vsel %vm6806, %v6802, 1326507024
    %v6817 = vsel %vm6805, %v6799, %v6816
    %v6818 = vsel %vm6804, %v6815, %v6817
    %v6819 = vshll.u32 %v6779, 8
    %v6820 = vmul.u32.u64.compose %v6819, %v6818
    %v6821 = vextract.low.u32 %v6820
    %v6822 = vextract.high.u32 %v6820
    %v6823 = vmul.u32.u64.compose %v6819, %v6814
    %v6824 = vextract.low.u32 %v6823
    %v6825 = vextract.high.u32 %v6823
    %v6826 = vmul.u32 %v6819, %v6810
    %v6827 = vadd.s32 %v6822, %v6824
    %vm6828 = vc.u32 %v6822, %v6824
    %v6829 = vadd.s32 %v6825, 1
    %v6830 = vsel %vm6828, %v6829, %v6825
    %v6831 = vadd.s32 %v6826, %v6830
    %v6832 = vadd.s32 %v6831, 536870912
    %v6833 = vshrl.u32 %v6832, 30
    %v6834 = vshll.u32 %v6833, 30
    %v6835 = vsub.s32 %v6831, %v6834
    %vm6836 = vcmp.lt.s32.totalorder %v6835, 0
    %v6837 = vsub.s32 0, %v6835
    %v6838 = vsel %vm6836, %v6837, %v6835
    %v6839 = vclz %v6838
    %v6840 = vsub.s32 %v6839, 2
    %vm6841 = vcmp.gt.s32.totalorder 0, %v6840
    %v6842 = vsel %vm6841, 0, %v6840
    %v6843 = vsub.s32 32, %v6842
    %v6844 = vshll.u32 %v6835, %v6842
    %v6845 = vshrl.u32 %v6827, %v6843
    %v6846 = vor.u32 %v6844, %v6845
    %v6847 = vsub.s32 4294967266, %v6842
    %v6848 = vadd.s32 %v6847, 127
    %v6849 = vshll.u32 %v6848, 23
    %v6850 = vor.u32 4788187, %v6849
    %v6851 = vand.u32 2147483647, %v6850
    %v6853 = vcvt.s32.f32 %v6846
    %v6854 = vmul.f32 %v6853, %v6851
    %v6855 = vxor.u32 %v6854, 2147483648
    %v6856 = vsel %vm6773, %v6855, %v6854
    %v6857 = vsub.s32 4, %v6833
    %v6858 = vsel %vm6773, %v6857, %v6833
    %v6859 = vsel %vm6772, %v6770, %v6856
    %v6860 = vsel %vm6772, 0, %v6858
    %v6861 = vcosq.f32.pop %v6859
    %v6862 = vsinq.f32.pop %v6859
    %vm6863 = vweird.f32 %v6770
    %v6864 = vand.u32 %v6860, 3
    %vm6865 = vcmp.lt.s32.totalorder %v6864, 2
    %vm6866 = vcmp.eq.s32.totalorder %v6864, 0
    %v6867 = vxor.u32 %v6862, 2147483648
    %v6868 = vsel %vm6866, %v6861, %v6867
    %vm6869 = vcmp.eq.s32.totalorder %v6864, 2
    %v6870 = vxor.u32 %v6861, 2147483648
    %v6871 = vsel %vm6869, %v6870, %v6862
    %v6872 = vsel %vm6865, %v6868, %v6871
    %v6873 = vsel %vm6863, nan, %v6872
    %v6874 = vstv %s6767
    %v6875 = vmul.f32 %v6874, %v6873
    %v6876 = vadd.f32 %v6766, %v6875
    %s6877 = sld [smem:[#allocation2 + $0x11f]]
    %s6878 = sld [smem:[#allocation2 + $0x1f]]
    %v6879 = vstv %s6878
    %v6880 = vmul.f32 %v6879, %v23
    %v6881 = vand.u32 2147483647, %v6880
    %vm6882 = vcmp.le.f32.partialorder %v6881, 0.7853982
    %vm6883 = vcmp.lt.s32.totalorder %v6880, 0
    %v6884 = vand.u32 %v6880, 2139095040
    %v6885 = vshrl.u32 %v6884, 23
    %v6886 = vsub.s32 %v6885, 127
    %v6887 = vand.u32 2147483647, %v6880
    %v6888 = vand.u32 %v6887, 8388607
    %v6889 = vor.u32 %v6888, 8388608
    %v6890 = vsub.s32 0, %v6889
    %v6891 = vadd.s32 %v6886, 1
    %vm6892 = vcmp.gt.s32.totalorder %v6891, 0
    %v6893 = vsel %vm6892, %v6891, 0
    %v6894 = vshrl.u32 %v6893, 5
    %v6895 = vand.u32 %v6893, 31
    %v6896 = vsub.s32 32, %v6895
    %v6897 = vshrl.u32 683565275, %v6896
    %v6898 = vshll.u32 683565275, %v6895
    %v6899 = vshrl.u32 2475754826, %v6896
    %v6900 = vor.u32 %v6898, %v6899
    %v6901 = vshll.u32 2475754826, %v6895
    %v6902 = vshrl.u32 2131351028, %v6896
    %v6903 = vor.u32 %v6901, %v6902
    %v6904 = vshll.u32 2131351028, %v6895
    %v6905 = vshrl.u32 2102212464, %v6896
    %v6906 = vor.u32 %v6904, %v6905
    %v6907 = vshll.u32 2102212464, %v6895
    %v6908 = vshrl.u32 920167782, %v6896
    %v6909 = vor.u32 %v6907, %v6908
    %v6910 = vshll.u32 920167782, %v6895
    %v6911 = vshrl.u32 1326507024, %v6896
    %v6912 = vor.u32 %v6910, %v6911
    %vm6913 = vcmp.lt.s32.totalorder %v6894, 1
    %vm6914 = vcmp.lt.s32.totalorder %v6894, 2
    %vm6915 = vcmp.lt.s32.totalorder %v6894, 3
    %vm6916 = vcmp.lt.s32.totalorder %v6894, 4
    %v6917 = vsel %vm6913, %v6897, %v6900
    %v6918 = vsel %vm6916, %v6906, 2102212464
    %v6919 = vsel %vm6915, %v6903, %v6918
    %v6920 = vsel %vm6914, %v6917, %v6919
    %v6921 = vsel %vm6913, %v6900, %v6903
    %v6922 = vsel %vm6916, %v6909, 920167782
    %v6923 = vsel %vm6915, %v6906, %v6922
    %v6924 = vsel %vm6914, %v6921, %v6923
    %v6925 = vsel %vm6913, %v6903, %v6906
    %v6926 = vsel %vm6916, %v6912, 1326507024
    %v6927 = vsel %vm6915, %v6909, %v6926
    %v6928 = vsel %vm6914, %v6925, %v6927
    %v6929 = vshll.u32 %v6889, 8
    %v6930 = vmul.u32.u64.compose %v6929, %v6928
    %v6931 = vextract.low.u32 %v6930
    %v6932 = vextract.high.u32 %v6930
    %v6933 = vmul.u32.u64.compose %v6929, %v6924
    %v6934 = vextract.low.u32 %v6933
    %v6935 = vextract.high.u32 %v6933
    %v6936 = vmul.u32 %v6929, %v6920
    %v6937 = vadd.s32 %v6932, %v6934
    %vm6938 = vc.u32 %v6932, %v6934
    %v6939 = vadd.s32 %v6935, 1
    %v6940 = vsel %vm6938, %v6939, %v6935
    %v6941 = vadd.s32 %v6936, %v6940
    %v6942 = vadd.s32 %v6941, 536870912
    %v6943 = vshrl.u32 %v6942, 30
    %v6944 = vshll.u32 %v6943, 30
    %v6945 = vsub.s32 %v6941, %v6944
    %vm6946 = vcmp.lt.s32.totalorder %v6945, 0
    %v6947 = vsub.s32 0, %v6945
    %v6948 = vsel %vm6946, %v6947, %v6945
    %v6949 = vclz %v6948
    %v6950 = vsub.s32 %v6949, 2
    %vm6951 = vcmp.gt.s32.totalorder 0, %v6950
    %v6952 = vsel %vm6951, 0, %v6950
    %v6953 = vsub.s32 32, %v6952
    %v6954 = vshll.u32 %v6945, %v6952
    %v6955 = vshrl.u32 %v6937, %v6953
    %v6956 = vor.u32 %v6954, %v6955
    %v6957 = vsub.s32 4294967266, %v6952
    %v6958 = vadd.s32 %v6957, 127
    %v6959 = vshll.u32 %v6958, 23
    %v6960 = vor.u32 4788187, %v6959
    %v6961 = vand.u32 2147483647, %v6960
    %v6963 = vcvt.s32.f32 %v6956
    %v6964 = vmul.f32 %v6963, %v6961
    %v6965 = vxor.u32 %v6964, 2147483648
    %v6966 = vsel %vm6883, %v6965, %v6964
    %v6967 = vsub.s32 4, %v6943
    %v6968 = vsel %vm6883, %v6967, %v6943
    %v6969 = vsel %vm6882, %v6880, %v6966
    %v6970 = vsel %vm6882, 0, %v6968
    %v6971 = vcosq.f32.pop %v6969
    %v6972 = vsinq.f32.pop %v6969
    %vm6973 = vweird.f32 %v6880
    %v6974 = vadd.s32 %v6970, 3
    %v6975 = vand.u32 %v6974, 3
    %vm6976 = vcmp.lt.s32.totalorder %v6975, 2
    %vm6977 = vcmp.eq.s32.totalorder %v6975, 0
    %v6978 = vxor.u32 %v6972, 2147483648
    %v6979 = vsel %vm6977, %v6971, %v6978
    %vm6980 = vcmp.eq.s32.totalorder %v6975, 2
    %v6981 = vxor.u32 %v6971, 2147483648
    %v6982 = vsel %vm6980, %v6981, %v6972
    %v6983 = vsel %vm6976, %v6979, %v6982
    %v6984 = vsel %vm6973, nan, %v6983
    %v6985 = vstv %s6877
    %v6986 = vmul.f32 %v6985, %v6984
    %v6987 = vadd.f32 %v6876, %v6986
    %s6988 = sld [smem:[#allocation2 + $0x19f]]
    %s6989 = sld [smem:[#allocation2 + $0x9f]]
    %v6990 = vstv %s6989
    %v6991 = vmul.f32 %v6990, %v23
    %v6992 = vand.u32 2147483647, %v6991
    %vm6993 = vcmp.le.f32.partialorder %v6992, 0.7853982
    %vm6994 = vcmp.lt.s32.totalorder %v6991, 0
    %v6995 = vand.u32 %v6991, 2139095040
    %v6996 = vshrl.u32 %v6995, 23
    %v6997 = vsub.s32 %v6996, 127
    %v6998 = vand.u32 2147483647, %v6991
    %v6999 = vand.u32 %v6998, 8388607
    %v7000 = vor.u32 %v6999, 8388608
    %v7001 = vsub.s32 0, %v7000
    %v7002 = vadd.s32 %v6997, 1
    %vm7003 = vcmp.gt.s32.totalorder %v7002, 0
    %v7004 = vsel %vm7003, %v7002, 0
    %v7005 = vshrl.u32 %v7004, 5
    %v7006 = vand.u32 %v7004, 31
    %v7007 = vsub.s32 32, %v7006
    %v7008 = vshrl.u32 683565275, %v7007
    %v7009 = vshll.u32 683565275, %v7006
    %v7010 = vshrl.u32 2475754826, %v7007
    %v7011 = vor.u32 %v7009, %v7010
    %v7012 = vshll.u32 2475754826, %v7006
    %v7013 = vshrl.u32 2131351028, %v7007
    %v7014 = vor.u32 %v7012, %v7013
    %v7015 = vshll.u32 2131351028, %v7006
    %v7016 = vshrl.u32 2102212464, %v7007
    %v7017 = vor.u32 %v7015, %v7016
    %v7018 = vshll.u32 2102212464, %v7006
    %v7019 = vshrl.u32 920167782, %v7007
    %v7020 = vor.u32 %v7018, %v7019
    %v7021 = vshll.u32 920167782, %v7006
    %v7022 = vshrl.u32 1326507024, %v7007
    %v7023 = vor.u32 %v7021, %v7022
    %vm7024 = vcmp.lt.s32.totalorder %v7005, 1
    %vm7025 = vcmp.lt.s32.totalorder %v7005, 2
    %vm7026 = vcmp.lt.s32.totalorder %v7005, 3
    %vm7027 = vcmp.lt.s32.totalorder %v7005, 4
    %v7028 = vsel %vm7024, %v7008, %v7011
    %v7029 = vsel %vm7027, %v7017, 2102212464
    %v7030 = vsel %vm7026, %v7014, %v7029
    %v7031 = vsel %vm7025, %v7028, %v7030
    %v7032 = vsel %vm7024, %v7011, %v7014
    %v7033 = vsel %vm7027, %v7020, 920167782
    %v7034 = vsel %vm7026, %v7017, %v7033
    %v7035 = vsel %vm7025, %v7032, %v7034
    %v7036 = vsel %vm7024, %v7014, %v7017
    %v7037 = vsel %vm7027, %v7023, 1326507024
    %v7038 = vsel %vm7026, %v7020, %v7037
    %v7039 = vsel %vm7025, %v7036, %v7038
    %v7040 = vshll.u32 %v7000, 8
    %v7041 = vmul.u32.u64.compose %v7040, %v7039
    %v7042 = vextract.low.u32 %v7041
    %v7043 = vextract.high.u32 %v7041
    %v7044 = vmul.u32.u64.compose %v7040, %v7035
    %v7045 = vextract.low.u32 %v7044
    %v7046 = vextract.high.u32 %v7044
    %v7047 = vmul.u32 %v7040, %v7031
    %v7048 = vadd.s32 %v7043, %v7045
    %vm7049 = vc.u32 %v7043, %v7045
    %v7050 = vadd.s32 %v7046, 1
    %v7051 = vsel %vm7049, %v7050, %v7046
    %v7052 = vadd.s32 %v7047, %v7051
    %v7053 = vadd.s32 %v7052, 536870912
    %v7054 = vshrl.u32 %v7053, 30
    %v7055 = vshll.u32 %v7054, 30
    %v7056 = vsub.s32 %v7052, %v7055
    %vm7057 = vcmp.lt.s32.totalorder %v7056, 0
    %v7058 = vsub.s32 0, %v7056
    %v7059 = vsel %vm7057, %v7058, %v7056
    %v7060 = vclz %v7059
    %v7061 = vsub.s32 %v7060, 2
    %vm7062 = vcmp.gt.s32.totalorder 0, %v7061
    %v7063 = vsel %vm7062, 0, %v7061
    %v7064 = vsub.s32 32, %v7063
    %v7065 = vshll.u32 %v7056, %v7063
    %v7066 = vshrl.u32 %v7048, %v7064
    %v7067 = vor.u32 %v7065, %v7066
    %v7068 = vsub.s32 4294967266, %v7063
    %v7069 = vadd.s32 %v7068, 127
    %v7070 = vshll.u32 %v7069, 23
    %v7071 = vor.u32 4788187, %v7070
    %v7072 = vand.u32 2147483647, %v7071
    %v7074 = vcvt.s32.f32 %v7067
    %v7075 = vmul.f32 %v7074, %v7072
    %v7076 = vxor.u32 %v7075, 2147483648
    %v7077 = vsel %vm6994, %v7076, %v7075
    %v7078 = vsub.s32 4, %v7054
    %v7079 = vsel %vm6994, %v7078, %v7054
    %v7080 = vsel %vm6993, %v6991, %v7077
    %v7081 = vsel %vm6993, 0, %v7079
    %v7082 = vcosq.f32.pop %v7080
    %v7083 = vsinq.f32.pop %v7080
    %vm7084 = vweird.f32 %v6991
    %v7085 = vand.u32 %v7081, 3
    %vm7086 = vcmp.lt.s32.totalorder %v7085, 2
    %vm7087 = vcmp.eq.s32.totalorder %v7085, 0
    %v7088 = vxor.u32 %v7083, 2147483648
    %v7089 = vsel %vm7087, %v7082, %v7088
    %vm7090 = vcmp.eq.s32.totalorder %v7085, 2
    %v7091 = vxor.u32 %v7082, 2147483648
    %v7092 = vsel %vm7090, %v7091, %v7083
    %v7093 = vsel %vm7086, %v7089, %v7092
    %v7094 = vsel %vm7084, nan, %v7093
    %v7095 = vstv %s6988
    %v7096 = vmul.f32 %v7095, %v7094
    %v7097 = vadd.f32 %v6987, %v7096
    %7098 = vst [vmem:[#allocation5] sm:$0x1] %v7097
    // Predicated region
    $region14: #{tpu_custom_call.1} parent=1 // pred_check
      _
    $region15: #{tpu_custom_call.1} parent=1 // pred_check_branch
      %7100 = sbr.rel (0) target = $region17
    $region16: #{tpu_custom_call.1} parent=1 // pred_region
      %s7102 = ssub.s32 16, 16
      %7103 = vsyncadd [#allocation3], %s7102
      %s7105 = sshll.u32 [#allocation5], 4
      %s7106 = int_to_ptr.vmem [resolvable:$true] %s7105
      %7108 = dma.vmem_to_hbm [thread:$0]  %s7106, 16, %s2, [#allocation3]
    $region17: #{tpu_custom_call.1} parent=1 // pred_fallthru
      _
    // Predicated region
    $region18: #{tpu_custom_call.1} parent=1 // pred_check
      _
    $region19: #{tpu_custom_call.1} parent=1 // pred_check_branch
      %7110 = sbr.rel (0) target = $region21
    $region20: #{tpu_custom_call.1} parent=1 // pred_region
      %7111 = dma.done [#allocation3], 16
    $region21: #{tpu_custom_call.1} parent=1 // pred_fallthru
      _
    %7112 = vsyncpa [#allocation3], 1
    %7113 = vsyncpa [#allocation4], 1

</llo_original>
